<compile_context>
chip_gen: v7x
topology: tpu7x:2x2x1
jax: 0.10.0
libtpu: 0.0.40
codegen_flags: <defaults>
</compile_context>

<pallas_src>
import functools

import jax
import jax.numpy as jnp
from jax import lax
from jax.experimental import pallas as pl
from jax.experimental.pallas import tpu as pltpu

LANE = 128


def _round_up(a, b):
    return (a + b - 1) // b * b


def _pick_tile(total, candidates):
    for t in candidates:
        if total % t == 0:
            return t
    return total


# ----------------------------------------------------------------------------
# Fused 3x3 conv + bias + ReLU kernel (im2col folded into the kernel)
# ----------------------------------------------------------------------------
def _conv3x3_kernel(x_ref, w_ref, b_ref, o_ref, *, apply_relu):
    # x_ref: (1, H+2, W+2, Cin_p) bf16   (spatial halo, lane-padded channels)
    # w_ref: (3, 3, Cin_p, Cout_p) bf16
    # b_ref: (1, Cout_p) f32
    # o_ref: (1, H, W, Cout_p) bf16
    h_out = o_ref.shape[1]
    w_out = o_ref.shape[2]
    cout = o_ref.shape[3]

    def row_body(i, carry):
        acc = jnp.zeros((w_out, cout), jnp.float32)
        for di in range(3):
            for dj in range(3):
                patch = x_ref[0, i + di, dj:dj + w_out, :]      # (W, Cin_p) bf16
                acc = acc + jnp.dot(patch, w_ref[di, dj],
                                    preferred_element_type=jnp.float32)
        acc = acc + b_ref[...]                                  # (1, Cout) bcast
        if apply_relu:
            acc = jnp.maximum(acc, 0.0)
        o_ref[0, i] = acc.astype(o_ref.dtype)
        return carry

    lax.fori_loop(0, h_out, row_body, 0)


def conv3x3_relu(x, w, b):
    """3x3 conv (stride 1, pad 1) + bias + ReLU.

    x: (N, H, W, Cin_p) bf16 with Cin_p a multiple of 128 (extra channels == 0)
    w: (3, 3, Cin_true, Cout_true) f32   b: (Cout_true,) f32
    Returns (N, H, W, Cout_p) bf16 with Cout_p = round_up(Cout_true, 128) and
    the padded output channels exactly zero.
    """
    n, h, wd, cin_p = x.shape
    cin_t, cout_t = w.shape[2], w.shape[3]
    cout_p = _round_up(cout_t, LANE)

    wp = jnp.pad(w, ((0, 0), (0, 0), (0, cin_p - cin_t),
                     (0, cout_p - cout_t))).astype(jnp.bfloat16)
    bp = jnp.pad(b, (0, cout_p - cout_t)).astype(jnp.float32).reshape(1, cout_p)
    xp = jnp.pad(x, ((0, 0), (1, 1), (1, 1), (0, 0)))           # spatial halo only

    flops = 2 * n * h * wd * 9 * cin_p * cout_p
    bytes_acc = (xp.size * 2 + wp.size * 2 + bp.size * 4 + n * h * wd * cout_p * 2)

    out = pl.pallas_call(
        functools.partial(_conv3x3_kernel, apply_relu=True),
        out_shape=jax.ShapeDtypeStruct((n, h, wd, cout_p), jnp.bfloat16),
        grid=(n,),
        in_specs=[
            pl.BlockSpec((1, h + 2, wd + 2, cin_p), lambda i: (i, 0, 0, 0)),
            pl.BlockSpec((3, 3, cin_p, cout_p), lambda i: (0, 0, 0, 0)),
            pl.BlockSpec((1, cout_p), lambda i: (0, 0)),
        ],
        out_specs=pl.BlockSpec((1, h, wd, cout_p), lambda i: (i, 0, 0, 0)),
        compiler_params=pltpu.CompilerParams(
            dimension_semantics=("parallel",)),
        cost_estimate=pl.CostEstimate(flops=flops, transcendentals=0,
                                      bytes_accessed=bytes_acc),
    )(xp, wp, bp)
    return out


# ----------------------------------------------------------------------------
# Tiled 2x2 max-pool kernel (pools straight from NHWC, lane-aligned pairing)
# ----------------------------------------------------------------------------
def _maxpool_kernel(x_ref, o_ref, *, c):
    # x_ref: (1, 2*th, W/2, 2*C) -- lane halves are (even-col, odd-col) pixels
    x = x_ref[0]
    hmax = jnp.maximum(x[:, :, :c], x[:, :, c:])                # horizontal pool
    th2, wo, _ = hmax.shape
    hmax = hmax.reshape(th2 // 2, 2, wo, c)                     # free leading split
    o_ref[0] = jnp.maximum(hmax[:, 0], hmax[:, 1])              # vertical pool


def maxpool2x2(x):
    """2x2 max pool, stride 2.  x: (N, H, W, C_p) bf16, C_p multiple of 128."""
    n, h, w, c = x.shape
    assert h % 2 == 0 and w % 2 == 0
    ho, wo = h // 2, w // 2
    xr = x.reshape(n, h, wo, 2 * c)                             # free reshape

    # Pick an output-row tile so the input block stays small (deep pipelining).
    th = ho
    while th > 1 and (2 * th * wo * 2 * c * x.dtype.itemsize) > (1 << 18):
        th //= 2
    if ho % th != 0:
        th = ho

    out = pl.pallas_call(
        functools.partial(_maxpool_kernel, c=c),
        out_shape=jax.ShapeDtypeStruct((n, ho, wo, c), x.dtype),
        grid=(n, ho // th),
        in_specs=[pl.BlockSpec((1, 2 * th, wo, 2 * c), lambda i, j: (i, j, 0, 0))],
        out_specs=pl.BlockSpec((1, th, wo, c), lambda i, j: (i, j, 0, 0)),
        compiler_params=pltpu.CompilerParams(
            dimension_semantics=("parallel", "parallel")),
    )(xr)
    return out


# ----------------------------------------------------------------------------
# Matmul + bias (+ReLU) with K-reduction grid axis and f32 VMEM accumulator
# ----------------------------------------------------------------------------
def _matmul_bias_kernel(x_ref, w_ref, b_ref, o_ref, acc_ref, *, apply_relu):
    @pl.when(pl.program_id(2) == 0)
    def _():
        acc_ref[...] = jnp.zeros_like(acc_ref)

    acc_ref[...] += jnp.dot(x_ref[...], w_ref[...],
                            preferred_element_type=jnp.float32)

    @pl.when(pl.program_id(2) == pl.num_programs(2) - 1)
    def _():
        acc = acc_ref[...] + b_ref[...]
        if apply_relu:
            acc = jnp.maximum(acc, 0.0)
        o_ref[...] = acc.astype(o_ref.dtype)


def matmul_bias(x, w, b, *, relu, out_dtype=jnp.bfloat16):
    """x: (M, K), w: (K, N), b: (N,) -> (M, N), bf16 MXU inputs, f32 accum."""
    M, K = x.shape
    K2, N = w.shape
    assert K == K2

    Mp = _round_up(M, 16)
    if Mp > 256:
        Mp = _round_up(M, 256)
        tm = 256
    else:
        tm = Mp
    Kp = _round_up(K, LANE)
    Np = _round_up(N, LANE)
    tk = _pick_tile(Kp, (512, 256, 128))
    tn = _pick_tile(Np, (256, 128))

    xp = jnp.pad(x, ((0, Mp - M), (0, Kp - K))).astype(jnp.bfloat16)
    wp = jnp.pad(w, ((0, Kp - K), (0, Np - N))).astype(jnp.bfloat16)
    bp = jnp.pad(b, (0, Np - N)).astype(jnp.float32).reshape(1, Np)

    grid = (Mp // tm, Np // tn, Kp // tk)
    flops = 2 * Mp * Kp * Np
    bytes_acc = Mp * Kp * 2 + Kp * Np * 2 + Np * 4 + Mp * Np * jnp.dtype(out_dtype).itemsize

    out = pl.pallas_call(
        functools.partial(_matmul_bias_kernel, apply_relu=relu),
        out_shape=jax.ShapeDtypeStruct((Mp, Np), out_dtype),
        grid=grid,
        in_specs=[
            pl.BlockSpec((tm, tk), lambda i, j, k: (i, k)),
            pl.BlockSpec((tk, tn), lambda i, j, k: (k, j)),
            pl.BlockSpec((1, tn), lambda i, j, k: (0, j)),
        ],
        out_specs=pl.BlockSpec((tm, tn), lambda i, j, k: (i, j)),
        scratch_shapes=[pltpu.VMEM((tm, tn), jnp.float32)],
        compiler_params=pltpu.CompilerParams(
            dimension_semantics=("parallel", "parallel", "arbitrary")),
        cost_estimate=pl.CostEstimate(flops=flops, transcendentals=0,
                                      bytes_accessed=bytes_acc),
    )(xp, wp, bp)
    return out[:M, :N]


# ----------------------------------------------------------------------------
# VGG16 (scaled-down cfg for the small test)
# ----------------------------------------------------------------------------
CFG = [8, 8, "M", 16, 16, "M", 16, 16, 16, "M", 32, 32, 32, "M", 32, 32, 32, "M"]
NROF_CLASSES = 10
FC_HIDDEN = 64


def init_params(key, cfg, in_channels, nrof_classes, fc_hidden):
    params = {"convs": [], "fcs": []}
    c = in_channels
    for v in cfg:
        if v == "M":
            continue
        key, kw = jax.random.split(key)
        w = jax.random.normal(kw, (3, 3, c, v), jnp.float32) / jnp.sqrt(9.0 * c)
        b = jnp.zeros((v,), jnp.float32)
        params["convs"].append((w, b))
        c = v
    dims = [c, fc_hidden, fc_hidden, nrof_classes]   # spatial is 1x1 after 5 pools
    for i in range(3):
        key, kw = jax.random.split(key)
        w = jax.random.normal(kw, (dims[i], dims[i + 1]), jnp.float32) / jnp.sqrt(
            float(dims[i]))
        b = jnp.zeros((dims[i + 1],), jnp.float32)
        params["fcs"].append((w, b))
    return params


def vgg16_forward(params, x_nchw, cfg):
    # NCHW (torch convention) -> NHWC for TPU (channels on lanes), bf16 activ.
    x = jnp.transpose(x_nchw, (0, 2, 3, 1)).astype(jnp.float32)
    c_true = x.shape[-1]
    c_pad = _round_up(c_true, LANE)
    x = jnp.pad(x, ((0, 0), (0, 0), (0, 0), (0, c_pad - c_true))).astype(jnp.bfloat16)

    ci = 0
    for v in cfg:
        if v == "M":
            x = maxpool2x2(x)
        else:
            w, b = params["convs"][ci]
            x = conv3x3_relu(x, w, b)
            c_true = v
            ci += 1

    n = x.shape[0]
    # Spatial is 1x1 after the 5 pools, so NHWC flatten == torch NCHW flatten;
    # drop the zero lane padding before the classifier.
    assert x.shape[1] == 1 and x.shape[2] == 1
    x = x.reshape(n, -1)[:, :c_true]

    n_fc = len(params["fcs"])
    for i, (w, b) in enumerate(params["fcs"]):
        last = i == n_fc - 1
        x = matmul_bias(x, w, b, relu=not last,
                        out_dtype=jnp.float32 if last else jnp.bfloat16)
    return x               # (batch, nrof_classes), f32


if __name__ == "__main__":
    key = jax.random.PRNGKey(0)
    kx, kp = jax.random.split(key)
    x = jax.random.normal(kx, (2, 3, 32, 32), jnp.float32)   # NCHW, like torch
    params = init_params(kp, CFG, in_channels=3,
                         nrof_classes=NROF_CLASSES, fc_hidden=FC_HIDDEN)

    fwd = jax.jit(functools.partial(vgg16_forward, cfg=tuple(CFG)))
    out = fwd(params, x)
    out = jax.block_until_ready(out)
    assert out.shape == (2, NROF_CLASSES), out.shape
    assert bool(jnp.all(jnp.isfinite(out)))
    print("KERNEL_OK")
</pallas_src>

<mosaic_0001>
module attributes {stable_mosaic.version = 11 : i64} {
  func.func @_conv3x3_kernel(%arg0: i32, %arg1: memref<1x34x34x128xbf16, #tpu.memory_space<vmem>>, %arg2: memref<3x3x128x128xbf16, #tpu.memory_space<vmem>>, %arg3: memref<1x128xf32, #tpu.memory_space<vmem>>, %arg4: memref<1x32x32x128xbf16, #tpu.memory_space<vmem>>) attributes {dimension_semantics = [#tpu.dimension_semantics<parallel>], iteration_bounds = array<i64: 2>, scalar_prefetch = 0 : i64, scratch_operands = 0 : i64, tpu.core_type = #tpu.core_type<tc>, window_params = [{transform_indices = @transform_0, window_bounds = array<i64: 1, 34, 34, 128>}, {pipeline_mode = #tpu.pipeline_mode<synchronous>, transform_indices = @transform_1, window_bounds = array<i64: 3, 3, 128, 128>}, {pipeline_mode = #tpu.pipeline_mode<synchronous>, transform_indices = @transform_2, window_bounds = array<i64: 1, 128>}, {transform_indices = @transform_3, window_bounds = array<i64: 1, 32, 32, 128>}]} {
    %c0_i32 = arith.constant 0 : i32
    %c32_i32 = arith.constant 32 : i32
    %0 = arith.addi %c0_i32, %c32_i32 : i32
    %c1_i32 = arith.constant 1 : i32
    scf.for %arg5 = %c0_i32 to %0 step %c1_i32  : i32 {
      %cst = arith.constant 0.000000e+00 : f32
      %1 = vector.broadcast %cst : f32 to vector<32x128xf32>
      %c0_i32_1 = arith.constant 0 : i32
      %2 = arith.addi %arg5, %c0_i32_1 : i32
      %c0 = arith.constant 0 : index
      %3 = arith.index_cast %2 : i32 to index
      %c0_2 = arith.constant 0 : index
      %c0_3 = arith.constant 0 : index
      %4 = vector.load %arg1[%c0, %3, %c0_2, %c0_3] : memref<1x34x34x128xbf16, #tpu.memory_space<vmem>>, vector<1x1x32x128xbf16>
      %5 = vector.shape_cast %4 : vector<1x1x32x128xbf16> to vector<32x128xbf16>
      %c0_4 = arith.constant 0 : index
      %c0_5 = arith.constant 0 : index
      %c0_6 = arith.constant 0 : index
      %c0_7 = arith.constant 0 : index
      %6 = vector.load %arg2[%c0_4, %c0_5, %c0_6, %c0_7] : memref<3x3x128x128xbf16, #tpu.memory_space<vmem>>, vector<1x1x128x128xbf16>
      %7 = vector.shape_cast %6 : vector<1x1x128x128xbf16> to vector<128x128xbf16>
      %cst_8 = arith.constant dense<0.000000e+00> : vector<32x128xf32>
      %8 = tpu.matmul %5, %7, %cst_8 {dimension_numbers = #tpu.dot_dimension_numbers<[1], [0], [0], [1], [0, 0, 1, 1], [], []>} : vector<32x128xbf16>, vector<128x128xbf16>, vector<32x128xf32> -> vector<32x128xf32>
      %9 = arith.addf %1, %8 : vector<32x128xf32>
      %c0_i32_9 = arith.constant 0 : i32
      %10 = arith.addi %arg5, %c0_i32_9 : i32
      %c0_10 = arith.constant 0 : index
      %11 = arith.index_cast %10 : i32 to index
      %c1 = arith.constant 1 : index
      %c0_11 = arith.constant 0 : index
      %12 = vector.load %arg1[%c0_10, %11, %c1, %c0_11] : memref<1x34x34x128xbf16, #tpu.memory_space<vmem>>, vector<1x1x32x128xbf16>
      %13 = vector.shape_cast %12 : vector<1x1x32x128xbf16> to vector<32x128xbf16>
      %c0_12 = arith.constant 0 : index
      %c1_13 = arith.constant 1 : index
      %c0_14 = arith.constant 0 : index
      %c0_15 = arith.constant 0 : index
      %14 = vector.load %arg2[%c0_12, %c1_13, %c0_14, %c0_15] : memref<3x3x128x128xbf16, #tpu.memory_space<vmem>>, vector<1x1x128x128xbf16>
      %15 = vector.shape_cast %14 : vector<1x1x128x128xbf16> to vector<128x128xbf16>
      %cst_16 = arith.constant dense<0.000000e+00> : vector<32x128xf32>
      %16 = tpu.matmul %13, %15, %cst_16 {dimension_numbers = #tpu.dot_dimension_numbers<[1], [0], [0], [1], [0, 0, 1, 1], [], []>} : vector<32x128xbf16>, vector<128x128xbf16>, vector<32x128xf32> -> vector<32x128xf32>
      %17 = arith.addf %9, %16 : vector<32x128xf32>
      %c0_i32_17 = arith.constant 0 : i32
      %18 = arith.addi %arg5, %c0_i32_17 : i32
      %c0_18 = arith.constant 0 : index
      %19 = arith.index_cast %18 : i32 to index
      %c2 = arith.constant 2 : index
      %c0_19 = arith.constant 0 : index
      %20 = vector.load %arg1[%c0_18, %19, %c2, %c0_19] : memref<1x34x34x128xbf16, #tpu.memory_space<vmem>>, vector<1x1x32x128xbf16>
      %21 = vector.shape_cast %20 : vector<1x1x32x128xbf16> to vector<32x128xbf16>
      %c0_20 = arith.constant 0 : index
      %c2_21 = arith.constant 2 : index
      %c0_22 = arith.constant 0 : index
      %c0_23 = arith.constant 0 : index
      %22 = vector.load %arg2[%c0_20, %c2_21, %c0_22, %c0_23] : memref<3x3x128x128xbf16, #tpu.memory_space<vmem>>, vector<1x1x128x128xbf16>
      %23 = vector.shape_cast %22 : vector<1x1x128x128xbf16> to vector<128x128xbf16>
      %cst_24 = arith.constant dense<0.000000e+00> : vector<32x128xf32>
      %24 = tpu.matmul %21, %23, %cst_24 {dimension_numbers = #tpu.dot_dimension_numbers<[1], [0], [0], [1], [0, 0, 1, 1], [], []>} : vector<32x128xbf16>, vector<128x128xbf16>, vector<32x128xf32> -> vector<32x128xf32>
      %25 = arith.addf %17, %24 : vector<32x128xf32>
      %c1_i32_25 = arith.constant 1 : i32
      %26 = arith.addi %arg5, %c1_i32_25 : i32
      %c0_26 = arith.constant 0 : index
      %27 = arith.index_cast %26 : i32 to index
      %c0_27 = arith.constant 0 : index
      %c0_28 = arith.constant 0 : index
      %28 = vector.load %arg1[%c0_26, %27, %c0_27, %c0_28] : memref<1x34x34x128xbf16, #tpu.memory_space<vmem>>, vector<1x1x32x128xbf16>
      %29 = vector.shape_cast %28 : vector<1x1x32x128xbf16> to vector<32x128xbf16>
      %c1_29 = arith.constant 1 : index
      %c0_30 = arith.constant 0 : index
      %c0_31 = arith.constant 0 : index
      %c0_32 = arith.constant 0 : index
      %30 = vector.load %arg2[%c1_29, %c0_30, %c0_31, %c0_32] : memref<3x3x128x128xbf16, #tpu.memory_space<vmem>>, vector<1x1x128x128xbf16>
      %31 = vector.shape_cast %30 : vector<1x1x128x128xbf16> to vector<128x128xbf16>
      %cst_33 = arith.constant dense<0.000000e+00> : vector<32x128xf32>
      %32 = tpu.matmul %29, %31, %cst_33 {dimension_numbers = #tpu.dot_dimension_numbers<[1], [0], [0], [1], [0, 0, 1, 1], [], []>} : vector<32x128xbf16>, vector<128x128xbf16>, vector<32x128xf32> -> vector<32x128xf32>
      %33 = arith.addf %25, %32 : vector<32x128xf32>
      %c1_i32_34 = arith.constant 1 : i32
      %34 = arith.addi %arg5, %c1_i32_34 : i32
      %c0_35 = arith.constant 0 : index
      %35 = arith.index_cast %34 : i32 to index
      %c1_36 = arith.constant 1 : index
      %c0_37 = arith.constant 0 : index
      %36 = vector.load %arg1[%c0_35, %35, %c1_36, %c0_37] : memref<1x34x34x128xbf16, #tpu.memory_space<vmem>>, vector<1x1x32x128xbf16>
      %37 = vector.shape_cast %36 : vector<1x1x32x128xbf16> to vector<32x128xbf16>
      %c1_38 = arith.constant 1 : index
      %c1_39 = arith.constant 1 : index
      %c0_40 = arith.constant 0 : index
      %c0_41 = arith.constant 0 : index
      %38 = vector.load %arg2[%c1_38, %c1_39, %c0_40, %c0_41] : memref<3x3x128x128xbf16, #tpu.memory_space<vmem>>, vector<1x1x128x128xbf16>
      %39 = vector.shape_cast %38 : vector<1x1x128x128xbf16> to vector<128x128xbf16>
      %cst_42 = arith.constant dense<0.000000e+00> : vector<32x128xf32>
      %40 = tpu.matmul %37, %39, %cst_42 {dimension_numbers = #tpu.dot_dimension_numbers<[1], [0], [0], [1], [0, 0, 1, 1], [], []>} : vector<32x128xbf16>, vector<128x128xbf16>, vector<32x128xf32> -> vector<32x128xf32>
      %41 = arith.addf %33, %40 : vector<32x128xf32>
      %c1_i32_43 = arith.constant 1 : i32
      %42 = arith.addi %arg5, %c1_i32_43 : i32
      %c0_44 = arith.constant 0 : index
      %43 = arith.index_cast %42 : i32 to index
      %c2_45 = arith.constant 2 : index
      %c0_46 = arith.constant 0 : index
      %44 = vector.load %arg1[%c0_44, %43, %c2_45, %c0_46] : memref<1x34x34x128xbf16, #tpu.memory_space<vmem>>, vector<1x1x32x128xbf16>
      %45 = vector.shape_cast %44 : vector<1x1x32x128xbf16> to vector<32x128xbf16>
      %c1_47 = arith.constant 1 : index
      %c2_48 = arith.constant 2 : index
      %c0_49 = arith.constant 0 : index
      %c0_50 = arith.constant 0 : index
      %46 = vector.load %arg2[%c1_47, %c2_48, %c0_49, %c0_50] : memref<3x3x128x128xbf16, #tpu.memory_space<vmem>>, vector<1x1x128x128xbf16>
      %47 = vector.shape_cast %46 : vector<1x1x128x128xbf16> to vector<128x128xbf16>
      %cst_51 = arith.constant dense<0.000000e+00> : vector<32x128xf32>
      %48 = tpu.matmul %45, %47, %cst_51 {dimension_numbers = #tpu.dot_dimension_numbers<[1], [0], [0], [1], [0, 0, 1, 1], [], []>} : vector<32x128xbf16>, vector<128x128xbf16>, vector<32x128xf32> -> vector<32x128xf32>
      %49 = arith.addf %41, %48 : vector<32x128xf32>
      %c2_i32 = arith.constant 2 : i32
      %50 = arith.addi %arg5, %c2_i32 : i32
      %c0_52 = arith.constant 0 : index
      %51 = arith.index_cast %50 : i32 to index
      %c0_53 = arith.constant 0 : index
      %c0_54 = arith.constant 0 : index
      %52 = vector.load %arg1[%c0_52, %51, %c0_53, %c0_54] : memref<1x34x34x128xbf16, #tpu.memory_space<vmem>>, vector<1x1x32x128xbf16>
      %53 = vector.shape_cast %52 : vector<1x1x32x128xbf16> to vector<32x128xbf16>
      %c2_55 = arith.constant 2 : index
      %c0_56 = arith.constant 0 : index
      %c0_57 = arith.constant 0 : index
      %c0_58 = arith.constant 0 : index
      %54 = vector.load %arg2[%c2_55, %c0_56, %c0_57, %c0_58] : memref<3x3x128x128xbf16, #tpu.memory_space<vmem>>, vector<1x1x128x128xbf16>
      %55 = vector.shape_cast %54 : vector<1x1x128x128xbf16> to vector<128x128xbf16>
      %cst_59 = arith.constant dense<0.000000e+00> : vector<32x128xf32>
      %56 = tpu.matmul %53, %55, %cst_59 {dimension_numbers = #tpu.dot_dimension_numbers<[1], [0], [0], [1], [0, 0, 1, 1], [], []>} : vector<32x128xbf16>, vector<128x128xbf16>, vector<32x128xf32> -> vector<32x128xf32>
      %57 = arith.addf %49, %56 : vector<32x128xf32>
      %c2_i32_60 = arith.constant 2 : i32
      %58 = arith.addi %arg5, %c2_i32_60 : i32
      %c0_61 = arith.constant 0 : index
      %59 = arith.index_cast %58 : i32 to index
      %c1_62 = arith.constant 1 : index
      %c0_63 = arith.constant 0 : index
      %60 = vector.load %arg1[%c0_61, %59, %c1_62, %c0_63] : memref<1x34x34x128xbf16, #tpu.memory_space<vmem>>, vector<1x1x32x128xbf16>
      %61 = vector.shape_cast %60 : vector<1x1x32x128xbf16> to vector<32x128xbf16>
      %c2_64 = arith.constant 2 : index
      %c1_65 = arith.constant 1 : index
      %c0_66 = arith.constant 0 : index
      %c0_67 = arith.constant 0 : index
      %62 = vector.load %arg2[%c2_64, %c1_65, %c0_66, %c0_67] : memref<3x3x128x128xbf16, #tpu.memory_space<vmem>>, vector<1x1x128x128xbf16>
      %63 = vector.shape_cast %62 : vector<1x1x128x128xbf16> to vector<128x128xbf16>
      %cst_68 = arith.constant dense<0.000000e+00> : vector<32x128xf32>
      %64 = tpu.matmul %61, %63, %cst_68 {dimension_numbers = #tpu.dot_dimension_numbers<[1], [0], [0], [1], [0, 0, 1, 1], [], []>} : vector<32x128xbf16>, vector<128x128xbf16>, vector<32x128xf32> -> vector<32x128xf32>
      %65 = arith.addf %57, %64 : vector<32x128xf32>
      %c2_i32_69 = arith.constant 2 : i32
      %66 = arith.addi %arg5, %c2_i32_69 : i32
      %c0_70 = arith.constant 0 : index
      %67 = arith.index_cast %66 : i32 to index
      %c2_71 = arith.constant 2 : index
      %c0_72 = arith.constant 0 : index
      %68 = vector.load %arg1[%c0_70, %67, %c2_71, %c0_72] : memref<1x34x34x128xbf16, #tpu.memory_space<vmem>>, vector<1x1x32x128xbf16>
      %69 = vector.shape_cast %68 : vector<1x1x32x128xbf16> to vector<32x128xbf16>
      %c2_73 = arith.constant 2 : index
      %c2_74 = arith.constant 2 : index
      %c0_75 = arith.constant 0 : index
      %c0_76 = arith.constant 0 : index
      %70 = vector.load %arg2[%c2_73, %c2_74, %c0_75, %c0_76] : memref<3x3x128x128xbf16, #tpu.memory_space<vmem>>, vector<1x1x128x128xbf16>
      %71 = vector.shape_cast %70 : vector<1x1x128x128xbf16> to vector<128x128xbf16>
      %cst_77 = arith.constant dense<0.000000e+00> : vector<32x128xf32>
      %72 = tpu.matmul %69, %71, %cst_77 {dimension_numbers = #tpu.dot_dimension_numbers<[1], [0], [0], [1], [0, 0, 1, 1], [], []>} : vector<32x128xbf16>, vector<128x128xbf16>, vector<32x128xf32> -> vector<32x128xf32>
      %73 = arith.addf %65, %72 : vector<32x128xf32>
      %c0_78 = arith.constant 0 : index
      %c0_79 = arith.constant 0 : index
      %74 = vector.load %arg3[%c0_78, %c0_79] : memref<1x128xf32, #tpu.memory_space<vmem>>, vector<1x128xf32>
      %75 = vector.broadcast %74 : vector<1x128xf32> to vector<32x128xf32>
      %76 = arith.addf %73, %75 : vector<32x128xf32>
      %cst_80 = arith.constant 0.000000e+00 : f32
      %77 = vector.broadcast %cst_80 : f32 to vector<32x128xf32>
      %78 = arith.maximumf %76, %77 : vector<32x128xf32>
      %79 = arith.truncf %78 : vector<32x128xf32> to vector<32x128xbf16>
      %c0_81 = arith.constant 0 : index
      %80 = arith.index_cast %arg5 : i32 to index
      %c0_82 = arith.constant 0 : index
      %c0_83 = arith.constant 0 : index
      %81 = vector.load %arg4[%c0_81, %80, %c0_82, %c0_83] : memref<1x32x32x128xbf16, #tpu.memory_space<vmem>>, vector<1x1x32x128xbf16>
      %82 = vector.shape_cast %81 : vector<1x1x32x128xbf16> to vector<32x128xbf16>
      %83 = vector.shape_cast %79 : vector<32x128xbf16> to vector<1x1x32x128xbf16>
      tpu.vector_store %arg4[%c0_81, %80, %c0_82, %c0_83], %83 {strides = array<i32>} : memref<1x32x32x128xbf16, #tpu.memory_space<vmem>>, vector<1x1x32x128xbf16>,
    }
    %c32_i32_0 = arith.constant 32 : i32
    return
  }
  func.func @transform_0(%arg0: i32) -> (i32, i32, i32, i32) {
    %c0_i32 = arith.constant 0 : i32
    %c0_i32_0 = arith.constant 0 : i32
    %c0_i32_1 = arith.constant 0 : i32
    %c0_i32_2 = arith.constant 0 : i32
    return %arg0, %c0_i32, %c0_i32_0, %c0_i32_1 : i32, i32, i32, i32
  }
  func.func @transform_1(%arg0: i32) -> (i32, i32, i32, i32) {
    %c0_i32 = arith.constant 0 : i32
    %c0_i32_0 = arith.constant 0 : i32
    %c0_i32_1 = arith.constant 0 : i32
    %c0_i32_2 = arith.constant 0 : i32
    %c0_i32_3 = arith.constant 0 : i32
    return %c0_i32, %c0_i32_0, %c0_i32_1, %c0_i32_2 : i32, i32, i32, i32
  }
  func.func @transform_2(%arg0: i32) -> (i32, i32) {
    %c0_i32 = arith.constant 0 : i32
    %c0_i32_0 = arith.constant 0 : i32
    %c0_i32_1 = arith.constant 0 : i32
    return %c0_i32, %c0_i32_0 : i32, i32
  }
  func.func @transform_3(%arg0: i32) -> (i32, i32, i32, i32) {
    %c0_i32 = arith.constant 0 : i32
    %c0_i32_0 = arith.constant 0 : i32
    %c0_i32_1 = arith.constant 0 : i32
    %c0_i32_2 = arith.constant 0 : i32
    return %arg0, %c0_i32, %c0_i32_0, %c0_i32_1 : i32, i32, i32, i32
  }
}

module attributes {stable_mosaic.version = 11 : i64} {
  func.func @_maxpool_kernel(%arg0: i32, %arg1: i32, %arg2: memref<1x32x16x256xbf16, #tpu.memory_space<vmem>>, %arg3: memref<1x16x16x128xbf16, #tpu.memory_space<vmem>>) attributes {dimension_semantics = [#tpu.dimension_semantics<parallel>, #tpu.dimension_semantics<parallel>], iteration_bounds = array<i64: 2, 1>, scalar_prefetch = 0 : i64, scratch_operands = 0 : i64, tpu.core_type = #tpu.core_type<tc>, window_params = [{transform_indices = @transform_0, window_bounds = array<i64: 1, 32, 16, 256>}, {transform_indices = @transform_1, window_bounds = array<i64: 1, 16, 16, 128>}]} {
    %c0 = arith.constant 0 : index
    %c0_0 = arith.constant 0 : index
    %c0_1 = arith.constant 0 : index
    %c0_2 = arith.constant 0 : index
    %0 = vector.load %arg2[%c0, %c0_0, %c0_1, %c0_2] : memref<1x32x16x256xbf16, #tpu.memory_space<vmem>>, vector<1x32x16x256xbf16>
    %1 = vector.shape_cast %0 : vector<1x32x16x256xbf16> to vector<32x16x256xbf16>
    %2 = vector.extract_strided_slice %1 {offsets = [0, 0, 0], sizes = [32, 16, 128], strides = [1, 1, 1]} : vector<32x16x256xbf16> to vector<32x16x128xbf16>
    %3 = vector.extract_strided_slice %1 {offsets = [0, 0, 128], sizes = [32, 16, 128], strides = [1, 1, 1]} : vector<32x16x256xbf16> to vector<32x16x128xbf16>
    %4 = arith.maximumf %2, %3 : vector<32x16x128xbf16>
    %5 = vector.shape_cast %4 : vector<32x16x128xbf16> to vector<16x2x16x128xbf16>
    %6 = vector.extract_strided_slice %5 {offsets = [0, 0, 0, 0], sizes = [16, 1, 16, 128], strides = [1, 1, 1, 1]} : vector<16x2x16x128xbf16> to vector<16x1x16x128xbf16>
    %7 = vector.shape_cast %6 : vector<16x1x16x128xbf16> to vector<16x16x128xbf16>
    %8 = vector.extract_strided_slice %5 {offsets = [0, 1, 0, 0], sizes = [16, 1, 16, 128], strides = [1, 1, 1, 1]} : vector<16x2x16x128xbf16> to vector<16x1x16x128xbf16>
    %9 = vector.shape_cast %8 : vector<16x1x16x128xbf16> to vector<16x16x128xbf16>
    %10 = arith.maximumf %7, %9 : vector<16x16x128xbf16>
    %c0_3 = arith.constant 0 : index
    %c0_4 = arith.constant 0 : index
    %c0_5 = arith.constant 0 : index
    %c0_6 = arith.constant 0 : index
    %11 = vector.load %arg3[%c0_3, %c0_4, %c0_5, %c0_6] : memref<1x16x16x128xbf16, #tpu.memory_space<vmem>>, vector<1x16x16x128xbf16>
    %12 = vector.shape_cast %11 : vector<1x16x16x128xbf16> to vector<16x16x128xbf16>
    %13 = vector.shape_cast %10 : vector<16x16x128xbf16> to vector<1x16x16x128xbf16>
    tpu.vector_store %arg3[%c0_3, %c0_4, %c0_5, %c0_6], %13 {strides = array<i32>} : memref<1x16x16x128xbf16, #tpu.memory_space<vmem>>, vector<1x16x16x128xbf16>,
    return
  }
  func.func @transform_0(%arg0: i32, %arg1: i32) -> (i32, i32, i32, i32) {
    %c0_i32 = arith.constant 0 : i32
    %c0_i32_0 = arith.constant 0 : i32
    %c0_i32_1 = arith.constant 0 : i32
    return %arg0, %arg1, %c0_i32, %c0_i32_0 : i32, i32, i32, i32
  }
  func.func @transform_1(%arg0: i32, %arg1: i32) -> (i32, i32, i32, i32) {
    %c0_i32 = arith.constant 0 : i32
    %c0_i32_0 = arith.constant 0 : i32
    %c0_i32_1 = arith.constant 0 : i32
    return %arg0, %arg1, %c0_i32, %c0_i32_0 : i32, i32, i32, i32
  }
}

module attributes {stable_mosaic.version = 11 : i64} {
  func.func @_conv3x3_kernel(%arg0: i32, %arg1: memref<1x18x18x128xbf16, #tpu.memory_space<vmem>>, %arg2: memref<3x3x128x128xbf16, #tpu.memory_space<vmem>>, %arg3: memref<1x128xf32, #tpu.memory_space<vmem>>, %arg4: memref<1x16x16x128xbf16, #tpu.memory_space<vmem>>) attributes {dimension_semantics = [#tpu.dimension_semantics<parallel>], iteration_bounds = array<i64: 2>, scalar_prefetch = 0 : i64, scratch_operands = 0 : i64, tpu.core_type = #tpu.core_type<tc>, window_params = [{transform_indices = @transform_0, window_bounds = array<i64: 1, 18, 18, 128>}, {pipeline_mode = #tpu.pipeline_mode<synchronous>, transform_indices = @transform_1, window_bounds = array<i64: 3, 3, 128, 128>}, {pipeline_mode = #tpu.pipeline_mode<synchronous>, transform_indices = @transform_2, window_bounds = array<i64: 1, 128>}, {transform_indices = @transform_3, window_bounds = array<i64: 1, 16, 16, 128>}]} {
    %c0_i32 = arith.constant 0 : i32
    %c16_i32 = arith.constant 16 : i32
    %0 = arith.addi %c0_i32, %c16_i32 : i32
    %c1_i32 = arith.constant 1 : i32
    scf.for %arg5 = %c0_i32 to %0 step %c1_i32  : i32 {
      %cst = arith.constant 0.000000e+00 : f32
      %1 = vector.broadcast %cst : f32 to vector<16x128xf32>
      %c0_i32_1 = arith.constant 0 : i32
      %2 = arith.addi %arg5, %c0_i32_1 : i32
      %c0 = arith.constant 0 : index
      %3 = arith.index_cast %2 : i32 to index
      %c0_2 = arith.constant 0 : index
      %c0_3 = arith.constant 0 : index
      %4 = vector.load %arg1[%c0, %3, %c0_2, %c0_3] : memref<1x18x18x128xbf16, #tpu.memory_space<vmem>>, vector<1x1x16x128xbf16>
      %5 = vector.shape_cast %4 : vector<1x1x16x128xbf16> to vector<16x128xbf16>
      %c0_4 = arith.constant 0 : index
      %c0_5 = arith.constant 0 : index
      %c0_6 = arith.constant 0 : index
      %c0_7 = arith.constant 0 : index
      %6 = vector.load %arg2[%c0_4, %c0_5, %c0_6, %c0_7] : memref<3x3x128x128xbf16, #tpu.memory_space<vmem>>, vector<1x1x128x128xbf16>
      %7 = vector.shape_cast %6 : vector<1x1x128x128xbf16> to vector<128x128xbf16>
      %cst_8 = arith.constant dense<0.000000e+00> : vector<16x128xf32>
      %8 = tpu.matmul %5, %7, %cst_8 {dimension_numbers = #tpu.dot_dimension_numbers<[1], [0], [0], [1], [0, 0, 1, 1], [], []>} : vector<16x128xbf16>, vector<128x128xbf16>, vector<16x128xf32> -> vector<16x128xf32>
      %9 = arith.addf %1, %8 : vector<16x128xf32>
      %c0_i32_9 = arith.constant 0 : i32
      %10 = arith.addi %arg5, %c0_i32_9 : i32
      %c0_10 = arith.constant 0 : index
      %11 = arith.index_cast %10 : i32 to index
      %c1 = arith.constant 1 : index
      %c0_11 = arith.constant 0 : index
      %12 = vector.load %arg1[%c0_10, %11, %c1, %c0_11] : memref<1x18x18x128xbf16, #tpu.memory_space<vmem>>, vector<1x1x16x128xbf16>
      %13 = vector.shape_cast %12 : vector<1x1x16x128xbf16> to vector<16x128xbf16>
      %c0_12 = arith.constant 0 : index
      %c1_13 = arith.constant 1 : index
      %c0_14 = arith.constant 0 : index
      %c0_15 = arith.constant 0 : index
      %14 = vector.load %arg2[%c0_12, %c1_13, %c0_14, %c0_15] : memref<3x3x128x128xbf16, #tpu.memory_space<vmem>>, vector<1x1x128x128xbf16>
      %15 = vector.shape_cast %14 : vector<1x1x128x128xbf16> to vector<128x128xbf16>
      %cst_16 = arith.constant dense<0.000000e+00> : vector<16x128xf32>
      %16 = tpu.matmul %13, %15, %cst_16 {dimension_numbers = #tpu.dot_dimension_numbers<[1], [0], [0], [1], [0, 0, 1, 1], [], []>} : vector<16x128xbf16>, vector<128x128xbf16>, vector<16x128xf32> -> vector<16x128xf32>
      %17 = arith.addf %9, %16 : vector<16x128xf32>
      %c0_i32_17 = arith.constant 0 : i32
      %18 = arith.addi %arg5, %c0_i32_17 : i32
      %c0_18 = arith.constant 0 : index
      %19 = arith.index_cast %18 : i32 to index
      %c2 = arith.constant 2 : index
      %c0_19 = arith.constant 0 : index
      %20 = vector.load %arg1[%c0_18, %19, %c2, %c0_19] : memref<1x18x18x128xbf16, #tpu.memory_space<vmem>>, vector<1x1x16x128xbf16>
      %21 = vector.shape_cast %20 : vector<1x1x16x128xbf16> to vector<16x128xbf16>
      %c0_20 = arith.constant 0 : index
      %c2_21 = arith.constant 2 : index
      %c0_22 = arith.constant 0 : index
      %c0_23 = arith.constant 0 : index
      %22 = vector.load %arg2[%c0_20, %c2_21, %c0_22, %c0_23] : memref<3x3x128x128xbf16, #tpu.memory_space<vmem>>, vector<1x1x128x128xbf16>
      %23 = vector.shape_cast %22 : vector<1x1x128x128xbf16> to vector<128x128xbf16>
      %cst_24 = arith.constant dense<0.000000e+00> : vector<16x128xf32>
      %24 = tpu.matmul %21, %23, %cst_24 {dimension_numbers = #tpu.dot_dimension_numbers<[1], [0], [0], [1], [0, 0, 1, 1], [], []>} : vector<16x128xbf16>, vector<128x128xbf16>, vector<16x128xf32> -> vector<16x128xf32>
      %25 = arith.addf %17, %24 : vector<16x128xf32>
      %c1_i32_25 = arith.constant 1 : i32
      %26 = arith.addi %arg5, %c1_i32_25 : i32
      %c0_26 = arith.constant 0 : index
      %27 = arith.index_cast %26 : i32 to index
      %c0_27 = arith.constant 0 : index
      %c0_28 = arith.constant 0 : index
      %28 = vector.load %arg1[%c0_26, %27, %c0_27, %c0_28] : memref<1x18x18x128xbf16, #tpu.memory_space<vmem>>, vector<1x1x16x128xbf16>
      %29 = vector.shape_cast %28 : vector<1x1x16x128xbf16> to vector<16x128xbf16>
      %c1_29 = arith.constant 1 : index
      %c0_30 = arith.constant 0 : index
      %c0_31 = arith.constant 0 : index
      %c0_32 = arith.constant 0 : index
      %30 = vector.load %arg2[%c1_29, %c0_30, %c0_31, %c0_32] : memref<3x3x128x128xbf16, #tpu.memory_space<vmem>>, vector<1x1x128x128xbf16>
      %31 = vector.shape_cast %30 : vector<1x1x128x128xbf16> to vector<128x128xbf16>
      %cst_33 = arith.constant dense<0.000000e+00> : vector<16x128xf32>
      %32 = tpu.matmul %29, %31, %cst_33 {dimension_numbers = #tpu.dot_dimension_numbers<[1], [0], [0], [1], [0, 0, 1, 1], [], []>} : vector<16x128xbf16>, vector<128x128xbf16>, vector<16x128xf32> -> vector<16x128xf32>
      %33 = arith.addf %25, %32 : vector<16x128xf32>
      %c1_i32_34 = arith.constant 1 : i32
      %34 = arith.addi %arg5, %c1_i32_34 : i32
      %c0_35 = arith.constant 0 : index
      %35 = arith.index_cast %34 : i32 to index
      %c1_36 = arith.constant 1 : index
      %c0_37 = arith.constant 0 : index
      %36 = vector.load %arg1[%c0_35, %35, %c1_36, %c0_37] : memref<1x18x18x128xbf16, #tpu.memory_space<vmem>>, vector<1x1x16x128xbf16>
      %37 = vector.shape_cast %36 : vector<1x1x16x128xbf16> to vector<16x128xbf16>
      %c1_38 = arith.constant 1 : index
      %c1_39 = arith.constant 1 : index
      %c0_40 = arith.constant 0 : index
      %c0_41 = arith.constant 0 : index
      %38 = vector.load %arg2[%c1_38, %c1_39, %c0_40, %c0_41] : memref<3x3x128x128xbf16, #tpu.memory_space<vmem>>, vector<1x1x128x128xbf16>
      %39 = vector.shape_cast %38 : vector<1x1x128x128xbf16> to vector<128x128xbf16>
      %cst_42 = arith.constant dense<0.000000e+00> : vector<16x128xf32>
      %40 = tpu.matmul %37, %39, %cst_42 {dimension_numbers = #tpu.dot_dimension_numbers<[1], [0], [0], [1], [0, 0, 1, 1], [], []>} : vector<16x128xbf16>, vector<128x128xbf16>, vector<16x128xf32> -> vector<16x128xf32>
      %41 = arith.addf %33, %40 : vector<16x128xf32>
      %c1_i32_43 = arith.constant 1 : i32
      %42 = arith.addi %arg5, %c1_i32_43 : i32
      %c0_44 = arith.constant 0 : index
      %43 = arith.index_cast %42 : i32 to index
      %c2_45 = arith.constant 2 : index
      %c0_46 = arith.constant 0 : index
      %44 = vector.load %arg1[%c0_44, %43, %c2_45, %c0_46] : memref<1x18x18x128xbf16, #tpu.memory_space<vmem>>, vector<1x1x16x128xbf16>
      %45 = vector.shape_cast %44 : vector<1x1x16x128xbf16> to vector<16x128xbf16>
      %c1_47 = arith.constant 1 : index
      %c2_48 = arith.constant 2 : index
      %c0_49 = arith.constant 0 : index
      %c0_50 = arith.constant 0 : index
      %46 = vector.load %arg2[%c1_47, %c2_48, %c0_49, %c0_50] : memref<3x3x128x128xbf16, #tpu.memory_space<vmem>>, vector<1x1x128x128xbf16>
      %47 = vector.shape_cast %46 : vector<1x1x128x128xbf16> to vector<128x128xbf16>
      %cst_51 = arith.constant dense<0.000000e+00> : vector<16x128xf32>
      %48 = tpu.matmul %45, %47, %cst_51 {dimension_numbers = #tpu.dot_dimension_numbers<[1], [0], [0], [1], [0, 0, 1, 1], [], []>} : vector<16x128xbf16>, vector<128x128xbf16>, vector<16x128xf32> -> vector<16x128xf32>
      %49 = arith.addf %41, %48 : vector<16x128xf32>
      %c2_i32 = arith.constant 2 : i32
      %50 = arith.addi %arg5, %c2_i32 : i32
      %c0_52 = arith.constant 0 : index
      %51 = arith.index_cast %50 : i32 to index
      %c0_53 = arith.constant 0 : index
      %c0_54 = arith.constant 0 : index
      %52 = vector.load %arg1[%c0_52, %51, %c0_53, %c0_54] : memref<1x18x18x128xbf16, #tpu.memory_space<vmem>>, vector<1x1x16x128xbf16>
      %53 = vector.shape_cast %52 : vector<1x1x16x128xbf16> to vector<16x128xbf16>
      %c2_55 = arith.constant 2 : index
      %c0_56 = arith.constant 0 : index
      %c0_57 = arith.constant 0 : index
      %c0_58 = arith.constant 0 : index
      %54 = vector.load %arg2[%c2_55, %c0_56, %c0_57, %c0_58] : memref<3x3x128x128xbf16, #tpu.memory_space<vmem>>, vector<1x1x128x128xbf16>
      %55 = vector.shape_cast %54 : vector<1x1x128x128xbf16> to vector<128x128xbf16>
      %cst_59 = arith.constant dense<0.000000e+00> : vector<16x128xf32>
      %56 = tpu.matmul %53, %55, %cst_59 {dimension_numbers = #tpu.dot_dimension_numbers<[1], [0], [0], [1], [0, 0, 1, 1], [], []>} : vector<16x128xbf16>, vector<128x128xbf16>, vector<16x128xf32> -> vector<16x128xf32>
      %57 = arith.addf %49, %56 : vector<16x128xf32>
      %c2_i32_60 = arith.constant 2 : i32
      %58 = arith.addi %arg5, %c2_i32_60 : i32
      %c0_61 = arith.constant 0 : index
      %59 = arith.index_cast %58 : i32 to index
      %c1_62 = arith.constant 1 : index
      %c0_63 = arith.constant 0 : index
      %60 = vector.load %arg1[%c0_61, %59, %c1_62, %c0_63] : memref<1x18x18x128xbf16, #tpu.memory_space<vmem>>, vector<1x1x16x128xbf16>
      %61 = vector.shape_cast %60 : vector<1x1x16x128xbf16> to vector<16x128xbf16>
      %c2_64 = arith.constant 2 : index
      %c1_65 = arith.constant 1 : index
      %c0_66 = arith.constant 0 : index
      %c0_67 = arith.constant 0 : index
      %62 = vector.load %arg2[%c2_64, %c1_65, %c0_66, %c0_67] : memref<3x3x128x128xbf16, #tpu.memory_space<vmem>>, vector<1x1x128x128xbf16>
      %63 = vector.shape_cast %62 : vector<1x1x128x128xbf16> to vector<128x128xbf16>
      %cst_68 = arith.constant dense<0.000000e+00> : vector<16x128xf32>
      %64 = tpu.matmul %61, %63, %cst_68 {dimension_numbers = #tpu.dot_dimension_numbers<[1], [0], [0], [1], [0, 0, 1, 1], [], []>} : vector<16x128xbf16>, vector<128x128xbf16>, vector<16x128xf32> -> vector<16x128xf32>
      %65 = arith.addf %57, %64 : vector<16x128xf32>
      %c2_i32_69 = arith.constant 2 : i32
      %66 = arith.addi %arg5, %c2_i32_69 : i32
      %c0_70 = arith.constant 0 : index
      %67 = arith.index_cast %66 : i32 to index
      %c2_71 = arith.constant 2 : index
      %c0_72 = arith.constant 0 : index
      %68 = vector.load %arg1[%c0_70, %67, %c2_71, %c0_72] : memref<1x18x18x128xbf16, #tpu.memory_space<vmem>>, vector<1x1x16x128xbf16>
      %69 = vector.shape_cast %68 : vector<1x1x16x128xbf16> to vector<16x128xbf16>
      %c2_73 = arith.constant 2 : index
      %c2_74 = arith.constant 2 : index
      %c0_75 = arith.constant 0 : index
      %c0_76 = arith.constant 0 : index
      %70 = vector.load %arg2[%c2_73, %c2_74, %c0_75, %c0_76] : memref<3x3x128x128xbf16, #tpu.memory_space<vmem>>, vector<1x1x128x128xbf16>
      %71 = vector.shape_cast %70 : vector<1x1x128x128xbf16> to vector<128x128xbf16>
      %cst_77 = arith.constant dense<0.000000e+00> : vector<16x128xf32>
      %72 = tpu.matmul %69, %71, %cst_77 {dimension_numbers = #tpu.dot_dimension_numbers<[1], [0], [0], [1], [0, 0, 1, 1], [], []>} : vector<16x128xbf16>, vector<128x128xbf16>, vector<16x128xf32> -> vector<16x128xf32>
      %73 = arith.addf %65, %72 : vector<16x128xf32>
      %c0_78 = arith.constant 0 : index
      %c0_79 = arith.constant 0 : index
      %74 = vector.load %arg3[%c0_78, %c0_79] : memref<1x128xf32, #tpu.memory_space<vmem>>, vector<1x128xf32>
      %75 = vector.broadcast %74 : vector<1x128xf32> to vector<16x128xf32>
      %76 = arith.addf %73, %75 : vector<16x128xf32>
      %cst_80 = arith.constant 0.000000e+00 : f32
      %77 = vector.broadcast %cst_80 : f32 to vector<16x128xf32>
      %78 = arith.maximumf %76, %77 : vector<16x128xf32>
      %79 = arith.truncf %78 : vector<16x128xf32> to vector<16x128xbf16>
      %c0_81 = arith.constant 0 : index
      %80 = arith.index_cast %arg5 : i32 to index
      %c0_82 = arith.constant 0 : index
      %c0_83 = arith.constant 0 : index
      %81 = vector.load %arg4[%c0_81, %80, %c0_82, %c0_83] : memref<1x16x16x128xbf16, #tpu.memory_space<vmem>>, vector<1x1x16x128xbf16>
      %82 = vector.shape_cast %81 : vector<1x1x16x128xbf16> to vector<16x128xbf16>
      %83 = vector.shape_cast %79 : vector<16x128xbf16> to vector<1x1x16x128xbf16>
      tpu.vector_store %arg4[%c0_81, %80, %c0_82, %c0_83], %83 {strides = array<i32>} : memref<1x16x16x128xbf16, #tpu.memory_space<vmem>>, vector<1x1x16x128xbf16>,
    }
    %c16_i32_0 = arith.constant 16 : i32
    return
  }
  func.func @transform_0(%arg0: i32) -> (i32, i32, i32, i32) {
    %c0_i32 = arith.constant 0 : i32
    %c0_i32_0 = arith.constant 0 : i32
    %c0_i32_1 = arith.constant 0 : i32
    %c0_i32_2 = arith.constant 0 : i32
    return %arg0, %c0_i32, %c0_i32_0, %c0_i32_1 : i32, i32, i32, i32
  }
  func.func @transform_1(%arg0: i32) -> (i32, i32, i32, i32) {
    %c0_i32 = arith.constant 0 : i32
    %c0_i32_0 = arith.constant 0 : i32
    %c0_i32_1 = arith.constant 0 : i32
    %c0_i32_2 = arith.constant 0 : i32
    %c0_i32_3 = arith.constant 0 : i32
    return %c0_i32, %c0_i32_0, %c0_i32_1, %c0_i32_2 : i32, i32, i32, i32
  }
  func.func @transform_2(%arg0: i32) -> (i32, i32) {
    %c0_i32 = arith.constant 0 : i32
    %c0_i32_0 = arith.constant 0 : i32
    %c0_i32_1 = arith.constant 0 : i32
    return %c0_i32, %c0_i32_0 : i32, i32
  }
  func.func @transform_3(%arg0: i32) -> (i32, i32, i32, i32) {
    %c0_i32 = arith.constant 0 : i32
    %c0_i32_0 = arith.constant 0 : i32
    %c0_i32_1 = arith.constant 0 : i32
    %c0_i32_2 = arith.constant 0 : i32
    return %arg0, %c0_i32, %c0_i32_0, %c0_i32_1 : i32, i32, i32, i32
  }
}

module attributes {stable_mosaic.version = 11 : i64} {
  func.func @_maxpool_kernel(%arg0: i32, %arg1: i32, %arg2: memref<1x16x8x256xbf16, #tpu.memory_space<vmem>>, %arg3: memref<1x8x8x128xbf16, #tpu.memory_space<vmem>>) attributes {dimension_semantics = [#tpu.dimension_semantics<parallel>, #tpu.dimension_semantics<parallel>], iteration_bounds = array<i64: 2, 1>, scalar_prefetch = 0 : i64, scratch_operands = 0 : i64, tpu.core_type = #tpu.core_type<tc>, window_params = [{transform_indices = @transform_0, window_bounds = array<i64: 1, 16, 8, 256>}, {transform_indices = @transform_1, window_bounds = array<i64: 1, 8, 8, 128>}]} {
    %c0 = arith.constant 0 : index
    %c0_0 = arith.constant 0 : index
    %c0_1 = arith.constant 0 : index
    %c0_2 = arith.constant 0 : index
    %0 = vector.load %arg2[%c0, %c0_0, %c0_1, %c0_2] : memref<1x16x8x256xbf16, #tpu.memory_space<vmem>>, vector<1x16x8x256xbf16>
    %1 = vector.shape_cast %0 : vector<1x16x8x256xbf16> to vector<16x8x256xbf16>
    %2 = vector.extract_strided_slice %1 {offsets = [0, 0, 0], sizes = [16, 8, 128], strides = [1, 1, 1]} : vector<16x8x256xbf16> to vector<16x8x128xbf16>
    %3 = vector.extract_strided_slice %1 {offsets = [0, 0, 128], sizes = [16, 8, 128], strides = [1, 1, 1]} : vector<16x8x256xbf16> to vector<16x8x128xbf16>
    %4 = arith.maximumf %2, %3 : vector<16x8x128xbf16>
    %5 = vector.shape_cast %4 : vector<16x8x128xbf16> to vector<8x2x8x128xbf16>
    %6 = vector.extract_strided_slice %5 {offsets = [0, 0, 0, 0], sizes = [8, 1, 8, 128], strides = [1, 1, 1, 1]} : vector<8x2x8x128xbf16> to vector<8x1x8x128xbf16>
    %7 = vector.shape_cast %6 : vector<8x1x8x128xbf16> to vector<8x8x128xbf16>
    %8 = vector.extract_strided_slice %5 {offsets = [0, 1, 0, 0], sizes = [8, 1, 8, 128], strides = [1, 1, 1, 1]} : vector<8x2x8x128xbf16> to vector<8x1x8x128xbf16>
    %9 = vector.shape_cast %8 : vector<8x1x8x128xbf16> to vector<8x8x128xbf16>
    %10 = arith.maximumf %7, %9 : vector<8x8x128xbf16>
    %c0_3 = arith.constant 0 : index
    %c0_4 = arith.constant 0 : index
    %c0_5 = arith.constant 0 : index
    %c0_6 = arith.constant 0 : index
    %11 = vector.load %arg3[%c0_3, %c0_4, %c0_5, %c0_6] : memref<1x8x8x128xbf16, #tpu.memory_space<vmem>>, vector<1x8x8x128xbf16>
    %12 = vector.shape_cast %11 : vector<1x8x8x128xbf16> to vector<8x8x128xbf16>
    %13 = vector.shape_cast %10 : vector<8x8x128xbf16> to vector<1x8x8x128xbf16>
    tpu.vector_store %arg3[%c0_3, %c0_4, %c0_5, %c0_6], %13 {strides = array<i32>} : memref<1x8x8x128xbf16, #tpu.memory_space<vmem>>, vector<1x8x8x128xbf16>,
    return
  }
  func.func @transform_0(%arg0: i32, %arg1: i32) -> (i32, i32, i32, i32) {
    %c0_i32 = arith.constant 0 : i32
    %c0_i32_0 = arith.constant 0 : i32
    %c0_i32_1 = arith.constant 0 : i32
    return %arg0, %arg1, %c0_i32, %c0_i32_0 : i32, i32, i32, i32
  }
  func.func @transform_1(%arg0: i32, %arg1: i32) -> (i32, i32, i32, i32) {
    %c0_i32 = arith.constant 0 : i32
    %c0_i32_0 = arith.constant 0 : i32
    %c0_i32_1 = arith.constant 0 : i32
    return %arg0, %arg1, %c0_i32, %c0_i32_0 : i32, i32, i32, i32
  }
}

module attributes {stable_mosaic.version = 11 : i64} {
  func.func @_conv3x3_kernel(%arg0: i32, %arg1: memref<1x10x10x128xbf16, #tpu.memory_space<vmem>>, %arg2: memref<3x3x128x128xbf16, #tpu.memory_space<vmem>>, %arg3: memref<1x128xf32, #tpu.memory_space<vmem>>, %arg4: memref<1x8x8x128xbf16, #tpu.memory_space<vmem>>) attributes {dimension_semantics = [#tpu.dimension_semantics<parallel>], iteration_bounds = array<i64: 2>, scalar_prefetch = 0 : i64, scratch_operands = 0 : i64, tpu.core_type = #tpu.core_type<tc>, window_params = [{transform_indices = @transform_0, window_bounds = array<i64: 1, 10, 10, 128>}, {pipeline_mode = #tpu.pipeline_mode<synchronous>, transform_indices = @transform_1, window_bounds = array<i64: 3, 3, 128, 128>}, {pipeline_mode = #tpu.pipeline_mode<synchronous>, transform_indices = @transform_2, window_bounds = array<i64: 1, 128>}, {transform_indices = @transform_3, window_bounds = array<i64: 1, 8, 8, 128>}]} {
    %c0_i32 = arith.constant 0 : i32
    %c8_i32 = arith.constant 8 : i32
    %0 = arith.addi %c0_i32, %c8_i32 : i32
    %c1_i32 = arith.constant 1 : i32
    scf.for %arg5 = %c0_i32 to %0 step %c1_i32  : i32 {
      %cst = arith.constant 0.000000e+00 : f32
      %1 = vector.broadcast %cst : f32 to vector<8x128xf32>
      %c0_i32_1 = arith.constant 0 : i32
      %2 = arith.addi %arg5, %c0_i32_1 : i32
      %c0 = arith.constant 0 : index
      %3 = arith.index_cast %2 : i32 to index
      %c0_2 = arith.constant 0 : index
      %c0_3 = arith.constant 0 : index
      %4 = vector.load %arg1[%c0, %3, %c0_2, %c0_3] : memref<1x10x10x128xbf16, #tpu.memory_space<vmem>>, vector<1x1x8x128xbf16>
      %5 = vector.shape_cast %4 : vector<1x1x8x128xbf16> to vector<8x128xbf16>
      %c0_4 = arith.constant 0 : index
      %c0_5 = arith.constant 0 : index
      %c0_6 = arith.constant 0 : index
      %c0_7 = arith.constant 0 : index
      %6 = vector.load %arg2[%c0_4, %c0_5, %c0_6, %c0_7] : memref<3x3x128x128xbf16, #tpu.memory_space<vmem>>, vector<1x1x128x128xbf16>
      %7 = vector.shape_cast %6 : vector<1x1x128x128xbf16> to vector<128x128xbf16>
      %cst_8 = arith.constant dense<0.000000e+00> : vector<8x128xf32>
      %8 = tpu.matmul %5, %7, %cst_8 {dimension_numbers = #tpu.dot_dimension_numbers<[1], [0], [0], [1], [0, 0, 1, 1], [], []>} : vector<8x128xbf16>, vector<128x128xbf16>, vector<8x128xf32> -> vector<8x128xf32>
      %9 = arith.addf %1, %8 : vector<8x128xf32>
      %c0_i32_9 = arith.constant 0 : i32
      %10 = arith.addi %arg5, %c0_i32_9 : i32
      %c0_10 = arith.constant 0 : index
      %11 = arith.index_cast %10 : i32 to index
      %c1 = arith.constant 1 : index
      %c0_11 = arith.constant 0 : index
      %12 = vector.load %arg1[%c0_10, %11, %c1, %c0_11] : memref<1x10x10x128xbf16, #tpu.memory_space<vmem>>, vector<1x1x8x128xbf16>
      %13 = vector.shape_cast %12 : vector<1x1x8x128xbf16> to vector<8x128xbf16>
      %c0_12 = arith.constant 0 : index
      %c1_13 = arith.constant 1 : index
      %c0_14 = arith.constant 0 : index
      %c0_15 = arith.constant 0 : index
      %14 = vector.load %arg2[%c0_12, %c1_13, %c0_14, %c0_15] : memref<3x3x128x128xbf16, #tpu.memory_space<vmem>>, vector<1x1x128x128xbf16>
      %15 = vector.shape_cast %14 : vector<1x1x128x128xbf16> to vector<128x128xbf16>
      %cst_16 = arith.constant dense<0.000000e+00> : vector<8x128xf32>
      %16 = tpu.matmul %13, %15, %cst_16 {dimension_numbers = #tpu.dot_dimension_numbers<[1], [0], [0], [1], [0, 0, 1, 1], [], []>} : vector<8x128xbf16>, vector<128x128xbf16>, vector<8x128xf32> -> vector<8x128xf32>
      %17 = arith.addf %9, %16 : vector<8x128xf32>
      %c0_i32_17 = arith.constant 0 : i32
      %18 = arith.addi %arg5, %c0_i32_17 : i32
      %c0_18 = arith.constant 0 : index
      %19 = arith.index_cast %18 : i32 to index
      %c2 = arith.constant 2 : index
      %c0_19 = arith.constant 0 : index
      %20 = vector.load %arg1[%c0_18, %19, %c2, %c0_19] : memref<1x10x10x128xbf16, #tpu.memory_space<vmem>>, vector<1x1x8x128xbf16>
      %21 = vector.shape_cast %20 : vector<1x1x8x128xbf16> to vector<8x128xbf16>
      %c0_20 = arith.constant 0 : index
      %c2_21 = arith.constant 2 : index
      %c0_22 = arith.constant 0 : index
      %c0_23 = arith.constant 0 : index
      %22 = vector.load %arg2[%c0_20, %c2_21, %c0_22, %c0_23] : memref<3x3x128x128xbf16, #tpu.memory_space<vmem>>, vector<1x1x128x128xbf16>
      %23 = vector.shape_cast %22 : vector<1x1x128x128xbf16> to vector<128x128xbf16>
      %cst_24 = arith.constant dense<0.000000e+00> : vector<8x128xf32>
      %24 = tpu.matmul %21, %23, %cst_24 {dimension_numbers = #tpu.dot_dimension_numbers<[1], [0], [0], [1], [0, 0, 1, 1], [], []>} : vector<8x128xbf16>, vector<128x128xbf16>, vector<8x128xf32> -> vector<8x128xf32>
      %25 = arith.addf %17, %24 : vector<8x128xf32>
      %c1_i32_25 = arith.constant 1 : i32
      %26 = arith.addi %arg5, %c1_i32_25 : i32
      %c0_26 = arith.constant 0 : index
      %27 = arith.index_cast %26 : i32 to index
      %c0_27 = arith.constant 0 : index
      %c0_28 = arith.constant 0 : index
      %28 = vector.load %arg1[%c0_26, %27, %c0_27, %c0_28] : memref<1x10x10x128xbf16, #tpu.memory_space<vmem>>, vector<1x1x8x128xbf16>
      %29 = vector.shape_cast %28 : vector<1x1x8x128xbf16> to vector<8x128xbf16>
      %c1_29 = arith.constant 1 : index
      %c0_30 = arith.constant 0 : index
      %c0_31 = arith.constant 0 : index
      %c0_32 = arith.constant 0 : index
      %30 = vector.load %arg2[%c1_29, %c0_30, %c0_31, %c0_32] : memref<3x3x128x128xbf16, #tpu.memory_space<vmem>>, vector<1x1x128x128xbf16>
      %31 = vector.shape_cast %30 : vector<1x1x128x128xbf16> to vector<128x128xbf16>
      %cst_33 = arith.constant dense<0.000000e+00> : vector<8x128xf32>
      %32 = tpu.matmul %29, %31, %cst_33 {dimension_numbers = #tpu.dot_dimension_numbers<[1], [0], [0], [1], [0, 0, 1, 1], [], []>} : vector<8x128xbf16>, vector<128x128xbf16>, vector<8x128xf32> -> vector<8x128xf32>
      %33 = arith.addf %25, %32 : vector<8x128xf32>
      %c1_i32_34 = arith.constant 1 : i32
      %34 = arith.addi %arg5, %c1_i32_34 : i32
      %c0_35 = arith.constant 0 : index
      %35 = arith.index_cast %34 : i32 to index
      %c1_36 = arith.constant 1 : index
      %c0_37 = arith.constant 0 : index
      %36 = vector.load %arg1[%c0_35, %35, %c1_36, %c0_37] : memref<1x10x10x128xbf16, #tpu.memory_space<vmem>>, vector<1x1x8x128xbf16>
      %37 = vector.shape_cast %36 : vector<1x1x8x128xbf16> to vector<8x128xbf16>
      %c1_38 = arith.constant 1 : index
      %c1_39 = arith.constant 1 : index
      %c0_40 = arith.constant 0 : index
      %c0_41 = arith.constant 0 : index
      %38 = vector.load %arg2[%c1_38, %c1_39, %c0_40, %c0_41] : memref<3x3x128x128xbf16, #tpu.memory_space<vmem>>, vector<1x1x128x128xbf16>
      %39 = vector.shape_cast %38 : vector<1x1x128x128xbf16> to vector<128x128xbf16>
      %cst_42 = arith.constant dense<0.000000e+00> : vector<8x128xf32>
      %40 = tpu.matmul %37, %39, %cst_42 {dimension_numbers = #tpu.dot_dimension_numbers<[1], [0], [0], [1], [0, 0, 1, 1], [], []>} : vector<8x128xbf16>, vector<128x128xbf16>, vector<8x128xf32> -> vector<8x128xf32>
      %41 = arith.addf %33, %40 : vector<8x128xf32>
      %c1_i32_43 = arith.constant 1 : i32
      %42 = arith.addi %arg5, %c1_i32_43 : i32
      %c0_44 = arith.constant 0 : index
      %43 = arith.index_cast %42 : i32 to index
      %c2_45 = arith.constant 2 : index
      %c0_46 = arith.constant 0 : index
      %44 = vector.load %arg1[%c0_44, %43, %c2_45, %c0_46] : memref<1x10x10x128xbf16, #tpu.memory_space<vmem>>, vector<1x1x8x128xbf16>
      %45 = vector.shape_cast %44 : vector<1x1x8x128xbf16> to vector<8x128xbf16>
      %c1_47 = arith.constant 1 : index
      %c2_48 = arith.constant 2 : index
      %c0_49 = arith.constant 0 : index
      %c0_50 = arith.constant 0 : index
      %46 = vector.load %arg2[%c1_47, %c2_48, %c0_49, %c0_50] : memref<3x3x128x128xbf16, #tpu.memory_space<vmem>>, vector<1x1x128x128xbf16>
      %47 = vector.shape_cast %46 : vector<1x1x128x128xbf16> to vector<128x128xbf16>
      %cst_51 = arith.constant dense<0.000000e+00> : vector<8x128xf32>
      %48 = tpu.matmul %45, %47, %cst_51 {dimension_numbers = #tpu.dot_dimension_numbers<[1], [0], [0], [1], [0, 0, 1, 1], [], []>} : vector<8x128xbf16>, vector<128x128xbf16>, vector<8x128xf32> -> vector<8x128xf32>
      %49 = arith.addf %41, %48 : vector<8x128xf32>
      %c2_i32 = arith.constant 2 : i32
      %50 = arith.addi %arg5, %c2_i32 : i32
      %c0_52 = arith.constant 0 : index
      %51 = arith.index_cast %50 : i32 to index
      %c0_53 = arith.constant 0 : index
      %c0_54 = arith.constant 0 : index
      %52 = vector.load %arg1[%c0_52, %51, %c0_53, %c0_54] : memref<1x10x10x128xbf16, #tpu.memory_space<vmem>>, vector<1x1x8x128xbf16>
      %53 = vector.shape_cast %52 : vector<1x1x8x128xbf16> to vector<8x128xbf16>
      %c2_55 = arith.constant 2 : index
      %c0_56 = arith.constant 0 : index
      %c0_57 = arith.constant 0 : index
      %c0_58 = arith.constant 0 : index
      %54 = vector.load %arg2[%c2_55, %c0_56, %c0_57, %c0_58] : memref<3x3x128x128xbf16, #tpu.memory_space<vmem>>, vector<1x1x128x128xbf16>
      %55 = vector.shape_cast %54 : vector<1x1x128x128xbf16> to vector<128x128xbf16>
      %cst_59 = arith.constant dense<0.000000e+00> : vector<8x128xf32>
      %56 = tpu.matmul %53, %55, %cst_59 {dimension_numbers = #tpu.dot_dimension_numbers<[1], [0], [0], [1], [0, 0, 1, 1], [], []>} : vector<8x128xbf16>, vector<128x128xbf16>, vector<8x128xf32> -> vector<8x128xf32>
      %57 = arith.addf %49, %56 : vector<8x128xf32>
      %c2_i32_60 = arith.constant 2 : i32
      %58 = arith.addi %arg5, %c2_i32_60 : i32
      %c0_61 = arith.constant 0 : index
      %59 = arith.index_cast %58 : i32 to index
      %c1_62 = arith.constant 1 : index
      %c0_63 = arith.constant 0 : index
      %60 = vector.load %arg1[%c0_61, %59, %c1_62, %c0_63] : memref<1x10x10x128xbf16, #tpu.memory_space<vmem>>, vector<1x1x8x128xbf16>
      %61 = vector.shape_cast %60 : vector<1x1x8x128xbf16> to vector<8x128xbf16>
      %c2_64 = arith.constant 2 : index
      %c1_65 = arith.constant 1 : index
      %c0_66 = arith.constant 0 : index
      %c0_67 = arith.constant 0 : index
      %62 = vector.load %arg2[%c2_64, %c1_65, %c0_66, %c0_67] : memref<3x3x128x128xbf16, #tpu.memory_space<vmem>>, vector<1x1x128x128xbf16>
      %63 = vector.shape_cast %62 : vector<1x1x128x128xbf16> to vector<128x128xbf16>
      %cst_68 = arith.constant dense<0.000000e+00> : vector<8x128xf32>
      %64 = tpu.matmul %61, %63, %cst_68 {dimension_numbers = #tpu.dot_dimension_numbers<[1], [0], [0], [1], [0, 0, 1, 1], [], []>} : vector<8x128xbf16>, vector<128x128xbf16>, vector<8x128xf32> -> vector<8x128xf32>
      %65 = arith.addf %57, %64 : vector<8x128xf32>
      %c2_i32_69 = arith.constant 2 : i32
      %66 = arith.addi %arg5, %c2_i32_69 : i32
      %c0_70 = arith.constant 0 : index
      %67 = arith.index_cast %66 : i32 to index
      %c2_71 = arith.constant 2 : index
      %c0_72 = arith.constant 0 : index
      %68 = vector.load %arg1[%c0_70, %67, %c2_71, %c0_72] : memref<1x10x10x128xbf16, #tpu.memory_space<vmem>>, vector<1x1x8x128xbf16>
      %69 = vector.shape_cast %68 : vector<1x1x8x128xbf16> to vector<8x128xbf16>
      %c2_73 = arith.constant 2 : index
      %c2_74 = arith.constant 2 : index
      %c0_75 = arith.constant 0 : index
      %c0_76 = arith.constant 0 : index
      %70 = vector.load %arg2[%c2_73, %c2_74, %c0_75, %c0_76] : memref<3x3x128x128xbf16, #tpu.memory_space<vmem>>, vector<1x1x128x128xbf16>
      %71 = vector.shape_cast %70 : vector<1x1x128x128xbf16> to vector<128x128xbf16>
      %cst_77 = arith.constant dense<0.000000e+00> : vector<8x128xf32>
      %72 = tpu.matmul %69, %71, %cst_77 {dimension_numbers = #tpu.dot_dimension_numbers<[1], [0], [0], [1], [0, 0, 1, 1], [], []>} : vector<8x128xbf16>, vector<128x128xbf16>, vector<8x128xf32> -> vector<8x128xf32>
      %73 = arith.addf %65, %72 : vector<8x128xf32>
      %c0_78 = arith.constant 0 : index
      %c0_79 = arith.constant 0 : index
      %74 = vector.load %arg3[%c0_78, %c0_79] : memref<1x128xf32, #tpu.memory_space<vmem>>, vector<1x128xf32>
      %75 = vector.broadcast %74 : vector<1x128xf32> to vector<8x128xf32>
      %76 = arith.addf %73, %75 : vector<8x128xf32>
      %cst_80 = arith.constant 0.000000e+00 : f32
      %77 = vector.broadcast %cst_80 : f32 to vector<8x128xf32>
      %78 = arith.maximumf %76, %77 : vector<8x128xf32>
      %79 = arith.truncf %78 : vector<8x128xf32> to vector<8x128xbf16>
      %c0_81 = arith.constant 0 : index
      %80 = arith.index_cast %arg5 : i32 to index
      %c0_82 = arith.constant 0 : index
      %c0_83 = arith.constant 0 : index
      %81 = vector.load %arg4[%c0_81, %80, %c0_82, %c0_83] : memref<1x8x8x128xbf16, #tpu.memory_space<vmem>>, vector<1x1x8x128xbf16>
      %82 = vector.shape_cast %81 : vector<1x1x8x128xbf16> to vector<8x128xbf16>
      %83 = vector.shape_cast %79 : vector<8x128xbf16> to vector<1x1x8x128xbf16>
      tpu.vector_store %arg4[%c0_81, %80, %c0_82, %c0_83], %83 {strides = array<i32>} : memref<1x8x8x128xbf16, #tpu.memory_space<vmem>>, vector<1x1x8x128xbf16>,
    }
    %c8_i32_0 = arith.constant 8 : i32
    return
  }
  func.func @transform_0(%arg0: i32) -> (i32, i32, i32, i32) {
    %c0_i32 = arith.constant 0 : i32
    %c0_i32_0 = arith.constant 0 : i32
    %c0_i32_1 = arith.constant 0 : i32
    %c0_i32_2 = arith.constant 0 : i32
    return %arg0, %c0_i32, %c0_i32_0, %c0_i32_1 : i32, i32, i32, i32
  }
  func.func @transform_1(%arg0: i32) -> (i32, i32, i32, i32) {
    %c0_i32 = arith.constant 0 : i32
    %c0_i32_0 = arith.constant 0 : i32
    %c0_i32_1 = arith.constant 0 : i32
    %c0_i32_2 = arith.constant 0 : i32
    %c0_i32_3 = arith.constant 0 : i32
    return %c0_i32, %c0_i32_0, %c0_i32_1, %c0_i32_2 : i32, i32, i32, i32
  }
  func.func @transform_2(%arg0: i32) -> (i32, i32) {
    %c0_i32 = arith.constant 0 : i32
    %c0_i32_0 = arith.constant 0 : i32
    %c0_i32_1 = arith.constant 0 : i32
    return %c0_i32, %c0_i32_0 : i32, i32
  }
  func.func @transform_3(%arg0: i32) -> (i32, i32, i32, i32) {
    %c0_i32 = arith.constant 0 : i32
    %c0_i32_0 = arith.constant 0 : i32
    %c0_i32_1 = arith.constant 0 : i32
    %c0_i32_2 = arith.constant 0 : i32
    return %arg0, %c0_i32, %c0_i32_0, %c0_i32_1 : i32, i32, i32, i32
  }
}

module attributes {stable_mosaic.version = 11 : i64} {
  func.func @_maxpool_kernel(%arg0: i32, %arg1: i32, %arg2: memref<1x8x4x256xbf16, #tpu.memory_space<vmem>>, %arg3: memref<1x4x4x128xbf16, #tpu.memory_space<vmem>>) attributes {dimension_semantics = [#tpu.dimension_semantics<parallel>, #tpu.dimension_semantics<parallel>], iteration_bounds = array<i64: 2, 1>, scalar_prefetch = 0 : i64, scratch_operands = 0 : i64, tpu.core_type = #tpu.core_type<tc>, window_params = [{transform_indices = @transform_0, window_bounds = array<i64: 1, 8, 4, 256>}, {transform_indices = @transform_1, window_bounds = array<i64: 1, 4, 4, 128>}]} {
    %c0 = arith.constant 0 : index
    %c0_0 = arith.constant 0 : index
    %c0_1 = arith.constant 0 : index
    %c0_2 = arith.constant 0 : index
    %0 = vector.load %arg2[%c0, %c0_0, %c0_1, %c0_2] : memref<1x8x4x256xbf16, #tpu.memory_space<vmem>>, vector<1x8x4x256xbf16>
    %1 = vector.shape_cast %0 : vector<1x8x4x256xbf16> to vector<8x4x256xbf16>
    %2 = vector.extract_strided_slice %1 {offsets = [0, 0, 0], sizes = [8, 4, 128], strides = [1, 1, 1]} : vector<8x4x256xbf16> to vector<8x4x128xbf16>
    %3 = vector.extract_strided_slice %1 {offsets = [0, 0, 128], sizes = [8, 4, 128], strides = [1, 1, 1]} : vector<8x4x256xbf16> to vector<8x4x128xbf16>
    %4 = arith.maximumf %2, %3 : vector<8x4x128xbf16>
    %5 = vector.shape_cast %4 : vector<8x4x128xbf16> to vector<4x2x4x128xbf16>
    %6 = vector.extract_strided_slice %5 {offsets = [0, 0, 0, 0], sizes = [4, 1, 4, 128], strides = [1, 1, 1, 1]} : vector<4x2x4x128xbf16> to vector<4x1x4x128xbf16>
    %7 = vector.shape_cast %6 : vector<4x1x4x128xbf16> to vector<4x4x128xbf16>
    %8 = vector.extract_strided_slice %5 {offsets = [0, 1, 0, 0], sizes = [4, 1, 4, 128], strides = [1, 1, 1, 1]} : vector<4x2x4x128xbf16> to vector<4x1x4x128xbf16>
    %9 = vector.shape_cast %8 : vector<4x1x4x128xbf16> to vector<4x4x128xbf16>
    %10 = arith.maximumf %7, %9 : vector<4x4x128xbf16>
    %c0_3 = arith.constant 0 : index
    %c0_4 = arith.constant 0 : index
    %c0_5 = arith.constant 0 : index
    %c0_6 = arith.constant 0 : index
    %11 = vector.load %arg3[%c0_3, %c0_4, %c0_5, %c0_6] : memref<1x4x4x128xbf16, #tpu.memory_space<vmem>>, vector<1x4x4x128xbf16>
    %12 = vector.shape_cast %11 : vector<1x4x4x128xbf16> to vector<4x4x128xbf16>
    %13 = vector.shape_cast %10 : vector<4x4x128xbf16> to vector<1x4x4x128xbf16>
    tpu.vector_store %arg3[%c0_3, %c0_4, %c0_5, %c0_6], %13 {strides = array<i32>} : memref<1x4x4x128xbf16, #tpu.memory_space<vmem>>, vector<1x4x4x128xbf16>,
    return
  }
  func.func @transform_0(%arg0: i32, %arg1: i32) -> (i32, i32, i32, i32) {
    %c0_i32 = arith.constant 0 : i32
    %c0_i32_0 = arith.constant 0 : i32
    %c0_i32_1 = arith.constant 0 : i32
    return %arg0, %arg1, %c0_i32, %c0_i32_0 : i32, i32, i32, i32
  }
  func.func @transform_1(%arg0: i32, %arg1: i32) -> (i32, i32, i32, i32) {
    %c0_i32 = arith.constant 0 : i32
    %c0_i32_0 = arith.constant 0 : i32
    %c0_i32_1 = arith.constant 0 : i32
    return %arg0, %arg1, %c0_i32, %c0_i32_0 : i32, i32, i32, i32
  }
}

module attributes {stable_mosaic.version = 11 : i64} {
  func.func @_conv3x3_kernel(%arg0: i32, %arg1: memref<1x6x6x128xbf16, #tpu.memory_space<vmem>>, %arg2: memref<3x3x128x128xbf16, #tpu.memory_space<vmem>>, %arg3: memref<1x128xf32, #tpu.memory_space<vmem>>, %arg4: memref<1x4x4x128xbf16, #tpu.memory_space<vmem>>) attributes {dimension_semantics = [#tpu.dimension_semantics<parallel>], iteration_bounds = array<i64: 2>, scalar_prefetch = 0 : i64, scratch_operands = 0 : i64, tpu.core_type = #tpu.core_type<tc>, window_params = [{transform_indices = @transform_0, window_bounds = array<i64: 1, 6, 6, 128>}, {pipeline_mode = #tpu.pipeline_mode<synchronous>, transform_indices = @transform_1, window_bounds = array<i64: 3, 3, 128, 128>}, {pipeline_mode = #tpu.pipeline_mode<synchronous>, transform_indices = @transform_2, window_bounds = array<i64: 1, 128>}, {transform_indices = @transform_3, window_bounds = array<i64: 1, 4, 4, 128>}]} {
    %c0_i32 = arith.constant 0 : i32
    %c4_i32 = arith.constant 4 : i32
    %0 = arith.addi %c0_i32, %c4_i32 : i32
    %c1_i32 = arith.constant 1 : i32
    scf.for %arg5 = %c0_i32 to %0 step %c1_i32  : i32 {
      %cst = arith.constant 0.000000e+00 : f32
      %1 = vector.broadcast %cst : f32 to vector<4x128xf32>
      %c0_i32_1 = arith.constant 0 : i32
      %2 = arith.addi %arg5, %c0_i32_1 : i32
      %c0 = arith.constant 0 : index
      %3 = arith.index_cast %2 : i32 to index
      %c0_2 = arith.constant 0 : index
      %c0_3 = arith.constant 0 : index
      %4 = vector.load %arg1[%c0, %3, %c0_2, %c0_3] : memref<1x6x6x128xbf16, #tpu.memory_space<vmem>>, vector<1x1x4x128xbf16>
      %5 = vector.shape_cast %4 : vector<1x1x4x128xbf16> to vector<4x128xbf16>
      %c0_4 = arith.constant 0 : index
      %c0_5 = arith.constant 0 : index
      %c0_6 = arith.constant 0 : index
      %c0_7 = arith.constant 0 : index
      %6 = vector.load %arg2[%c0_4, %c0_5, %c0_6, %c0_7] : memref<3x3x128x128xbf16, #tpu.memory_space<vmem>>, vector<1x1x128x128xbf16>
      %7 = vector.shape_cast %6 : vector<1x1x128x128xbf16> to vector<128x128xbf16>
      %cst_8 = arith.constant dense<0.000000e+00> : vector<4x128xf32>
      %8 = tpu.matmul %5, %7, %cst_8 {dimension_numbers = #tpu.dot_dimension_numbers<[1], [0], [0], [1], [0, 0, 1, 1], [], []>} : vector<4x128xbf16>, vector<128x128xbf16>, vector<4x128xf32> -> vector<4x128xf32>
      %9 = arith.addf %1, %8 : vector<4x128xf32>
      %c0_i32_9 = arith.constant 0 : i32
      %10 = arith.addi %arg5, %c0_i32_9 : i32
      %c0_10 = arith.constant 0 : index
      %11 = arith.index_cast %10 : i32 to index
      %c1 = arith.constant 1 : index
      %c0_11 = arith.constant 0 : index
      %12 = vector.load %arg1[%c0_10, %11, %c1, %c0_11] : memref<1x6x6x128xbf16, #tpu.memory_space<vmem>>, vector<1x1x4x128xbf16>
      %13 = vector.shape_cast %12 : vector<1x1x4x128xbf16> to vector<4x128xbf16>
      %c0_12 = arith.constant 0 : index
      %c1_13 = arith.constant 1 : index
      %c0_14 = arith.constant 0 : index
      %c0_15 = arith.constant 0 : index
      %14 = vector.load %arg2[%c0_12, %c1_13, %c0_14, %c0_15] : memref<3x3x128x128xbf16, #tpu.memory_space<vmem>>, vector<1x1x128x128xbf16>
      %15 = vector.shape_cast %14 : vector<1x1x128x128xbf16> to vector<128x128xbf16>
      %cst_16 = arith.constant dense<0.000000e+00> : vector<4x128xf32>
      %16 = tpu.matmul %13, %15, %cst_16 {dimension_numbers = #tpu.dot_dimension_numbers<[1], [0], [0], [1], [0, 0, 1, 1], [], []>} : vector<4x128xbf16>, vector<128x128xbf16>, vector<4x128xf32> -> vector<4x128xf32>
      %17 = arith.addf %9, %16 : vector<4x128xf32>
      %c0_i32_17 = arith.constant 0 : i32
      %18 = arith.addi %arg5, %c0_i32_17 : i32
      %c0_18 = arith.constant 0 : index
      %19 = arith.index_cast %18 : i32 to index
      %c2 = arith.constant 2 : index
      %c0_19 = arith.constant 0 : index
      %20 = vector.load %arg1[%c0_18, %19, %c2, %c0_19] : memref<1x6x6x128xbf16, #tpu.memory_space<vmem>>, vector<1x1x4x128xbf16>
      %21 = vector.shape_cast %20 : vector<1x1x4x128xbf16> to vector<4x128xbf16>
      %c0_20 = arith.constant 0 : index
      %c2_21 = arith.constant 2 : index
      %c0_22 = arith.constant 0 : index
      %c0_23 = arith.constant 0 : index
      %22 = vector.load %arg2[%c0_20, %c2_21, %c0_22, %c0_23] : memref<3x3x128x128xbf16, #tpu.memory_space<vmem>>, vector<1x1x128x128xbf16>
      %23 = vector.shape_cast %22 : vector<1x1x128x128xbf16> to vector<128x128xbf16>
      %cst_24 = arith.constant dense<0.000000e+00> : vector<4x128xf32>
      %24 = tpu.matmul %21, %23, %cst_24 {dimension_numbers = #tpu.dot_dimension_numbers<[1], [0], [0], [1], [0, 0, 1, 1], [], []>} : vector<4x128xbf16>, vector<128x128xbf16>, vector<4x128xf32> -> vector<4x128xf32>
      %25 = arith.addf %17, %24 : vector<4x128xf32>
      %c1_i32_25 = arith.constant 1 : i32
      %26 = arith.addi %arg5, %c1_i32_25 : i32
      %c0_26 = arith.constant 0 : index
      %27 = arith.index_cast %26 : i32 to index
      %c0_27 = arith.constant 0 : index
      %c0_28 = arith.constant 0 : index
      %28 = vector.load %arg1[%c0_26, %27, %c0_27, %c0_28] : memref<1x6x6x128xbf16, #tpu.memory_space<vmem>>, vector<1x1x4x128xbf16>
      %29 = vector.shape_cast %28 : vector<1x1x4x128xbf16> to vector<4x128xbf16>
      %c1_29 = arith.constant 1 : index
      %c0_30 = arith.constant 0 : index
      %c0_31 = arith.constant 0 : index
      %c0_32 = arith.constant 0 : index
      %30 = vector.load %arg2[%c1_29, %c0_30, %c0_31, %c0_32] : memref<3x3x128x128xbf16, #tpu.memory_space<vmem>>, vector<1x1x128x128xbf16>
      %31 = vector.shape_cast %30 : vector<1x1x128x128xbf16> to vector<128x128xbf16>
      %cst_33 = arith.constant dense<0.000000e+00> : vector<4x128xf32>
      %32 = tpu.matmul %29, %31, %cst_33 {dimension_numbers = #tpu.dot_dimension_numbers<[1], [0], [0], [1], [0, 0, 1, 1], [], []>} : vector<4x128xbf16>, vector<128x128xbf16>, vector<4x128xf32> -> vector<4x128xf32>
      %33 = arith.addf %25, %32 : vector<4x128xf32>
      %c1_i32_34 = arith.constant 1 : i32
      %34 = arith.addi %arg5, %c1_i32_34 : i32
      %c0_35 = arith.constant 0 : index
      %35 = arith.index_cast %34 : i32 to index
      %c1_36 = arith.constant 1 : index
      %c0_37 = arith.constant 0 : index
      %36 = vector.load %arg1[%c0_35, %35, %c1_36, %c0_37] : memref<1x6x6x128xbf16, #tpu.memory_space<vmem>>, vector<1x1x4x128xbf16>
      %37 = vector.shape_cast %36 : vector<1x1x4x128xbf16> to vector<4x128xbf16>
      %c1_38 = arith.constant 1 : index
      %c1_39 = arith.constant 1 : index
      %c0_40 = arith.constant 0 : index
      %c0_41 = arith.constant 0 : index
      %38 = vector.load %arg2[%c1_38, %c1_39, %c0_40, %c0_41] : memref<3x3x128x128xbf16, #tpu.memory_space<vmem>>, vector<1x1x128x128xbf16>
      %39 = vector.shape_cast %38 : vector<1x1x128x128xbf16> to vector<128x128xbf16>
      %cst_42 = arith.constant dense<0.000000e+00> : vector<4x128xf32>
      %40 = tpu.matmul %37, %39, %cst_42 {dimension_numbers = #tpu.dot_dimension_numbers<[1], [0], [0], [1], [0, 0, 1, 1], [], []>} : vector<4x128xbf16>, vector<128x128xbf16>, vector<4x128xf32> -> vector<4x128xf32>
      %41 = arith.addf %33, %40 : vector<4x128xf32>
      %c1_i32_43 = arith.constant 1 : i32
      %42 = arith.addi %arg5, %c1_i32_43 : i32
      %c0_44 = arith.constant 0 : index
      %43 = arith.index_cast %42 : i32 to index
      %c2_45 = arith.constant 2 : index
      %c0_46 = arith.constant 0 : index
      %44 = vector.load %arg1[%c0_44, %43, %c2_45, %c0_46] : memref<1x6x6x128xbf16, #tpu.memory_space<vmem>>, vector<1x1x4x128xbf16>
      %45 = vector.shape_cast %44 : vector<1x1x4x128xbf16> to vector<4x128xbf16>
      %c1_47 = arith.constant 1 : index
      %c2_48 = arith.constant 2 : index
      %c0_49 = arith.constant 0 : index
      %c0_50 = arith.constant 0 : index
      %46 = vector.load %arg2[%c1_47, %c2_48, %c0_49, %c0_50] : memref<3x3x128x128xbf16, #tpu.memory_space<vmem>>, vector<1x1x128x128xbf16>
      %47 = vector.shape_cast %46 : vector<1x1x128x128xbf16> to vector<128x128xbf16>
      %cst_51 = arith.constant dense<0.000000e+00> : vector<4x128xf32>
      %48 = tpu.matmul %45, %47, %cst_51 {dimension_numbers = #tpu.dot_dimension_numbers<[1], [0], [0], [1], [0, 0, 1, 1], [], []>} : vector<4x128xbf16>, vector<128x128xbf16>, vector<4x128xf32> -> vector<4x128xf32>
      %49 = arith.addf %41, %48 : vector<4x128xf32>
      %c2_i32 = arith.constant 2 : i32
      %50 = arith.addi %arg5, %c2_i32 : i32
      %c0_52 = arith.constant 0 : index
      %51 = arith.index_cast %50 : i32 to index
      %c0_53 = arith.constant 0 : index
      %c0_54 = arith.constant 0 : index
      %52 = vector.load %arg1[%c0_52, %51, %c0_53, %c0_54] : memref<1x6x6x128xbf16, #tpu.memory_space<vmem>>, vector<1x1x4x128xbf16>
      %53 = vector.shape_cast %52 : vector<1x1x4x128xbf16> to vector<4x128xbf16>
      %c2_55 = arith.constant 2 : index
      %c0_56 = arith.constant 0 : index
      %c0_57 = arith.constant 0 : index
      %c0_58 = arith.constant 0 : index
      %54 = vector.load %arg2[%c2_55, %c0_56, %c0_57, %c0_58] : memref<3x3x128x128xbf16, #tpu.memory_space<vmem>>, vector<1x1x128x128xbf16>
      %55 = vector.shape_cast %54 : vector<1x1x128x128xbf16> to vector<128x128xbf16>
      %cst_59 = arith.constant dense<0.000000e+00> : vector<4x128xf32>
      %56 = tpu.matmul %53, %55, %cst_59 {dimension_numbers = #tpu.dot_dimension_numbers<[1], [0], [0], [1], [0, 0, 1, 1], [], []>} : vector<4x128xbf16>, vector<128x128xbf16>, vector<4x128xf32> -> vector<4x128xf32>
      %57 = arith.addf %49, %56 : vector<4x128xf32>
      %c2_i32_60 = arith.constant 2 : i32
      %58 = arith.addi %arg5, %c2_i32_60 : i32
      %c0_61 = arith.constant 0 : index
      %59 = arith.index_cast %58 : i32 to index
      %c1_62 = arith.constant 1 : index
      %c0_63 = arith.constant 0 : index
      %60 = vector.load %arg1[%c0_61, %59, %c1_62, %c0_63] : memref<1x6x6x128xbf16, #tpu.memory_space<vmem>>, vector<1x1x4x128xbf16>
      %61 = vector.shape_cast %60 : vector<1x1x4x128xbf16> to vector<4x128xbf16>
      %c2_64 = arith.constant 2 : index
      %c1_65 = arith.constant 1 : index
      %c0_66 = arith.constant 0 : index
      %c0_67 = arith.constant 0 : index
      %62 = vector.load %arg2[%c2_64, %c1_65, %c0_66, %c0_67] : memref<3x3x128x128xbf16, #tpu.memory_space<vmem>>, vector<1x1x128x128xbf16>
      %63 = vector.shape_cast %62 : vector<1x1x128x128xbf16> to vector<128x128xbf16>
      %cst_68 = arith.constant dense<0.000000e+00> : vector<4x128xf32>
      %64 = tpu.matmul %61, %63, %cst_68 {dimension_numbers = #tpu.dot_dimension_numbers<[1], [0], [0], [1], [0, 0, 1, 1], [], []>} : vector<4x128xbf16>, vector<128x128xbf16>, vector<4x128xf32> -> vector<4x128xf32>
      %65 = arith.addf %57, %64 : vector<4x128xf32>
      %c2_i32_69 = arith.constant 2 : i32
      %66 = arith.addi %arg5, %c2_i32_69 : i32
      %c0_70 = arith.constant 0 : index
      %67 = arith.index_cast %66 : i32 to index
      %c2_71 = arith.constant 2 : index
      %c0_72 = arith.constant 0 : index
      %68 = vector.load %arg1[%c0_70, %67, %c2_71, %c0_72] : memref<1x6x6x128xbf16, #tpu.memory_space<vmem>>, vector<1x1x4x128xbf16>
      %69 = vector.shape_cast %68 : vector<1x1x4x128xbf16> to vector<4x128xbf16>
      %c2_73 = arith.constant 2 : index
      %c2_74 = arith.constant 2 : index
      %c0_75 = arith.constant 0 : index
      %c0_76 = arith.constant 0 : index
      %70 = vector.load %arg2[%c2_73, %c2_74, %c0_75, %c0_76] : memref<3x3x128x128xbf16, #tpu.memory_space<vmem>>, vector<1x1x128x128xbf16>
      %71 = vector.shape_cast %70 : vector<1x1x128x128xbf16> to vector<128x128xbf16>
      %cst_77 = arith.constant dense<0.000000e+00> : vector<4x128xf32>
      %72 = tpu.matmul %69, %71, %cst_77 {dimension_numbers = #tpu.dot_dimension_numbers<[1], [0], [0], [1], [0, 0, 1, 1], [], []>} : vector<4x128xbf16>, vector<128x128xbf16>, vector<4x128xf32> -> vector<4x128xf32>
      %73 = arith.addf %65, %72 : vector<4x128xf32>
      %c0_78 = arith.constant 0 : index
      %c0_79 = arith.constant 0 : index
      %74 = vector.load %arg3[%c0_78, %c0_79] : memref<1x128xf32, #tpu.memory_space<vmem>>, vector<1x128xf32>
      %75 = vector.broadcast %74 : vector<1x128xf32> to vector<4x128xf32>
      %76 = arith.addf %73, %75 : vector<4x128xf32>
      %cst_80 = arith.constant 0.000000e+00 : f32
      %77 = vector.broadcast %cst_80 : f32 to vector<4x128xf32>
      %78 = arith.maximumf %76, %77 : vector<4x128xf32>
      %79 = arith.truncf %78 : vector<4x128xf32> to vector<4x128xbf16>
      %c0_81 = arith.constant 0 : index
      %80 = arith.index_cast %arg5 : i32 to index
      %c0_82 = arith.constant 0 : index
      %c0_83 = arith.constant 0 : index
      %81 = vector.load %arg4[%c0_81, %80, %c0_82, %c0_83] : memref<1x4x4x128xbf16, #tpu.memory_space<vmem>>, vector<1x1x4x128xbf16>
      %82 = vector.shape_cast %81 : vector<1x1x4x128xbf16> to vector<4x128xbf16>
      %83 = vector.shape_cast %79 : vector<4x128xbf16> to vector<1x1x4x128xbf16>
      tpu.vector_store %arg4[%c0_81, %80, %c0_82, %c0_83], %83 {strides = array<i32>} : memref<1x4x4x128xbf16, #tpu.memory_space<vmem>>, vector<1x1x4x128xbf16>,
    }
    %c4_i32_0 = arith.constant 4 : i32
    return
  }
  func.func @transform_0(%arg0: i32) -> (i32, i32, i32, i32) {
    %c0_i32 = arith.constant 0 : i32
    %c0_i32_0 = arith.constant 0 : i32
    %c0_i32_1 = arith.constant 0 : i32
    %c0_i32_2 = arith.constant 0 : i32
    return %arg0, %c0_i32, %c0_i32_0, %c0_i32_1 : i32, i32, i32, i32
  }
  func.func @transform_1(%arg0: i32) -> (i32, i32, i32, i32) {
    %c0_i32 = arith.constant 0 : i32
    %c0_i32_0 = arith.constant 0 : i32
    %c0_i32_1 = arith.constant 0 : i32
    %c0_i32_2 = arith.constant 0 : i32
    %c0_i32_3 = arith.constant 0 : i32
    return %c0_i32, %c0_i32_0, %c0_i32_1, %c0_i32_2 : i32, i32, i32, i32
  }
  func.func @transform_2(%arg0: i32) -> (i32, i32) {
    %c0_i32 = arith.constant 0 : i32
    %c0_i32_0 = arith.constant 0 : i32
    %c0_i32_1 = arith.constant 0 : i32
    return %c0_i32, %c0_i32_0 : i32, i32
  }
  func.func @transform_3(%arg0: i32) -> (i32, i32, i32, i32) {
    %c0_i32 = arith.constant 0 : i32
    %c0_i32_0 = arith.constant 0 : i32
    %c0_i32_1 = arith.constant 0 : i32
    %c0_i32_2 = arith.constant 0 : i32
    return %arg0, %c0_i32, %c0_i32_0, %c0_i32_1 : i32, i32, i32, i32
  }
}

module attributes {stable_mosaic.version = 11 : i64} {
  func.func @_conv3x3_kernel(%arg0: i32, %arg1: memref<1x4x4x128xbf16, #tpu.memory_space<vmem>>, %arg2: memref<3x3x128x128xbf16, #tpu.memory_space<vmem>>, %arg3: memref<1x128xf32, #tpu.memory_space<vmem>>, %arg4: memref<1x2x2x128xbf16, #tpu.memory_space<vmem>>) attributes {dimension_semantics = [#tpu.dimension_semantics<parallel>], iteration_bounds = array<i64: 2>, scalar_prefetch = 0 : i64, scratch_operands = 0 : i64, tpu.core_type = #tpu.core_type<tc>, window_params = [{transform_indices = @transform_0, window_bounds = array<i64: 1, 4, 4, 128>}, {pipeline_mode = #tpu.pipeline_mode<synchronous>, transform_indices = @transform_1, window_bounds = array<i64: 3, 3, 128, 128>}, {pipeline_mode = #tpu.pipeline_mode<synchronous>, transform_indices = @transform_2, window_bounds = array<i64: 1, 128>}, {transform_indices = @transform_3, window_bounds = array<i64: 1, 2, 2, 128>}]} {
    %c0_i32 = arith.constant 0 : i32
    %c2_i32 = arith.constant 2 : i32
    %0 = arith.addi %c0_i32, %c2_i32 : i32
    %c1_i32 = arith.constant 1 : i32
    scf.for %arg5 = %c0_i32 to %0 step %c1_i32  : i32 {
      %cst = arith.constant 0.000000e+00 : f32
      %1 = vector.broadcast %cst : f32 to vector<2x128xf32>
      %c0_i32_1 = arith.constant 0 : i32
      %2 = arith.addi %arg5, %c0_i32_1 : i32
      %c0 = arith.constant 0 : index
      %3 = arith.index_cast %2 : i32 to index
      %c0_2 = arith.constant 0 : index
      %c0_3 = arith.constant 0 : index
      %4 = vector.load %arg1[%c0, %3, %c0_2, %c0_3] : memref<1x4x4x128xbf16, #tpu.memory_space<vmem>>, vector<1x1x2x128xbf16>
      %5 = vector.shape_cast %4 : vector<1x1x2x128xbf16> to vector<2x128xbf16>
      %c0_4 = arith.constant 0 : index
      %c0_5 = arith.constant 0 : index
      %c0_6 = arith.constant 0 : index
      %c0_7 = arith.constant 0 : index
      %6 = vector.load %arg2[%c0_4, %c0_5, %c0_6, %c0_7] : memref<3x3x128x128xbf16, #tpu.memory_space<vmem>>, vector<1x1x128x128xbf16>
      %7 = vector.shape_cast %6 : vector<1x1x128x128xbf16> to vector<128x128xbf16>
      %cst_8 = arith.constant dense<0.000000e+00> : vector<2x128xf32>
      %8 = tpu.matmul %5, %7, %cst_8 {dimension_numbers = #tpu.dot_dimension_numbers<[1], [0], [0], [1], [0, 0, 1, 1], [], []>} : vector<2x128xbf16>, vector<128x128xbf16>, vector<2x128xf32> -> vector<2x128xf32>
      %9 = arith.addf %1, %8 : vector<2x128xf32>
      %c0_i32_9 = arith.constant 0 : i32
      %10 = arith.addi %arg5, %c0_i32_9 : i32
      %c0_10 = arith.constant 0 : index
      %11 = arith.index_cast %10 : i32 to index
      %c1 = arith.constant 1 : index
      %c0_11 = arith.constant 0 : index
      %12 = vector.load %arg1[%c0_10, %11, %c1, %c0_11] : memref<1x4x4x128xbf16, #tpu.memory_space<vmem>>, vector<1x1x2x128xbf16>
      %13 = vector.shape_cast %12 : vector<1x1x2x128xbf16> to vector<2x128xbf16>
      %c0_12 = arith.constant 0 : index
      %c1_13 = arith.constant 1 : index
      %c0_14 = arith.constant 0 : index
      %c0_15 = arith.constant 0 : index
      %14 = vector.load %arg2[%c0_12, %c1_13, %c0_14, %c0_15] : memref<3x3x128x128xbf16, #tpu.memory_space<vmem>>, vector<1x1x128x128xbf16>
      %15 = vector.shape_cast %14 : vector<1x1x128x128xbf16> to vector<128x128xbf16>
      %cst_16 = arith.constant dense<0.000000e+00> : vector<2x128xf32>
      %16 = tpu.matmul %13, %15, %cst_16 {dimension_numbers = #tpu.dot_dimension_numbers<[1], [0], [0], [1], [0, 0, 1, 1], [], []>} : vector<2x128xbf16>, vector<128x128xbf16>, vector<2x128xf32> -> vector<2x128xf32>
      %17 = arith.addf %9, %16 : vector<2x128xf32>
      %c0_i32_17 = arith.constant 0 : i32
      %18 = arith.addi %arg5, %c0_i32_17 : i32
      %c0_18 = arith.constant 0 : index
      %19 = arith.index_cast %18 : i32 to index
      %c2 = arith.constant 2 : index
      %c0_19 = arith.constant 0 : index
      %20 = vector.load %arg1[%c0_18, %19, %c2, %c0_19] : memref<1x4x4x128xbf16, #tpu.memory_space<vmem>>, vector<1x1x2x128xbf16>
      %21 = vector.shape_cast %20 : vector<1x1x2x128xbf16> to vector<2x128xbf16>
      %c0_20 = arith.constant 0 : index
      %c2_21 = arith.constant 2 : index
      %c0_22 = arith.constant 0 : index
      %c0_23 = arith.constant 0 : index
      %22 = vector.load %arg2[%c0_20, %c2_21, %c0_22, %c0_23] : memref<3x3x128x128xbf16, #tpu.memory_space<vmem>>, vector<1x1x128x128xbf16>
      %23 = vector.shape_cast %22 : vector<1x1x128x128xbf16> to vector<128x128xbf16>
      %cst_24 = arith.constant dense<0.000000e+00> : vector<2x128xf32>
      %24 = tpu.matmul %21, %23, %cst_24 {dimension_numbers = #tpu.dot_dimension_numbers<[1], [0], [0], [1], [0, 0, 1, 1], [], []>} : vector<2x128xbf16>, vector<128x128xbf16>, vector<2x128xf32> -> vector<2x128xf32>
      %25 = arith.addf %17, %24 : vector<2x128xf32>
      %c1_i32_25 = arith.constant 1 : i32
      %26 = arith.addi %arg5, %c1_i32_25 : i32
      %c0_26 = arith.constant 0 : index
      %27 = arith.index_cast %26 : i32 to index
      %c0_27 = arith.constant 0 : index
      %c0_28 = arith.constant 0 : index
      %28 = vector.load %arg1[%c0_26, %27, %c0_27, %c0_28] : memref<1x4x4x128xbf16, #tpu.memory_space<vmem>>, vector<1x1x2x128xbf16>
      %29 = vector.shape_cast %28 : vector<1x1x2x128xbf16> to vector<2x128xbf16>
      %c1_29 = arith.constant 1 : index
      %c0_30 = arith.constant 0 : index
      %c0_31 = arith.constant 0 : index
      %c0_32 = arith.constant 0 : index
      %30 = vector.load %arg2[%c1_29, %c0_30, %c0_31, %c0_32] : memref<3x3x128x128xbf16, #tpu.memory_space<vmem>>, vector<1x1x128x128xbf16>
      %31 = vector.shape_cast %30 : vector<1x1x128x128xbf16> to vector<128x128xbf16>
      %cst_33 = arith.constant dense<0.000000e+00> : vector<2x128xf32>
      %32 = tpu.matmul %29, %31, %cst_33 {dimension_numbers = #tpu.dot_dimension_numbers<[1], [0], [0], [1], [0, 0, 1, 1], [], []>} : vector<2x128xbf16>, vector<128x128xbf16>, vector<2x128xf32> -> vector<2x128xf32>
      %33 = arith.addf %25, %32 : vector<2x128xf32>
      %c1_i32_34 = arith.constant 1 : i32
      %34 = arith.addi %arg5, %c1_i32_34 : i32
      %c0_35 = arith.constant 0 : index
      %35 = arith.index_cast %34 : i32 to index
      %c1_36 = arith.constant 1 : index
      %c0_37 = arith.constant 0 : index
      %36 = vector.load %arg1[%c0_35, %35, %c1_36, %c0_37] : memref<1x4x4x128xbf16, #tpu.memory_space<vmem>>, vector<1x1x2x128xbf16>
      %37 = vector.shape_cast %36 : vector<1x1x2x128xbf16> to vector<2x128xbf16>
      %c1_38 = arith.constant 1 : index
      %c1_39 = arith.constant 1 : index
      %c0_40 = arith.constant 0 : index
      %c0_41 = arith.constant 0 : index
      %38 = vector.load %arg2[%c1_38, %c1_39, %c0_40, %c0_41] : memref<3x3x128x128xbf16, #tpu.memory_space<vmem>>, vector<1x1x128x128xbf16>
      %39 = vector.shape_cast %38 : vector<1x1x128x128xbf16> to vector<128x128xbf16>
      %cst_42 = arith.constant dense<0.000000e+00> : vector<2x128xf32>
      %40 = tpu.matmul %37, %39, %cst_42 {dimension_numbers = #tpu.dot_dimension_numbers<[1], [0], [0], [1], [0, 0, 1, 1], [], []>} : vector<2x128xbf16>, vector<128x128xbf16>, vector<2x128xf32> -> vector<2x128xf32>
      %41 = arith.addf %33, %40 : vector<2x128xf32>
      %c1_i32_43 = arith.constant 1 : i32
      %42 = arith.addi %arg5, %c1_i32_43 : i32
      %c0_44 = arith.constant 0 : index
      %43 = arith.index_cast %42 : i32 to index
      %c2_45 = arith.constant 2 : index
      %c0_46 = arith.constant 0 : index
      %44 = vector.load %arg1[%c0_44, %43, %c2_45, %c0_46] : memref<1x4x4x128xbf16, #tpu.memory_space<vmem>>, vector<1x1x2x128xbf16>
      %45 = vector.shape_cast %44 : vector<1x1x2x128xbf16> to vector<2x128xbf16>
      %c1_47 = arith.constant 1 : index
      %c2_48 = arith.constant 2 : index
      %c0_49 = arith.constant 0 : index
      %c0_50 = arith.constant 0 : index
      %46 = vector.load %arg2[%c1_47, %c2_48, %c0_49, %c0_50] : memref<3x3x128x128xbf16, #tpu.memory_space<vmem>>, vector<1x1x128x128xbf16>
      %47 = vector.shape_cast %46 : vector<1x1x128x128xbf16> to vector<128x128xbf16>
      %cst_51 = arith.constant dense<0.000000e+00> : vector<2x128xf32>
      %48 = tpu.matmul %45, %47, %cst_51 {dimension_numbers = #tpu.dot_dimension_numbers<[1], [0], [0], [1], [0, 0, 1, 1], [], []>} : vector<2x128xbf16>, vector<128x128xbf16>, vector<2x128xf32> -> vector<2x128xf32>
      %49 = arith.addf %41, %48 : vector<2x128xf32>
      %c2_i32_52 = arith.constant 2 : i32
      %50 = arith.addi %arg5, %c2_i32_52 : i32
      %c0_53 = arith.constant 0 : index
      %51 = arith.index_cast %50 : i32 to index
      %c0_54 = arith.constant 0 : index
      %c0_55 = arith.constant 0 : index
      %52 = vector.load %arg1[%c0_53, %51, %c0_54, %c0_55] : memref<1x4x4x128xbf16, #tpu.memory_space<vmem>>, vector<1x1x2x128xbf16>
      %53 = vector.shape_cast %52 : vector<1x1x2x128xbf16> to vector<2x128xbf16>
      %c2_56 = arith.constant 2 : index
      %c0_57 = arith.constant 0 : index
      %c0_58 = arith.constant 0 : index
      %c0_59 = arith.constant 0 : index
      %54 = vector.load %arg2[%c2_56, %c0_57, %c0_58, %c0_59] : memref<3x3x128x128xbf16, #tpu.memory_space<vmem>>, vector<1x1x128x128xbf16>
      %55 = vector.shape_cast %54 : vector<1x1x128x128xbf16> to vector<128x128xbf16>
      %cst_60 = arith.constant dense<0.000000e+00> : vector<2x128xf32>
      %56 = tpu.matmul %53, %55, %cst_60 {dimension_numbers = #tpu.dot_dimension_numbers<[1], [0], [0], [1], [0, 0, 1, 1], [], []>} : vector<2x128xbf16>, vector<128x128xbf16>, vector<2x128xf32> -> vector<2x128xf32>
      %57 = arith.addf %49, %56 : vector<2x128xf32>
      %c2_i32_61 = arith.constant 2 : i32
      %58 = arith.addi %arg5, %c2_i32_61 : i32
      %c0_62 = arith.constant 0 : index
      %59 = arith.index_cast %58 : i32 to index
      %c1_63 = arith.constant 1 : index
      %c0_64 = arith.constant 0 : index
      %60 = vector.load %arg1[%c0_62, %59, %c1_63, %c0_64] : memref<1x4x4x128xbf16, #tpu.memory_space<vmem>>, vector<1x1x2x128xbf16>
      %61 = vector.shape_cast %60 : vector<1x1x2x128xbf16> to vector<2x128xbf16>
      %c2_65 = arith.constant 2 : index
      %c1_66 = arith.constant 1 : index
      %c0_67 = arith.constant 0 : index
      %c0_68 = arith.constant 0 : index
      %62 = vector.load %arg2[%c2_65, %c1_66, %c0_67, %c0_68] : memref<3x3x128x128xbf16, #tpu.memory_space<vmem>>, vector<1x1x128x128xbf16>
      %63 = vector.shape_cast %62 : vector<1x1x128x128xbf16> to vector<128x128xbf16>
      %cst_69 = arith.constant dense<0.000000e+00> : vector<2x128xf32>
      %64 = tpu.matmul %61, %63, %cst_69 {dimension_numbers = #tpu.dot_dimension_numbers<[1], [0], [0], [1], [0, 0, 1, 1], [], []>} : vector<2x128xbf16>, vector<128x128xbf16>, vector<2x128xf32> -> vector<2x128xf32>
      %65 = arith.addf %57, %64 : vector<2x128xf32>
      %c2_i32_70 = arith.constant 2 : i32
      %66 = arith.addi %arg5, %c2_i32_70 : i32
      %c0_71 = arith.constant 0 : index
      %67 = arith.index_cast %66 : i32 to index
      %c2_72 = arith.constant 2 : index
      %c0_73 = arith.constant 0 : index
      %68 = vector.load %arg1[%c0_71, %67, %c2_72, %c0_73] : memref<1x4x4x128xbf16, #tpu.memory_space<vmem>>, vector<1x1x2x128xbf16>
      %69 = vector.shape_cast %68 : vector<1x1x2x128xbf16> to vector<2x128xbf16>
      %c2_74 = arith.constant 2 : index
      %c2_75 = arith.constant 2 : index
      %c0_76 = arith.constant 0 : index
      %c0_77 = arith.constant 0 : index
      %70 = vector.load %arg2[%c2_74, %c2_75, %c0_76, %c0_77] : memref<3x3x128x128xbf16, #tpu.memory_space<vmem>>, vector<1x1x128x128xbf16>
      %71 = vector.shape_cast %70 : vector<1x1x128x128xbf16> to vector<128x128xbf16>
      %cst_78 = arith.constant dense<0.000000e+00> : vector<2x128xf32>
      %72 = tpu.matmul %69, %71, %cst_78 {dimension_numbers = #tpu.dot_dimension_numbers<[1], [0], [0], [1], [0, 0, 1, 1], [], []>} : vector<2x128xbf16>, vector<128x128xbf16>, vector<2x128xf32> -> vector<2x128xf32>
      %73 = arith.addf %65, %72 : vector<2x128xf32>
      %c0_79 = arith.constant 0 : index
      %c0_80 = arith.constant 0 : index
      %74 = vector.load %arg3[%c0_79, %c0_80] : memref<1x128xf32, #tpu.memory_space<vmem>>, vector<1x128xf32>
      %75 = vector.broadcast %74 : vector<1x128xf32> to vector<2x128xf32>
      %76 = arith.addf %73, %75 : vector<2x128xf32>
      %cst_81 = arith.constant 0.000000e+00 : f32
      %77 = vector.broadcast %cst_81 : f32 to vector<2x128xf32>
      %78 = arith.maximumf %76, %77 : vector<2x128xf32>
      %79 = arith.truncf %78 : vector<2x128xf32> to vector<2x128xbf16>
      %c0_82 = arith.constant 0 : index
      %80 = arith.index_cast %arg5 : i32 to index
      %c0_83 = arith.constant 0 : index
      %c0_84 = arith.constant 0 : index
      %81 = vector.load %arg4[%c0_82, %80, %c0_83, %c0_84] : memref<1x2x2x128xbf16, #tpu.memory_space<vmem>>, vector<1x1x2x128xbf16>
      %82 = vector.shape_cast %81 : vector<1x1x2x128xbf16> to vector<2x128xbf16>
      %83 = vector.shape_cast %79 : vector<2x128xbf16> to vector<1x1x2x128xbf16>
      tpu.vector_store %arg4[%c0_82, %80, %c0_83, %c0_84], %83 {strides = array<i32>} : memref<1x2x2x128xbf16, #tpu.memory_space<vmem>>, vector<1x1x2x128xbf16>,
    }
    %c2_i32_0 = arith.constant 2 : i32
    return
  }
  func.func @transform_0(%arg0: i32) -> (i32, i32, i32, i32) {
    %c0_i32 = arith.constant 0 : i32
    %c0_i32_0 = arith.constant 0 : i32
    %c0_i32_1 = arith.constant 0 : i32
    %c0_i32_2 = arith.constant 0 : i32
    return %arg0, %c0_i32, %c0_i32_0, %c0_i32_1 : i32, i32, i32, i32
  }
  func.func @transform_1(%arg0: i32) -> (i32, i32, i32, i32) {
    %c0_i32 = arith.constant 0 : i32
    %c0_i32_0 = arith.constant 0 : i32
    %c0_i32_1 = arith.constant 0 : i32
    %c0_i32_2 = arith.constant 0 : i32
    %c0_i32_3 = arith.constant 0 : i32
    return %c0_i32, %c0_i32_0, %c0_i32_1, %c0_i32_2 : i32, i32, i32, i32
  }
  func.func @transform_2(%arg0: i32) -> (i32, i32) {
    %c0_i32 = arith.constant 0 : i32
    %c0_i32_0 = arith.constant 0 : i32
    %c0_i32_1 = arith.constant 0 : i32
    return %c0_i32, %c0_i32_0 : i32, i32
  }
  func.func @transform_3(%arg0: i32) -> (i32, i32, i32, i32) {
    %c0_i32 = arith.constant 0 : i32
    %c0_i32_0 = arith.constant 0 : i32
    %c0_i32_1 = arith.constant 0 : i32
    %c0_i32_2 = arith.constant 0 : i32
    return %arg0, %c0_i32, %c0_i32_0, %c0_i32_1 : i32, i32, i32, i32
  }
}

module attributes {stable_mosaic.version = 11 : i64} {
  func.func @_maxpool_kernel(%arg0: i32, %arg1: i32, %arg2: memref<1x4x2x256xbf16, #tpu.memory_space<vmem>>, %arg3: memref<1x2x2x128xbf16, #tpu.memory_space<vmem>>) attributes {dimension_semantics = [#tpu.dimension_semantics<parallel>, #tpu.dimension_semantics<parallel>], iteration_bounds = array<i64: 2, 1>, scalar_prefetch = 0 : i64, scratch_operands = 0 : i64, tpu.core_type = #tpu.core_type<tc>, window_params = [{transform_indices = @transform_0, window_bounds = array<i64: 1, 4, 2, 256>}, {transform_indices = @transform_1, window_bounds = array<i64: 1, 2, 2, 128>}]} {
    %c0 = arith.constant 0 : index
    %c0_0 = arith.constant 0 : index
    %c0_1 = arith.constant 0 : index
    %c0_2 = arith.constant 0 : index
    %0 = vector.load %arg2[%c0, %c0_0, %c0_1, %c0_2] : memref<1x4x2x256xbf16, #tpu.memory_space<vmem>>, vector<1x4x2x256xbf16>
    %1 = vector.shape_cast %0 : vector<1x4x2x256xbf16> to vector<4x2x256xbf16>
    %2 = vector.extract_strided_slice %1 {offsets = [0, 0, 0], sizes = [4, 2, 128], strides = [1, 1, 1]} : vector<4x2x256xbf16> to vector<4x2x128xbf16>
    %3 = vector.extract_strided_slice %1 {offsets = [0, 0, 128], sizes = [4, 2, 128], strides = [1, 1, 1]} : vector<4x2x256xbf16> to vector<4x2x128xbf16>
    %4 = arith.maximumf %2, %3 : vector<4x2x128xbf16>
    %5 = vector.shape_cast %4 : vector<4x2x128xbf16> to vector<2x2x2x128xbf16>
    %6 = vector.extract_strided_slice %5 {offsets = [0, 0, 0, 0], sizes = [2, 1, 2, 128], strides = [1, 1, 1, 1]} : vector<2x2x2x128xbf16> to vector<2x1x2x128xbf16>
    %7 = vector.shape_cast %6 : vector<2x1x2x128xbf16> to vector<2x2x128xbf16>
    %8 = vector.extract_strided_slice %5 {offsets = [0, 1, 0, 0], sizes = [2, 1, 2, 128], strides = [1, 1, 1, 1]} : vector<2x2x2x128xbf16> to vector<2x1x2x128xbf16>
    %9 = vector.shape_cast %8 : vector<2x1x2x128xbf16> to vector<2x2x128xbf16>
    %10 = arith.maximumf %7, %9 : vector<2x2x128xbf16>
    %c0_3 = arith.constant 0 : index
    %c0_4 = arith.constant 0 : index
    %c0_5 = arith.constant 0 : index
    %c0_6 = arith.constant 0 : index
    %11 = vector.load %arg3[%c0_3, %c0_4, %c0_5, %c0_6] : memref<1x2x2x128xbf16, #tpu.memory_space<vmem>>, vector<1x2x2x128xbf16>
    %12 = vector.shape_cast %11 : vector<1x2x2x128xbf16> to vector<2x2x128xbf16>
    %13 = vector.shape_cast %10 : vector<2x2x128xbf16> to vector<1x2x2x128xbf16>
    tpu.vector_store %arg3[%c0_3, %c0_4, %c0_5, %c0_6], %13 {strides = array<i32>} : memref<1x2x2x128xbf16, #tpu.memory_space<vmem>>, vector<1x2x2x128xbf16>,
    return
  }
  func.func @transform_0(%arg0: i32, %arg1: i32) -> (i32, i32, i32, i32) {
    %c0_i32 = arith.constant 0 : i32
    %c0_i32_0 = arith.constant 0 : i32
    %c0_i32_1 = arith.constant 0 : i32
    return %arg0, %arg1, %c0_i32, %c0_i32_0 : i32, i32, i32, i32
  }
  func.func @transform_1(%arg0: i32, %arg1: i32) -> (i32, i32, i32, i32) {
    %c0_i32 = arith.constant 0 : i32
    %c0_i32_0 = arith.constant 0 : i32
    %c0_i32_1 = arith.constant 0 : i32
    return %arg0, %arg1, %c0_i32, %c0_i32_0 : i32, i32, i32, i32
  }
}

module attributes {stable_mosaic.version = 11 : i64} {
  func.func @_maxpool_kernel(%arg0: i32, %arg1: i32, %arg2: memref<1x2x1x256xbf16, #tpu.memory_space<vmem>>, %arg3: memref<1x1x1x128xbf16, #tpu.memory_space<vmem>>) attributes {dimension_semantics = [#tpu.dimension_semantics<parallel>, #tpu.dimension_semantics<parallel>], iteration_bounds = array<i64: 2, 1>, scalar_prefetch = 0 : i64, scratch_operands = 0 : i64, tpu.core_type = #tpu.core_type<tc>, window_params = [{transform_indices = @transform_0, window_bounds = array<i64: 1, 2, 1, 256>}, {transform_indices = @transform_1, window_bounds = array<i64: 1, 1, 1, 128>}]} {
    %c0 = arith.constant 0 : index
    %c0_0 = arith.constant 0 : index
    %c0_1 = arith.constant 0 : index
    %c0_2 = arith.constant 0 : index
    %0 = vector.load %arg2[%c0, %c0_0, %c0_1, %c0_2] : memref<1x2x1x256xbf16, #tpu.memory_space<vmem>>, vector<1x2x1x256xbf16>
    %1 = vector.shape_cast %0 : vector<1x2x1x256xbf16> to vector<2x1x256xbf16>
    %2 = vector.extract_strided_slice %1 {offsets = [0, 0, 0], sizes = [2, 1, 128], strides = [1, 1, 1]} : vector<2x1x256xbf16> to vector<2x1x128xbf16>
    %3 = vector.extract_strided_slice %1 {offsets = [0, 0, 128], sizes = [2, 1, 128], strides = [1, 1, 1]} : vector<2x1x256xbf16> to vector<2x1x128xbf16>
    %4 = arith.maximumf %2, %3 : vector<2x1x128xbf16>
    %5 = vector.shape_cast %4 : vector<2x1x128xbf16> to vector<1x2x1x128xbf16>
    %6 = vector.extract_strided_slice %5 {offsets = [0, 0, 0, 0], sizes = [1, 1, 1, 128], strides = [1, 1, 1, 1]} : vector<1x2x1x128xbf16> to vector<1x1x1x128xbf16>
    %7 = vector.shape_cast %6 : vector<1x1x1x128xbf16> to vector<1x1x128xbf16>
    %8 = vector.extract_strided_slice %5 {offsets = [0, 1, 0, 0], sizes = [1, 1, 1, 128], strides = [1, 1, 1, 1]} : vector<1x2x1x128xbf16> to vector<1x1x1x128xbf16>
    %9 = vector.shape_cast %8 : vector<1x1x1x128xbf16> to vector<1x1x128xbf16>
    %10 = arith.maximumf %7, %9 : vector<1x1x128xbf16>
    %c0_3 = arith.constant 0 : index
    %c0_4 = arith.constant 0 : index
    %c0_5 = arith.constant 0 : index
    %c0_6 = arith.constant 0 : index
    %11 = vector.load %arg3[%c0_3, %c0_4, %c0_5, %c0_6] : memref<1x1x1x128xbf16, #tpu.memory_space<vmem>>, vector<1x1x1x128xbf16>
    %12 = vector.shape_cast %11 : vector<1x1x1x128xbf16> to vector<1x1x128xbf16>
    %13 = vector.shape_cast %10 : vector<1x1x128xbf16> to vector<1x1x1x128xbf16>
    tpu.vector_store %arg3[%c0_3, %c0_4, %c0_5, %c0_6], %13 {strides = array<i32>} : memref<1x1x1x128xbf16, #tpu.memory_space<vmem>>, vector<1x1x1x128xbf16>,
    return
  }
  func.func @transform_0(%arg0: i32, %arg1: i32) -> (i32, i32, i32, i32) {
    %c0_i32 = arith.constant 0 : i32
    %c0_i32_0 = arith.constant 0 : i32
    %c0_i32_1 = arith.constant 0 : i32
    return %arg0, %arg1, %c0_i32, %c0_i32_0 : i32, i32, i32, i32
  }
  func.func @transform_1(%arg0: i32, %arg1: i32) -> (i32, i32, i32, i32) {
    %c0_i32 = arith.constant 0 : i32
    %c0_i32_0 = arith.constant 0 : i32
    %c0_i32_1 = arith.constant 0 : i32
    return %arg0, %arg1, %c0_i32, %c0_i32_0 : i32, i32, i32, i32
  }
}

module attributes {stable_mosaic.version = 11 : i64} {
  func.func @_matmul_bias_kernel(%arg0: i32, %arg1: i32, %arg2: i32, %arg3: memref<16x128xbf16, #tpu.memory_space<vmem>>, %arg4: memref<128x128xbf16, #tpu.memory_space<vmem>>, %arg5: memref<1x128xf32, #tpu.memory_space<vmem>>, %arg6: memref<16x128xbf16, #tpu.memory_space<vmem>>, %arg7: memref<16x128xf32, #tpu.memory_space<vmem>>) attributes {dimension_semantics = [#tpu.dimension_semantics<parallel>, #tpu.dimension_semantics<parallel>, #tpu.dimension_semantics<arbitrary>], iteration_bounds = array<i64: 1, 1, 1>, scalar_prefetch = 0 : i64, scratch_operands = 1 : i64, tpu.core_type = #tpu.core_type<tc>, window_params = [{transform_indices = @transform_0, window_bounds = array<i64: 16, 128>}, {transform_indices = @transform_1, window_bounds = array<i64: 128, 128>}, {transform_indices = @transform_2, window_bounds = array<i64: 1, 128>}, {transform_indices = @transform_3, window_bounds = array<i64: 16, 128>}]} {
    %c0_i32 = arith.constant 0 : i32
    %0 = arith.cmpi eq, %arg2, %c0_i32 : i32
    %1 = arith.extui %0 : i1 to i32
    %c0_i32_0 = arith.constant 0 : i32
    %2 = arith.cmpi ne, %1, %c0_i32_0 : i32
    scf.if %2 {
      %cst_10 = arith.constant 0.000000e+00 : f32
      %12 = vector.broadcast %cst_10 : f32 to vector<16x128xf32>
      %c0_11 = arith.constant 0 : index
      %c0_12 = arith.constant 0 : index
      %13 = vector.load %arg7[%c0_11, %c0_12] : memref<16x128xf32, #tpu.memory_space<vmem>>, vector<16x128xf32>
      tpu.vector_store %arg7[%c0_11, %c0_12], %12 {strides = array<i32>} : memref<16x128xf32, #tpu.memory_space<vmem>>, vector<16x128xf32>,
    } else {
    }
    %c0 = arith.constant 0 : index
    %c0_1 = arith.constant 0 : index
    %3 = vector.load %arg7[%c0, %c0_1] : memref<16x128xf32, #tpu.memory_space<vmem>>, vector<16x128xf32>
    %c0_2 = arith.constant 0 : index
    %c0_3 = arith.constant 0 : index
    %4 = vector.load %arg3[%c0_2, %c0_3] : memref<16x128xbf16, #tpu.memory_space<vmem>>, vector<16x128xbf16>
    %c0_4 = arith.constant 0 : index
    %c0_5 = arith.constant 0 : index
    %5 = vector.load %arg4[%c0_4, %c0_5] : memref<128x128xbf16, #tpu.memory_space<vmem>>, vector<128x128xbf16>
    %cst = arith.constant dense<0.000000e+00> : vector<16x128xf32>
    %6 = tpu.matmul %4, %5, %cst {dimension_numbers = #tpu.dot_dimension_numbers<[1], [0], [0], [1], [0, 0, 1, 1], [], []>} : vector<16x128xbf16>, vector<128x128xbf16>, vector<16x128xf32> -> vector<16x128xf32>
    %7 = arith.addf %3, %6 : vector<16x128xf32>
    %c0_6 = arith.constant 0 : index
    %c0_7 = arith.constant 0 : index
    %8 = vector.load %arg7[%c0_6, %c0_7] : memref<16x128xf32, #tpu.memory_space<vmem>>, vector<16x128xf32>
    tpu.vector_store %arg7[%c0_6, %c0_7], %7 {strides = array<i32>} : memref<16x128xf32, #tpu.memory_space<vmem>>, vector<16x128xf32>,
    %c0_i32_8 = arith.constant 0 : i32
    %9 = arith.cmpi eq, %arg2, %c0_i32_8 : i32
    %10 = arith.extui %9 : i1 to i32
    %c0_i32_9 = arith.constant 0 : i32
    %11 = arith.cmpi ne, %10, %c0_i32_9 : i32
    scf.if %11 {
      %c0_10 = arith.constant 0 : index
      %c0_11 = arith.constant 0 : index
      %12 = vector.load %arg7[%c0_10, %c0_11] : memref<16x128xf32, #tpu.memory_space<vmem>>, vector<16x128xf32>
      %c0_12 = arith.constant 0 : index
      %c0_13 = arith.constant 0 : index
      %13 = vector.load %arg5[%c0_12, %c0_13] : memref<1x128xf32, #tpu.memory_space<vmem>>, vector<1x128xf32>
      %14 = vector.broadcast %13 : vector<1x128xf32> to vector<16x128xf32>
      %15 = arith.addf %12, %14 : vector<16x128xf32>
      %cst_14 = arith.constant 0.000000e+00 : f32
      %16 = vector.broadcast %cst_14 : f32 to vector<16x128xf32>
      %17 = arith.maximumf %15, %16 : vector<16x128xf32>
      %18 = arith.truncf %17 : vector<16x128xf32> to vector<16x128xbf16>
      %c0_15 = arith.constant 0 : index
      %c0_16 = arith.constant 0 : index
      %19 = vector.load %arg6[%c0_15, %c0_16] : memref<16x128xbf16, #tpu.memory_space<vmem>>, vector<16x128xbf16>
      tpu.vector_store %arg6[%c0_15, %c0_16], %18 {strides = array<i32>} : memref<16x128xbf16, #tpu.memory_space<vmem>>, vector<16x128xbf16>,
    } else {
    }
    return
  }
  func.func @transform_0(%arg0: i32, %arg1: i32, %arg2: i32) -> (i32, i32) {
    %c0_i32 = arith.constant 0 : i32
    return %arg0, %arg2 : i32, i32
  }
  func.func @transform_1(%arg0: i32, %arg1: i32, %arg2: i32) -> (i32, i32) {
    %c0_i32 = arith.constant 0 : i32
    return %arg2, %arg1 : i32, i32
  }
  func.func @transform_2(%arg0: i32, %arg1: i32, %arg2: i32) -> (i32, i32) {
    %c0_i32 = arith.constant 0 : i32
    %c0_i32_0 = arith.constant 0 : i32
    return %c0_i32, %arg1 : i32, i32
  }
  func.func @transform_3(%arg0: i32, %arg1: i32, %arg2: i32) -> (i32, i32) {
    %c0_i32 = arith.constant 0 : i32
    return %arg0, %arg1 : i32, i32
  }
}

module attributes {stable_mosaic.version = 11 : i64} {
  func.func @_matmul_bias_kernel(%arg0: i32, %arg1: i32, %arg2: i32, %arg3: memref<16x128xbf16, #tpu.memory_space<vmem>>, %arg4: memref<128x128xbf16, #tpu.memory_space<vmem>>, %arg5: memref<1x128xf32, #tpu.memory_space<vmem>>, %arg6: memref<16x128xf32, #tpu.memory_space<vmem>>, %arg7: memref<16x128xf32, #tpu.memory_space<vmem>>) attributes {dimension_semantics = [#tpu.dimension_semantics<parallel>, #tpu.dimension_semantics<parallel>, #tpu.dimension_semantics<arbitrary>], iteration_bounds = array<i64: 1, 1, 1>, scalar_prefetch = 0 : i64, scratch_operands = 1 : i64, tpu.core_type = #tpu.core_type<tc>, window_params = [{transform_indices = @transform_0, window_bounds = array<i64: 16, 128>}, {transform_indices = @transform_1, window_bounds = array<i64: 128, 128>}, {transform_indices = @transform_2, window_bounds = array<i64: 1, 128>}, {transform_indices = @transform_3, window_bounds = array<i64: 16, 128>}]} {
    %c0_i32 = arith.constant 0 : i32
    %0 = arith.cmpi eq, %arg2, %c0_i32 : i32
    %1 = arith.extui %0 : i1 to i32
    %c0_i32_0 = arith.constant 0 : i32
    %2 = arith.cmpi ne, %1, %c0_i32_0 : i32
    scf.if %2 {
      %cst_10 = arith.constant 0.000000e+00 : f32
      %12 = vector.broadcast %cst_10 : f32 to vector<16x128xf32>
      %c0_11 = arith.constant 0 : index
      %c0_12 = arith.constant 0 : index
      %13 = vector.load %arg7[%c0_11, %c0_12] : memref<16x128xf32, #tpu.memory_space<vmem>>, vector<16x128xf32>
      tpu.vector_store %arg7[%c0_11, %c0_12], %12 {strides = array<i32>} : memref<16x128xf32, #tpu.memory_space<vmem>>, vector<16x128xf32>,
    } else {
    }
    %c0 = arith.constant 0 : index
    %c0_1 = arith.constant 0 : index
    %3 = vector.load %arg7[%c0, %c0_1] : memref<16x128xf32, #tpu.memory_space<vmem>>, vector<16x128xf32>
    %c0_2 = arith.constant 0 : index
    %c0_3 = arith.constant 0 : index
    %4 = vector.load %arg3[%c0_2, %c0_3] : memref<16x128xbf16, #tpu.memory_space<vmem>>, vector<16x128xbf16>
    %c0_4 = arith.constant 0 : index
    %c0_5 = arith.constant 0 : index
    %5 = vector.load %arg4[%c0_4, %c0_5] : memref<128x128xbf16, #tpu.memory_space<vmem>>, vector<128x128xbf16>
    %cst = arith.constant dense<0.000000e+00> : vector<16x128xf32>
    %6 = tpu.matmul %4, %5, %cst {dimension_numbers = #tpu.dot_dimension_numbers<[1], [0], [0], [1], [0, 0, 1, 1], [], []>} : vector<16x128xbf16>, vector<128x128xbf16>, vector<16x128xf32> -> vector<16x128xf32>
    %7 = arith.addf %3, %6 : vector<16x128xf32>
    %c0_6 = arith.constant 0 : index
    %c0_7 = arith.constant 0 : index
    %8 = vector.load %arg7[%c0_6, %c0_7] : memref<16x128xf32, #tpu.memory_space<vmem>>, vector<16x128xf32>
    tpu.vector_store %arg7[%c0_6, %c0_7], %7 {strides = array<i32>} : memref<16x128xf32, #tpu.memory_space<vmem>>, vector<16x128xf32>,
    %c0_i32_8 = arith.constant 0 : i32
    %9 = arith.cmpi eq, %arg2, %c0_i32_8 : i32
    %10 = arith.extui %9 : i1 to i32
    %c0_i32_9 = arith.constant 0 : i32
    %11 = arith.cmpi ne, %10, %c0_i32_9 : i32
    scf.if %11 {
      %c0_10 = arith.constant 0 : index
      %c0_11 = arith.constant 0 : index
      %12 = vector.load %arg7[%c0_10, %c0_11] : memref<16x128xf32, #tpu.memory_space<vmem>>, vector<16x128xf32>
      %c0_12 = arith.constant 0 : index
      %c0_13 = arith.constant 0 : index
      %13 = vector.load %arg5[%c0_12, %c0_13] : memref<1x128xf32, #tpu.memory_space<vmem>>, vector<1x128xf32>
      %14 = vector.broadcast %13 : vector<1x128xf32> to vector<16x128xf32>
      %15 = arith.addf %12, %14 : vector<16x128xf32>
      %c0_14 = arith.constant 0 : index
      %c0_15 = arith.constant 0 : index
      %16 = vector.load %arg6[%c0_14, %c0_15] : memref<16x128xf32, #tpu.memory_space<vmem>>, vector<16x128xf32>
      tpu.vector_store %arg6[%c0_14, %c0_15], %15 {strides = array<i32>} : memref<16x128xf32, #tpu.memory_space<vmem>>, vector<16x128xf32>,
    } else {
    }
    return
  }
  func.func @transform_0(%arg0: i32, %arg1: i32, %arg2: i32) -> (i32, i32) {
    %c0_i32 = arith.constant 0 : i32
    return %arg0, %arg2 : i32, i32
  }
  func.func @transform_1(%arg0: i32, %arg1: i32, %arg2: i32) -> (i32, i32) {
    %c0_i32 = arith.constant 0 : i32
    return %arg2, %arg1 : i32, i32
  }
  func.func @transform_2(%arg0: i32, %arg1: i32, %arg2: i32) -> (i32, i32) {
    %c0_i32 = arith.constant 0 : i32
    %c0_i32_0 = arith.constant 0 : i32
    return %c0_i32, %arg1 : i32, i32
  }
  func.func @transform_3(%arg0: i32, %arg1: i32, %arg2: i32) -> (i32, i32) {
    %c0_i32 = arith.constant 0 : i32
    return %arg0, %arg1 : i32, i32
  }
}

</mosaic_0001>

<llo_original>
// kernel: vgg16_forward.21
$region0: #{vgg16_forward.21}
  #allocation0 [shape = 'u32[]', space=smem, size = 0x4, offset = 0x4, fixed_abs, tag = 'smem constant byte address 0x4 - core index']
  #allocation1 [shape = 'u32[144,128]{1,0:T(1,128)}', space=vmem, size = 0x12000, scoped, tag = 'internal scratch']
  %s0 = inlined_call_operand.vmem [shape: bf16[2,34,34,128], index: 0, kind: input, shape index: {}]
  %s1 = inlined_call_operand.vmem [shape: bf16[3,3,128,128], index: 1, kind: input, shape index: {}]
  %s2 = inlined_call_operand.vmem [shape: f32[1,128], index: 2, kind: input, shape index: {}]
  %s3 = inlined_call_operand.vmem [shape: bf16[2,32,32,128], index: 3, kind: output, shape index: {}]
  %s4 = sld [smem:[#allocation0]]
  $region52: #{vgg16_forward.21} parent=0
    _
  %s6 = ssub.s32 1, %s4
  %s7 = scalar_select 0, %s6, %s4
  loop: start=0, step=1, limit=4
  $region2: #{vgg16_forward.21} parent=0 // loop_pre_header
    _
  $region3: #{vgg16_forward.21} parent=0 // loop_header
    %s9 = sphi 0, %s13
    %p10 = scmp.ge.s32.totalorder %s9, 4
    %s19 = sphi 0, %s21
    %s22 = sphi 0, %s19
    %s23 = sphi 0, %s22
    %s39 = sphi 0, %s23
    %s43 = sphi 0, %s43
    %s45 = sphi 0, %s43
    %s46 = sphi 0, %s45
    %s60 = sphi 0, %s46
    %s64 = sphi 0, %s64
    %s66 = sphi 0, %s64
    %s67 = sphi 0, %s66
    %s81 = sphi 0, %s67
    %s87 = sphi 0, %s89
    %s90 = sphi 0, %s87
    %s91 = sphi 0, %s90
    %s107 = sphi 0, %s91
  $region4: #{vgg16_forward.21} parent=0 // loop_header_branch
    %12 = sbr.rel (%p10) target = $region8
  $region5: #{vgg16_forward.21} parent=0 // loop_body
    %s14 = ssub.s32 %s9, 1
    %s15 = ssub.s32 %s9, 2
    %s16 = sadd.s32 %s9, 1
    %s17 = ssub.s32 %s9, %s16
    %p18 = scmp.eq.s32.totalorder %s17, 0
    %s20 = sadd.s32 %s19, 1
    %s21 = scalar_select %p18, %s19, %s20
    %p24 = pneg %p18
    %p25 = scmp.eq.s32.totalorder %s9, 1
    %p26 = por %p24, %p25
    %p27 = scmp.ne.s32.totalorder %s19, %s22
    %p28 = scmp.eq.s32.totalorder %s9, 0
    %p29 = por %p27, %p28
    %p30 = scmp.ne.s32.totalorder %s19, %s22
    %p31 = scmp.eq.s32.totalorder %s14, 1
    %p32 = por %p30, %p31
    %p33 = scmp.ne.s32.totalorder %s22, %s23
    %p34 = scmp.eq.s32.totalorder %s14, 0
    %p35 = por %p33, %p34
    %p36 = scmp.ne.s32.totalorder %s22, %s23
    %p37 = scmp.eq.s32.totalorder %s15, 1
    %p38 = por %p36, %p37
    %p40 = scmp.ne.s32.totalorder %s23, %s39
    %p41 = scmp.eq.s32.totalorder %s15, 0
    %p42 = por %p40, %p41
    %s44 = sadd.s32 %s43, 1
    %p47 = scmp.eq.s32.totalorder %s9, 1
    %p48 = scmp.ne.s32.totalorder %s43, %s45
    %p49 = scmp.eq.s32.totalorder %s9, 0
    %p50 = por %p48, %p49
    %p51 = scmp.ne.s32.totalorder %s43, %s45
    %p52 = scmp.eq.s32.totalorder %s14, 1
    %p53 = por %p51, %p52
    %p54 = scmp.ne.s32.totalorder %s45, %s46
    %p55 = scmp.eq.s32.totalorder %s14, 0
    %p56 = por %p54, %p55
    %p57 = scmp.ne.s32.totalorder %s45, %s46
    %p58 = scmp.eq.s32.totalorder %s15, 1
    %p59 = por %p57, %p58
    %p61 = scmp.ne.s32.totalorder %s46, %s60
    %p62 = scmp.eq.s32.totalorder %s15, 0
    %p63 = por %p61, %p62
    %s65 = sadd.s32 %s64, 1
    %p68 = scmp.eq.s32.totalorder %s9, 1
    %p69 = scmp.ne.s32.totalorder %s64, %s66
    %p70 = scmp.eq.s32.totalorder %s9, 0
    %p71 = por %p69, %p70
    %p72 = scmp.ne.s32.totalorder %s64, %s66
    %p73 = scmp.eq.s32.totalorder %s14, 1
    %p74 = por %p72, %p73
    %p75 = scmp.ne.s32.totalorder %s66, %s67
    %p76 = scmp.eq.s32.totalorder %s14, 0
    %p77 = por %p75, %p76
    %p78 = scmp.ne.s32.totalorder %s66, %s67
    %p79 = scmp.eq.s32.totalorder %s15, 1
    %p80 = por %p78, %p79
    %p82 = scmp.ne.s32.totalorder %s67, %s81
    %p83 = scmp.eq.s32.totalorder %s15, 0
    %p84 = por %p82, %p83
    %s85 = ssub.s32 %s9, %s16
    %p86 = scmp.eq.s32.totalorder %s85, 0
    %s88 = sadd.s32 %s87, 1
    %s89 = scalar_select %p86, %s87, %s88
    %p92 = pneg %p86
    %p93 = scmp.eq.s32.totalorder %s9, 1
    %p94 = por %p92, %p93
    %p95 = scmp.ne.s32.totalorder %s87, %s90
    %p96 = scmp.eq.s32.totalorder %s9, 0
    %p97 = por %p95, %p96
    %p98 = scmp.ne.s32.totalorder %s87, %s90
    %p99 = scmp.eq.s32.totalorder %s14, 1
    %p100 = por %p98, %p99
    %p101 = scmp.ne.s32.totalorder %s90, %s91
    %p102 = scmp.eq.s32.totalorder %s14, 0
    %p103 = por %p101, %p102
    %p104 = scmp.ne.s32.totalorder %s90, %s91
    %p105 = scmp.eq.s32.totalorder %s15, 1
    %p106 = por %p104, %p105
    %p108 = scmp.ne.s32.totalorder %s91, %s107
    %p109 = scmp.eq.s32.totalorder %s15, 0
    %p110 = por %p108, %p109
    %p111 = scmp.le.s32.totalorder 1, %s9
    %p112 = scmp.lt.s32.totalorder %s9, 3
    %p113 = pnand %p111, %p112
    %p114 = pneg %p113
    // Predicated region
    $region9: #{vgg16_forward.21} parent=5 // pred_check
      _
    $region10: #{vgg16_forward.21} parent=5 // pred_check_branch
      %116 = sbr.rel (%p113) target = $region12
    $region11: #{vgg16_forward.21} parent=5 // pred_region
      %s117 = ssub.s32 %s9, 1
      // Predicated region
      $region13: #{vgg16_forward.21} parent=11 // pred_check
        %p118 = pneg %p56
      $region14: #{vgg16_forward.21} parent=11 // pred_check_branch
        %120 = sbr.rel (%p118) target = $region16
      $region15: #{vgg16_forward.21} parent=11 // pred_region
        _
      $region16: #{vgg16_forward.21} parent=11 // pred_fallthru
        _
      // Predicated region
      $region17: #{vgg16_forward.21} parent=11 // pred_check
        %p121 = pneg %p77
      $region18: #{vgg16_forward.21} parent=11 // pred_check_branch
        %123 = sbr.rel (%p121) target = $region20
      $region19: #{vgg16_forward.21} parent=11 // pred_region
        _
      $region20: #{vgg16_forward.21} parent=11 // pred_fallthru
        _
    $region12: #{vgg16_forward.21} parent=5 // pred_fallthru
      _
    %p124 = scmp.lt.s32.totalorder %s9, 2
    // Predicated region
    $region21: #{vgg16_forward.21} parent=5 // pred_check
      %p125 = pneg %p124
    $region22: #{vgg16_forward.21} parent=5 // pred_check_branch
      %127 = sbr.rel (%p125) target = $region24
    $region23: #{vgg16_forward.21} parent=5 // pred_region
      // Predicated region
      $region25: #{vgg16_forward.21} parent=23 // pred_check
        %p128 = pneg %p29
      $region26: #{vgg16_forward.21} parent=23 // pred_check_branch
        %130 = sbr.rel (%p128) target = $region28
      $region27: #{vgg16_forward.21} parent=23 // pred_region
        %p131 = scmp.lt.s32.totalorder %s9, 1
        %s132 = scalar_select %p131, %s9, 1
        %s133 = smul.addr %s132, 170
        %s134 = smul.addr %s133, 4
        %s135 = scalar_lea.vmem %s0, %s134
      $region28: #{vgg16_forward.21} parent=23 // pred_fallthru
        _
    $region24: #{vgg16_forward.21} parent=5 // pred_fallthru
      _
    %p136 = scmp.le.s32.totalorder 1, %s9
    %p137 = scmp.lt.s32.totalorder %s9, 3
    %p138 = pnand %p136, %p137
    %p139 = pneg %p138
    // Predicated region
    $region29: #{vgg16_forward.21} parent=5 // pred_check
      _
    $region30: #{vgg16_forward.21} parent=5 // pred_check_branch
      %141 = sbr.rel (%p138) target = $region32
    $region31: #{vgg16_forward.21} parent=5 // pred_region
      %s142 = ssub.s32 %s9, 1
      %p143 = scmp.lt.s32.totalorder %s14, 1
      %s144 = scalar_select %p143, %s14, 1
      %s145 = smul.addr %s144, 170
      %s146 = smul.addr %s145, 4
      %s147 = scalar_lea.vmem %s0, %s146
      %p148 = pneg %p35
      %p149 = pneg %p32
      %p150 = pneg %p56
      %p151 = pneg %p53
      %p152 = pneg %p77
      %p153 = pneg %p74
      %p154 = pneg %p103
      %p155 = pneg %p100
      %p156 = scmp.lt.s32.totalorder %s14, 1
      %s157 = scalar_select %p156, %s14, 1
      %s158 = smul.addr %s157, 128
      %s159 = smul.addr %s158, 4
      %s160 = scalar_lea.vmem %s3, %s159
      %p161 = scmp.lt.s32.totalorder %s14, 1
      %s162 = scalar_select %p161, %s14, 1
      %s163 = smul.addr %s162, 170
      %s164 = smul.addr %s163, 4
      %s165 = scalar_lea.vmem %s0, %s164
      %p166 = scmp.lt.s32.totalorder %s14, 1
      %s167 = scalar_select %p166, %s14, 1
      %s168 = smul.addr %s167, 128
      %s169 = smul.addr %s168, 4
      %s170 = scalar_lea.vmem %s3, %s169
      loop: start=0, step=1, limit=32
      $region33: #{vgg16_forward.21} parent=31 // loop_pre_header
        _
      $region34: #{vgg16_forward.21} parent=31 // loop_header
        %s173 = sphi 0, %s177
        %p174 = scmp.ge.s32.totalorder %s173, 32
      $region35: #{vgg16_forward.21} parent=31 // loop_header_branch
        %176 = sbr.rel (%p174) target = $region39
      $region36: #{vgg16_forward.21} parent=31 // loop_body
        %s178 = smul.u32 %s173, 5
        %s179 = smul.addr %s178, 4
        %s180 = scalar_lea.vmem %s165, %s179
        %v181 = vld [vmem:[%s180] sm:$0xf]
        %v182 = vld [vmem:[%s180 + $0x4] sm:$0xf]
        %v183 = vld [vmem:[%s180 + $0x8] sm:$0xf]
        %v184 = vld [vmem:[%s180 + $0xc] sm:$0xf]
        %v185 = vld [vmem:[%s1] sm:$0xf]
        %v186 = vld [vmem:[%s1 + $0x4] sm:$0xf]
        %v187 = vld [vmem:[%s1 + $0x8] sm:$0xf]
        %v188 = vld [vmem:[%s1 + $0xc] sm:$0xf]
        %v189 = vld [vmem:[%s1 + $0x10] sm:$0xf]
        %v190 = vld [vmem:[%s1 + $0x14] sm:$0xf]
        %v191 = vld [vmem:[%s1 + $0x18] sm:$0xf]
        %v192 = vld [vmem:[%s1 + $0x1c] sm:$0xf]
        %v193 = vld [vmem:[%s1 + $0x20] sm:$0xf]
        %v194 = vld [vmem:[%s1 + $0x24] sm:$0xf]
        %v195 = vld [vmem:[%s1 + $0x28] sm:$0xf]
        %v196 = vld [vmem:[%s1 + $0x2c] sm:$0xf]
        %v197 = vld [vmem:[%s1 + $0x30] sm:$0xf]
        %v198 = vld [vmem:[%s1 + $0x34] sm:$0xf]
        %v199 = vld [vmem:[%s1 + $0x38] sm:$0xf]
        %v200 = vld [vmem:[%s1 + $0x3c] sm:$0xf]
        %v201 = vld [vmem:[%s180 + $0x10] sm:$0x1]
        %s202 = scalar_lea.vmem %s1, 64
        %v203 = vld [vmem:[%s202] sm:$0xf]
        %v204 = vld [vmem:[%s202 + $0x4] sm:$0xf]
        %v205 = vld [vmem:[%s202 + $0x8] sm:$0xf]
        %v206 = vld [vmem:[%s202 + $0xc] sm:$0xf]
        %v207 = vld [vmem:[%s202 + $0x10] sm:$0xf]
        %v208 = vld [vmem:[%s202 + $0x14] sm:$0xf]
        %v209 = vld [vmem:[%s202 + $0x18] sm:$0xf]
        %v210 = vld [vmem:[%s202 + $0x1c] sm:$0xf]
        %v211 = vld [vmem:[%s202 + $0x20] sm:$0xf]
        %v212 = vld [vmem:[%s202 + $0x24] sm:$0xf]
        %v213 = vld [vmem:[%s202 + $0x28] sm:$0xf]
        %v214 = vld [vmem:[%s202 + $0x2c] sm:$0xf]
        %v215 = vld [vmem:[%s202 + $0x30] sm:$0xf]
        %v216 = vld [vmem:[%s202 + $0x34] sm:$0xf]
        %v217 = vld [vmem:[%s202 + $0x38] sm:$0xf]
        %v218 = vld [vmem:[%s202 + $0x3c] sm:$0xf]
        %v224 = vunpack.c.l.b16 %v181
        %v225 = vunpack.c.l.b16 %v182
        %v226 = vunpack.c.l.b16 %v183
        %v227 = vunpack.c.l.b16 %v184
        %v228 = vunpack.c.l.b16 %v201
        %v229 = vpack.c.b16 %v225, %v224
        %v230 = vpack.c.b16 %v227, %v226
        %v231 = vpack.c.b16 %v228, %v228
        %vm232 = vsmask.f32 7424
        %v234 = vshrl.u32 %v229, 16
        %v236 = vshll.u32 %v229, 16
        %v238 = vrot.slane %v236, 1
        %v239 = vor.u32 %v234, %v238
        %v241 = vshll.u32 %v230, 16
        %v243 = vrot.slane %v241, 1
        %v244 = vsel %vm232, %v239, %v243
        %v245 = vshrl.u32 %v230, 16
        %v247 = vor.u32 %v245, %v243
        %v249 = vshll.u32 %v231, 16
        %v251 = vrot.slane %v249, 1
        %v252 = vsel %vm232, %v247, %v251
        %v271 = vunpack.c.l.b16 %v203
        %v272 = vunpack.c.l.b16 %v204
        %v273 = vunpack.c.l.b16 %v205
        %v274 = vunpack.c.l.b16 %v206
        %v275 = vunpack.c.l.b16 %v207
        %v276 = vunpack.c.l.b16 %v208
        %v277 = vunpack.c.l.b16 %v209
        %v278 = vunpack.c.l.b16 %v210
        %v279 = vunpack.c.l.b16 %v211
        %v280 = vunpack.c.l.b16 %v212
        %v281 = vunpack.c.l.b16 %v213
        %v282 = vunpack.c.l.b16 %v214
        %v283 = vunpack.c.l.b16 %v215
        %v284 = vunpack.c.l.b16 %v216
        %v285 = vunpack.c.l.b16 %v217
        %v286 = vunpack.c.l.b16 %v218
        %v287 = vpack.c.b16 %v272, %v271
        %v288 = vpack.c.b16 %v274, %v273
        %v289 = vpack.c.b16 %v276, %v275
        %v290 = vpack.c.b16 %v278, %v277
        %v291 = vpack.c.b16 %v280, %v279
        %v292 = vpack.c.b16 %v282, %v281
        %v293 = vpack.c.b16 %v284, %v283
        %v294 = vpack.c.b16 %v286, %v285
        %303 = vmatprep.subr.bf16.mxu0 0
        %304 = vmatpush1.bf16.msra.mxu0 %v287
        %305 = vmatprep.subr.bf16.mxu0 0
        %306 = vmatpush1.bf16.msra.mxu0 %v288
        %307 = vmatprep.subr.bf16.mxu0 0
        %308 = vmatpush1.bf16.msra.mxu0 %v289
        %309 = vmatprep.subr.bf16.mxu0 0
        %310 = vmatpush1.bf16.msra.mxu0 %v290
        %311 = vmatprep.subr.bf16.mxu0 0
        %312 = vmatpush1.bf16.msra.mxu0 %v291
        %313 = vmatprep.subr.bf16.mxu0 0
        %314 = vmatpush1.bf16.msra.mxu0 %v292
        %315 = vmatprep.subr.bf16.mxu0 0
        %316 = vmatpush1.bf16.msra.mxu0 %v293
        %317 = vmatprep.subr.bf16.mxu0 0
        %318 = vmatpush1.bf16.msra.mxu0 %v294
        %319 = vmatprep.subr.bf16.mxu0 0
        %320 = vmatpush1.bf16.msra.mxu0 0
        %321 = vmatprep.subr.bf16.mxu0 0
        %322 = vmatpush1.bf16.msra.mxu0 0
        %323 = vmatprep.subr.bf16.mxu0 0
        %324 = vmatpush1.bf16.msra.mxu0 0
        %325 = vmatprep.subr.bf16.mxu0 0
        %326 = vmatpush1.bf16.msra.mxu0 0
        %327 = vmatprep.subr.bf16.mxu0 0
        %328 = vmatpush1.bf16.msra.mxu0 0
        %329 = vmatprep.subr.bf16.mxu0 0
        %330 = vmatpush1.bf16.msra.mxu0 0
        %331 = vmatprep.subr.bf16.mxu0 0
        %332 = vmatpush1.bf16.msra.mxu0 0
        %333 = vmatprep.subr.bf16.mxu0 0
        %334 = vmatpush1.bf16.msra.mxu0 0
        %335 = vmatprep.mubr.bf16.mxu0 0
        %336 = vmatmul.mubr.bf16.gmra.mrb[0].mxu0 %v244
        %v337 = vpop.f32.mrb[0].mxu0
        %v338 = vadd.f32 0.0, %v337
        %v339 = vpop.f32.mrb[0].mxu0
        %v340 = vpop.f32.mrb[0].mxu0
        %v341 = vadd.f32 0.0, %v340
        %v342 = vpop.f32.mrb[0].mxu0
        %343 = vmatprep.mubr.bf16.mxu0 0
        %344 = vmatmul.mubr.bf16.gmra.mrb[0].mxu0 %v252
        %v345 = vpop.f32.mrb[0].mxu0
        %v346 = vadd.f32 0.0, %v345
        %v347 = vpop.f32.mrb[0].mxu0
        %v348 = vpop.f32.mrb[0].mxu0
        %v349 = vadd.f32 0.0, %v348
        %v350 = vpop.f32.mrb[0].mxu0
        %351 = vdwg.mxu0
        %v370 = vunpack.c.l.b16 %v185
        %v371 = vunpack.c.l.b16 %v186
        %v372 = vunpack.c.l.b16 %v187
        %v373 = vunpack.c.l.b16 %v188
        %v374 = vunpack.c.l.b16 %v189
        %v375 = vunpack.c.l.b16 %v190
        %v376 = vunpack.c.l.b16 %v191
        %v377 = vunpack.c.l.b16 %v192
        %v378 = vunpack.c.l.b16 %v193
        %v379 = vunpack.c.l.b16 %v194
        %v380 = vunpack.c.l.b16 %v195
        %v381 = vunpack.c.l.b16 %v196
        %v382 = vunpack.c.l.b16 %v197
        %v383 = vunpack.c.l.b16 %v198
        %v384 = vunpack.c.l.b16 %v199
        %v385 = vunpack.c.l.b16 %v200
        %v386 = vpack.c.b16 %v371, %v370
        %v387 = vpack.c.b16 %v373, %v372
        %v388 = vpack.c.b16 %v375, %v374
        %v389 = vpack.c.b16 %v377, %v376
        %v390 = vpack.c.b16 %v379, %v378
        %v391 = vpack.c.b16 %v381, %v380
        %v392 = vpack.c.b16 %v383, %v382
        %v393 = vpack.c.b16 %v385, %v384
        %402 = vmatprep.subr.bf16.mxu0 0
        %403 = vmatpush1.bf16.msra.mxu0 %v386
        %404 = vmatprep.subr.bf16.mxu0 0
        %405 = vmatpush1.bf16.msra.mxu0 %v387
        %406 = vmatprep.subr.bf16.mxu0 0
        %407 = vmatpush1.bf16.msra.mxu0 %v388
        %408 = vmatprep.subr.bf16.mxu0 0
        %409 = vmatpush1.bf16.msra.mxu0 %v389
        %410 = vmatprep.subr.bf16.mxu0 0
        %411 = vmatpush1.bf16.msra.mxu0 %v390
        %412 = vmatprep.subr.bf16.mxu0 0
        %413 = vmatpush1.bf16.msra.mxu0 %v391
        %414 = vmatprep.subr.bf16.mxu0 0
        %415 = vmatpush1.bf16.msra.mxu0 %v392
        %416 = vmatprep.subr.bf16.mxu0 0
        %417 = vmatpush1.bf16.msra.mxu0 %v393
        %418 = vmatprep.subr.bf16.mxu0 0
        %419 = vmatpush1.bf16.msra.mxu0 0
        %420 = vmatprep.subr.bf16.mxu0 0
        %421 = vmatpush1.bf16.msra.mxu0 0
        %422 = vmatprep.subr.bf16.mxu0 0
        %423 = vmatpush1.bf16.msra.mxu0 0
        %424 = vmatprep.subr.bf16.mxu0 0
        %425 = vmatpush1.bf16.msra.mxu0 0
        %426 = vmatprep.subr.bf16.mxu0 0
        %427 = vmatpush1.bf16.msra.mxu0 0
        %428 = vmatprep.subr.bf16.mxu0 0
        %429 = vmatpush1.bf16.msra.mxu0 0
        %430 = vmatprep.subr.bf16.mxu0 0
        %431 = vmatpush1.bf16.msra.mxu0 0
        %432 = vmatprep.subr.bf16.mxu0 0
        %433 = vmatpush1.bf16.msra.mxu0 0
        %434 = vmatprep.mubr.bf16.mxu0 0
        %435 = vmatmul.mubr.bf16.gmra.mrb[0].mxu0 %v229
        %v436 = vpop.f32.mrb[0].mxu0
        %v437 = vadd.f32 %v338, %v436
        %v438 = vpop.f32.mrb[0].mxu0
        %v439 = vpop.f32.mrb[0].mxu0
        %v440 = vadd.f32 %v341, %v439
        %v441 = vpop.f32.mrb[0].mxu0
        %442 = vmatprep.mubr.bf16.mxu0 0
        %443 = vmatmul.mubr.bf16.gmra.mrb[0].mxu0 %v230
        %v444 = vpop.f32.mrb[0].mxu0
        %v445 = vadd.f32 %v346, %v444
        %v446 = vpop.f32.mrb[0].mxu0
        %v447 = vpop.f32.mrb[0].mxu0
        %v448 = vadd.f32 %v349, %v447
        %v449 = vpop.f32.mrb[0].mxu0
        %450 = vdwg.mxu0
        %v451 = vld [vmem:[%s180] sm:$0xe]
        %s452 = scalar_lea.vmem %s1, 128
        %v453 = vld [vmem:[%s452] sm:$0xf]
        %v454 = vld [vmem:[%s452 + $0x4] sm:$0xf]
        %v455 = vld [vmem:[%s452 + $0x8] sm:$0xf]
        %v456 = vld [vmem:[%s452 + $0xc] sm:$0xf]
        %v457 = vld [vmem:[%s452 + $0x10] sm:$0xf]
        %v458 = vld [vmem:[%s452 + $0x14] sm:$0xf]
        %v459 = vld [vmem:[%s452 + $0x18] sm:$0xf]
        %v460 = vld [vmem:[%s452 + $0x1c] sm:$0xf]
        %v461 = vld [vmem:[%s452 + $0x20] sm:$0xf]
        %v462 = vld [vmem:[%s452 + $0x24] sm:$0xf]
        %v463 = vld [vmem:[%s452 + $0x28] sm:$0xf]
        %v464 = vld [vmem:[%s452 + $0x2c] sm:$0xf]
        %v465 = vld [vmem:[%s452 + $0x30] sm:$0xf]
        %v466 = vld [vmem:[%s452 + $0x34] sm:$0xf]
        %v467 = vld [vmem:[%s452 + $0x38] sm:$0xf]
        %v468 = vld [vmem:[%s452 + $0x3c] sm:$0xf]
        %v470 = vunpack.c.l.b16 %v451
        %v471 = vpack.c.b16 %v225, %v470
        %vm472 = vcmask 1046528
        %v473 = vrot.slane %v471, 1
        %v474 = vrot.slane %v230, 1
        %v475 = vsel %vm472, %v473, %v474
        %v476 = vrot.slane %v231, 1
        %v477 = vsel %vm472, %v474, %v476
        %v496 = vunpack.c.l.b16 %v453
        %v497 = vunpack.c.l.b16 %v454
        %v498 = vunpack.c.l.b16 %v455
        %v499 = vunpack.c.l.b16 %v456
        %v500 = vunpack.c.l.b16 %v457
        %v501 = vunpack.c.l.b16 %v458
        %v502 = vunpack.c.l.b16 %v459
        %v503 = vunpack.c.l.b16 %v460
        %v504 = vunpack.c.l.b16 %v461
        %v505 = vunpack.c.l.b16 %v462
        %v506 = vunpack.c.l.b16 %v463
        %v507 = vunpack.c.l.b16 %v464
        %v508 = vunpack.c.l.b16 %v465
        %v509 = vunpack.c.l.b16 %v466
        %v510 = vunpack.c.l.b16 %v467
        %v511 = vunpack.c.l.b16 %v468
        %v512 = vpack.c.b16 %v497, %v496
        %v513 = vpack.c.b16 %v499, %v498
        %v514 = vpack.c.b16 %v501, %v500
        %v515 = vpack.c.b16 %v503, %v502
        %v516 = vpack.c.b16 %v505, %v504
        %v517 = vpack.c.b16 %v507, %v506
        %v518 = vpack.c.b16 %v509, %v508
        %v519 = vpack.c.b16 %v511, %v510
        %528 = vmatprep.subr.bf16.mxu0 0
        %529 = vmatpush1.bf16.msra.mxu0 %v512
        %530 = vmatprep.subr.bf16.mxu0 0
        %531 = vmatpush1.bf16.msra.mxu0 %v513
        %532 = vmatprep.subr.bf16.mxu0 0
        %533 = vmatpush1.bf16.msra.mxu0 %v514
        %534 = vmatprep.subr.bf16.mxu0 0
        %535 = vmatpush1.bf16.msra.mxu0 %v515
        %536 = vmatprep.subr.bf16.mxu0 0
        %537 = vmatpush1.bf16.msra.mxu0 %v516
        %538 = vmatprep.subr.bf16.mxu0 0
        %539 = vmatpush1.bf16.msra.mxu0 %v517
        %540 = vmatprep.subr.bf16.mxu0 0
        %541 = vmatpush1.bf16.msra.mxu0 %v518
        %542 = vmatprep.subr.bf16.mxu0 0
        %543 = vmatpush1.bf16.msra.mxu0 %v519
        %544 = vmatprep.subr.bf16.mxu0 0
        %545 = vmatpush1.bf16.msra.mxu0 0
        %546 = vmatprep.subr.bf16.mxu0 0
        %547 = vmatpush1.bf16.msra.mxu0 0
        %548 = vmatprep.subr.bf16.mxu0 0
        %549 = vmatpush1.bf16.msra.mxu0 0
        %550 = vmatprep.subr.bf16.mxu0 0
        %551 = vmatpush1.bf16.msra.mxu0 0
        %552 = vmatprep.subr.bf16.mxu0 0
        %553 = vmatpush1.bf16.msra.mxu0 0
        %554 = vmatprep.subr.bf16.mxu0 0
        %555 = vmatpush1.bf16.msra.mxu0 0
        %556 = vmatprep.subr.bf16.mxu0 0
        %557 = vmatpush1.bf16.msra.mxu0 0
        %558 = vmatprep.subr.bf16.mxu0 0
        %559 = vmatpush1.bf16.msra.mxu0 0
        %560 = vmatprep.mubr.bf16.mxu0 0
        %561 = vmatmul.mubr.bf16.gmra.mrb[0].mxu0 %v475
        %v562 = vpop.f32.mrb[0].mxu0
        %v563 = vadd.f32 0.0, %v562
        %v564 = vpop.f32.mrb[0].mxu0
        %v565 = vpop.f32.mrb[0].mxu0
        %v566 = vadd.f32 0.0, %v565
        %v567 = vpop.f32.mrb[0].mxu0
        %568 = vmatprep.mubr.bf16.mxu0 0
        %569 = vmatmul.mubr.bf16.gmra.mrb[0].mxu0 %v477
        %v570 = vpop.f32.mrb[0].mxu0
        %v571 = vadd.f32 0.0, %v570
        %v572 = vpop.f32.mrb[0].mxu0
        %v573 = vpop.f32.mrb[0].mxu0
        %v574 = vadd.f32 0.0, %v573
        %v575 = vpop.f32.mrb[0].mxu0
        %576 = vdwg.mxu0
        %v577 = vadd.f32 %v437, %v563
        %v578 = vadd.f32 %v440, %v566
        %v579 = vadd.f32 %v445, %v571
        %v580 = vadd.f32 %v448, %v574
        %s581 = sadd.s32 %s173, 1
        %s582 = smul.u32 %s581, 5
        %s583 = smul.addr %s582, 4
        %s584 = scalar_lea.vmem %s165, %s583
        %v585 = vld [vmem:[%s584] sm:$0xf]
        %v586 = vld [vmem:[%s584 + $0x4] sm:$0xf]
        %v587 = vld [vmem:[%s584 + $0x8] sm:$0xf]
        %v588 = vld [vmem:[%s584 + $0xc] sm:$0xf]
        %s589 = scalar_lea.vmem %s1, 192
        %v590 = vld [vmem:[%s589] sm:$0xf]
        %v591 = vld [vmem:[%s589 + $0x4] sm:$0xf]
        %v592 = vld [vmem:[%s589 + $0x8] sm:$0xf]
        %v593 = vld [vmem:[%s589 + $0xc] sm:$0xf]
        %v594 = vld [vmem:[%s589 + $0x10] sm:$0xf]
        %v595 = vld [vmem:[%s589 + $0x14] sm:$0xf]
        %v596 = vld [vmem:[%s589 + $0x18] sm:$0xf]
        %v597 = vld [vmem:[%s589 + $0x1c] sm:$0xf]
        %v598 = vld [vmem:[%s589 + $0x20] sm:$0xf]
        %v599 = vld [vmem:[%s589 + $0x24] sm:$0xf]
        %v600 = vld [vmem:[%s589 + $0x28] sm:$0xf]
        %v601 = vld [vmem:[%s589 + $0x2c] sm:$0xf]
        %v602 = vld [vmem:[%s589 + $0x30] sm:$0xf]
        %v603 = vld [vmem:[%s589 + $0x34] sm:$0xf]
        %v604 = vld [vmem:[%s589 + $0x38] sm:$0xf]
        %v605 = vld [vmem:[%s589 + $0x3c] sm:$0xf]
        %v610 = vunpack.c.l.b16 %v585
        %v611 = vunpack.c.l.b16 %v586
        %v612 = vunpack.c.l.b16 %v587
        %v613 = vunpack.c.l.b16 %v588
        %v614 = vpack.c.b16 %v611, %v610
        %v615 = vpack.c.b16 %v613, %v612
        %v634 = vunpack.c.l.b16 %v590
        %v635 = vunpack.c.l.b16 %v591
        %v636 = vunpack.c.l.b16 %v592
        %v637 = vunpack.c.l.b16 %v593
        %v638 = vunpack.c.l.b16 %v594
        %v639 = vunpack.c.l.b16 %v595
        %v640 = vunpack.c.l.b16 %v596
        %v641 = vunpack.c.l.b16 %v597
        %v642 = vunpack.c.l.b16 %v598
        %v643 = vunpack.c.l.b16 %v599
        %v644 = vunpack.c.l.b16 %v600
        %v645 = vunpack.c.l.b16 %v601
        %v646 = vunpack.c.l.b16 %v602
        %v647 = vunpack.c.l.b16 %v603
        %v648 = vunpack.c.l.b16 %v604
        %v649 = vunpack.c.l.b16 %v605
        %v650 = vpack.c.b16 %v635, %v634
        %v651 = vpack.c.b16 %v637, %v636
        %v652 = vpack.c.b16 %v639, %v638
        %v653 = vpack.c.b16 %v641, %v640
        %v654 = vpack.c.b16 %v643, %v642
        %v655 = vpack.c.b16 %v645, %v644
        %v656 = vpack.c.b16 %v647, %v646
        %v657 = vpack.c.b16 %v649, %v648
        %666 = vmatprep.subr.bf16.mxu0 0
        %667 = vmatpush1.bf16.msra.mxu0 %v650
        %668 = vmatprep.subr.bf16.mxu0 0
        %669 = vmatpush1.bf16.msra.mxu0 %v651
        %670 = vmatprep.subr.bf16.mxu0 0
        %671 = vmatpush1.bf16.msra.mxu0 %v652
        %672 = vmatprep.subr.bf16.mxu0 0
        %673 = vmatpush1.bf16.msra.mxu0 %v653
        %674 = vmatprep.subr.bf16.mxu0 0
        %675 = vmatpush1.bf16.msra.mxu0 %v654
        %676 = vmatprep.subr.bf16.mxu0 0
        %677 = vmatpush1.bf16.msra.mxu0 %v655
        %678 = vmatprep.subr.bf16.mxu0 0
        %679 = vmatpush1.bf16.msra.mxu0 %v656
        %680 = vmatprep.subr.bf16.mxu0 0
        %681 = vmatpush1.bf16.msra.mxu0 %v657
        %682 = vmatprep.subr.bf16.mxu0 0
        %683 = vmatpush1.bf16.msra.mxu0 0
        %684 = vmatprep.subr.bf16.mxu0 0
        %685 = vmatpush1.bf16.msra.mxu0 0
        %686 = vmatprep.subr.bf16.mxu0 0
        %687 = vmatpush1.bf16.msra.mxu0 0
        %688 = vmatprep.subr.bf16.mxu0 0
        %689 = vmatpush1.bf16.msra.mxu0 0
        %690 = vmatprep.subr.bf16.mxu0 0
        %691 = vmatpush1.bf16.msra.mxu0 0
        %692 = vmatprep.subr.bf16.mxu0 0
        %693 = vmatpush1.bf16.msra.mxu0 0
        %694 = vmatprep.subr.bf16.mxu0 0
        %695 = vmatpush1.bf16.msra.mxu0 0
        %696 = vmatprep.subr.bf16.mxu0 0
        %697 = vmatpush1.bf16.msra.mxu0 0
        %698 = vmatprep.mubr.bf16.mxu0 0
        %699 = vmatmul.mubr.bf16.gmra.mrb[0].mxu0 %v614
        %v700 = vpop.f32.mrb[0].mxu0
        %v701 = vadd.f32 0.0, %v700
        %v702 = vpop.f32.mrb[0].mxu0
        %v703 = vpop.f32.mrb[0].mxu0
        %v704 = vadd.f32 0.0, %v703
        %v705 = vpop.f32.mrb[0].mxu0
        %706 = vmatprep.mubr.bf16.mxu0 0
        %707 = vmatmul.mubr.bf16.gmra.mrb[0].mxu0 %v615
        %v708 = vpop.f32.mrb[0].mxu0
        %v709 = vadd.f32 0.0, %v708
        %v710 = vpop.f32.mrb[0].mxu0
        %v711 = vpop.f32.mrb[0].mxu0
        %v712 = vadd.f32 0.0, %v711
        %v713 = vpop.f32.mrb[0].mxu0
        %714 = vdwg.mxu0
        %v715 = vadd.f32 %v577, %v701
        %v716 = vadd.f32 %v578, %v704
        %v717 = vadd.f32 %v579, %v709
        %v718 = vadd.f32 %v580, %v712
        %v719 = vld [vmem:[%s584] sm:$0xf]
        %v720 = vld [vmem:[%s584 + $0x4] sm:$0xf]
        %v721 = vld [vmem:[%s584 + $0x8] sm:$0xf]
        %v722 = vld [vmem:[%s584 + $0xc] sm:$0xf]
        %v723 = vld [vmem:[%s584 + $0x10] sm:$0x1]
        %s724 = scalar_lea.vmem %s1, 256
        %v725 = vld [vmem:[%s724] sm:$0xf]
        %v726 = vld [vmem:[%s724 + $0x4] sm:$0xf]
        %v727 = vld [vmem:[%s724 + $0x8] sm:$0xf]
        %v728 = vld [vmem:[%s724 + $0xc] sm:$0xf]
        %v729 = vld [vmem:[%s724 + $0x10] sm:$0xf]
        %v730 = vld [vmem:[%s724 + $0x14] sm:$0xf]
        %v731 = vld [vmem:[%s724 + $0x18] sm:$0xf]
        %v732 = vld [vmem:[%s724 + $0x1c] sm:$0xf]
        %v733 = vld [vmem:[%s724 + $0x20] sm:$0xf]
        %v734 = vld [vmem:[%s724 + $0x24] sm:$0xf]
        %v735 = vld [vmem:[%s724 + $0x28] sm:$0xf]
        %v736 = vld [vmem:[%s724 + $0x2c] sm:$0xf]
        %v737 = vld [vmem:[%s724 + $0x30] sm:$0xf]
        %v738 = vld [vmem:[%s724 + $0x34] sm:$0xf]
        %v739 = vld [vmem:[%s724 + $0x38] sm:$0xf]
        %v740 = vld [vmem:[%s724 + $0x3c] sm:$0xf]
        %v746 = vunpack.c.l.b16 %v719
        %v747 = vunpack.c.l.b16 %v720
        %v748 = vunpack.c.l.b16 %v721
        %v749 = vunpack.c.l.b16 %v722
        %v750 = vunpack.c.l.b16 %v723
        %v751 = vpack.c.b16 %v747, %v746
        %v752 = vpack.c.b16 %v749, %v748
        %v753 = vpack.c.b16 %v750, %v750
        %v755 = vshrl.u32 %v751, 16
        %v757 = vshll.u32 %v751, 16
        %v759 = vrot.slane %v757, 1
        %v760 = vor.u32 %v755, %v759
        %v762 = vshll.u32 %v752, 16
        %v764 = vrot.slane %v762, 1
        %v765 = vsel %vm232, %v760, %v764
        %v766 = vshrl.u32 %v752, 16
        %v768 = vor.u32 %v766, %v764
        %v770 = vshll.u32 %v753, 16
        %v772 = vrot.slane %v770, 1
        %v773 = vsel %vm232, %v768, %v772
        %v792 = vunpack.c.l.b16 %v725
        %v793 = vunpack.c.l.b16 %v726
        %v794 = vunpack.c.l.b16 %v727
        %v795 = vunpack.c.l.b16 %v728
        %v796 = vunpack.c.l.b16 %v729
        %v797 = vunpack.c.l.b16 %v730
        %v798 = vunpack.c.l.b16 %v731
        %v799 = vunpack.c.l.b16 %v732
        %v800 = vunpack.c.l.b16 %v733
        %v801 = vunpack.c.l.b16 %v734
        %v802 = vunpack.c.l.b16 %v735
        %v803 = vunpack.c.l.b16 %v736
        %v804 = vunpack.c.l.b16 %v737
        %v805 = vunpack.c.l.b16 %v738
        %v806 = vunpack.c.l.b16 %v739
        %v807 = vunpack.c.l.b16 %v740
        %v808 = vpack.c.b16 %v793, %v792
        %v809 = vpack.c.b16 %v795, %v794
        %v810 = vpack.c.b16 %v797, %v796
        %v811 = vpack.c.b16 %v799, %v798
        %v812 = vpack.c.b16 %v801, %v800
        %v813 = vpack.c.b16 %v803, %v802
        %v814 = vpack.c.b16 %v805, %v804
        %v815 = vpack.c.b16 %v807, %v806
        %824 = vmatprep.subr.bf16.mxu0 0
        %825 = vmatpush1.bf16.msra.mxu0 %v808
        %826 = vmatprep.subr.bf16.mxu0 0
        %827 = vmatpush1.bf16.msra.mxu0 %v809
        %828 = vmatprep.subr.bf16.mxu0 0
        %829 = vmatpush1.bf16.msra.mxu0 %v810
        %830 = vmatprep.subr.bf16.mxu0 0
        %831 = vmatpush1.bf16.msra.mxu0 %v811
        %832 = vmatprep.subr.bf16.mxu0 0
        %833 = vmatpush1.bf16.msra.mxu0 %v812
        %834 = vmatprep.subr.bf16.mxu0 0
        %835 = vmatpush1.bf16.msra.mxu0 %v813
        %836 = vmatprep.subr.bf16.mxu0 0
        %837 = vmatpush1.bf16.msra.mxu0 %v814
        %838 = vmatprep.subr.bf16.mxu0 0
        %839 = vmatpush1.bf16.msra.mxu0 %v815
        %840 = vmatprep.subr.bf16.mxu0 0
        %841 = vmatpush1.bf16.msra.mxu0 0
        %842 = vmatprep.subr.bf16.mxu0 0
        %843 = vmatpush1.bf16.msra.mxu0 0
        %844 = vmatprep.subr.bf16.mxu0 0
        %845 = vmatpush1.bf16.msra.mxu0 0
        %846 = vmatprep.subr.bf16.mxu0 0
        %847 = vmatpush1.bf16.msra.mxu0 0
        %848 = vmatprep.subr.bf16.mxu0 0
        %849 = vmatpush1.bf16.msra.mxu0 0
        %850 = vmatprep.subr.bf16.mxu0 0
        %851 = vmatpush1.bf16.msra.mxu0 0
        %852 = vmatprep.subr.bf16.mxu0 0
        %853 = vmatpush1.bf16.msra.mxu0 0
        %854 = vmatprep.subr.bf16.mxu0 0
        %855 = vmatpush1.bf16.msra.mxu0 0
        %856 = vmatprep.mubr.bf16.mxu0 0
        %857 = vmatmul.mubr.bf16.gmra.mrb[0].mxu0 %v765
        %v858 = vpop.f32.mrb[0].mxu0
        %v859 = vadd.f32 0.0, %v858
        %v860 = vpop.f32.mrb[0].mxu0
        %v861 = vpop.f32.mrb[0].mxu0
        %v862 = vadd.f32 0.0, %v861
        %v863 = vpop.f32.mrb[0].mxu0
        %864 = vmatprep.mubr.bf16.mxu0 0
        %865 = vmatmul.mubr.bf16.gmra.mrb[0].mxu0 %v773
        %v866 = vpop.f32.mrb[0].mxu0
        %v867 = vadd.f32 0.0, %v866
        %v868 = vpop.f32.mrb[0].mxu0
        %v869 = vpop.f32.mrb[0].mxu0
        %v870 = vadd.f32 0.0, %v869
        %v871 = vpop.f32.mrb[0].mxu0
        %872 = vdwg.mxu0
        %v873 = vadd.f32 %v715, %v859
        %v874 = vadd.f32 %v716, %v862
        %v875 = vadd.f32 %v717, %v867
        %v876 = vadd.f32 %v718, %v870
        %v877 = vld [vmem:[%s584] sm:$0xe]
        %s878 = scalar_lea.vmem %s1, 320
        %v879 = vld [vmem:[%s878] sm:$0xf]
        %v880 = vld [vmem:[%s878 + $0x4] sm:$0xf]
        %v881 = vld [vmem:[%s878 + $0x8] sm:$0xf]
        %v882 = vld [vmem:[%s878 + $0xc] sm:$0xf]
        %v883 = vld [vmem:[%s878 + $0x10] sm:$0xf]
        %v884 = vld [vmem:[%s878 + $0x14] sm:$0xf]
        %v885 = vld [vmem:[%s878 + $0x18] sm:$0xf]
        %v886 = vld [vmem:[%s878 + $0x1c] sm:$0xf]
        %v887 = vld [vmem:[%s878 + $0x20] sm:$0xf]
        %v888 = vld [vmem:[%s878 + $0x24] sm:$0xf]
        %v889 = vld [vmem:[%s878 + $0x28] sm:$0xf]
        %v890 = vld [vmem:[%s878 + $0x2c] sm:$0xf]
        %v891 = vld [vmem:[%s878 + $0x30] sm:$0xf]
        %v892 = vld [vmem:[%s878 + $0x34] sm:$0xf]
        %v893 = vld [vmem:[%s878 + $0x38] sm:$0xf]
        %v894 = vld [vmem:[%s878 + $0x3c] sm:$0xf]
        %v896 = vunpack.c.l.b16 %v877
        %v897 = vpack.c.b16 %v747, %v896
        %v898 = vrot.slane %v897, 1
        %v899 = vrot.slane %v752, 1
        %v900 = vsel %vm472, %v898, %v899
        %v901 = vrot.slane %v753, 1
        %v902 = vsel %vm472, %v899, %v901
        %v921 = vunpack.c.l.b16 %v879
        %v922 = vunpack.c.l.b16 %v880
        %v923 = vunpack.c.l.b16 %v881
        %v924 = vunpack.c.l.b16 %v882
        %v925 = vunpack.c.l.b16 %v883
        %v926 = vunpack.c.l.b16 %v884
        %v927 = vunpack.c.l.b16 %v885
        %v928 = vunpack.c.l.b16 %v886
        %v929 = vunpack.c.l.b16 %v887
        %v930 = vunpack.c.l.b16 %v888
        %v931 = vunpack.c.l.b16 %v889
        %v932 = vunpack.c.l.b16 %v890
        %v933 = vunpack.c.l.b16 %v891
        %v934 = vunpack.c.l.b16 %v892
        %v935 = vunpack.c.l.b16 %v893
        %v936 = vunpack.c.l.b16 %v894
        %v937 = vpack.c.b16 %v922, %v921
        %v938 = vpack.c.b16 %v924, %v923
        %v939 = vpack.c.b16 %v926, %v925
        %v940 = vpack.c.b16 %v928, %v927
        %v941 = vpack.c.b16 %v930, %v929
        %v942 = vpack.c.b16 %v932, %v931
        %v943 = vpack.c.b16 %v934, %v933
        %v944 = vpack.c.b16 %v936, %v935
        %953 = vmatprep.subr.bf16.mxu0 0
        %954 = vmatpush1.bf16.msra.mxu0 %v937
        %955 = vmatprep.subr.bf16.mxu0 0
        %956 = vmatpush1.bf16.msra.mxu0 %v938
        %957 = vmatprep.subr.bf16.mxu0 0
        %958 = vmatpush1.bf16.msra.mxu0 %v939
        %959 = vmatprep.subr.bf16.mxu0 0
        %960 = vmatpush1.bf16.msra.mxu0 %v940
        %961 = vmatprep.subr.bf16.mxu0 0
        %962 = vmatpush1.bf16.msra.mxu0 %v941
        %963 = vmatprep.subr.bf16.mxu0 0
        %964 = vmatpush1.bf16.msra.mxu0 %v942
        %965 = vmatprep.subr.bf16.mxu0 0
        %966 = vmatpush1.bf16.msra.mxu0 %v943
        %967 = vmatprep.subr.bf16.mxu0 0
        %968 = vmatpush1.bf16.msra.mxu0 %v944
        %969 = vmatprep.subr.bf16.mxu0 0
        %970 = vmatpush1.bf16.msra.mxu0 0
        %971 = vmatprep.subr.bf16.mxu0 0
        %972 = vmatpush1.bf16.msra.mxu0 0
        %973 = vmatprep.subr.bf16.mxu0 0
        %974 = vmatpush1.bf16.msra.mxu0 0
        %975 = vmatprep.subr.bf16.mxu0 0
        %976 = vmatpush1.bf16.msra.mxu0 0
        %977 = vmatprep.subr.bf16.mxu0 0
        %978 = vmatpush1.bf16.msra.mxu0 0
        %979 = vmatprep.subr.bf16.mxu0 0
        %980 = vmatpush1.bf16.msra.mxu0 0
        %981 = vmatprep.subr.bf16.mxu0 0
        %982 = vmatpush1.bf16.msra.mxu0 0
        %983 = vmatprep.subr.bf16.mxu0 0
        %984 = vmatpush1.bf16.msra.mxu0 0
        %985 = vmatprep.mubr.bf16.mxu0 0
        %986 = vmatmul.mubr.bf16.gmra.mrb[0].mxu0 %v900
        %v987 = vpop.f32.mrb[0].mxu0
        %v988 = vadd.f32 0.0, %v987
        %v989 = vpop.f32.mrb[0].mxu0
        %v990 = vpop.f32.mrb[0].mxu0
        %v991 = vadd.f32 0.0, %v990
        %v992 = vpop.f32.mrb[0].mxu0
        %993 = vmatprep.mubr.bf16.mxu0 0
        %994 = vmatmul.mubr.bf16.gmra.mrb[0].mxu0 %v902
        %v995 = vpop.f32.mrb[0].mxu0
        %v996 = vadd.f32 0.0, %v995
        %v997 = vpop.f32.mrb[0].mxu0
        %v998 = vpop.f32.mrb[0].mxu0
        %v999 = vadd.f32 0.0, %v998
        %v1000 = vpop.f32.mrb[0].mxu0
        %1001 = vdwg.mxu0
        %v1002 = vadd.f32 %v873, %v988
        %v1003 = vadd.f32 %v874, %v991
        %v1004 = vadd.f32 %v875, %v996
        %v1005 = vadd.f32 %v876, %v999
        %s1006 = sadd.s32 %s173, 2
        %s1007 = smul.u32 %s1006, 5
        %s1008 = smul.addr %s1007, 4
        %s1009 = scalar_lea.vmem %s165, %s1008
        %v1010 = vld [vmem:[%s1009] sm:$0xf]
        %v1011 = vld [vmem:[%s1009 + $0x4] sm:$0xf]
        %v1012 = vld [vmem:[%s1009 + $0x8] sm:$0xf]
        %v1013 = vld [vmem:[%s1009 + $0xc] sm:$0xf]
        %s1014 = scalar_lea.vmem %s1, 384
        %v1015 = vld [vmem:[%s1014] sm:$0xf]
        %v1016 = vld [vmem:[%s1014 + $0x4] sm:$0xf]
        %v1017 = vld [vmem:[%s1014 + $0x8] sm:$0xf]
        %v1018 = vld [vmem:[%s1014 + $0xc] sm:$0xf]
        %v1019 = vld [vmem:[%s1014 + $0x10] sm:$0xf]
        %v1020 = vld [vmem:[%s1014 + $0x14] sm:$0xf]
        %v1021 = vld [vmem:[%s1014 + $0x18] sm:$0xf]
        %v1022 = vld [vmem:[%s1014 + $0x1c] sm:$0xf]
        %v1023 = vld [vmem:[%s1014 + $0x20] sm:$0xf]
        %v1024 = vld [vmem:[%s1014 + $0x24] sm:$0xf]
        %v1025 = vld [vmem:[%s1014 + $0x28] sm:$0xf]
        %v1026 = vld [vmem:[%s1014 + $0x2c] sm:$0xf]
        %v1027 = vld [vmem:[%s1014 + $0x30] sm:$0xf]
        %v1028 = vld [vmem:[%s1014 + $0x34] sm:$0xf]
        %v1029 = vld [vmem:[%s1014 + $0x38] sm:$0xf]
        %v1030 = vld [vmem:[%s1014 + $0x3c] sm:$0xf]
        %v1035 = vunpack.c.l.b16 %v1010
        %v1036 = vunpack.c.l.b16 %v1011
        %v1037 = vunpack.c.l.b16 %v1012
        %v1038 = vunpack.c.l.b16 %v1013
        %v1039 = vpack.c.b16 %v1036, %v1035
        %v1040 = vpack.c.b16 %v1038, %v1037
        %v1059 = vunpack.c.l.b16 %v1015
        %v1060 = vunpack.c.l.b16 %v1016
        %v1061 = vunpack.c.l.b16 %v1017
        %v1062 = vunpack.c.l.b16 %v1018
        %v1063 = vunpack.c.l.b16 %v1019
        %v1064 = vunpack.c.l.b16 %v1020
        %v1065 = vunpack.c.l.b16 %v1021
        %v1066 = vunpack.c.l.b16 %v1022
        %v1067 = vunpack.c.l.b16 %v1023
        %v1068 = vunpack.c.l.b16 %v1024
        %v1069 = vunpack.c.l.b16 %v1025
        %v1070 = vunpack.c.l.b16 %v1026
        %v1071 = vunpack.c.l.b16 %v1027
        %v1072 = vunpack.c.l.b16 %v1028
        %v1073 = vunpack.c.l.b16 %v1029
        %v1074 = vunpack.c.l.b16 %v1030
        %v1075 = vpack.c.b16 %v1060, %v1059
        %v1076 = vpack.c.b16 %v1062, %v1061
        %v1077 = vpack.c.b16 %v1064, %v1063
        %v1078 = vpack.c.b16 %v1066, %v1065
        %v1079 = vpack.c.b16 %v1068, %v1067
        %v1080 = vpack.c.b16 %v1070, %v1069
        %v1081 = vpack.c.b16 %v1072, %v1071
        %v1082 = vpack.c.b16 %v1074, %v1073
        %1091 = vmatprep.subr.bf16.mxu0 0
        %1092 = vmatpush1.bf16.msra.mxu0 %v1075
        %1093 = vmatprep.subr.bf16.mxu0 0
        %1094 = vmatpush1.bf16.msra.mxu0 %v1076
        %1095 = vmatprep.subr.bf16.mxu0 0
        %1096 = vmatpush1.bf16.msra.mxu0 %v1077
        %1097 = vmatprep.subr.bf16.mxu0 0
        %1098 = vmatpush1.bf16.msra.mxu0 %v1078
        %1099 = vmatprep.subr.bf16.mxu0 0
        %1100 = vmatpush1.bf16.msra.mxu0 %v1079
        %1101 = vmatprep.subr.bf16.mxu0 0
        %1102 = vmatpush1.bf16.msra.mxu0 %v1080
        %1103 = vmatprep.subr.bf16.mxu0 0
        %1104 = vmatpush1.bf16.msra.mxu0 %v1081
        %1105 = vmatprep.subr.bf16.mxu0 0
        %1106 = vmatpush1.bf16.msra.mxu0 %v1082
        %1107 = vmatprep.subr.bf16.mxu0 0
        %1108 = vmatpush1.bf16.msra.mxu0 0
        %1109 = vmatprep.subr.bf16.mxu0 0
        %1110 = vmatpush1.bf16.msra.mxu0 0
        %1111 = vmatprep.subr.bf16.mxu0 0
        %1112 = vmatpush1.bf16.msra.mxu0 0
        %1113 = vmatprep.subr.bf16.mxu0 0
        %1114 = vmatpush1.bf16.msra.mxu0 0
        %1115 = vmatprep.subr.bf16.mxu0 0
        %1116 = vmatpush1.bf16.msra.mxu0 0
        %1117 = vmatprep.subr.bf16.mxu0 0
        %1118 = vmatpush1.bf16.msra.mxu0 0
        %1119 = vmatprep.subr.bf16.mxu0 0
        %1120 = vmatpush1.bf16.msra.mxu0 0
        %1121 = vmatprep.subr.bf16.mxu0 0
        %1122 = vmatpush1.bf16.msra.mxu0 0
        %1123 = vmatprep.mubr.bf16.mxu0 0
        %1124 = vmatmul.mubr.bf16.gmra.mrb[0].mxu0 %v1039
        %v1125 = vpop.f32.mrb[0].mxu0
        %v1126 = vadd.f32 0.0, %v1125
        %v1127 = vpop.f32.mrb[0].mxu0
        %v1128 = vpop.f32.mrb[0].mxu0
        %v1129 = vadd.f32 0.0, %v1128
        %v1130 = vpop.f32.mrb[0].mxu0
        %1131 = vmatprep.mubr.bf16.mxu0 0
        %1132 = vmatmul.mubr.bf16.gmra.mrb[0].mxu0 %v1040
        %v1133 = vpop.f32.mrb[0].mxu0
        %v1134 = vadd.f32 0.0, %v1133
        %v1135 = vpop.f32.mrb[0].mxu0
        %v1136 = vpop.f32.mrb[0].mxu0
        %v1137 = vadd.f32 0.0, %v1136
        %v1138 = vpop.f32.mrb[0].mxu0
        %1139 = vdwg.mxu0
        %v1140 = vadd.f32 %v1002, %v1126
        %v1141 = vadd.f32 %v1003, %v1129
        %v1142 = vadd.f32 %v1004, %v1134
        %v1143 = vadd.f32 %v1005, %v1137
        %v1144 = vld [vmem:[%s1009] sm:$0xf]
        %v1145 = vld [vmem:[%s1009 + $0x4] sm:$0xf]
        %v1146 = vld [vmem:[%s1009 + $0x8] sm:$0xf]
        %v1147 = vld [vmem:[%s1009 + $0xc] sm:$0xf]
        %v1148 = vld [vmem:[%s1009 + $0x10] sm:$0x1]
        %s1149 = scalar_lea.vmem %s1, 448
        %v1150 = vld [vmem:[%s1149] sm:$0xf]
        %v1151 = vld [vmem:[%s1149 + $0x4] sm:$0xf]
        %v1152 = vld [vmem:[%s1149 + $0x8] sm:$0xf]
        %v1153 = vld [vmem:[%s1149 + $0xc] sm:$0xf]
        %v1154 = vld [vmem:[%s1149 + $0x10] sm:$0xf]
        %v1155 = vld [vmem:[%s1149 + $0x14] sm:$0xf]
        %v1156 = vld [vmem:[%s1149 + $0x18] sm:$0xf]
        %v1157 = vld [vmem:[%s1149 + $0x1c] sm:$0xf]
        %v1158 = vld [vmem:[%s1149 + $0x20] sm:$0xf]
        %v1159 = vld [vmem:[%s1149 + $0x24] sm:$0xf]
        %v1160 = vld [vmem:[%s1149 + $0x28] sm:$0xf]
        %v1161 = vld [vmem:[%s1149 + $0x2c] sm:$0xf]
        %v1162 = vld [vmem:[%s1149 + $0x30] sm:$0xf]
        %v1163 = vld [vmem:[%s1149 + $0x34] sm:$0xf]
        %v1164 = vld [vmem:[%s1149 + $0x38] sm:$0xf]
        %v1165 = vld [vmem:[%s1149 + $0x3c] sm:$0xf]
        %v1171 = vunpack.c.l.b16 %v1144
        %v1172 = vunpack.c.l.b16 %v1145
        %v1173 = vunpack.c.l.b16 %v1146
        %v1174 = vunpack.c.l.b16 %v1147
        %v1175 = vunpack.c.l.b16 %v1148
        %v1176 = vpack.c.b16 %v1172, %v1171
        %v1177 = vpack.c.b16 %v1174, %v1173
        %v1178 = vpack.c.b16 %v1175, %v1175
        %v1180 = vshrl.u32 %v1176, 16
        %v1182 = vshll.u32 %v1176, 16
        %v1184 = vrot.slane %v1182, 1
        %v1185 = vor.u32 %v1180, %v1184
        %v1187 = vshll.u32 %v1177, 16
        %v1189 = vrot.slane %v1187, 1
        %v1190 = vsel %vm232, %v1185, %v1189
        %v1191 = vshrl.u32 %v1177, 16
        %v1193 = vor.u32 %v1191, %v1189
        %v1195 = vshll.u32 %v1178, 16
        %v1197 = vrot.slane %v1195, 1
        %v1198 = vsel %vm232, %v1193, %v1197
        %v1217 = vunpack.c.l.b16 %v1150
        %v1218 = vunpack.c.l.b16 %v1151
        %v1219 = vunpack.c.l.b16 %v1152
        %v1220 = vunpack.c.l.b16 %v1153
        %v1221 = vunpack.c.l.b16 %v1154
        %v1222 = vunpack.c.l.b16 %v1155
        %v1223 = vunpack.c.l.b16 %v1156
        %v1224 = vunpack.c.l.b16 %v1157
        %v1225 = vunpack.c.l.b16 %v1158
        %v1226 = vunpack.c.l.b16 %v1159
        %v1227 = vunpack.c.l.b16 %v1160
        %v1228 = vunpack.c.l.b16 %v1161
        %v1229 = vunpack.c.l.b16 %v1162
        %v1230 = vunpack.c.l.b16 %v1163
        %v1231 = vunpack.c.l.b16 %v1164
        %v1232 = vunpack.c.l.b16 %v1165
        %v1233 = vpack.c.b16 %v1218, %v1217
        %v1234 = vpack.c.b16 %v1220, %v1219
        %v1235 = vpack.c.b16 %v1222, %v1221
        %v1236 = vpack.c.b16 %v1224, %v1223
        %v1237 = vpack.c.b16 %v1226, %v1225
        %v1238 = vpack.c.b16 %v1228, %v1227
        %v1239 = vpack.c.b16 %v1230, %v1229
        %v1240 = vpack.c.b16 %v1232, %v1231
        %1249 = vmatprep.subr.bf16.mxu0 0
        %1250 = vmatpush1.bf16.msra.mxu0 %v1233
        %1251 = vmatprep.subr.bf16.mxu0 0
        %1252 = vmatpush1.bf16.msra.mxu0 %v1234
        %1253 = vmatprep.subr.bf16.mxu0 0
        %1254 = vmatpush1.bf16.msra.mxu0 %v1235
        %1255 = vmatprep.subr.bf16.mxu0 0
        %1256 = vmatpush1.bf16.msra.mxu0 %v1236
        %1257 = vmatprep.subr.bf16.mxu0 0
        %1258 = vmatpush1.bf16.msra.mxu0 %v1237
        %1259 = vmatprep.subr.bf16.mxu0 0
        %1260 = vmatpush1.bf16.msra.mxu0 %v1238
        %1261 = vmatprep.subr.bf16.mxu0 0
        %1262 = vmatpush1.bf16.msra.mxu0 %v1239
        %1263 = vmatprep.subr.bf16.mxu0 0
        %1264 = vmatpush1.bf16.msra.mxu0 %v1240
        %1265 = vmatprep.subr.bf16.mxu0 0
        %1266 = vmatpush1.bf16.msra.mxu0 0
        %1267 = vmatprep.subr.bf16.mxu0 0
        %1268 = vmatpush1.bf16.msra.mxu0 0
        %1269 = vmatprep.subr.bf16.mxu0 0
        %1270 = vmatpush1.bf16.msra.mxu0 0
        %1271 = vmatprep.subr.bf16.mxu0 0
        %1272 = vmatpush1.bf16.msra.mxu0 0
        %1273 = vmatprep.subr.bf16.mxu0 0
        %1274 = vmatpush1.bf16.msra.mxu0 0
        %1275 = vmatprep.subr.bf16.mxu0 0
        %1276 = vmatpush1.bf16.msra.mxu0 0
        %1277 = vmatprep.subr.bf16.mxu0 0
        %1278 = vmatpush1.bf16.msra.mxu0 0
        %1279 = vmatprep.subr.bf16.mxu0 0
        %1280 = vmatpush1.bf16.msra.mxu0 0
        %1281 = vmatprep.mubr.bf16.mxu0 0
        %1282 = vmatmul.mubr.bf16.gmra.mrb[0].mxu0 %v1190
        %v1283 = vpop.f32.mrb[0].mxu0
        %v1284 = vadd.f32 0.0, %v1283
        %v1285 = vpop.f32.mrb[0].mxu0
        %v1286 = vpop.f32.mrb[0].mxu0
        %v1287 = vadd.f32 0.0, %v1286
        %v1288 = vpop.f32.mrb[0].mxu0
        %1289 = vmatprep.mubr.bf16.mxu0 0
        %1290 = vmatmul.mubr.bf16.gmra.mrb[0].mxu0 %v1198
        %v1291 = vpop.f32.mrb[0].mxu0
        %v1292 = vadd.f32 0.0, %v1291
        %v1293 = vpop.f32.mrb[0].mxu0
        %v1294 = vpop.f32.mrb[0].mxu0
        %v1295 = vadd.f32 0.0, %v1294
        %v1296 = vpop.f32.mrb[0].mxu0
        %1297 = vdwg.mxu0
        %v1298 = vadd.f32 %v1140, %v1284
        %v1299 = vadd.f32 %v1141, %v1287
        %v1300 = vadd.f32 %v1142, %v1292
        %v1301 = vadd.f32 %v1143, %v1295
        %v1302 = vld [vmem:[%s1009] sm:$0xe]
        %s1303 = scalar_lea.vmem %s1, 512
        %v1304 = vld [vmem:[%s1303] sm:$0xf]
        %v1305 = vld [vmem:[%s1303 + $0x4] sm:$0xf]
        %v1306 = vld [vmem:[%s1303 + $0x8] sm:$0xf]
        %v1307 = vld [vmem:[%s1303 + $0xc] sm:$0xf]
        %v1308 = vld [vmem:[%s1303 + $0x10] sm:$0xf]
        %v1309 = vld [vmem:[%s1303 + $0x14] sm:$0xf]
        %v1310 = vld [vmem:[%s1303 + $0x18] sm:$0xf]
        %v1311 = vld [vmem:[%s1303 + $0x1c] sm:$0xf]
        %v1312 = vld [vmem:[%s1303 + $0x20] sm:$0xf]
        %v1313 = vld [vmem:[%s1303 + $0x24] sm:$0xf]
        %v1314 = vld [vmem:[%s1303 + $0x28] sm:$0xf]
        %v1315 = vld [vmem:[%s1303 + $0x2c] sm:$0xf]
        %v1316 = vld [vmem:[%s1303 + $0x30] sm:$0xf]
        %v1317 = vld [vmem:[%s1303 + $0x34] sm:$0xf]
        %v1318 = vld [vmem:[%s1303 + $0x38] sm:$0xf]
        %v1319 = vld [vmem:[%s1303 + $0x3c] sm:$0xf]
        %v1321 = vunpack.c.l.b16 %v1302
        %v1322 = vpack.c.b16 %v1172, %v1321
        %v1323 = vrot.slane %v1322, 1
        %v1324 = vrot.slane %v1177, 1
        %v1325 = vsel %vm472, %v1323, %v1324
        %v1326 = vrot.slane %v1178, 1
        %v1327 = vsel %vm472, %v1324, %v1326
        %v1346 = vunpack.c.l.b16 %v1304
        %v1347 = vunpack.c.l.b16 %v1305
        %v1348 = vunpack.c.l.b16 %v1306
        %v1349 = vunpack.c.l.b16 %v1307
        %v1350 = vunpack.c.l.b16 %v1308
        %v1351 = vunpack.c.l.b16 %v1309
        %v1352 = vunpack.c.l.b16 %v1310
        %v1353 = vunpack.c.l.b16 %v1311
        %v1354 = vunpack.c.l.b16 %v1312
        %v1355 = vunpack.c.l.b16 %v1313
        %v1356 = vunpack.c.l.b16 %v1314
        %v1357 = vunpack.c.l.b16 %v1315
        %v1358 = vunpack.c.l.b16 %v1316
        %v1359 = vunpack.c.l.b16 %v1317
        %v1360 = vunpack.c.l.b16 %v1318
        %v1361 = vunpack.c.l.b16 %v1319
        %v1362 = vpack.c.b16 %v1347, %v1346
        %v1363 = vpack.c.b16 %v1349, %v1348
        %v1364 = vpack.c.b16 %v1351, %v1350
        %v1365 = vpack.c.b16 %v1353, %v1352
        %v1366 = vpack.c.b16 %v1355, %v1354
        %v1367 = vpack.c.b16 %v1357, %v1356
        %v1368 = vpack.c.b16 %v1359, %v1358
        %v1369 = vpack.c.b16 %v1361, %v1360
        %1378 = vmatprep.subr.bf16.mxu0 0
        %1379 = vmatpush1.bf16.msra.mxu0 %v1362
        %1380 = vmatprep.subr.bf16.mxu0 0
        %1381 = vmatpush1.bf16.msra.mxu0 %v1363
        %1382 = vmatprep.subr.bf16.mxu0 0
        %1383 = vmatpush1.bf16.msra.mxu0 %v1364
        %1384 = vmatprep.subr.bf16.mxu0 0
        %1385 = vmatpush1.bf16.msra.mxu0 %v1365
        %1386 = vmatprep.subr.bf16.mxu0 0
        %1387 = vmatpush1.bf16.msra.mxu0 %v1366
        %1388 = vmatprep.subr.bf16.mxu0 0
        %1389 = vmatpush1.bf16.msra.mxu0 %v1367
        %1390 = vmatprep.subr.bf16.mxu0 0
        %1391 = vmatpush1.bf16.msra.mxu0 %v1368
        %1392 = vmatprep.subr.bf16.mxu0 0
        %1393 = vmatpush1.bf16.msra.mxu0 %v1369
        %1394 = vmatprep.subr.bf16.mxu0 0
        %1395 = vmatpush1.bf16.msra.mxu0 0
        %1396 = vmatprep.subr.bf16.mxu0 0
        %1397 = vmatpush1.bf16.msra.mxu0 0
        %1398 = vmatprep.subr.bf16.mxu0 0
        %1399 = vmatpush1.bf16.msra.mxu0 0
        %1400 = vmatprep.subr.bf16.mxu0 0
        %1401 = vmatpush1.bf16.msra.mxu0 0
        %1402 = vmatprep.subr.bf16.mxu0 0
        %1403 = vmatpush1.bf16.msra.mxu0 0
        %1404 = vmatprep.subr.bf16.mxu0 0
        %1405 = vmatpush1.bf16.msra.mxu0 0
        %1406 = vmatprep.subr.bf16.mxu0 0
        %1407 = vmatpush1.bf16.msra.mxu0 0
        %1408 = vmatprep.subr.bf16.mxu0 0
        %1409 = vmatpush1.bf16.msra.mxu0 0
        %1410 = vmatprep.mubr.bf16.mxu0 0
        %1411 = vmatmul.mubr.bf16.gmra.mrb[0].mxu0 %v1325
        %v1412 = vpop.f32.mrb[0].mxu0
        %v1413 = vadd.f32 0.0, %v1412
        %v1414 = vpop.f32.mrb[0].mxu0
        %v1415 = vpop.f32.mrb[0].mxu0
        %v1416 = vadd.f32 0.0, %v1415
        %v1417 = vpop.f32.mrb[0].mxu0
        %1418 = vmatprep.mubr.bf16.mxu0 0
        %1419 = vmatmul.mubr.bf16.gmra.mrb[0].mxu0 %v1327
        %v1420 = vpop.f32.mrb[0].mxu0
        %v1421 = vadd.f32 0.0, %v1420
        %v1422 = vpop.f32.mrb[0].mxu0
        %v1423 = vpop.f32.mrb[0].mxu0
        %v1424 = vadd.f32 0.0, %v1423
        %v1425 = vpop.f32.mrb[0].mxu0
        %1426 = vdwg.mxu0
        %v1427 = vadd.f32 %v1298, %v1413
        %v1428 = vadd.f32 %v1299, %v1416
        %v1429 = vadd.f32 %v1300, %v1421
        %v1430 = vadd.f32 %v1301, %v1424
        %v1431 = vld [vmem:[%s2] sm:$0x1]
        %v1433 = vlaneseq
        %v1434 = vshrl.u32 %v1433, 7
        %v1435 = vsub.s32 0, %v1434
        %v1436 = vrot.slane %v1431, %v1435
        %v1438 = vadd.f32 %v1427, %v1436
        %v1439 = vadd.f32 %v1428, %v1436
        %v1440 = vadd.f32 %v1429, %v1436
        %v1441 = vadd.f32 %v1430, %v1436
        %v1442 = vmax.f32 %v1438, 0.0
        %v1443 = vmax.f32 %v1439, 0.0
        %v1444 = vmax.f32 %v1440, 0.0
        %v1445 = vmax.f32 %v1441, 0.0
        %v1446 = vpack.c.bf16 %v1443, %v1442
        %v1447 = vpack.c.bf16 %v1445, %v1444
        %v1450 = vunpack.c.l.b16 %v1446
        %v1451 = vunpack.c.h.b16 %v1446
        %v1452 = vunpack.c.l.b16 %v1447
        %v1453 = vunpack.c.h.b16 %v1447
        %v1454 = vpack.c.b16 %v1450, %v1450
        %v1455 = vpack.c.b16 %v1451, %v1451
        %v1456 = vpack.c.b16 %v1452, %v1452
        %v1457 = vpack.c.b16 %v1453, %v1453
        %s1462 = smul.u32 %s173, 4
        %s1463 = smul.addr %s1462, 4
        %s1464 = scalar_lea.vmem %s170, %s1463
        %1465 = vst [vmem:[%s1464] sm:$0xf] %v1454
        %1466 = vst [vmem:[%s1464 + $0x4] sm:$0xf] %v1455
        %1467 = vst [vmem:[%s1464 + $0x8] sm:$0xf] %v1456
        %1468 = vst [vmem:[%s1464 + $0xc] sm:$0xf] %v1457
      $region37: #{vgg16_forward.21} parent=31 // loop_footer
        %s177 = sadd.s32 1, %s173
      $region38: #{vgg16_forward.21} parent=31 // loop_footer_branch
        %172 = sbr.rel target = $region34
      $region39: #{vgg16_forward.21} parent=31 // loop_exit
        _
      %p1469 = scmp.lt.s32.totalorder %s14, 1
      %s1470 = scalar_select %p1469, %s14, 1
      %s1471 = smul.addr %s1470, 128
      %s1472 = smul.addr %s1471, 4
      %s1473 = scalar_lea.vmem %s3, %s1472
      // Predicated region
      $region40: #{vgg16_forward.21} parent=31 // pred_check
        %p1474 = pneg %p100
      $region41: #{vgg16_forward.21} parent=31 // pred_check_branch
        %1476 = sbr.rel (%p1474) target = $region43
      $region42: #{vgg16_forward.21} parent=31 // pred_region
        _
      $region43: #{vgg16_forward.21} parent=31 // pred_fallthru
        _
    $region32: #{vgg16_forward.21} parent=5 // pred_fallthru
      _
    %p1477 = scmp.le.s32.totalorder 2, %s9
    // Predicated region
    $region44: #{vgg16_forward.21} parent=5 // pred_check
      %p1478 = pneg %p1477
    $region45: #{vgg16_forward.21} parent=5 // pred_check_branch
      %1480 = sbr.rel (%p1478) target = $region47
    $region46: #{vgg16_forward.21} parent=5 // pred_region
      %s1481 = ssub.s32 %s9, 2
      // Predicated region
      $region48: #{vgg16_forward.21} parent=46 // pred_check
        %p1482 = pneg %p106
      $region49: #{vgg16_forward.21} parent=46 // pred_check_branch
        %1484 = sbr.rel (%p1482) target = $region51
      $region50: #{vgg16_forward.21} parent=46 // pred_region
        %p1485 = scmp.lt.s32.totalorder %s15, 1
        %s1486 = scalar_select %p1485, %s15, 1
        %s1487 = smul.addr %s1486, 128
        %s1488 = smul.addr %s1487, 4
        %s1489 = scalar_lea.vmem %s3, %s1488
      $region51: #{vgg16_forward.21} parent=46 // pred_fallthru
        _
    $region47: #{vgg16_forward.21} parent=5 // pred_fallthru
      _
  $region6: #{vgg16_forward.21} parent=0 // loop_footer
    %s13 = sadd.s32 1, %s9
  $region7: #{vgg16_forward.21} parent=0 // loop_footer_branch
    %8 = sbr.rel target = $region3
  $region8: #{vgg16_forward.21} parent=0 // loop_exit
    _

// kernel: vgg16_forward.23
$region0: #{vgg16_forward.23}
  #allocation0 [shape = 'u32[]', space=smem, size = 0x4, offset = 0x4, fixed_abs, tag = 'smem constant byte address 0x4 - core index']
  #allocation1 [shape = 'u32[144,128]{1,0:T(1,128)}', space=vmem, size = 0x12000, scoped, tag = 'internal scratch']
  %s0 = inlined_call_operand.vmem [shape: bf16[2,32,16,256], index: 0, kind: input, shape index: {}]
  %s1 = inlined_call_operand.vmem [shape: bf16[2,16,16,128], index: 1, kind: output, shape index: {}]
  %s2 = sld [smem:[#allocation0]]
  $region37: #{vgg16_forward.23} parent=0
    _
  %s4 = ssub.s32 1, %s2
  %s5 = scalar_select 0, %s4, %s2
  loop: start=0, step=1, limit=4
  $region2: #{vgg16_forward.23} parent=0 // loop_pre_header
    _
  $region3: #{vgg16_forward.23} parent=0 // loop_header
    %s7 = sphi 0, %s11
    %p8 = scmp.ge.s32.totalorder %s7, 4
    %s14 = sphi 0, %s26
    %s15 = sphi 0, %s22
    %s16 = sphi 0, %s14
    %s17 = sphi 0, %s15
    %s18 = sphi 0, %s16
    %s19 = sphi 0, %s17
    %s31 = sphi 0, %s33
    %s34 = sphi 0, %s31
    %s35 = sphi 0, %s34
    %s51 = sphi 0, %s35
    %s59 = sphi 0, %s61
    %s62 = sphi 0, %s59
    %s63 = sphi 0, %s62
    %s79 = sphi 0, %s63
  $region4: #{vgg16_forward.23} parent=0 // loop_header_branch
    %10 = sbr.rel (%p8) target = $region8
  $region5: #{vgg16_forward.23} parent=0 // loop_body
    %s12 = ssub.s32 %s7, 1
    %s13 = ssub.s32 %s7, 2
    %s20 = sadd.s32 1, %s15
    %p21 = scmp.ge.s32.totalorder %s20, 1
    %s22 = scalar_select %p21, 0, %s20
    %s23 = sadd.s32 1, %s14
    %s24 = scalar_select %p21, %s23, %s14
    %p25 = scmp.ge.s32.totalorder %s24, 2
    %s26 = scalar_select %p25, 0, %s24
    %s27 = ssub.s32 %s14, %s26
    %s28 = ssub.s32 %s15, %s22
    %s29 = sor.u32 %s27, %s28
    %p30 = scmp.eq.s32.totalorder %s29, 0
    %s32 = sadd.s32 %s31, 1
    %s33 = scalar_select %p30, %s31, %s32
    %p36 = pneg %p30
    %p37 = scmp.eq.s32.totalorder %s7, 1
    %p38 = por %p36, %p37
    %p39 = scmp.ne.s32.totalorder %s31, %s34
    %p40 = scmp.eq.s32.totalorder %s7, 0
    %p41 = por %p39, %p40
    %p42 = scmp.ne.s32.totalorder %s31, %s34
    %p43 = scmp.eq.s32.totalorder %s12, 1
    %p44 = por %p42, %p43
    %p45 = scmp.ne.s32.totalorder %s34, %s35
    %p46 = scmp.eq.s32.totalorder %s12, 0
    %p47 = por %p45, %p46
    %p48 = scmp.ne.s32.totalorder %s34, %s35
    %p49 = scmp.eq.s32.totalorder %s13, 1
    %p50 = por %p48, %p49
    %p52 = scmp.ne.s32.totalorder %s35, %s51
    %p53 = scmp.eq.s32.totalorder %s13, 0
    %p54 = por %p52, %p53
    %s55 = ssub.s32 %s14, %s26
    %s56 = ssub.s32 %s15, %s22
    %s57 = sor.u32 %s55, %s56
    %p58 = scmp.eq.s32.totalorder %s57, 0
    %s60 = sadd.s32 %s59, 1
    %s61 = scalar_select %p58, %s59, %s60
    %p64 = pneg %p58
    %p65 = scmp.eq.s32.totalorder %s7, 1
    %p66 = por %p64, %p65
    %p67 = scmp.ne.s32.totalorder %s59, %s62
    %p68 = scmp.eq.s32.totalorder %s7, 0
    %p69 = por %p67, %p68
    %p70 = scmp.ne.s32.totalorder %s59, %s62
    %p71 = scmp.eq.s32.totalorder %s12, 1
    %p72 = por %p70, %p71
    %p73 = scmp.ne.s32.totalorder %s62, %s63
    %p74 = scmp.eq.s32.totalorder %s12, 0
    %p75 = por %p73, %p74
    %p76 = scmp.ne.s32.totalorder %s62, %s63
    %p77 = scmp.eq.s32.totalorder %s13, 1
    %p78 = por %p76, %p77
    %p80 = scmp.ne.s32.totalorder %s63, %s79
    %p81 = scmp.eq.s32.totalorder %s13, 0
    %p82 = por %p80, %p81
    %p83 = scmp.le.s32.totalorder 1, %s7
    %p84 = scmp.lt.s32.totalorder %s7, 3
    %p85 = pnand %p83, %p84
    %p86 = pneg %p85
    // Predicated region
    $region9: #{vgg16_forward.23} parent=5 // pred_check
      _
    $region10: #{vgg16_forward.23} parent=5 // pred_check_branch
      %88 = sbr.rel (%p85) target = $region12
    $region11: #{vgg16_forward.23} parent=5 // pred_region
      %s89 = ssub.s32 %s7, 1
    $region12: #{vgg16_forward.23} parent=5 // pred_fallthru
      _
    %p90 = scmp.lt.s32.totalorder %s7, 2
    // Predicated region
    $region13: #{vgg16_forward.23} parent=5 // pred_check
      %p91 = pneg %p90
    $region14: #{vgg16_forward.23} parent=5 // pred_check_branch
      %93 = sbr.rel (%p91) target = $region16
    $region15: #{vgg16_forward.23} parent=5 // pred_region
      // Predicated region
      $region17: #{vgg16_forward.23} parent=15 // pred_check
        %p94 = pneg %p41
      $region18: #{vgg16_forward.23} parent=15 // pred_check_branch
        %96 = sbr.rel (%p94) target = $region20
      $region19: #{vgg16_forward.23} parent=15 // pred_region
        %s97 = smul.u32 32, %s15
        %p98 = scmp.lt.s32.totalorder %s14, 1
        %s99 = scalar_select %p98, %s14, 1
        %p100 = scmp.lt.s32.totalorder %s97, 31
        %s101 = scalar_select %p100, %s97, 31
        %s102 = smul.addr %s101, 4
        %s103 = smul.addr %s99, 128
        %s104 = sadd.s32 %s102, %s103
        %s105 = smul.addr %s104, 4
        %s106 = scalar_lea.vmem %s0, %s105
        %s107 = smul.u32 32, %s15
      $region20: #{vgg16_forward.23} parent=15 // pred_fallthru
        _
    $region16: #{vgg16_forward.23} parent=5 // pred_fallthru
      _
    %p108 = scmp.le.s32.totalorder 1, %s7
    %p109 = scmp.lt.s32.totalorder %s7, 3
    %p110 = pnand %p108, %p109
    %p111 = pneg %p110
    // Predicated region
    $region21: #{vgg16_forward.23} parent=5 // pred_check
      _
    $region22: #{vgg16_forward.23} parent=5 // pred_check_branch
      %113 = sbr.rel (%p110) target = $region24
    $region23: #{vgg16_forward.23} parent=5 // pred_region
      %s114 = ssub.s32 %s7, 1
      %s115 = smul.u32 32, %s17
      %p116 = scmp.lt.s32.totalorder %s16, 1
      %s117 = scalar_select %p116, %s16, 1
      %p118 = scmp.lt.s32.totalorder %s115, 31
      %s119 = scalar_select %p118, %s115, 31
      %s120 = smul.addr %s119, 4
      %s121 = smul.addr %s117, 128
      %s122 = sadd.s32 %s120, %s121
      %s123 = smul.addr %s122, 4
      %s124 = scalar_lea.vmem %s0, %s123
      %p125 = pneg %p47
      %p126 = pneg %p44
      %p127 = pneg %p75
      %p128 = pneg %p72
      %s129 = smul.u32 16, %s17
      %p130 = scmp.lt.s32.totalorder %s16, 1
      %s131 = scalar_select %p130, %s16, 1
      %p132 = scmp.lt.s32.totalorder %s129, 15
      %s133 = scalar_select %p132, %s129, 15
      %s134 = smul.addr %s133, 2
      %s135 = smul.addr %s131, 32
      %s136 = sadd.s32 %s134, %s135
      %s137 = smul.addr %s136, 4
      %s138 = scalar_lea.vmem %s1, %s137
      %s139 = smul.u32 32, %s17
      %p140 = scmp.lt.s32.totalorder %s16, 1
      %s141 = scalar_select %p140, %s16, 1
      %p142 = scmp.lt.s32.totalorder %s139, 31
      %s143 = scalar_select %p142, %s139, 31
      %s144 = smul.addr %s143, 4
      %s145 = smul.addr %s141, 128
      %s146 = sadd.s32 %s144, %s145
      %s147 = smul.addr %s146, 4
      %s148 = scalar_lea.vmem %s0, %s147
      %s149 = smul.u32 32, %s17
      %s150 = smul.u32 16, %s17
      %p151 = scmp.lt.s32.totalorder %s16, 1
      %s152 = scalar_select %p151, %s16, 1
      %p153 = scmp.lt.s32.totalorder %s150, 15
      %s154 = scalar_select %p153, %s150, 15
      %s155 = smul.addr %s154, 2
      %s156 = smul.addr %s152, 32
      %s157 = sadd.s32 %s155, %s156
      %s158 = smul.addr %s157, 4
      %s159 = scalar_lea.vmem %s1, %s158
      %s160 = smul.u32 16, %s17
      %v161 = vld [vmem:[%s148] sm:$0xff]
      %v162 = vld [vmem:[%s148 + $0x8] sm:$0xff]
      %v163 = vld [vmem:[%s148 + $0x10] sm:$0xff]
      %v164 = vld [vmem:[%s148 + $0x18] sm:$0xff]
      %v165 = vld [vmem:[%s148 + $0x20] sm:$0xff]
      %v166 = vld [vmem:[%s148 + $0x28] sm:$0xff]
      %v167 = vld [vmem:[%s148 + $0x30] sm:$0xff]
      %v168 = vld [vmem:[%s148 + $0x38] sm:$0xff]
      %v169 = vld [vmem:[%s148 + $0x40] sm:$0xff]
      %v170 = vld [vmem:[%s148 + $0x48] sm:$0xff]
      %v171 = vld [vmem:[%s148 + $0x50] sm:$0xff]
      %v172 = vld [vmem:[%s148 + $0x58] sm:$0xff]
      %v173 = vld [vmem:[%s148 + $0x60] sm:$0xff]
      %v174 = vld [vmem:[%s148 + $0x68] sm:$0xff]
      %v175 = vld [vmem:[%s148 + $0x70] sm:$0xff]
      %v176 = vld [vmem:[%s148 + $0x78] sm:$0xff]
      %v177 = vld [vmem:[%s148 + $0x80] sm:$0xff]
      %v178 = vld [vmem:[%s148 + $0x88] sm:$0xff]
      %v179 = vld [vmem:[%s148 + $0x90] sm:$0xff]
      %v180 = vld [vmem:[%s148 + $0x98] sm:$0xff]
      %v181 = vld [vmem:[%s148 + $0xa0] sm:$0xff]
      %v182 = vld [vmem:[%s148 + $0xa8] sm:$0xff]
      %v183 = vld [vmem:[%s148 + $0xb0] sm:$0xff]
      %v184 = vld [vmem:[%s148 + $0xb8] sm:$0xff]
      %v185 = vld [vmem:[%s148 + $0xc0] sm:$0xff]
      %v186 = vld [vmem:[%s148 + $0xc8] sm:$0xff]
      %v187 = vld [vmem:[%s148 + $0xd0] sm:$0xff]
      %v188 = vld [vmem:[%s148 + $0xd8] sm:$0xff]
      %v189 = vld [vmem:[%s148 + $0xe0] sm:$0xff]
      %v190 = vld [vmem:[%s148 + $0xe8] sm:$0xff]
      %v191 = vld [vmem:[%s148 + $0xf0] sm:$0xff]
      %v192 = vld [vmem:[%s148 + $0xf8] sm:$0xff]
      %v193 = vld [vmem:[%s148 + $0x100] sm:$0xff]
      %v194 = vld [vmem:[%s148 + $0x108] sm:$0xff]
      %v195 = vld [vmem:[%s148 + $0x110] sm:$0xff]
      %v196 = vld [vmem:[%s148 + $0x118] sm:$0xff]
      %v197 = vld [vmem:[%s148 + $0x120] sm:$0xff]
      %v198 = vld [vmem:[%s148 + $0x128] sm:$0xff]
      %v199 = vld [vmem:[%s148 + $0x130] sm:$0xff]
      %v200 = vld [vmem:[%s148 + $0x138] sm:$0xff]
      %v201 = vld [vmem:[%s148 + $0x140] sm:$0xff]
      %v202 = vld [vmem:[%s148 + $0x148] sm:$0xff]
      %v203 = vld [vmem:[%s148 + $0x150] sm:$0xff]
      %v204 = vld [vmem:[%s148 + $0x158] sm:$0xff]
      %v205 = vld [vmem:[%s148 + $0x160] sm:$0xff]
      %v206 = vld [vmem:[%s148 + $0x168] sm:$0xff]
      %v207 = vld [vmem:[%s148 + $0x170] sm:$0xff]
      %v208 = vld [vmem:[%s148 + $0x178] sm:$0xff]
      %v209 = vld [vmem:[%s148 + $0x180] sm:$0xff]
      %v210 = vld [vmem:[%s148 + $0x188] sm:$0xff]
      %v211 = vld [vmem:[%s148 + $0x190] sm:$0xff]
      %v212 = vld [vmem:[%s148 + $0x198] sm:$0xff]
      %v213 = vld [vmem:[%s148 + $0x1a0] sm:$0xff]
      %v214 = vld [vmem:[%s148 + $0x1a8] sm:$0xff]
      %v215 = vld [vmem:[%s148 + $0x1b0] sm:$0xff]
      %v216 = vld [vmem:[%s148 + $0x1b8] sm:$0xff]
      %v217 = vld [vmem:[%s148 + $0x1c0] sm:$0xff]
      %v218 = vld [vmem:[%s148 + $0x1c8] sm:$0xff]
      %v219 = vld [vmem:[%s148 + $0x1d0] sm:$0xff]
      %v220 = vld [vmem:[%s148 + $0x1d8] sm:$0xff]
      %v221 = vld [vmem:[%s148 + $0x1e0] sm:$0xff]
      %v222 = vld [vmem:[%s148 + $0x1e8] sm:$0xff]
      %v223 = vld [vmem:[%s148 + $0x1f0] sm:$0xff]
      %v224 = vld [vmem:[%s148 + $0x1f8] sm:$0xff]
      %v289 = vrot.slane %v161, 4
      %v290 = vrot.slane %v162, 4
      %v291 = vrot.slane %v163, 4
      %v292 = vrot.slane %v164, 4
      %v293 = vrot.slane %v165, 4
      %v294 = vrot.slane %v166, 4
      %v295 = vrot.slane %v167, 4
      %v296 = vrot.slane %v168, 4
      %v297 = vrot.slane %v169, 4
      %v298 = vrot.slane %v170, 4
      %v299 = vrot.slane %v171, 4
      %v300 = vrot.slane %v172, 4
      %v301 = vrot.slane %v173, 4
      %v302 = vrot.slane %v174, 4
      %v303 = vrot.slane %v175, 4
      %v304 = vrot.slane %v176, 4
      %v305 = vrot.slane %v177, 4
      %v306 = vrot.slane %v178, 4
      %v307 = vrot.slane %v179, 4
      %v308 = vrot.slane %v180, 4
      %v309 = vrot.slane %v181, 4
      %v310 = vrot.slane %v182, 4
      %v311 = vrot.slane %v183, 4
      %v312 = vrot.slane %v184, 4
      %v313 = vrot.slane %v185, 4
      %v314 = vrot.slane %v186, 4
      %v315 = vrot.slane %v187, 4
      %v316 = vrot.slane %v188, 4
      %v317 = vrot.slane %v189, 4
      %v318 = vrot.slane %v190, 4
      %v319 = vrot.slane %v191, 4
      %v320 = vrot.slane %v192, 4
      %v321 = vrot.slane %v193, 4
      %v322 = vrot.slane %v194, 4
      %v323 = vrot.slane %v195, 4
      %v324 = vrot.slane %v196, 4
      %v325 = vrot.slane %v197, 4
      %v326 = vrot.slane %v198, 4
      %v327 = vrot.slane %v199, 4
      %v328 = vrot.slane %v200, 4
      %v329 = vrot.slane %v201, 4
      %v330 = vrot.slane %v202, 4
      %v331 = vrot.slane %v203, 4
      %v332 = vrot.slane %v204, 4
      %v333 = vrot.slane %v205, 4
      %v334 = vrot.slane %v206, 4
      %v335 = vrot.slane %v207, 4
      %v336 = vrot.slane %v208, 4
      %v337 = vrot.slane %v209, 4
      %v338 = vrot.slane %v210, 4
      %v339 = vrot.slane %v211, 4
      %v340 = vrot.slane %v212, 4
      %v341 = vrot.slane %v213, 4
      %v342 = vrot.slane %v214, 4
      %v343 = vrot.slane %v215, 4
      %v344 = vrot.slane %v216, 4
      %v345 = vrot.slane %v217, 4
      %v346 = vrot.slane %v218, 4
      %v347 = vrot.slane %v219, 4
      %v348 = vrot.slane %v220, 4
      %v349 = vrot.slane %v221, 4
      %v350 = vrot.slane %v222, 4
      %v351 = vrot.slane %v223, 4
      %v352 = vrot.slane %v224, 4
      %v417 = vmax.bf16 %v161, %v289
      %v418 = vmax.bf16 %v162, %v290
      %v419 = vmax.bf16 %v163, %v291
      %v420 = vmax.bf16 %v164, %v292
      %v421 = vmax.bf16 %v165, %v293
      %v422 = vmax.bf16 %v166, %v294
      %v423 = vmax.bf16 %v167, %v295
      %v424 = vmax.bf16 %v168, %v296
      %v425 = vmax.bf16 %v169, %v297
      %v426 = vmax.bf16 %v170, %v298
      %v427 = vmax.bf16 %v171, %v299
      %v428 = vmax.bf16 %v172, %v300
      %v429 = vmax.bf16 %v173, %v301
      %v430 = vmax.bf16 %v174, %v302
      %v431 = vmax.bf16 %v175, %v303
      %v432 = vmax.bf16 %v176, %v304
      %v433 = vmax.bf16 %v177, %v305
      %v434 = vmax.bf16 %v178, %v306
      %v435 = vmax.bf16 %v179, %v307
      %v436 = vmax.bf16 %v180, %v308
      %v437 = vmax.bf16 %v181, %v309
      %v438 = vmax.bf16 %v182, %v310
      %v439 = vmax.bf16 %v183, %v311
      %v440 = vmax.bf16 %v184, %v312
      %v441 = vmax.bf16 %v185, %v313
      %v442 = vmax.bf16 %v186, %v314
      %v443 = vmax.bf16 %v187, %v315
      %v444 = vmax.bf16 %v188, %v316
      %v445 = vmax.bf16 %v189, %v317
      %v446 = vmax.bf16 %v190, %v318
      %v447 = vmax.bf16 %v191, %v319
      %v448 = vmax.bf16 %v192, %v320
      %v449 = vmax.bf16 %v193, %v321
      %v450 = vmax.bf16 %v194, %v322
      %v451 = vmax.bf16 %v195, %v323
      %v452 = vmax.bf16 %v196, %v324
      %v453 = vmax.bf16 %v197, %v325
      %v454 = vmax.bf16 %v198, %v326
      %v455 = vmax.bf16 %v199, %v327
      %v456 = vmax.bf16 %v200, %v328
      %v457 = vmax.bf16 %v201, %v329
      %v458 = vmax.bf16 %v202, %v330
      %v459 = vmax.bf16 %v203, %v331
      %v460 = vmax.bf16 %v204, %v332
      %v461 = vmax.bf16 %v205, %v333
      %v462 = vmax.bf16 %v206, %v334
      %v463 = vmax.bf16 %v207, %v335
      %v464 = vmax.bf16 %v208, %v336
      %v465 = vmax.bf16 %v209, %v337
      %v466 = vmax.bf16 %v210, %v338
      %v467 = vmax.bf16 %v211, %v339
      %v468 = vmax.bf16 %v212, %v340
      %v469 = vmax.bf16 %v213, %v341
      %v470 = vmax.bf16 %v214, %v342
      %v471 = vmax.bf16 %v215, %v343
      %v472 = vmax.bf16 %v216, %v344
      %v473 = vmax.bf16 %v217, %v345
      %v474 = vmax.bf16 %v218, %v346
      %v475 = vmax.bf16 %v219, %v347
      %v476 = vmax.bf16 %v220, %v348
      %v477 = vmax.bf16 %v221, %v349
      %v478 = vmax.bf16 %v222, %v350
      %v479 = vmax.bf16 %v223, %v351
      %v480 = vmax.bf16 %v224, %v352
      %v481 = vmax.bf16 %v417, %v419
      %v482 = vmax.bf16 %v418, %v420
      %v483 = vmax.bf16 %v421, %v423
      %v484 = vmax.bf16 %v422, %v424
      %v485 = vmax.bf16 %v425, %v427
      %v486 = vmax.bf16 %v426, %v428
      %v487 = vmax.bf16 %v429, %v431
      %v488 = vmax.bf16 %v430, %v432
      %v489 = vmax.bf16 %v433, %v435
      %v490 = vmax.bf16 %v434, %v436
      %v491 = vmax.bf16 %v437, %v439
      %v492 = vmax.bf16 %v438, %v440
      %v493 = vmax.bf16 %v441, %v443
      %v494 = vmax.bf16 %v442, %v444
      %v495 = vmax.bf16 %v445, %v447
      %v496 = vmax.bf16 %v446, %v448
      %v497 = vmax.bf16 %v449, %v451
      %v498 = vmax.bf16 %v450, %v452
      %v499 = vmax.bf16 %v453, %v455
      %v500 = vmax.bf16 %v454, %v456
      %v501 = vmax.bf16 %v457, %v459
      %v502 = vmax.bf16 %v458, %v460
      %v503 = vmax.bf16 %v461, %v463
      %v504 = vmax.bf16 %v462, %v464
      %v505 = vmax.bf16 %v465, %v467
      %v506 = vmax.bf16 %v466, %v468
      %v507 = vmax.bf16 %v469, %v471
      %v508 = vmax.bf16 %v470, %v472
      %v509 = vmax.bf16 %v473, %v475
      %v510 = vmax.bf16 %v474, %v476
      %v511 = vmax.bf16 %v477, %v479
      %v512 = vmax.bf16 %v478, %v480
      %513 = vst [vmem:[%s159] sm:$0xf] %v481
      %514 = vst [vmem:[%s159 + $0x4] sm:$0xf] %v482
      %515 = vst [vmem:[%s159 + $0x8] sm:$0xf] %v483
      %516 = vst [vmem:[%s159 + $0xc] sm:$0xf] %v484
      %517 = vst [vmem:[%s159 + $0x10] sm:$0xf] %v485
      %518 = vst [vmem:[%s159 + $0x14] sm:$0xf] %v486
      %519 = vst [vmem:[%s159 + $0x18] sm:$0xf] %v487
      %520 = vst [vmem:[%s159 + $0x1c] sm:$0xf] %v488
      %521 = vst [vmem:[%s159 + $0x20] sm:$0xf] %v489
      %522 = vst [vmem:[%s159 + $0x24] sm:$0xf] %v490
      %523 = vst [vmem:[%s159 + $0x28] sm:$0xf] %v491
      %524 = vst [vmem:[%s159 + $0x2c] sm:$0xf] %v492
      %525 = vst [vmem:[%s159 + $0x30] sm:$0xf] %v493
      %526 = vst [vmem:[%s159 + $0x34] sm:$0xf] %v494
      %527 = vst [vmem:[%s159 + $0x38] sm:$0xf] %v495
      %528 = vst [vmem:[%s159 + $0x3c] sm:$0xf] %v496
      %529 = vst [vmem:[%s159 + $0x40] sm:$0xf] %v497
      %530 = vst [vmem:[%s159 + $0x44] sm:$0xf] %v498
      %531 = vst [vmem:[%s159 + $0x48] sm:$0xf] %v499
      %532 = vst [vmem:[%s159 + $0x4c] sm:$0xf] %v500
      %533 = vst [vmem:[%s159 + $0x50] sm:$0xf] %v501
      %534 = vst [vmem:[%s159 + $0x54] sm:$0xf] %v502
      %535 = vst [vmem:[%s159 + $0x58] sm:$0xf] %v503
      %536 = vst [vmem:[%s159 + $0x5c] sm:$0xf] %v504
      %537 = vst [vmem:[%s159 + $0x60] sm:$0xf] %v505
      %538 = vst [vmem:[%s159 + $0x64] sm:$0xf] %v506
      %539 = vst [vmem:[%s159 + $0x68] sm:$0xf] %v507
      %540 = vst [vmem:[%s159 + $0x6c] sm:$0xf] %v508
      %541 = vst [vmem:[%s159 + $0x70] sm:$0xf] %v509
      %542 = vst [vmem:[%s159 + $0x74] sm:$0xf] %v510
      %543 = vst [vmem:[%s159 + $0x78] sm:$0xf] %v511
      %544 = vst [vmem:[%s159 + $0x7c] sm:$0xf] %v512
      %s545 = smul.u32 16, %s17
      %p546 = scmp.lt.s32.totalorder %s16, 1
      %s547 = scalar_select %p546, %s16, 1
      %p548 = scmp.lt.s32.totalorder %s545, 15
      %s549 = scalar_select %p548, %s545, 15
      %s550 = smul.addr %s549, 2
      %s551 = smul.addr %s547, 32
      %s552 = sadd.s32 %s550, %s551
      %s553 = smul.addr %s552, 4
      %s554 = scalar_lea.vmem %s1, %s553
      // Predicated region
      $region25: #{vgg16_forward.23} parent=23 // pred_check
        %p555 = pneg %p72
      $region26: #{vgg16_forward.23} parent=23 // pred_check_branch
        %557 = sbr.rel (%p555) target = $region28
      $region27: #{vgg16_forward.23} parent=23 // pred_region
        %s558 = smul.u32 16, %s17
      $region28: #{vgg16_forward.23} parent=23 // pred_fallthru
        _
    $region24: #{vgg16_forward.23} parent=5 // pred_fallthru
      _
    %p559 = scmp.le.s32.totalorder 2, %s7
    // Predicated region
    $region29: #{vgg16_forward.23} parent=5 // pred_check
      %p560 = pneg %p559
    $region30: #{vgg16_forward.23} parent=5 // pred_check_branch
      %562 = sbr.rel (%p560) target = $region32
    $region31: #{vgg16_forward.23} parent=5 // pred_region
      %s563 = ssub.s32 %s7, 2
      // Predicated region
      $region33: #{vgg16_forward.23} parent=31 // pred_check
        %p564 = pneg %p78
      $region34: #{vgg16_forward.23} parent=31 // pred_check_branch
        %566 = sbr.rel (%p564) target = $region36
      $region35: #{vgg16_forward.23} parent=31 // pred_region
        %s567 = smul.u32 16, %s19
        %p568 = scmp.lt.s32.totalorder %s18, 1
        %s569 = scalar_select %p568, %s18, 1
        %p570 = scmp.lt.s32.totalorder %s567, 15
        %s571 = scalar_select %p570, %s567, 15
        %s572 = smul.addr %s571, 2
        %s573 = smul.addr %s569, 32
        %s574 = sadd.s32 %s572, %s573
        %s575 = smul.addr %s574, 4
        %s576 = scalar_lea.vmem %s1, %s575
      $region36: #{vgg16_forward.23} parent=31 // pred_fallthru
        _
    $region32: #{vgg16_forward.23} parent=5 // pred_fallthru
      _
  $region6: #{vgg16_forward.23} parent=0 // loop_footer
    %s11 = sadd.s32 1, %s7
  $region7: #{vgg16_forward.23} parent=0 // loop_footer_branch
    %6 = sbr.rel target = $region3
  $region8: #{vgg16_forward.23} parent=0 // loop_exit
    _

// kernel: vgg16_forward.26
$region0: #{vgg16_forward.26}
  #allocation0 [shape = 'u32[]', space=smem, size = 0x4, offset = 0x4, fixed_abs, tag = 'smem constant byte address 0x4 - core index']
  #allocation1 [shape = 'u32[144,128]{1,0:T(1,128)}', space=vmem, size = 0x12000, scoped, tag = 'internal scratch']
  %s0 = inlined_call_operand.vmem [shape: bf16[2,16,8,256], index: 0, kind: input, shape index: {}]
  %s1 = inlined_call_operand.vmem [shape: bf16[2,8,8,128], index: 1, kind: output, shape index: {}]
  %s2 = sld [smem:[#allocation0]]
  $region37: #{vgg16_forward.26} parent=0
    _
  %s4 = ssub.s32 1, %s2
  %s5 = scalar_select 0, %s4, %s2
  loop: start=0, step=1, limit=4
  $region2: #{vgg16_forward.26} parent=0 // loop_pre_header
    _
  $region3: #{vgg16_forward.26} parent=0 // loop_header
    %s7 = sphi 0, %s11
    %p8 = scmp.ge.s32.totalorder %s7, 4
    %s14 = sphi 0, %s26
    %s15 = sphi 0, %s22
    %s16 = sphi 0, %s14
    %s17 = sphi 0, %s15
    %s18 = sphi 0, %s16
    %s19 = sphi 0, %s17
    %s31 = sphi 0, %s33
    %s34 = sphi 0, %s31
    %s35 = sphi 0, %s34
    %s51 = sphi 0, %s35
    %s59 = sphi 0, %s61
    %s62 = sphi 0, %s59
    %s63 = sphi 0, %s62
    %s79 = sphi 0, %s63
  $region4: #{vgg16_forward.26} parent=0 // loop_header_branch
    %10 = sbr.rel (%p8) target = $region8
  $region5: #{vgg16_forward.26} parent=0 // loop_body
    %s12 = ssub.s32 %s7, 1
    %s13 = ssub.s32 %s7, 2
    %s20 = sadd.s32 1, %s15
    %p21 = scmp.ge.s32.totalorder %s20, 1
    %s22 = scalar_select %p21, 0, %s20
    %s23 = sadd.s32 1, %s14
    %s24 = scalar_select %p21, %s23, %s14
    %p25 = scmp.ge.s32.totalorder %s24, 2
    %s26 = scalar_select %p25, 0, %s24
    %s27 = ssub.s32 %s14, %s26
    %s28 = ssub.s32 %s15, %s22
    %s29 = sor.u32 %s27, %s28
    %p30 = scmp.eq.s32.totalorder %s29, 0
    %s32 = sadd.s32 %s31, 1
    %s33 = scalar_select %p30, %s31, %s32
    %p36 = pneg %p30
    %p37 = scmp.eq.s32.totalorder %s7, 1
    %p38 = por %p36, %p37
    %p39 = scmp.ne.s32.totalorder %s31, %s34
    %p40 = scmp.eq.s32.totalorder %s7, 0
    %p41 = por %p39, %p40
    %p42 = scmp.ne.s32.totalorder %s31, %s34
    %p43 = scmp.eq.s32.totalorder %s12, 1
    %p44 = por %p42, %p43
    %p45 = scmp.ne.s32.totalorder %s34, %s35
    %p46 = scmp.eq.s32.totalorder %s12, 0
    %p47 = por %p45, %p46
    %p48 = scmp.ne.s32.totalorder %s34, %s35
    %p49 = scmp.eq.s32.totalorder %s13, 1
    %p50 = por %p48, %p49
    %p52 = scmp.ne.s32.totalorder %s35, %s51
    %p53 = scmp.eq.s32.totalorder %s13, 0
    %p54 = por %p52, %p53
    %s55 = ssub.s32 %s14, %s26
    %s56 = ssub.s32 %s15, %s22
    %s57 = sor.u32 %s55, %s56
    %p58 = scmp.eq.s32.totalorder %s57, 0
    %s60 = sadd.s32 %s59, 1
    %s61 = scalar_select %p58, %s59, %s60
    %p64 = pneg %p58
    %p65 = scmp.eq.s32.totalorder %s7, 1
    %p66 = por %p64, %p65
    %p67 = scmp.ne.s32.totalorder %s59, %s62
    %p68 = scmp.eq.s32.totalorder %s7, 0
    %p69 = por %p67, %p68
    %p70 = scmp.ne.s32.totalorder %s59, %s62
    %p71 = scmp.eq.s32.totalorder %s12, 1
    %p72 = por %p70, %p71
    %p73 = scmp.ne.s32.totalorder %s62, %s63
    %p74 = scmp.eq.s32.totalorder %s12, 0
    %p75 = por %p73, %p74
    %p76 = scmp.ne.s32.totalorder %s62, %s63
    %p77 = scmp.eq.s32.totalorder %s13, 1
    %p78 = por %p76, %p77
    %p80 = scmp.ne.s32.totalorder %s63, %s79
    %p81 = scmp.eq.s32.totalorder %s13, 0
    %p82 = por %p80, %p81
    %p83 = scmp.le.s32.totalorder 1, %s7
    %p84 = scmp.lt.s32.totalorder %s7, 3
    %p85 = pnand %p83, %p84
    %p86 = pneg %p85
    // Predicated region
    $region9: #{vgg16_forward.26} parent=5 // pred_check
      _
    $region10: #{vgg16_forward.26} parent=5 // pred_check_branch
      %88 = sbr.rel (%p85) target = $region12
    $region11: #{vgg16_forward.26} parent=5 // pred_region
      %s89 = ssub.s32 %s7, 1
    $region12: #{vgg16_forward.26} parent=5 // pred_fallthru
      _
    %p90 = scmp.lt.s32.totalorder %s7, 2
    // Predicated region
    $region13: #{vgg16_forward.26} parent=5 // pred_check
      %p91 = pneg %p90
    $region14: #{vgg16_forward.26} parent=5 // pred_check_branch
      %93 = sbr.rel (%p91) target = $region16
    $region15: #{vgg16_forward.26} parent=5 // pred_region
      // Predicated region
      $region17: #{vgg16_forward.26} parent=15 // pred_check
        %p94 = pneg %p41
      $region18: #{vgg16_forward.26} parent=15 // pred_check_branch
        %96 = sbr.rel (%p94) target = $region20
      $region19: #{vgg16_forward.26} parent=15 // pred_region
        %s97 = smul.u32 16, %s15
        %p98 = scmp.lt.s32.totalorder %s14, 1
        %s99 = scalar_select %p98, %s14, 1
        %p100 = scmp.lt.s32.totalorder %s97, 15
        %s101 = scalar_select %p100, %s97, 15
        %s102 = smul.addr %s101, 2
        %s103 = smul.addr %s99, 32
        %s104 = sadd.s32 %s102, %s103
        %s105 = smul.addr %s104, 4
        %s106 = scalar_lea.vmem %s0, %s105
        %s107 = smul.u32 16, %s15
      $region20: #{vgg16_forward.26} parent=15 // pred_fallthru
        _
    $region16: #{vgg16_forward.26} parent=5 // pred_fallthru
      _
    %p108 = scmp.le.s32.totalorder 1, %s7
    %p109 = scmp.lt.s32.totalorder %s7, 3
    %p110 = pnand %p108, %p109
    %p111 = pneg %p110
    // Predicated region
    $region21: #{vgg16_forward.26} parent=5 // pred_check
      _
    $region22: #{vgg16_forward.26} parent=5 // pred_check_branch
      %113 = sbr.rel (%p110) target = $region24
    $region23: #{vgg16_forward.26} parent=5 // pred_region
      %s114 = ssub.s32 %s7, 1
      %s115 = smul.u32 16, %s17
      %p116 = scmp.lt.s32.totalorder %s16, 1
      %s117 = scalar_select %p116, %s16, 1
      %p118 = scmp.lt.s32.totalorder %s115, 15
      %s119 = scalar_select %p118, %s115, 15
      %s120 = smul.addr %s119, 2
      %s121 = smul.addr %s117, 32
      %s122 = sadd.s32 %s120, %s121
      %s123 = smul.addr %s122, 4
      %s124 = scalar_lea.vmem %s0, %s123
      %p125 = pneg %p47
      %p126 = pneg %p44
      %p127 = pneg %p75
      %p128 = pneg %p72
      %s129 = smul.u32 8, %s17
      %p130 = scmp.lt.s32.totalorder %s16, 1
      %s131 = scalar_select %p130, %s16, 1
      %p132 = scmp.lt.s32.totalorder %s129, 7
      %s133 = scalar_select %p132, %s129, 7
      %s134 = smul.addr %s131, 8
      %s135 = sadd.s32 %s133, %s134
      %s136 = smul.addr %s135, 4
      %s137 = scalar_lea.vmem %s1, %s136
      %s138 = smul.u32 16, %s17
      %p139 = scmp.lt.s32.totalorder %s16, 1
      %s140 = scalar_select %p139, %s16, 1
      %p141 = scmp.lt.s32.totalorder %s138, 15
      %s142 = scalar_select %p141, %s138, 15
      %s143 = smul.addr %s142, 2
      %s144 = smul.addr %s140, 32
      %s145 = sadd.s32 %s143, %s144
      %s146 = smul.addr %s145, 4
      %s147 = scalar_lea.vmem %s0, %s146
      %s148 = smul.u32 16, %s17
      %s149 = smul.u32 8, %s17
      %p150 = scmp.lt.s32.totalorder %s16, 1
      %s151 = scalar_select %p150, %s16, 1
      %p152 = scmp.lt.s32.totalorder %s149, 7
      %s153 = scalar_select %p152, %s149, 7
      %s154 = smul.addr %s151, 8
      %s155 = sadd.s32 %s153, %s154
      %s156 = smul.addr %s155, 4
      %s157 = scalar_lea.vmem %s1, %s156
      %s158 = smul.u32 8, %s17
      %v159 = vld [vmem:[%s147] sm:$0xff]
      %v160 = vld [vmem:[%s147 + $0x8] sm:$0xff]
      %v161 = vld [vmem:[%s147 + $0x10] sm:$0xff]
      %v162 = vld [vmem:[%s147 + $0x18] sm:$0xff]
      %v163 = vld [vmem:[%s147 + $0x20] sm:$0xff]
      %v164 = vld [vmem:[%s147 + $0x28] sm:$0xff]
      %v165 = vld [vmem:[%s147 + $0x30] sm:$0xff]
      %v166 = vld [vmem:[%s147 + $0x38] sm:$0xff]
      %v167 = vld [vmem:[%s147 + $0x40] sm:$0xff]
      %v168 = vld [vmem:[%s147 + $0x48] sm:$0xff]
      %v169 = vld [vmem:[%s147 + $0x50] sm:$0xff]
      %v170 = vld [vmem:[%s147 + $0x58] sm:$0xff]
      %v171 = vld [vmem:[%s147 + $0x60] sm:$0xff]
      %v172 = vld [vmem:[%s147 + $0x68] sm:$0xff]
      %v173 = vld [vmem:[%s147 + $0x70] sm:$0xff]
      %v174 = vld [vmem:[%s147 + $0x78] sm:$0xff]
      %v191 = vrot.slane %v159, 4
      %v192 = vrot.slane %v160, 4
      %v193 = vrot.slane %v161, 4
      %v194 = vrot.slane %v162, 4
      %v195 = vrot.slane %v163, 4
      %v196 = vrot.slane %v164, 4
      %v197 = vrot.slane %v165, 4
      %v198 = vrot.slane %v166, 4
      %v199 = vrot.slane %v167, 4
      %v200 = vrot.slane %v168, 4
      %v201 = vrot.slane %v169, 4
      %v202 = vrot.slane %v170, 4
      %v203 = vrot.slane %v171, 4
      %v204 = vrot.slane %v172, 4
      %v205 = vrot.slane %v173, 4
      %v206 = vrot.slane %v174, 4
      %v223 = vmax.bf16 %v159, %v191
      %v224 = vmax.bf16 %v160, %v192
      %v225 = vmax.bf16 %v161, %v193
      %v226 = vmax.bf16 %v162, %v194
      %v227 = vmax.bf16 %v163, %v195
      %v228 = vmax.bf16 %v164, %v196
      %v229 = vmax.bf16 %v165, %v197
      %v230 = vmax.bf16 %v166, %v198
      %v231 = vmax.bf16 %v167, %v199
      %v232 = vmax.bf16 %v168, %v200
      %v233 = vmax.bf16 %v169, %v201
      %v234 = vmax.bf16 %v170, %v202
      %v235 = vmax.bf16 %v171, %v203
      %v236 = vmax.bf16 %v172, %v204
      %v237 = vmax.bf16 %v173, %v205
      %v238 = vmax.bf16 %v174, %v206
      %v239 = vmax.bf16 %v223, %v224
      %v240 = vmax.bf16 %v225, %v226
      %v241 = vmax.bf16 %v227, %v228
      %v242 = vmax.bf16 %v229, %v230
      %v243 = vmax.bf16 %v231, %v232
      %v244 = vmax.bf16 %v233, %v234
      %v245 = vmax.bf16 %v235, %v236
      %v246 = vmax.bf16 %v237, %v238
      %247 = vst [vmem:[%s157] sm:$0xf] %v239
      %248 = vst [vmem:[%s157 + $0x4] sm:$0xf] %v240
      %249 = vst [vmem:[%s157 + $0x8] sm:$0xf] %v241
      %250 = vst [vmem:[%s157 + $0xc] sm:$0xf] %v242
      %251 = vst [vmem:[%s157 + $0x10] sm:$0xf] %v243
      %252 = vst [vmem:[%s157 + $0x14] sm:$0xf] %v244
      %253 = vst [vmem:[%s157 + $0x18] sm:$0xf] %v245
      %254 = vst [vmem:[%s157 + $0x1c] sm:$0xf] %v246
      %s255 = smul.u32 8, %s17
      %p256 = scmp.lt.s32.totalorder %s16, 1
      %s257 = scalar_select %p256, %s16, 1
      %p258 = scmp.lt.s32.totalorder %s255, 7
      %s259 = scalar_select %p258, %s255, 7
      %s260 = smul.addr %s257, 8
      %s261 = sadd.s32 %s259, %s260
      %s262 = smul.addr %s261, 4
      %s263 = scalar_lea.vmem %s1, %s262
      // Predicated region
      $region25: #{vgg16_forward.26} parent=23 // pred_check
        %p264 = pneg %p72
      $region26: #{vgg16_forward.26} parent=23 // pred_check_branch
        %266 = sbr.rel (%p264) target = $region28
      $region27: #{vgg16_forward.26} parent=23 // pred_region
        %s267 = smul.u32 8, %s17
      $region28: #{vgg16_forward.26} parent=23 // pred_fallthru
        _
    $region24: #{vgg16_forward.26} parent=5 // pred_fallthru
      _
    %p268 = scmp.le.s32.totalorder 2, %s7
    // Predicated region
    $region29: #{vgg16_forward.26} parent=5 // pred_check
      %p269 = pneg %p268
    $region30: #{vgg16_forward.26} parent=5 // pred_check_branch
      %271 = sbr.rel (%p269) target = $region32
    $region31: #{vgg16_forward.26} parent=5 // pred_region
      %s272 = ssub.s32 %s7, 2
      // Predicated region
      $region33: #{vgg16_forward.26} parent=31 // pred_check
        %p273 = pneg %p78
      $region34: #{vgg16_forward.26} parent=31 // pred_check_branch
        %275 = sbr.rel (%p273) target = $region36
      $region35: #{vgg16_forward.26} parent=31 // pred_region
        %s276 = smul.u32 8, %s19
        %p277 = scmp.lt.s32.totalorder %s18, 1
        %s278 = scalar_select %p277, %s18, 1
        %p279 = scmp.lt.s32.totalorder %s276, 7
        %s280 = scalar_select %p279, %s276, 7
        %s281 = smul.addr %s278, 8
        %s282 = sadd.s32 %s280, %s281
        %s283 = smul.addr %s282, 4
        %s284 = scalar_lea.vmem %s1, %s283
      $region36: #{vgg16_forward.26} parent=31 // pred_fallthru
        _
    $region32: #{vgg16_forward.26} parent=5 // pred_fallthru
      _
  $region6: #{vgg16_forward.26} parent=0 // loop_footer
    %s11 = sadd.s32 1, %s7
  $region7: #{vgg16_forward.26} parent=0 // loop_footer_branch
    %6 = sbr.rel target = $region3
  $region8: #{vgg16_forward.26} parent=0 // loop_exit
    _

// kernel: vgg16_forward.24
$region0: #{vgg16_forward.24}
  #allocation0 [shape = 'u32[]', space=smem, size = 0x4, offset = 0x4, fixed_abs, tag = 'smem constant byte address 0x4 - core index']
  #allocation1 [shape = 'u32[144,128]{1,0:T(1,128)}', space=vmem, size = 0x12000, scoped, tag = 'internal scratch']
  %s0 = inlined_call_operand.vmem [shape: bf16[2,18,18,128], index: 0, kind: input, shape index: {}]
  %s1 = inlined_call_operand.vmem [shape: bf16[3,3,128,128], index: 1, kind: input, shape index: {}]
  %s2 = inlined_call_operand.vmem [shape: f32[1,128], index: 2, kind: input, shape index: {}]
  %s3 = inlined_call_operand.vmem [shape: bf16[2,16,16,128], index: 3, kind: output, shape index: {}]
  %s4 = sld [smem:[#allocation0]]
  $region52: #{vgg16_forward.24} parent=0
    _
  %s6 = ssub.s32 1, %s4
  %s7 = scalar_select 0, %s6, %s4
  loop: start=0, step=1, limit=4
  $region2: #{vgg16_forward.24} parent=0 // loop_pre_header
    _
  $region3: #{vgg16_forward.24} parent=0 // loop_header
    %s9 = sphi 0, %s13
    %p10 = scmp.ge.s32.totalorder %s9, 4
    %s19 = sphi 0, %s21
    %s22 = sphi 0, %s19
    %s23 = sphi 0, %s22
    %s39 = sphi 0, %s23
    %s43 = sphi 0, %s43
    %s45 = sphi 0, %s43
    %s46 = sphi 0, %s45
    %s60 = sphi 0, %s46
    %s64 = sphi 0, %s64
    %s66 = sphi 0, %s64
    %s67 = sphi 0, %s66
    %s81 = sphi 0, %s67
    %s87 = sphi 0, %s89
    %s90 = sphi 0, %s87
    %s91 = sphi 0, %s90
    %s107 = sphi 0, %s91
  $region4: #{vgg16_forward.24} parent=0 // loop_header_branch
    %12 = sbr.rel (%p10) target = $region8
  $region5: #{vgg16_forward.24} parent=0 // loop_body
    %s14 = ssub.s32 %s9, 1
    %s15 = ssub.s32 %s9, 2
    %s16 = sadd.s32 %s9, 1
    %s17 = ssub.s32 %s9, %s16
    %p18 = scmp.eq.s32.totalorder %s17, 0
    %s20 = sadd.s32 %s19, 1
    %s21 = scalar_select %p18, %s19, %s20
    %p24 = pneg %p18
    %p25 = scmp.eq.s32.totalorder %s9, 1
    %p26 = por %p24, %p25
    %p27 = scmp.ne.s32.totalorder %s19, %s22
    %p28 = scmp.eq.s32.totalorder %s9, 0
    %p29 = por %p27, %p28
    %p30 = scmp.ne.s32.totalorder %s19, %s22
    %p31 = scmp.eq.s32.totalorder %s14, 1
    %p32 = por %p30, %p31
    %p33 = scmp.ne.s32.totalorder %s22, %s23
    %p34 = scmp.eq.s32.totalorder %s14, 0
    %p35 = por %p33, %p34
    %p36 = scmp.ne.s32.totalorder %s22, %s23
    %p37 = scmp.eq.s32.totalorder %s15, 1
    %p38 = por %p36, %p37
    %p40 = scmp.ne.s32.totalorder %s23, %s39
    %p41 = scmp.eq.s32.totalorder %s15, 0
    %p42 = por %p40, %p41
    %s44 = sadd.s32 %s43, 1
    %p47 = scmp.eq.s32.totalorder %s9, 1
    %p48 = scmp.ne.s32.totalorder %s43, %s45
    %p49 = scmp.eq.s32.totalorder %s9, 0
    %p50 = por %p48, %p49
    %p51 = scmp.ne.s32.totalorder %s43, %s45
    %p52 = scmp.eq.s32.totalorder %s14, 1
    %p53 = por %p51, %p52
    %p54 = scmp.ne.s32.totalorder %s45, %s46
    %p55 = scmp.eq.s32.totalorder %s14, 0
    %p56 = por %p54, %p55
    %p57 = scmp.ne.s32.totalorder %s45, %s46
    %p58 = scmp.eq.s32.totalorder %s15, 1
    %p59 = por %p57, %p58
    %p61 = scmp.ne.s32.totalorder %s46, %s60
    %p62 = scmp.eq.s32.totalorder %s15, 0
    %p63 = por %p61, %p62
    %s65 = sadd.s32 %s64, 1
    %p68 = scmp.eq.s32.totalorder %s9, 1
    %p69 = scmp.ne.s32.totalorder %s64, %s66
    %p70 = scmp.eq.s32.totalorder %s9, 0
    %p71 = por %p69, %p70
    %p72 = scmp.ne.s32.totalorder %s64, %s66
    %p73 = scmp.eq.s32.totalorder %s14, 1
    %p74 = por %p72, %p73
    %p75 = scmp.ne.s32.totalorder %s66, %s67
    %p76 = scmp.eq.s32.totalorder %s14, 0
    %p77 = por %p75, %p76
    %p78 = scmp.ne.s32.totalorder %s66, %s67
    %p79 = scmp.eq.s32.totalorder %s15, 1
    %p80 = por %p78, %p79
    %p82 = scmp.ne.s32.totalorder %s67, %s81
    %p83 = scmp.eq.s32.totalorder %s15, 0
    %p84 = por %p82, %p83
    %s85 = ssub.s32 %s9, %s16
    %p86 = scmp.eq.s32.totalorder %s85, 0
    %s88 = sadd.s32 %s87, 1
    %s89 = scalar_select %p86, %s87, %s88
    %p92 = pneg %p86
    %p93 = scmp.eq.s32.totalorder %s9, 1
    %p94 = por %p92, %p93
    %p95 = scmp.ne.s32.totalorder %s87, %s90
    %p96 = scmp.eq.s32.totalorder %s9, 0
    %p97 = por %p95, %p96
    %p98 = scmp.ne.s32.totalorder %s87, %s90
    %p99 = scmp.eq.s32.totalorder %s14, 1
    %p100 = por %p98, %p99
    %p101 = scmp.ne.s32.totalorder %s90, %s91
    %p102 = scmp.eq.s32.totalorder %s14, 0
    %p103 = por %p101, %p102
    %p104 = scmp.ne.s32.totalorder %s90, %s91
    %p105 = scmp.eq.s32.totalorder %s15, 1
    %p106 = por %p104, %p105
    %p108 = scmp.ne.s32.totalorder %s91, %s107
    %p109 = scmp.eq.s32.totalorder %s15, 0
    %p110 = por %p108, %p109
    %p111 = scmp.le.s32.totalorder 1, %s9
    %p112 = scmp.lt.s32.totalorder %s9, 3
    %p113 = pnand %p111, %p112
    %p114 = pneg %p113
    // Predicated region
    $region9: #{vgg16_forward.24} parent=5 // pred_check
      _
    $region10: #{vgg16_forward.24} parent=5 // pred_check_branch
      %116 = sbr.rel (%p113) target = $region12
    $region11: #{vgg16_forward.24} parent=5 // pred_region
      %s117 = ssub.s32 %s9, 1
      // Predicated region
      $region13: #{vgg16_forward.24} parent=11 // pred_check
        %p118 = pneg %p56
      $region14: #{vgg16_forward.24} parent=11 // pred_check_branch
        %120 = sbr.rel (%p118) target = $region16
      $region15: #{vgg16_forward.24} parent=11 // pred_region
        _
      $region16: #{vgg16_forward.24} parent=11 // pred_fallthru
        _
      // Predicated region
      $region17: #{vgg16_forward.24} parent=11 // pred_check
        %p121 = pneg %p77
      $region18: #{vgg16_forward.24} parent=11 // pred_check_branch
        %123 = sbr.rel (%p121) target = $region20
      $region19: #{vgg16_forward.24} parent=11 // pred_region
        _
      $region20: #{vgg16_forward.24} parent=11 // pred_fallthru
        _
    $region12: #{vgg16_forward.24} parent=5 // pred_fallthru
      _
    %p124 = scmp.lt.s32.totalorder %s9, 2
    // Predicated region
    $region21: #{vgg16_forward.24} parent=5 // pred_check
      %p125 = pneg %p124
    $region22: #{vgg16_forward.24} parent=5 // pred_check_branch
      %127 = sbr.rel (%p125) target = $region24
    $region23: #{vgg16_forward.24} parent=5 // pred_region
      // Predicated region
      $region25: #{vgg16_forward.24} parent=23 // pred_check
        %p128 = pneg %p29
      $region26: #{vgg16_forward.24} parent=23 // pred_check_branch
        %130 = sbr.rel (%p128) target = $region28
      $region27: #{vgg16_forward.24} parent=23 // pred_region
        %p131 = scmp.lt.s32.totalorder %s9, 1
        %s132 = scalar_select %p131, %s9, 1
        %s133 = smul.addr %s132, 54
        %s134 = smul.addr %s133, 4
        %s135 = scalar_lea.vmem %s0, %s134
      $region28: #{vgg16_forward.24} parent=23 // pred_fallthru
        _
    $region24: #{vgg16_forward.24} parent=5 // pred_fallthru
      _
    %p136 = scmp.le.s32.totalorder 1, %s9
    %p137 = scmp.lt.s32.totalorder %s9, 3
    %p138 = pnand %p136, %p137
    %p139 = pneg %p138
    // Predicated region
    $region29: #{vgg16_forward.24} parent=5 // pred_check
      _
    $region30: #{vgg16_forward.24} parent=5 // pred_check_branch
      %141 = sbr.rel (%p138) target = $region32
    $region31: #{vgg16_forward.24} parent=5 // pred_region
      %s142 = ssub.s32 %s9, 1
      %p143 = scmp.lt.s32.totalorder %s14, 1
      %s144 = scalar_select %p143, %s14, 1
      %s145 = smul.addr %s144, 54
      %s146 = smul.addr %s145, 4
      %s147 = scalar_lea.vmem %s0, %s146
      %p148 = pneg %p35
      %p149 = pneg %p32
      %p150 = pneg %p56
      %p151 = pneg %p53
      %p152 = pneg %p77
      %p153 = pneg %p74
      %p154 = pneg %p103
      %p155 = pneg %p100
      %p156 = scmp.lt.s32.totalorder %s14, 1
      %s157 = scalar_select %p156, %s14, 1
      %s158 = smul.addr %s157, 32
      %s159 = smul.addr %s158, 4
      %s160 = scalar_lea.vmem %s3, %s159
      %p161 = scmp.lt.s32.totalorder %s14, 1
      %s162 = scalar_select %p161, %s14, 1
      %s163 = smul.addr %s162, 54
      %s164 = smul.addr %s163, 4
      %s165 = scalar_lea.vmem %s0, %s164
      %p166 = scmp.lt.s32.totalorder %s14, 1
      %s167 = scalar_select %p166, %s14, 1
      %s168 = smul.addr %s167, 32
      %s169 = smul.addr %s168, 4
      %s170 = scalar_lea.vmem %s3, %s169
      loop: start=0, step=1, limit=16
      $region33: #{vgg16_forward.24} parent=31 // loop_pre_header
        _
      $region34: #{vgg16_forward.24} parent=31 // loop_header
        %s173 = sphi 0, %s177
        %p174 = scmp.ge.s32.totalorder %s173, 16
      $region35: #{vgg16_forward.24} parent=31 // loop_header_branch
        %176 = sbr.rel (%p174) target = $region39
      $region36: #{vgg16_forward.24} parent=31 // loop_body
        %s178 = smul.u32 %s173, 3
        %s179 = smul.addr %s178, 4
        %s180 = scalar_lea.vmem %s165, %s179
        %v181 = vld [vmem:[%s180] sm:$0xf]
        %v182 = vld [vmem:[%s180 + $0x4] sm:$0xf]
        %v183 = vld [vmem:[%s1] sm:$0xf]
        %v184 = vld [vmem:[%s1 + $0x4] sm:$0xf]
        %v185 = vld [vmem:[%s1 + $0x8] sm:$0xf]
        %v186 = vld [vmem:[%s1 + $0xc] sm:$0xf]
        %v187 = vld [vmem:[%s1 + $0x10] sm:$0xf]
        %v188 = vld [vmem:[%s1 + $0x14] sm:$0xf]
        %v189 = vld [vmem:[%s1 + $0x18] sm:$0xf]
        %v190 = vld [vmem:[%s1 + $0x1c] sm:$0xf]
        %v191 = vld [vmem:[%s1 + $0x20] sm:$0xf]
        %v192 = vld [vmem:[%s1 + $0x24] sm:$0xf]
        %v193 = vld [vmem:[%s1 + $0x28] sm:$0xf]
        %v194 = vld [vmem:[%s1 + $0x2c] sm:$0xf]
        %v195 = vld [vmem:[%s1 + $0x30] sm:$0xf]
        %v196 = vld [vmem:[%s1 + $0x34] sm:$0xf]
        %v197 = vld [vmem:[%s1 + $0x38] sm:$0xf]
        %v198 = vld [vmem:[%s1 + $0x3c] sm:$0xf]
        %v199 = vld [vmem:[%s180 + $0x8] sm:$0x1]
        %s200 = scalar_lea.vmem %s1, 64
        %v201 = vld [vmem:[%s200] sm:$0xf]
        %v202 = vld [vmem:[%s200 + $0x4] sm:$0xf]
        %v203 = vld [vmem:[%s200 + $0x8] sm:$0xf]
        %v204 = vld [vmem:[%s200 + $0xc] sm:$0xf]
        %v205 = vld [vmem:[%s200 + $0x10] sm:$0xf]
        %v206 = vld [vmem:[%s200 + $0x14] sm:$0xf]
        %v207 = vld [vmem:[%s200 + $0x18] sm:$0xf]
        %v208 = vld [vmem:[%s200 + $0x1c] sm:$0xf]
        %v209 = vld [vmem:[%s200 + $0x20] sm:$0xf]
        %v210 = vld [vmem:[%s200 + $0x24] sm:$0xf]
        %v211 = vld [vmem:[%s200 + $0x28] sm:$0xf]
        %v212 = vld [vmem:[%s200 + $0x2c] sm:$0xf]
        %v213 = vld [vmem:[%s200 + $0x30] sm:$0xf]
        %v214 = vld [vmem:[%s200 + $0x34] sm:$0xf]
        %v215 = vld [vmem:[%s200 + $0x38] sm:$0xf]
        %v216 = vld [vmem:[%s200 + $0x3c] sm:$0xf]
        %v220 = vunpack.c.l.b16 %v181
        %v221 = vunpack.c.l.b16 %v182
        %v222 = vunpack.c.l.b16 %v199
        %v223 = vpack.c.b16 %v221, %v220
        %v224 = vpack.c.b16 %v222, %v222
        %vm225 = vsmask.f32 7424
        %v227 = vshrl.u32 %v223, 16
        %v229 = vshll.u32 %v223, 16
        %v231 = vrot.slane %v229, 1
        %v232 = vor.u32 %v227, %v231
        %v234 = vshll.u32 %v224, 16
        %v236 = vrot.slane %v234, 1
        %v237 = vsel %vm225, %v232, %v236
        %v255 = vunpack.c.l.b16 %v201
        %v256 = vunpack.c.l.b16 %v202
        %v257 = vunpack.c.l.b16 %v203
        %v258 = vunpack.c.l.b16 %v204
        %v259 = vunpack.c.l.b16 %v205
        %v260 = vunpack.c.l.b16 %v206
        %v261 = vunpack.c.l.b16 %v207
        %v262 = vunpack.c.l.b16 %v208
        %v263 = vunpack.c.l.b16 %v209
        %v264 = vunpack.c.l.b16 %v210
        %v265 = vunpack.c.l.b16 %v211
        %v266 = vunpack.c.l.b16 %v212
        %v267 = vunpack.c.l.b16 %v213
        %v268 = vunpack.c.l.b16 %v214
        %v269 = vunpack.c.l.b16 %v215
        %v270 = vunpack.c.l.b16 %v216
        %v271 = vpack.c.b16 %v256, %v255
        %v272 = vpack.c.b16 %v258, %v257
        %v273 = vpack.c.b16 %v260, %v259
        %v274 = vpack.c.b16 %v262, %v261
        %v275 = vpack.c.b16 %v264, %v263
        %v276 = vpack.c.b16 %v266, %v265
        %v277 = vpack.c.b16 %v268, %v267
        %v278 = vpack.c.b16 %v270, %v269
        %287 = vmatprep.subr.bf16.mxu0 0
        %288 = vmatpush1.bf16.msra.mxu0 %v271
        %289 = vmatprep.subr.bf16.mxu0 0
        %290 = vmatpush1.bf16.msra.mxu0 %v272
        %291 = vmatprep.subr.bf16.mxu0 0
        %292 = vmatpush1.bf16.msra.mxu0 %v273
        %293 = vmatprep.subr.bf16.mxu0 0
        %294 = vmatpush1.bf16.msra.mxu0 %v274
        %295 = vmatprep.subr.bf16.mxu0 0
        %296 = vmatpush1.bf16.msra.mxu0 %v275
        %297 = vmatprep.subr.bf16.mxu0 0
        %298 = vmatpush1.bf16.msra.mxu0 %v276
        %299 = vmatprep.subr.bf16.mxu0 0
        %300 = vmatpush1.bf16.msra.mxu0 %v277
        %301 = vmatprep.subr.bf16.mxu0 0
        %302 = vmatpush1.bf16.msra.mxu0 %v278
        %303 = vmatprep.subr.bf16.mxu0 0
        %304 = vmatpush1.bf16.msra.mxu0 0
        %305 = vmatprep.subr.bf16.mxu0 0
        %306 = vmatpush1.bf16.msra.mxu0 0
        %307 = vmatprep.subr.bf16.mxu0 0
        %308 = vmatpush1.bf16.msra.mxu0 0
        %309 = vmatprep.subr.bf16.mxu0 0
        %310 = vmatpush1.bf16.msra.mxu0 0
        %311 = vmatprep.subr.bf16.mxu0 0
        %312 = vmatpush1.bf16.msra.mxu0 0
        %313 = vmatprep.subr.bf16.mxu0 0
        %314 = vmatpush1.bf16.msra.mxu0 0
        %315 = vmatprep.subr.bf16.mxu0 0
        %316 = vmatpush1.bf16.msra.mxu0 0
        %317 = vmatprep.subr.bf16.mxu0 0
        %318 = vmatpush1.bf16.msra.mxu0 0
        %319 = vmatprep.mubr.bf16.mxu0 0
        %320 = vmatmul.mubr.bf16.gmra.mrb[0].mxu0 %v237
        %v321 = vpop.f32.mrb[0].mxu0
        %v322 = vadd.f32 0.0, %v321
        %v323 = vpop.f32.mrb[0].mxu0
        %v324 = vpop.f32.mrb[0].mxu0
        %v325 = vadd.f32 0.0, %v324
        %v326 = vpop.f32.mrb[0].mxu0
        %327 = vdwg.mxu0
        %v345 = vunpack.c.l.b16 %v183
        %v346 = vunpack.c.l.b16 %v184
        %v347 = vunpack.c.l.b16 %v185
        %v348 = vunpack.c.l.b16 %v186
        %v349 = vunpack.c.l.b16 %v187
        %v350 = vunpack.c.l.b16 %v188
        %v351 = vunpack.c.l.b16 %v189
        %v352 = vunpack.c.l.b16 %v190
        %v353 = vunpack.c.l.b16 %v191
        %v354 = vunpack.c.l.b16 %v192
        %v355 = vunpack.c.l.b16 %v193
        %v356 = vunpack.c.l.b16 %v194
        %v357 = vunpack.c.l.b16 %v195
        %v358 = vunpack.c.l.b16 %v196
        %v359 = vunpack.c.l.b16 %v197
        %v360 = vunpack.c.l.b16 %v198
        %v361 = vpack.c.b16 %v346, %v345
        %v362 = vpack.c.b16 %v348, %v347
        %v363 = vpack.c.b16 %v350, %v349
        %v364 = vpack.c.b16 %v352, %v351
        %v365 = vpack.c.b16 %v354, %v353
        %v366 = vpack.c.b16 %v356, %v355
        %v367 = vpack.c.b16 %v358, %v357
        %v368 = vpack.c.b16 %v360, %v359
        %377 = vmatprep.subr.bf16.mxu0 0
        %378 = vmatpush1.bf16.msra.mxu0 %v361
        %379 = vmatprep.subr.bf16.mxu0 0
        %380 = vmatpush1.bf16.msra.mxu0 %v362
        %381 = vmatprep.subr.bf16.mxu0 0
        %382 = vmatpush1.bf16.msra.mxu0 %v363
        %383 = vmatprep.subr.bf16.mxu0 0
        %384 = vmatpush1.bf16.msra.mxu0 %v364
        %385 = vmatprep.subr.bf16.mxu0 0
        %386 = vmatpush1.bf16.msra.mxu0 %v365
        %387 = vmatprep.subr.bf16.mxu0 0
        %388 = vmatpush1.bf16.msra.mxu0 %v366
        %389 = vmatprep.subr.bf16.mxu0 0
        %390 = vmatpush1.bf16.msra.mxu0 %v367
        %391 = vmatprep.subr.bf16.mxu0 0
        %392 = vmatpush1.bf16.msra.mxu0 %v368
        %393 = vmatprep.subr.bf16.mxu0 0
        %394 = vmatpush1.bf16.msra.mxu0 0
        %395 = vmatprep.subr.bf16.mxu0 0
        %396 = vmatpush1.bf16.msra.mxu0 0
        %397 = vmatprep.subr.bf16.mxu0 0
        %398 = vmatpush1.bf16.msra.mxu0 0
        %399 = vmatprep.subr.bf16.mxu0 0
        %400 = vmatpush1.bf16.msra.mxu0 0
        %401 = vmatprep.subr.bf16.mxu0 0
        %402 = vmatpush1.bf16.msra.mxu0 0
        %403 = vmatprep.subr.bf16.mxu0 0
        %404 = vmatpush1.bf16.msra.mxu0 0
        %405 = vmatprep.subr.bf16.mxu0 0
        %406 = vmatpush1.bf16.msra.mxu0 0
        %407 = vmatprep.subr.bf16.mxu0 0
        %408 = vmatpush1.bf16.msra.mxu0 0
        %409 = vmatprep.mubr.bf16.mxu0 0
        %410 = vmatmul.mubr.bf16.gmra.mrb[0].mxu0 %v223
        %v411 = vpop.f32.mrb[0].mxu0
        %v412 = vadd.f32 %v322, %v411
        %v413 = vpop.f32.mrb[0].mxu0
        %v414 = vpop.f32.mrb[0].mxu0
        %v415 = vadd.f32 %v325, %v414
        %v416 = vpop.f32.mrb[0].mxu0
        %417 = vdwg.mxu0
        %v418 = vld [vmem:[%s180] sm:$0xe]
        %s419 = scalar_lea.vmem %s1, 128
        %v420 = vld [vmem:[%s419] sm:$0xf]
        %v421 = vld [vmem:[%s419 + $0x4] sm:$0xf]
        %v422 = vld [vmem:[%s419 + $0x8] sm:$0xf]
        %v423 = vld [vmem:[%s419 + $0xc] sm:$0xf]
        %v424 = vld [vmem:[%s419 + $0x10] sm:$0xf]
        %v425 = vld [vmem:[%s419 + $0x14] sm:$0xf]
        %v426 = vld [vmem:[%s419 + $0x18] sm:$0xf]
        %v427 = vld [vmem:[%s419 + $0x1c] sm:$0xf]
        %v428 = vld [vmem:[%s419 + $0x20] sm:$0xf]
        %v429 = vld [vmem:[%s419 + $0x24] sm:$0xf]
        %v430 = vld [vmem:[%s419 + $0x28] sm:$0xf]
        %v431 = vld [vmem:[%s419 + $0x2c] sm:$0xf]
        %v432 = vld [vmem:[%s419 + $0x30] sm:$0xf]
        %v433 = vld [vmem:[%s419 + $0x34] sm:$0xf]
        %v434 = vld [vmem:[%s419 + $0x38] sm:$0xf]
        %v435 = vld [vmem:[%s419 + $0x3c] sm:$0xf]
        %v437 = vunpack.c.l.b16 %v418
        %v438 = vpack.c.b16 %v221, %v437
        %vm439 = vcmask 1046528
        %v440 = vrot.slane %v438, 1
        %v441 = vrot.slane %v224, 1
        %v442 = vsel %vm439, %v440, %v441
        %v460 = vunpack.c.l.b16 %v420
        %v461 = vunpack.c.l.b16 %v421
        %v462 = vunpack.c.l.b16 %v422
        %v463 = vunpack.c.l.b16 %v423
        %v464 = vunpack.c.l.b16 %v424
        %v465 = vunpack.c.l.b16 %v425
        %v466 = vunpack.c.l.b16 %v426
        %v467 = vunpack.c.l.b16 %v427
        %v468 = vunpack.c.l.b16 %v428
        %v469 = vunpack.c.l.b16 %v429
        %v470 = vunpack.c.l.b16 %v430
        %v471 = vunpack.c.l.b16 %v431
        %v472 = vunpack.c.l.b16 %v432
        %v473 = vunpack.c.l.b16 %v433
        %v474 = vunpack.c.l.b16 %v434
        %v475 = vunpack.c.l.b16 %v435
        %v476 = vpack.c.b16 %v461, %v460
        %v477 = vpack.c.b16 %v463, %v462
        %v478 = vpack.c.b16 %v465, %v464
        %v479 = vpack.c.b16 %v467, %v466
        %v480 = vpack.c.b16 %v469, %v468
        %v481 = vpack.c.b16 %v471, %v470
        %v482 = vpack.c.b16 %v473, %v472
        %v483 = vpack.c.b16 %v475, %v474
        %492 = vmatprep.subr.bf16.mxu0 0
        %493 = vmatpush1.bf16.msra.mxu0 %v476
        %494 = vmatprep.subr.bf16.mxu0 0
        %495 = vmatpush1.bf16.msra.mxu0 %v477
        %496 = vmatprep.subr.bf16.mxu0 0
        %497 = vmatpush1.bf16.msra.mxu0 %v478
        %498 = vmatprep.subr.bf16.mxu0 0
        %499 = vmatpush1.bf16.msra.mxu0 %v479
        %500 = vmatprep.subr.bf16.mxu0 0
        %501 = vmatpush1.bf16.msra.mxu0 %v480
        %502 = vmatprep.subr.bf16.mxu0 0
        %503 = vmatpush1.bf16.msra.mxu0 %v481
        %504 = vmatprep.subr.bf16.mxu0 0
        %505 = vmatpush1.bf16.msra.mxu0 %v482
        %506 = vmatprep.subr.bf16.mxu0 0
        %507 = vmatpush1.bf16.msra.mxu0 %v483
        %508 = vmatprep.subr.bf16.mxu0 0
        %509 = vmatpush1.bf16.msra.mxu0 0
        %510 = vmatprep.subr.bf16.mxu0 0
        %511 = vmatpush1.bf16.msra.mxu0 0
        %512 = vmatprep.subr.bf16.mxu0 0
        %513 = vmatpush1.bf16.msra.mxu0 0
        %514 = vmatprep.subr.bf16.mxu0 0
        %515 = vmatpush1.bf16.msra.mxu0 0
        %516 = vmatprep.subr.bf16.mxu0 0
        %517 = vmatpush1.bf16.msra.mxu0 0
        %518 = vmatprep.subr.bf16.mxu0 0
        %519 = vmatpush1.bf16.msra.mxu0 0
        %520 = vmatprep.subr.bf16.mxu0 0
        %521 = vmatpush1.bf16.msra.mxu0 0
        %522 = vmatprep.subr.bf16.mxu0 0
        %523 = vmatpush1.bf16.msra.mxu0 0
        %524 = vmatprep.mubr.bf16.mxu0 0
        %525 = vmatmul.mubr.bf16.gmra.mrb[0].mxu0 %v442
        %v526 = vpop.f32.mrb[0].mxu0
        %v527 = vadd.f32 0.0, %v526
        %v528 = vpop.f32.mrb[0].mxu0
        %v529 = vpop.f32.mrb[0].mxu0
        %v530 = vadd.f32 0.0, %v529
        %v531 = vpop.f32.mrb[0].mxu0
        %532 = vdwg.mxu0
        %v533 = vadd.f32 %v412, %v527
        %v534 = vadd.f32 %v415, %v530
        %s535 = sadd.s32 %s173, 1
        %s536 = smul.u32 %s535, 3
        %s537 = smul.addr %s536, 4
        %s538 = scalar_lea.vmem %s165, %s537
        %v539 = vld [vmem:[%s538] sm:$0xf]
        %v540 = vld [vmem:[%s538 + $0x4] sm:$0xf]
        %s541 = scalar_lea.vmem %s1, 192
        %v542 = vld [vmem:[%s541] sm:$0xf]
        %v543 = vld [vmem:[%s541 + $0x4] sm:$0xf]
        %v544 = vld [vmem:[%s541 + $0x8] sm:$0xf]
        %v545 = vld [vmem:[%s541 + $0xc] sm:$0xf]
        %v546 = vld [vmem:[%s541 + $0x10] sm:$0xf]
        %v547 = vld [vmem:[%s541 + $0x14] sm:$0xf]
        %v548 = vld [vmem:[%s541 + $0x18] sm:$0xf]
        %v549 = vld [vmem:[%s541 + $0x1c] sm:$0xf]
        %v550 = vld [vmem:[%s541 + $0x20] sm:$0xf]
        %v551 = vld [vmem:[%s541 + $0x24] sm:$0xf]
        %v552 = vld [vmem:[%s541 + $0x28] sm:$0xf]
        %v553 = vld [vmem:[%s541 + $0x2c] sm:$0xf]
        %v554 = vld [vmem:[%s541 + $0x30] sm:$0xf]
        %v555 = vld [vmem:[%s541 + $0x34] sm:$0xf]
        %v556 = vld [vmem:[%s541 + $0x38] sm:$0xf]
        %v557 = vld [vmem:[%s541 + $0x3c] sm:$0xf]
        %v560 = vunpack.c.l.b16 %v539
        %v561 = vunpack.c.l.b16 %v540
        %v562 = vpack.c.b16 %v561, %v560
        %v580 = vunpack.c.l.b16 %v542
        %v581 = vunpack.c.l.b16 %v543
        %v582 = vunpack.c.l.b16 %v544
        %v583 = vunpack.c.l.b16 %v545
        %v584 = vunpack.c.l.b16 %v546
        %v585 = vunpack.c.l.b16 %v547
        %v586 = vunpack.c.l.b16 %v548
        %v587 = vunpack.c.l.b16 %v549
        %v588 = vunpack.c.l.b16 %v550
        %v589 = vunpack.c.l.b16 %v551
        %v590 = vunpack.c.l.b16 %v552
        %v591 = vunpack.c.l.b16 %v553
        %v592 = vunpack.c.l.b16 %v554
        %v593 = vunpack.c.l.b16 %v555
        %v594 = vunpack.c.l.b16 %v556
        %v595 = vunpack.c.l.b16 %v557
        %v596 = vpack.c.b16 %v581, %v580
        %v597 = vpack.c.b16 %v583, %v582
        %v598 = vpack.c.b16 %v585, %v584
        %v599 = vpack.c.b16 %v587, %v586
        %v600 = vpack.c.b16 %v589, %v588
        %v601 = vpack.c.b16 %v591, %v590
        %v602 = vpack.c.b16 %v593, %v592
        %v603 = vpack.c.b16 %v595, %v594
        %612 = vmatprep.subr.bf16.mxu0 0
        %613 = vmatpush1.bf16.msra.mxu0 %v596
        %614 = vmatprep.subr.bf16.mxu0 0
        %615 = vmatpush1.bf16.msra.mxu0 %v597
        %616 = vmatprep.subr.bf16.mxu0 0
        %617 = vmatpush1.bf16.msra.mxu0 %v598
        %618 = vmatprep.subr.bf16.mxu0 0
        %619 = vmatpush1.bf16.msra.mxu0 %v599
        %620 = vmatprep.subr.bf16.mxu0 0
        %621 = vmatpush1.bf16.msra.mxu0 %v600
        %622 = vmatprep.subr.bf16.mxu0 0
        %623 = vmatpush1.bf16.msra.mxu0 %v601
        %624 = vmatprep.subr.bf16.mxu0 0
        %625 = vmatpush1.bf16.msra.mxu0 %v602
        %626 = vmatprep.subr.bf16.mxu0 0
        %627 = vmatpush1.bf16.msra.mxu0 %v603
        %628 = vmatprep.subr.bf16.mxu0 0
        %629 = vmatpush1.bf16.msra.mxu0 0
        %630 = vmatprep.subr.bf16.mxu0 0
        %631 = vmatpush1.bf16.msra.mxu0 0
        %632 = vmatprep.subr.bf16.mxu0 0
        %633 = vmatpush1.bf16.msra.mxu0 0
        %634 = vmatprep.subr.bf16.mxu0 0
        %635 = vmatpush1.bf16.msra.mxu0 0
        %636 = vmatprep.subr.bf16.mxu0 0
        %637 = vmatpush1.bf16.msra.mxu0 0
        %638 = vmatprep.subr.bf16.mxu0 0
        %639 = vmatpush1.bf16.msra.mxu0 0
        %640 = vmatprep.subr.bf16.mxu0 0
        %641 = vmatpush1.bf16.msra.mxu0 0
        %642 = vmatprep.subr.bf16.mxu0 0
        %643 = vmatpush1.bf16.msra.mxu0 0
        %644 = vmatprep.mubr.bf16.mxu0 0
        %645 = vmatmul.mubr.bf16.gmra.mrb[0].mxu0 %v562
        %v646 = vpop.f32.mrb[0].mxu0
        %v647 = vadd.f32 0.0, %v646
        %v648 = vpop.f32.mrb[0].mxu0
        %v649 = vpop.f32.mrb[0].mxu0
        %v650 = vadd.f32 0.0, %v649
        %v651 = vpop.f32.mrb[0].mxu0
        %652 = vdwg.mxu0
        %v653 = vadd.f32 %v533, %v647
        %v654 = vadd.f32 %v534, %v650
        %v655 = vld [vmem:[%s538] sm:$0xf]
        %v656 = vld [vmem:[%s538 + $0x4] sm:$0xf]
        %v657 = vld [vmem:[%s538 + $0x8] sm:$0x1]
        %s658 = scalar_lea.vmem %s1, 256
        %v659 = vld [vmem:[%s658] sm:$0xf]
        %v660 = vld [vmem:[%s658 + $0x4] sm:$0xf]
        %v661 = vld [vmem:[%s658 + $0x8] sm:$0xf]
        %v662 = vld [vmem:[%s658 + $0xc] sm:$0xf]
        %v663 = vld [vmem:[%s658 + $0x10] sm:$0xf]
        %v664 = vld [vmem:[%s658 + $0x14] sm:$0xf]
        %v665 = vld [vmem:[%s658 + $0x18] sm:$0xf]
        %v666 = vld [vmem:[%s658 + $0x1c] sm:$0xf]
        %v667 = vld [vmem:[%s658 + $0x20] sm:$0xf]
        %v668 = vld [vmem:[%s658 + $0x24] sm:$0xf]
        %v669 = vld [vmem:[%s658 + $0x28] sm:$0xf]
        %v670 = vld [vmem:[%s658 + $0x2c] sm:$0xf]
        %v671 = vld [vmem:[%s658 + $0x30] sm:$0xf]
        %v672 = vld [vmem:[%s658 + $0x34] sm:$0xf]
        %v673 = vld [vmem:[%s658 + $0x38] sm:$0xf]
        %v674 = vld [vmem:[%s658 + $0x3c] sm:$0xf]
        %v678 = vunpack.c.l.b16 %v655
        %v679 = vunpack.c.l.b16 %v656
        %v680 = vunpack.c.l.b16 %v657
        %v681 = vpack.c.b16 %v679, %v678
        %v682 = vpack.c.b16 %v680, %v680
        %v684 = vshrl.u32 %v681, 16
        %v686 = vshll.u32 %v681, 16
        %v688 = vrot.slane %v686, 1
        %v689 = vor.u32 %v684, %v688
        %v691 = vshll.u32 %v682, 16
        %v693 = vrot.slane %v691, 1
        %v694 = vsel %vm225, %v689, %v693
        %v712 = vunpack.c.l.b16 %v659
        %v713 = vunpack.c.l.b16 %v660
        %v714 = vunpack.c.l.b16 %v661
        %v715 = vunpack.c.l.b16 %v662
        %v716 = vunpack.c.l.b16 %v663
        %v717 = vunpack.c.l.b16 %v664
        %v718 = vunpack.c.l.b16 %v665
        %v719 = vunpack.c.l.b16 %v666
        %v720 = vunpack.c.l.b16 %v667
        %v721 = vunpack.c.l.b16 %v668
        %v722 = vunpack.c.l.b16 %v669
        %v723 = vunpack.c.l.b16 %v670
        %v724 = vunpack.c.l.b16 %v671
        %v725 = vunpack.c.l.b16 %v672
        %v726 = vunpack.c.l.b16 %v673
        %v727 = vunpack.c.l.b16 %v674
        %v728 = vpack.c.b16 %v713, %v712
        %v729 = vpack.c.b16 %v715, %v714
        %v730 = vpack.c.b16 %v717, %v716
        %v731 = vpack.c.b16 %v719, %v718
        %v732 = vpack.c.b16 %v721, %v720
        %v733 = vpack.c.b16 %v723, %v722
        %v734 = vpack.c.b16 %v725, %v724
        %v735 = vpack.c.b16 %v727, %v726
        %744 = vmatprep.subr.bf16.mxu0 0
        %745 = vmatpush1.bf16.msra.mxu0 %v728
        %746 = vmatprep.subr.bf16.mxu0 0
        %747 = vmatpush1.bf16.msra.mxu0 %v729
        %748 = vmatprep.subr.bf16.mxu0 0
        %749 = vmatpush1.bf16.msra.mxu0 %v730
        %750 = vmatprep.subr.bf16.mxu0 0
        %751 = vmatpush1.bf16.msra.mxu0 %v731
        %752 = vmatprep.subr.bf16.mxu0 0
        %753 = vmatpush1.bf16.msra.mxu0 %v732
        %754 = vmatprep.subr.bf16.mxu0 0
        %755 = vmatpush1.bf16.msra.mxu0 %v733
        %756 = vmatprep.subr.bf16.mxu0 0
        %757 = vmatpush1.bf16.msra.mxu0 %v734
        %758 = vmatprep.subr.bf16.mxu0 0
        %759 = vmatpush1.bf16.msra.mxu0 %v735
        %760 = vmatprep.subr.bf16.mxu0 0
        %761 = vmatpush1.bf16.msra.mxu0 0
        %762 = vmatprep.subr.bf16.mxu0 0
        %763 = vmatpush1.bf16.msra.mxu0 0
        %764 = vmatprep.subr.bf16.mxu0 0
        %765 = vmatpush1.bf16.msra.mxu0 0
        %766 = vmatprep.subr.bf16.mxu0 0
        %767 = vmatpush1.bf16.msra.mxu0 0
        %768 = vmatprep.subr.bf16.mxu0 0
        %769 = vmatpush1.bf16.msra.mxu0 0
        %770 = vmatprep.subr.bf16.mxu0 0
        %771 = vmatpush1.bf16.msra.mxu0 0
        %772 = vmatprep.subr.bf16.mxu0 0
        %773 = vmatpush1.bf16.msra.mxu0 0
        %774 = vmatprep.subr.bf16.mxu0 0
        %775 = vmatpush1.bf16.msra.mxu0 0
        %776 = vmatprep.mubr.bf16.mxu0 0
        %777 = vmatmul.mubr.bf16.gmra.mrb[0].mxu0 %v694
        %v778 = vpop.f32.mrb[0].mxu0
        %v779 = vadd.f32 0.0, %v778
        %v780 = vpop.f32.mrb[0].mxu0
        %v781 = vpop.f32.mrb[0].mxu0
        %v782 = vadd.f32 0.0, %v781
        %v783 = vpop.f32.mrb[0].mxu0
        %784 = vdwg.mxu0
        %v785 = vadd.f32 %v653, %v779
        %v786 = vadd.f32 %v654, %v782
        %v787 = vld [vmem:[%s538] sm:$0xe]
        %s788 = scalar_lea.vmem %s1, 320
        %v789 = vld [vmem:[%s788] sm:$0xf]
        %v790 = vld [vmem:[%s788 + $0x4] sm:$0xf]
        %v791 = vld [vmem:[%s788 + $0x8] sm:$0xf]
        %v792 = vld [vmem:[%s788 + $0xc] sm:$0xf]
        %v793 = vld [vmem:[%s788 + $0x10] sm:$0xf]
        %v794 = vld [vmem:[%s788 + $0x14] sm:$0xf]
        %v795 = vld [vmem:[%s788 + $0x18] sm:$0xf]
        %v796 = vld [vmem:[%s788 + $0x1c] sm:$0xf]
        %v797 = vld [vmem:[%s788 + $0x20] sm:$0xf]
        %v798 = vld [vmem:[%s788 + $0x24] sm:$0xf]
        %v799 = vld [vmem:[%s788 + $0x28] sm:$0xf]
        %v800 = vld [vmem:[%s788 + $0x2c] sm:$0xf]
        %v801 = vld [vmem:[%s788 + $0x30] sm:$0xf]
        %v802 = vld [vmem:[%s788 + $0x34] sm:$0xf]
        %v803 = vld [vmem:[%s788 + $0x38] sm:$0xf]
        %v804 = vld [vmem:[%s788 + $0x3c] sm:$0xf]
        %v806 = vunpack.c.l.b16 %v787
        %v807 = vpack.c.b16 %v679, %v806
        %v808 = vrot.slane %v807, 1
        %v809 = vrot.slane %v682, 1
        %v810 = vsel %vm439, %v808, %v809
        %v828 = vunpack.c.l.b16 %v789
        %v829 = vunpack.c.l.b16 %v790
        %v830 = vunpack.c.l.b16 %v791
        %v831 = vunpack.c.l.b16 %v792
        %v832 = vunpack.c.l.b16 %v793
        %v833 = vunpack.c.l.b16 %v794
        %v834 = vunpack.c.l.b16 %v795
        %v835 = vunpack.c.l.b16 %v796
        %v836 = vunpack.c.l.b16 %v797
        %v837 = vunpack.c.l.b16 %v798
        %v838 = vunpack.c.l.b16 %v799
        %v839 = vunpack.c.l.b16 %v800
        %v840 = vunpack.c.l.b16 %v801
        %v841 = vunpack.c.l.b16 %v802
        %v842 = vunpack.c.l.b16 %v803
        %v843 = vunpack.c.l.b16 %v804
        %v844 = vpack.c.b16 %v829, %v828
        %v845 = vpack.c.b16 %v831, %v830
        %v846 = vpack.c.b16 %v833, %v832
        %v847 = vpack.c.b16 %v835, %v834
        %v848 = vpack.c.b16 %v837, %v836
        %v849 = vpack.c.b16 %v839, %v838
        %v850 = vpack.c.b16 %v841, %v840
        %v851 = vpack.c.b16 %v843, %v842
        %860 = vmatprep.subr.bf16.mxu0 0
        %861 = vmatpush1.bf16.msra.mxu0 %v844
        %862 = vmatprep.subr.bf16.mxu0 0
        %863 = vmatpush1.bf16.msra.mxu0 %v845
        %864 = vmatprep.subr.bf16.mxu0 0
        %865 = vmatpush1.bf16.msra.mxu0 %v846
        %866 = vmatprep.subr.bf16.mxu0 0
        %867 = vmatpush1.bf16.msra.mxu0 %v847
        %868 = vmatprep.subr.bf16.mxu0 0
        %869 = vmatpush1.bf16.msra.mxu0 %v848
        %870 = vmatprep.subr.bf16.mxu0 0
        %871 = vmatpush1.bf16.msra.mxu0 %v849
        %872 = vmatprep.subr.bf16.mxu0 0
        %873 = vmatpush1.bf16.msra.mxu0 %v850
        %874 = vmatprep.subr.bf16.mxu0 0
        %875 = vmatpush1.bf16.msra.mxu0 %v851
        %876 = vmatprep.subr.bf16.mxu0 0
        %877 = vmatpush1.bf16.msra.mxu0 0
        %878 = vmatprep.subr.bf16.mxu0 0
        %879 = vmatpush1.bf16.msra.mxu0 0
        %880 = vmatprep.subr.bf16.mxu0 0
        %881 = vmatpush1.bf16.msra.mxu0 0
        %882 = vmatprep.subr.bf16.mxu0 0
        %883 = vmatpush1.bf16.msra.mxu0 0
        %884 = vmatprep.subr.bf16.mxu0 0
        %885 = vmatpush1.bf16.msra.mxu0 0
        %886 = vmatprep.subr.bf16.mxu0 0
        %887 = vmatpush1.bf16.msra.mxu0 0
        %888 = vmatprep.subr.bf16.mxu0 0
        %889 = vmatpush1.bf16.msra.mxu0 0
        %890 = vmatprep.subr.bf16.mxu0 0
        %891 = vmatpush1.bf16.msra.mxu0 0
        %892 = vmatprep.mubr.bf16.mxu0 0
        %893 = vmatmul.mubr.bf16.gmra.mrb[0].mxu0 %v810
        %v894 = vpop.f32.mrb[0].mxu0
        %v895 = vadd.f32 0.0, %v894
        %v896 = vpop.f32.mrb[0].mxu0
        %v897 = vpop.f32.mrb[0].mxu0
        %v898 = vadd.f32 0.0, %v897
        %v899 = vpop.f32.mrb[0].mxu0
        %900 = vdwg.mxu0
        %v901 = vadd.f32 %v785, %v895
        %v902 = vadd.f32 %v786, %v898
        %s903 = sadd.s32 %s173, 2
        %s904 = smul.u32 %s903, 3
        %s905 = smul.addr %s904, 4
        %s906 = scalar_lea.vmem %s165, %s905
        %v907 = vld [vmem:[%s906] sm:$0xf]
        %v908 = vld [vmem:[%s906 + $0x4] sm:$0xf]
        %s909 = scalar_lea.vmem %s1, 384
        %v910 = vld [vmem:[%s909] sm:$0xf]
        %v911 = vld [vmem:[%s909 + $0x4] sm:$0xf]
        %v912 = vld [vmem:[%s909 + $0x8] sm:$0xf]
        %v913 = vld [vmem:[%s909 + $0xc] sm:$0xf]
        %v914 = vld [vmem:[%s909 + $0x10] sm:$0xf]
        %v915 = vld [vmem:[%s909 + $0x14] sm:$0xf]
        %v916 = vld [vmem:[%s909 + $0x18] sm:$0xf]
        %v917 = vld [vmem:[%s909 + $0x1c] sm:$0xf]
        %v918 = vld [vmem:[%s909 + $0x20] sm:$0xf]
        %v919 = vld [vmem:[%s909 + $0x24] sm:$0xf]
        %v920 = vld [vmem:[%s909 + $0x28] sm:$0xf]
        %v921 = vld [vmem:[%s909 + $0x2c] sm:$0xf]
        %v922 = vld [vmem:[%s909 + $0x30] sm:$0xf]
        %v923 = vld [vmem:[%s909 + $0x34] sm:$0xf]
        %v924 = vld [vmem:[%s909 + $0x38] sm:$0xf]
        %v925 = vld [vmem:[%s909 + $0x3c] sm:$0xf]
        %v928 = vunpack.c.l.b16 %v907
        %v929 = vunpack.c.l.b16 %v908
        %v930 = vpack.c.b16 %v929, %v928
        %v948 = vunpack.c.l.b16 %v910
        %v949 = vunpack.c.l.b16 %v911
        %v950 = vunpack.c.l.b16 %v912
        %v951 = vunpack.c.l.b16 %v913
        %v952 = vunpack.c.l.b16 %v914
        %v953 = vunpack.c.l.b16 %v915
        %v954 = vunpack.c.l.b16 %v916
        %v955 = vunpack.c.l.b16 %v917
        %v956 = vunpack.c.l.b16 %v918
        %v957 = vunpack.c.l.b16 %v919
        %v958 = vunpack.c.l.b16 %v920
        %v959 = vunpack.c.l.b16 %v921
        %v960 = vunpack.c.l.b16 %v922
        %v961 = vunpack.c.l.b16 %v923
        %v962 = vunpack.c.l.b16 %v924
        %v963 = vunpack.c.l.b16 %v925
        %v964 = vpack.c.b16 %v949, %v948
        %v965 = vpack.c.b16 %v951, %v950
        %v966 = vpack.c.b16 %v953, %v952
        %v967 = vpack.c.b16 %v955, %v954
        %v968 = vpack.c.b16 %v957, %v956
        %v969 = vpack.c.b16 %v959, %v958
        %v970 = vpack.c.b16 %v961, %v960
        %v971 = vpack.c.b16 %v963, %v962
        %980 = vmatprep.subr.bf16.mxu0 0
        %981 = vmatpush1.bf16.msra.mxu0 %v964
        %982 = vmatprep.subr.bf16.mxu0 0
        %983 = vmatpush1.bf16.msra.mxu0 %v965
        %984 = vmatprep.subr.bf16.mxu0 0
        %985 = vmatpush1.bf16.msra.mxu0 %v966
        %986 = vmatprep.subr.bf16.mxu0 0
        %987 = vmatpush1.bf16.msra.mxu0 %v967
        %988 = vmatprep.subr.bf16.mxu0 0
        %989 = vmatpush1.bf16.msra.mxu0 %v968
        %990 = vmatprep.subr.bf16.mxu0 0
        %991 = vmatpush1.bf16.msra.mxu0 %v969
        %992 = vmatprep.subr.bf16.mxu0 0
        %993 = vmatpush1.bf16.msra.mxu0 %v970
        %994 = vmatprep.subr.bf16.mxu0 0
        %995 = vmatpush1.bf16.msra.mxu0 %v971
        %996 = vmatprep.subr.bf16.mxu0 0
        %997 = vmatpush1.bf16.msra.mxu0 0
        %998 = vmatprep.subr.bf16.mxu0 0
        %999 = vmatpush1.bf16.msra.mxu0 0
        %1000 = vmatprep.subr.bf16.mxu0 0
        %1001 = vmatpush1.bf16.msra.mxu0 0
        %1002 = vmatprep.subr.bf16.mxu0 0
        %1003 = vmatpush1.bf16.msra.mxu0 0
        %1004 = vmatprep.subr.bf16.mxu0 0
        %1005 = vmatpush1.bf16.msra.mxu0 0
        %1006 = vmatprep.subr.bf16.mxu0 0
        %1007 = vmatpush1.bf16.msra.mxu0 0
        %1008 = vmatprep.subr.bf16.mxu0 0
        %1009 = vmatpush1.bf16.msra.mxu0 0
        %1010 = vmatprep.subr.bf16.mxu0 0
        %1011 = vmatpush1.bf16.msra.mxu0 0
        %1012 = vmatprep.mubr.bf16.mxu0 0
        %1013 = vmatmul.mubr.bf16.gmra.mrb[0].mxu0 %v930
        %v1014 = vpop.f32.mrb[0].mxu0
        %v1015 = vadd.f32 0.0, %v1014
        %v1016 = vpop.f32.mrb[0].mxu0
        %v1017 = vpop.f32.mrb[0].mxu0
        %v1018 = vadd.f32 0.0, %v1017
        %v1019 = vpop.f32.mrb[0].mxu0
        %1020 = vdwg.mxu0
        %v1021 = vadd.f32 %v901, %v1015
        %v1022 = vadd.f32 %v902, %v1018
        %v1023 = vld [vmem:[%s906] sm:$0xf]
        %v1024 = vld [vmem:[%s906 + $0x4] sm:$0xf]
        %v1025 = vld [vmem:[%s906 + $0x8] sm:$0x1]
        %s1026 = scalar_lea.vmem %s1, 448
        %v1027 = vld [vmem:[%s1026] sm:$0xf]
        %v1028 = vld [vmem:[%s1026 + $0x4] sm:$0xf]
        %v1029 = vld [vmem:[%s1026 + $0x8] sm:$0xf]
        %v1030 = vld [vmem:[%s1026 + $0xc] sm:$0xf]
        %v1031 = vld [vmem:[%s1026 + $0x10] sm:$0xf]
        %v1032 = vld [vmem:[%s1026 + $0x14] sm:$0xf]
        %v1033 = vld [vmem:[%s1026 + $0x18] sm:$0xf]
        %v1034 = vld [vmem:[%s1026 + $0x1c] sm:$0xf]
        %v1035 = vld [vmem:[%s1026 + $0x20] sm:$0xf]
        %v1036 = vld [vmem:[%s1026 + $0x24] sm:$0xf]
        %v1037 = vld [vmem:[%s1026 + $0x28] sm:$0xf]
        %v1038 = vld [vmem:[%s1026 + $0x2c] sm:$0xf]
        %v1039 = vld [vmem:[%s1026 + $0x30] sm:$0xf]
        %v1040 = vld [vmem:[%s1026 + $0x34] sm:$0xf]
        %v1041 = vld [vmem:[%s1026 + $0x38] sm:$0xf]
        %v1042 = vld [vmem:[%s1026 + $0x3c] sm:$0xf]
        %v1046 = vunpack.c.l.b16 %v1023
        %v1047 = vunpack.c.l.b16 %v1024
        %v1048 = vunpack.c.l.b16 %v1025
        %v1049 = vpack.c.b16 %v1047, %v1046
        %v1050 = vpack.c.b16 %v1048, %v1048
        %v1052 = vshrl.u32 %v1049, 16
        %v1054 = vshll.u32 %v1049, 16
        %v1056 = vrot.slane %v1054, 1
        %v1057 = vor.u32 %v1052, %v1056
        %v1059 = vshll.u32 %v1050, 16
        %v1061 = vrot.slane %v1059, 1
        %v1062 = vsel %vm225, %v1057, %v1061
        %v1080 = vunpack.c.l.b16 %v1027
        %v1081 = vunpack.c.l.b16 %v1028
        %v1082 = vunpack.c.l.b16 %v1029
        %v1083 = vunpack.c.l.b16 %v1030
        %v1084 = vunpack.c.l.b16 %v1031
        %v1085 = vunpack.c.l.b16 %v1032
        %v1086 = vunpack.c.l.b16 %v1033
        %v1087 = vunpack.c.l.b16 %v1034
        %v1088 = vunpack.c.l.b16 %v1035
        %v1089 = vunpack.c.l.b16 %v1036
        %v1090 = vunpack.c.l.b16 %v1037
        %v1091 = vunpack.c.l.b16 %v1038
        %v1092 = vunpack.c.l.b16 %v1039
        %v1093 = vunpack.c.l.b16 %v1040
        %v1094 = vunpack.c.l.b16 %v1041
        %v1095 = vunpack.c.l.b16 %v1042
        %v1096 = vpack.c.b16 %v1081, %v1080
        %v1097 = vpack.c.b16 %v1083, %v1082
        %v1098 = vpack.c.b16 %v1085, %v1084
        %v1099 = vpack.c.b16 %v1087, %v1086
        %v1100 = vpack.c.b16 %v1089, %v1088
        %v1101 = vpack.c.b16 %v1091, %v1090
        %v1102 = vpack.c.b16 %v1093, %v1092
        %v1103 = vpack.c.b16 %v1095, %v1094
        %1112 = vmatprep.subr.bf16.mxu0 0
        %1113 = vmatpush1.bf16.msra.mxu0 %v1096
        %1114 = vmatprep.subr.bf16.mxu0 0
        %1115 = vmatpush1.bf16.msra.mxu0 %v1097
        %1116 = vmatprep.subr.bf16.mxu0 0
        %1117 = vmatpush1.bf16.msra.mxu0 %v1098
        %1118 = vmatprep.subr.bf16.mxu0 0
        %1119 = vmatpush1.bf16.msra.mxu0 %v1099
        %1120 = vmatprep.subr.bf16.mxu0 0
        %1121 = vmatpush1.bf16.msra.mxu0 %v1100
        %1122 = vmatprep.subr.bf16.mxu0 0
        %1123 = vmatpush1.bf16.msra.mxu0 %v1101
        %1124 = vmatprep.subr.bf16.mxu0 0
        %1125 = vmatpush1.bf16.msra.mxu0 %v1102
        %1126 = vmatprep.subr.bf16.mxu0 0
        %1127 = vmatpush1.bf16.msra.mxu0 %v1103
        %1128 = vmatprep.subr.bf16.mxu0 0
        %1129 = vmatpush1.bf16.msra.mxu0 0
        %1130 = vmatprep.subr.bf16.mxu0 0
        %1131 = vmatpush1.bf16.msra.mxu0 0
        %1132 = vmatprep.subr.bf16.mxu0 0
        %1133 = vmatpush1.bf16.msra.mxu0 0
        %1134 = vmatprep.subr.bf16.mxu0 0
        %1135 = vmatpush1.bf16.msra.mxu0 0
        %1136 = vmatprep.subr.bf16.mxu0 0
        %1137 = vmatpush1.bf16.msra.mxu0 0
        %1138 = vmatprep.subr.bf16.mxu0 0
        %1139 = vmatpush1.bf16.msra.mxu0 0
        %1140 = vmatprep.subr.bf16.mxu0 0
        %1141 = vmatpush1.bf16.msra.mxu0 0
        %1142 = vmatprep.subr.bf16.mxu0 0
        %1143 = vmatpush1.bf16.msra.mxu0 0
        %1144 = vmatprep.mubr.bf16.mxu0 0
        %1145 = vmatmul.mubr.bf16.gmra.mrb[0].mxu0 %v1062
        %v1146 = vpop.f32.mrb[0].mxu0
        %v1147 = vadd.f32 0.0, %v1146
        %v1148 = vpop.f32.mrb[0].mxu0
        %v1149 = vpop.f32.mrb[0].mxu0
        %v1150 = vadd.f32 0.0, %v1149
        %v1151 = vpop.f32.mrb[0].mxu0
        %1152 = vdwg.mxu0
        %v1153 = vadd.f32 %v1021, %v1147
        %v1154 = vadd.f32 %v1022, %v1150
        %v1155 = vld [vmem:[%s906] sm:$0xe]
        %s1156 = scalar_lea.vmem %s1, 512
        %v1157 = vld [vmem:[%s1156] sm:$0xf]
        %v1158 = vld [vmem:[%s1156 + $0x4] sm:$0xf]
        %v1159 = vld [vmem:[%s1156 + $0x8] sm:$0xf]
        %v1160 = vld [vmem:[%s1156 + $0xc] sm:$0xf]
        %v1161 = vld [vmem:[%s1156 + $0x10] sm:$0xf]
        %v1162 = vld [vmem:[%s1156 + $0x14] sm:$0xf]
        %v1163 = vld [vmem:[%s1156 + $0x18] sm:$0xf]
        %v1164 = vld [vmem:[%s1156 + $0x1c] sm:$0xf]
        %v1165 = vld [vmem:[%s1156 + $0x20] sm:$0xf]
        %v1166 = vld [vmem:[%s1156 + $0x24] sm:$0xf]
        %v1167 = vld [vmem:[%s1156 + $0x28] sm:$0xf]
        %v1168 = vld [vmem:[%s1156 + $0x2c] sm:$0xf]
        %v1169 = vld [vmem:[%s1156 + $0x30] sm:$0xf]
        %v1170 = vld [vmem:[%s1156 + $0x34] sm:$0xf]
        %v1171 = vld [vmem:[%s1156 + $0x38] sm:$0xf]
        %v1172 = vld [vmem:[%s1156 + $0x3c] sm:$0xf]
        %v1174 = vunpack.c.l.b16 %v1155
        %v1175 = vpack.c.b16 %v1047, %v1174
        %v1176 = vrot.slane %v1175, 1
        %v1177 = vrot.slane %v1050, 1
        %v1178 = vsel %vm439, %v1176, %v1177
        %v1196 = vunpack.c.l.b16 %v1157
        %v1197 = vunpack.c.l.b16 %v1158
        %v1198 = vunpack.c.l.b16 %v1159
        %v1199 = vunpack.c.l.b16 %v1160
        %v1200 = vunpack.c.l.b16 %v1161
        %v1201 = vunpack.c.l.b16 %v1162
        %v1202 = vunpack.c.l.b16 %v1163
        %v1203 = vunpack.c.l.b16 %v1164
        %v1204 = vunpack.c.l.b16 %v1165
        %v1205 = vunpack.c.l.b16 %v1166
        %v1206 = vunpack.c.l.b16 %v1167
        %v1207 = vunpack.c.l.b16 %v1168
        %v1208 = vunpack.c.l.b16 %v1169
        %v1209 = vunpack.c.l.b16 %v1170
        %v1210 = vunpack.c.l.b16 %v1171
        %v1211 = vunpack.c.l.b16 %v1172
        %v1212 = vpack.c.b16 %v1197, %v1196
        %v1213 = vpack.c.b16 %v1199, %v1198
        %v1214 = vpack.c.b16 %v1201, %v1200
        %v1215 = vpack.c.b16 %v1203, %v1202
        %v1216 = vpack.c.b16 %v1205, %v1204
        %v1217 = vpack.c.b16 %v1207, %v1206
        %v1218 = vpack.c.b16 %v1209, %v1208
        %v1219 = vpack.c.b16 %v1211, %v1210
        %1228 = vmatprep.subr.bf16.mxu0 0
        %1229 = vmatpush1.bf16.msra.mxu0 %v1212
        %1230 = vmatprep.subr.bf16.mxu0 0
        %1231 = vmatpush1.bf16.msra.mxu0 %v1213
        %1232 = vmatprep.subr.bf16.mxu0 0
        %1233 = vmatpush1.bf16.msra.mxu0 %v1214
        %1234 = vmatprep.subr.bf16.mxu0 0
        %1235 = vmatpush1.bf16.msra.mxu0 %v1215
        %1236 = vmatprep.subr.bf16.mxu0 0
        %1237 = vmatpush1.bf16.msra.mxu0 %v1216
        %1238 = vmatprep.subr.bf16.mxu0 0
        %1239 = vmatpush1.bf16.msra.mxu0 %v1217
        %1240 = vmatprep.subr.bf16.mxu0 0
        %1241 = vmatpush1.bf16.msra.mxu0 %v1218
        %1242 = vmatprep.subr.bf16.mxu0 0
        %1243 = vmatpush1.bf16.msra.mxu0 %v1219
        %1244 = vmatprep.subr.bf16.mxu0 0
        %1245 = vmatpush1.bf16.msra.mxu0 0
        %1246 = vmatprep.subr.bf16.mxu0 0
        %1247 = vmatpush1.bf16.msra.mxu0 0
        %1248 = vmatprep.subr.bf16.mxu0 0
        %1249 = vmatpush1.bf16.msra.mxu0 0
        %1250 = vmatprep.subr.bf16.mxu0 0
        %1251 = vmatpush1.bf16.msra.mxu0 0
        %1252 = vmatprep.subr.bf16.mxu0 0
        %1253 = vmatpush1.bf16.msra.mxu0 0
        %1254 = vmatprep.subr.bf16.mxu0 0
        %1255 = vmatpush1.bf16.msra.mxu0 0
        %1256 = vmatprep.subr.bf16.mxu0 0
        %1257 = vmatpush1.bf16.msra.mxu0 0
        %1258 = vmatprep.subr.bf16.mxu0 0
        %1259 = vmatpush1.bf16.msra.mxu0 0
        %1260 = vmatprep.mubr.bf16.mxu0 0
        %1261 = vmatmul.mubr.bf16.gmra.mrb[0].mxu0 %v1178
        %v1262 = vpop.f32.mrb[0].mxu0
        %v1263 = vadd.f32 0.0, %v1262
        %v1264 = vpop.f32.mrb[0].mxu0
        %v1265 = vpop.f32.mrb[0].mxu0
        %v1266 = vadd.f32 0.0, %v1265
        %v1267 = vpop.f32.mrb[0].mxu0
        %1268 = vdwg.mxu0
        %v1269 = vadd.f32 %v1153, %v1263
        %v1270 = vadd.f32 %v1154, %v1266
        %v1271 = vld [vmem:[%s2] sm:$0x1]
        %v1273 = vlaneseq
        %v1274 = vshrl.u32 %v1273, 7
        %v1275 = vsub.s32 0, %v1274
        %v1276 = vrot.slane %v1271, %v1275
        %v1278 = vadd.f32 %v1269, %v1276
        %v1279 = vadd.f32 %v1270, %v1276
        %v1280 = vmax.f32 %v1278, 0.0
        %v1281 = vmax.f32 %v1279, 0.0
        %v1282 = vpack.c.bf16 %v1281, %v1280
        %v1284 = vunpack.c.l.b16 %v1282
        %v1285 = vunpack.c.h.b16 %v1282
        %v1286 = vpack.c.b16 %v1284, %v1284
        %v1287 = vpack.c.b16 %v1285, %v1285
        %s1290 = smul.u32 %s173, 2
        %s1291 = smul.addr %s1290, 4
        %s1292 = scalar_lea.vmem %s170, %s1291
        %1293 = vst [vmem:[%s1292] sm:$0xf] %v1286
        %1294 = vst [vmem:[%s1292 + $0x4] sm:$0xf] %v1287
      $region37: #{vgg16_forward.24} parent=31 // loop_footer
        %s177 = sadd.s32 1, %s173
      $region38: #{vgg16_forward.24} parent=31 // loop_footer_branch
        %172 = sbr.rel target = $region34
      $region39: #{vgg16_forward.24} parent=31 // loop_exit
        _
      %p1295 = scmp.lt.s32.totalorder %s14, 1
      %s1296 = scalar_select %p1295, %s14, 1
      %s1297 = smul.addr %s1296, 32
      %s1298 = smul.addr %s1297, 4
      %s1299 = scalar_lea.vmem %s3, %s1298
      // Predicated region
      $region40: #{vgg16_forward.24} parent=31 // pred_check
        %p1300 = pneg %p100
      $region41: #{vgg16_forward.24} parent=31 // pred_check_branch
        %1302 = sbr.rel (%p1300) target = $region43
      $region42: #{vgg16_forward.24} parent=31 // pred_region
        _
      $region43: #{vgg16_forward.24} parent=31 // pred_fallthru
        _
    $region32: #{vgg16_forward.24} parent=5 // pred_fallthru
      _
    %p1303 = scmp.le.s32.totalorder 2, %s9
    // Predicated region
    $region44: #{vgg16_forward.24} parent=5 // pred_check
      %p1304 = pneg %p1303
    $region45: #{vgg16_forward.24} parent=5 // pred_check_branch
      %1306 = sbr.rel (%p1304) target = $region47
    $region46: #{vgg16_forward.24} parent=5 // pred_region
      %s1307 = ssub.s32 %s9, 2
      // Predicated region
      $region48: #{vgg16_forward.24} parent=46 // pred_check
        %p1308 = pneg %p106
      $region49: #{vgg16_forward.24} parent=46 // pred_check_branch
        %1310 = sbr.rel (%p1308) target = $region51
      $region50: #{vgg16_forward.24} parent=46 // pred_region
        %p1311 = scmp.lt.s32.totalorder %s15, 1
        %s1312 = scalar_select %p1311, %s15, 1
        %s1313 = smul.addr %s1312, 32
        %s1314 = smul.addr %s1313, 4
        %s1315 = scalar_lea.vmem %s3, %s1314
      $region51: #{vgg16_forward.24} parent=46 // pred_fallthru
        _
    $region47: #{vgg16_forward.24} parent=5 // pred_fallthru
      _
  $region6: #{vgg16_forward.24} parent=0 // loop_footer
    %s13 = sadd.s32 1, %s9
  $region7: #{vgg16_forward.24} parent=0 // loop_footer_branch
    %8 = sbr.rel target = $region3
  $region8: #{vgg16_forward.24} parent=0 // loop_exit
    _

// kernel: vgg16_forward.30
$region0: #{vgg16_forward.30}
  #allocation0 [shape = 'u32[]', space=smem, size = 0x4, offset = 0x4, fixed_abs, tag = 'smem constant byte address 0x4 - core index']
  #allocation1 [shape = 'u32[144,128]{1,0:T(1,128)}', space=vmem, size = 0x12000, scoped, tag = 'internal scratch']
  %s0 = inlined_call_operand.vmem [shape: bf16[2,8,4,256], index: 0, kind: input, shape index: {}]
  %s1 = inlined_call_operand.vmem [shape: bf16[2,4,4,128], index: 1, kind: output, shape index: {}]
  %s2 = sld [smem:[#allocation0]]
  $region37: #{vgg16_forward.30} parent=0
    _
  %s4 = ssub.s32 1, %s2
  %s5 = scalar_select 0, %s4, %s2
  loop: start=0, step=1, limit=4
  $region2: #{vgg16_forward.30} parent=0 // loop_pre_header
    _
  $region3: #{vgg16_forward.30} parent=0 // loop_header
    %s7 = sphi 0, %s11
    %p8 = scmp.ge.s32.totalorder %s7, 4
    %s14 = sphi 0, %s26
    %s15 = sphi 0, %s22
    %s16 = sphi 0, %s14
    %s17 = sphi 0, %s15
    %s18 = sphi 0, %s16
    %s19 = sphi 0, %s17
    %s31 = sphi 0, %s33
    %s34 = sphi 0, %s31
    %s35 = sphi 0, %s34
    %s51 = sphi 0, %s35
    %s59 = sphi 0, %s61
    %s62 = sphi 0, %s59
    %s63 = sphi 0, %s62
    %s79 = sphi 0, %s63
  $region4: #{vgg16_forward.30} parent=0 // loop_header_branch
    %10 = sbr.rel (%p8) target = $region8
  $region5: #{vgg16_forward.30} parent=0 // loop_body
    %s12 = ssub.s32 %s7, 1
    %s13 = ssub.s32 %s7, 2
    %s20 = sadd.s32 1, %s15
    %p21 = scmp.ge.s32.totalorder %s20, 1
    %s22 = scalar_select %p21, 0, %s20
    %s23 = sadd.s32 1, %s14
    %s24 = scalar_select %p21, %s23, %s14
    %p25 = scmp.ge.s32.totalorder %s24, 2
    %s26 = scalar_select %p25, 0, %s24
    %s27 = ssub.s32 %s14, %s26
    %s28 = ssub.s32 %s15, %s22
    %s29 = sor.u32 %s27, %s28
    %p30 = scmp.eq.s32.totalorder %s29, 0
    %s32 = sadd.s32 %s31, 1
    %s33 = scalar_select %p30, %s31, %s32
    %p36 = pneg %p30
    %p37 = scmp.eq.s32.totalorder %s7, 1
    %p38 = por %p36, %p37
    %p39 = scmp.ne.s32.totalorder %s31, %s34
    %p40 = scmp.eq.s32.totalorder %s7, 0
    %p41 = por %p39, %p40
    %p42 = scmp.ne.s32.totalorder %s31, %s34
    %p43 = scmp.eq.s32.totalorder %s12, 1
    %p44 = por %p42, %p43
    %p45 = scmp.ne.s32.totalorder %s34, %s35
    %p46 = scmp.eq.s32.totalorder %s12, 0
    %p47 = por %p45, %p46
    %p48 = scmp.ne.s32.totalorder %s34, %s35
    %p49 = scmp.eq.s32.totalorder %s13, 1
    %p50 = por %p48, %p49
    %p52 = scmp.ne.s32.totalorder %s35, %s51
    %p53 = scmp.eq.s32.totalorder %s13, 0
    %p54 = por %p52, %p53
    %s55 = ssub.s32 %s14, %s26
    %s56 = ssub.s32 %s15, %s22
    %s57 = sor.u32 %s55, %s56
    %p58 = scmp.eq.s32.totalorder %s57, 0
    %s60 = sadd.s32 %s59, 1
    %s61 = scalar_select %p58, %s59, %s60
    %p64 = pneg %p58
    %p65 = scmp.eq.s32.totalorder %s7, 1
    %p66 = por %p64, %p65
    %p67 = scmp.ne.s32.totalorder %s59, %s62
    %p68 = scmp.eq.s32.totalorder %s7, 0
    %p69 = por %p67, %p68
    %p70 = scmp.ne.s32.totalorder %s59, %s62
    %p71 = scmp.eq.s32.totalorder %s12, 1
    %p72 = por %p70, %p71
    %p73 = scmp.ne.s32.totalorder %s62, %s63
    %p74 = scmp.eq.s32.totalorder %s12, 0
    %p75 = por %p73, %p74
    %p76 = scmp.ne.s32.totalorder %s62, %s63
    %p77 = scmp.eq.s32.totalorder %s13, 1
    %p78 = por %p76, %p77
    %p80 = scmp.ne.s32.totalorder %s63, %s79
    %p81 = scmp.eq.s32.totalorder %s13, 0
    %p82 = por %p80, %p81
    %p83 = scmp.le.s32.totalorder 1, %s7
    %p84 = scmp.lt.s32.totalorder %s7, 3
    %p85 = pnand %p83, %p84
    %p86 = pneg %p85
    // Predicated region
    $region9: #{vgg16_forward.30} parent=5 // pred_check
      _
    $region10: #{vgg16_forward.30} parent=5 // pred_check_branch
      %88 = sbr.rel (%p85) target = $region12
    $region11: #{vgg16_forward.30} parent=5 // pred_region
      %s89 = ssub.s32 %s7, 1
    $region12: #{vgg16_forward.30} parent=5 // pred_fallthru
      _
    %p90 = scmp.lt.s32.totalorder %s7, 2
    // Predicated region
    $region13: #{vgg16_forward.30} parent=5 // pred_check
      %p91 = pneg %p90
    $region14: #{vgg16_forward.30} parent=5 // pred_check_branch
      %93 = sbr.rel (%p91) target = $region16
    $region15: #{vgg16_forward.30} parent=5 // pred_region
      // Predicated region
      $region17: #{vgg16_forward.30} parent=15 // pred_check
        %p94 = pneg %p41
      $region18: #{vgg16_forward.30} parent=15 // pred_check_branch
        %96 = sbr.rel (%p94) target = $region20
      $region19: #{vgg16_forward.30} parent=15 // pred_region
        %s97 = smul.u32 8, %s15
        %p98 = scmp.lt.s32.totalorder %s14, 1
        %s99 = scalar_select %p98, %s14, 1
        %p100 = scmp.lt.s32.totalorder %s97, 7
        %s101 = scalar_select %p100, %s97, 7
        %s102 = smul.addr %s101, 2
        %s103 = smul.addr %s99, 16
        %s104 = sadd.s32 %s102, %s103
        %s105 = smul.addr %s104, 2
        %s106 = scalar_lea.vmem %s0, %s105
        %s107 = smul.u32 8, %s15
      $region20: #{vgg16_forward.30} parent=15 // pred_fallthru
        _
    $region16: #{vgg16_forward.30} parent=5 // pred_fallthru
      _
    %p108 = scmp.le.s32.totalorder 1, %s7
    %p109 = scmp.lt.s32.totalorder %s7, 3
    %p110 = pnand %p108, %p109
    %p111 = pneg %p110
    // Predicated region
    $region21: #{vgg16_forward.30} parent=5 // pred_check
      _
    $region22: #{vgg16_forward.30} parent=5 // pred_check_branch
      %113 = sbr.rel (%p110) target = $region24
    $region23: #{vgg16_forward.30} parent=5 // pred_region
      %s114 = ssub.s32 %s7, 1
      %s115 = smul.u32 8, %s17
      %p116 = scmp.lt.s32.totalorder %s16, 1
      %s117 = scalar_select %p116, %s16, 1
      %p118 = scmp.lt.s32.totalorder %s115, 7
      %s119 = scalar_select %p118, %s115, 7
      %s120 = smul.addr %s119, 2
      %s121 = smul.addr %s117, 16
      %s122 = sadd.s32 %s120, %s121
      %s123 = smul.addr %s122, 2
      %s124 = scalar_lea.vmem %s0, %s123
      %p125 = pneg %p47
      %p126 = pneg %p44
      %p127 = pneg %p75
      %p128 = pneg %p72
      %s129 = smul.u32 4, %s17
      %p130 = scmp.lt.s32.totalorder %s16, 1
      %s131 = scalar_select %p130, %s16, 1
      %p132 = scmp.lt.s32.totalorder %s129, 3
      %s133 = scalar_select %p132, %s129, 3
      %s134 = smul.addr %s131, 4
      %s135 = sadd.s32 %s133, %s134
      %s136 = smul.addr %s135, 2
      %s137 = scalar_lea.vmem %s1, %s136
      %s138 = smul.u32 8, %s17
      %p139 = scmp.lt.s32.totalorder %s16, 1
      %s140 = scalar_select %p139, %s16, 1
      %p141 = scmp.lt.s32.totalorder %s138, 7
      %s142 = scalar_select %p141, %s138, 7
      %s143 = smul.addr %s142, 2
      %s144 = smul.addr %s140, 16
      %s145 = sadd.s32 %s143, %s144
      %s146 = smul.addr %s145, 2
      %s147 = scalar_lea.vmem %s0, %s146
      %s148 = smul.u32 8, %s17
      %s149 = smul.u32 4, %s17
      %p150 = scmp.lt.s32.totalorder %s16, 1
      %s151 = scalar_select %p150, %s16, 1
      %p152 = scmp.lt.s32.totalorder %s149, 3
      %s153 = scalar_select %p152, %s149, 3
      %s154 = smul.addr %s151, 4
      %s155 = sadd.s32 %s153, %s154
      %s156 = smul.addr %s155, 2
      %s157 = scalar_lea.vmem %s1, %s156
      %s158 = smul.u32 4, %s17
      %v159 = vld [vmem:[%s147] sm:$0xf]
      %v160 = vld [vmem:[%s147 + $0x4] sm:$0xf]
      %v161 = vld [vmem:[%s147 + $0x8] sm:$0xf]
      %v162 = vld [vmem:[%s147 + $0xc] sm:$0xf]
      %v163 = vld [vmem:[%s147 + $0x10] sm:$0xf]
      %v164 = vld [vmem:[%s147 + $0x14] sm:$0xf]
      %v165 = vld [vmem:[%s147 + $0x18] sm:$0xf]
      %v166 = vld [vmem:[%s147 + $0x1c] sm:$0xf]
      %v175 = vrot.slane %v159, 2
      %v176 = vrot.slane %v160, 2
      %v177 = vrot.slane %v161, 2
      %v178 = vrot.slane %v162, 2
      %v179 = vrot.slane %v163, 2
      %v180 = vrot.slane %v164, 2
      %v181 = vrot.slane %v165, 2
      %v182 = vrot.slane %v166, 2
      %v191 = vmax.bf16 %v159, %v175
      %v192 = vmax.bf16 %v160, %v176
      %v193 = vmax.bf16 %v161, %v177
      %v194 = vmax.bf16 %v162, %v178
      %v195 = vmax.bf16 %v163, %v179
      %v196 = vmax.bf16 %v164, %v180
      %v197 = vmax.bf16 %v165, %v181
      %v198 = vmax.bf16 %v166, %v182
      %v199 = vmax.bf16 %v191, %v192
      %v200 = vmax.bf16 %v193, %v194
      %v201 = vmax.bf16 %v195, %v196
      %v202 = vmax.bf16 %v197, %v198
      %203 = vst [vmem:[%s157] sm:$0x3] %v199
      %204 = vst [vmem:[%s157 + $0x2] sm:$0x3] %v200
      %205 = vst [vmem:[%s157 + $0x4] sm:$0x3] %v201
      %206 = vst [vmem:[%s157 + $0x6] sm:$0x3] %v202
      %s207 = smul.u32 4, %s17
      %p208 = scmp.lt.s32.totalorder %s16, 1
      %s209 = scalar_select %p208, %s16, 1
      %p210 = scmp.lt.s32.totalorder %s207, 3
      %s211 = scalar_select %p210, %s207, 3
      %s212 = smul.addr %s209, 4
      %s213 = sadd.s32 %s211, %s212
      %s214 = smul.addr %s213, 2
      %s215 = scalar_lea.vmem %s1, %s214
      // Predicated region
      $region25: #{vgg16_forward.30} parent=23 // pred_check
        %p216 = pneg %p72
      $region26: #{vgg16_forward.30} parent=23 // pred_check_branch
        %218 = sbr.rel (%p216) target = $region28
      $region27: #{vgg16_forward.30} parent=23 // pred_region
        %s219 = smul.u32 4, %s17
      $region28: #{vgg16_forward.30} parent=23 // pred_fallthru
        _
    $region24: #{vgg16_forward.30} parent=5 // pred_fallthru
      _
    %p220 = scmp.le.s32.totalorder 2, %s7
    // Predicated region
    $region29: #{vgg16_forward.30} parent=5 // pred_check
      %p221 = pneg %p220
    $region30: #{vgg16_forward.30} parent=5 // pred_check_branch
      %223 = sbr.rel (%p221) target = $region32
    $region31: #{vgg16_forward.30} parent=5 // pred_region
      %s224 = ssub.s32 %s7, 2
      // Predicated region
      $region33: #{vgg16_forward.30} parent=31 // pred_check
        %p225 = pneg %p78
      $region34: #{vgg16_forward.30} parent=31 // pred_check_branch
        %227 = sbr.rel (%p225) target = $region36
      $region35: #{vgg16_forward.30} parent=31 // pred_region
        %s228 = smul.u32 4, %s19
        %p229 = scmp.lt.s32.totalorder %s18, 1
        %s230 = scalar_select %p229, %s18, 1
        %p231 = scmp.lt.s32.totalorder %s228, 3
        %s232 = scalar_select %p231, %s228, 3
        %s233 = smul.addr %s230, 4
        %s234 = sadd.s32 %s232, %s233
        %s235 = smul.addr %s234, 2
        %s236 = scalar_lea.vmem %s1, %s235
      $region36: #{vgg16_forward.30} parent=31 // pred_fallthru
        _
    $region32: #{vgg16_forward.30} parent=5 // pred_fallthru
      _
  $region6: #{vgg16_forward.30} parent=0 // loop_footer
    %s11 = sadd.s32 1, %s7
  $region7: #{vgg16_forward.30} parent=0 // loop_footer_branch
    %6 = sbr.rel target = $region3
  $region8: #{vgg16_forward.30} parent=0 // loop_exit
    _

// kernel: vgg16_forward.27
$region0: #{vgg16_forward.27}
  #allocation0 [shape = 'u32[]', space=smem, size = 0x4, offset = 0x4, fixed_abs, tag = 'smem constant byte address 0x4 - core index']
  #allocation1 [shape = 'u32[144,128]{1,0:T(1,128)}', space=vmem, size = 0x12000, scoped, tag = 'internal scratch']
  %s0 = inlined_call_operand.vmem [shape: bf16[2,10,10,128], index: 0, kind: input, shape index: {}]
  %s1 = inlined_call_operand.vmem [shape: bf16[3,3,128,128], index: 1, kind: input, shape index: {}]
  %s2 = inlined_call_operand.vmem [shape: f32[1,128], index: 2, kind: input, shape index: {}]
  %s3 = inlined_call_operand.vmem [shape: bf16[2,8,8,128], index: 3, kind: output, shape index: {}]
  %s4 = sld [smem:[#allocation0]]
  $region52: #{vgg16_forward.27} parent=0
    _
  %s6 = ssub.s32 1, %s4
  %s7 = scalar_select 0, %s6, %s4
  loop: start=0, step=1, limit=4
  $region2: #{vgg16_forward.27} parent=0 // loop_pre_header
    _
  $region3: #{vgg16_forward.27} parent=0 // loop_header
    %s9 = sphi 0, %s13
    %p10 = scmp.ge.s32.totalorder %s9, 4
    %s19 = sphi 0, %s21
    %s22 = sphi 0, %s19
    %s23 = sphi 0, %s22
    %s39 = sphi 0, %s23
    %s43 = sphi 0, %s43
    %s45 = sphi 0, %s43
    %s46 = sphi 0, %s45
    %s60 = sphi 0, %s46
    %s64 = sphi 0, %s64
    %s66 = sphi 0, %s64
    %s67 = sphi 0, %s66
    %s81 = sphi 0, %s67
    %s87 = sphi 0, %s89
    %s90 = sphi 0, %s87
    %s91 = sphi 0, %s90
    %s107 = sphi 0, %s91
  $region4: #{vgg16_forward.27} parent=0 // loop_header_branch
    %12 = sbr.rel (%p10) target = $region8
  $region5: #{vgg16_forward.27} parent=0 // loop_body
    %s14 = ssub.s32 %s9, 1
    %s15 = ssub.s32 %s9, 2
    %s16 = sadd.s32 %s9, 1
    %s17 = ssub.s32 %s9, %s16
    %p18 = scmp.eq.s32.totalorder %s17, 0
    %s20 = sadd.s32 %s19, 1
    %s21 = scalar_select %p18, %s19, %s20
    %p24 = pneg %p18
    %p25 = scmp.eq.s32.totalorder %s9, 1
    %p26 = por %p24, %p25
    %p27 = scmp.ne.s32.totalorder %s19, %s22
    %p28 = scmp.eq.s32.totalorder %s9, 0
    %p29 = por %p27, %p28
    %p30 = scmp.ne.s32.totalorder %s19, %s22
    %p31 = scmp.eq.s32.totalorder %s14, 1
    %p32 = por %p30, %p31
    %p33 = scmp.ne.s32.totalorder %s22, %s23
    %p34 = scmp.eq.s32.totalorder %s14, 0
    %p35 = por %p33, %p34
    %p36 = scmp.ne.s32.totalorder %s22, %s23
    %p37 = scmp.eq.s32.totalorder %s15, 1
    %p38 = por %p36, %p37
    %p40 = scmp.ne.s32.totalorder %s23, %s39
    %p41 = scmp.eq.s32.totalorder %s15, 0
    %p42 = por %p40, %p41
    %s44 = sadd.s32 %s43, 1
    %p47 = scmp.eq.s32.totalorder %s9, 1
    %p48 = scmp.ne.s32.totalorder %s43, %s45
    %p49 = scmp.eq.s32.totalorder %s9, 0
    %p50 = por %p48, %p49
    %p51 = scmp.ne.s32.totalorder %s43, %s45
    %p52 = scmp.eq.s32.totalorder %s14, 1
    %p53 = por %p51, %p52
    %p54 = scmp.ne.s32.totalorder %s45, %s46
    %p55 = scmp.eq.s32.totalorder %s14, 0
    %p56 = por %p54, %p55
    %p57 = scmp.ne.s32.totalorder %s45, %s46
    %p58 = scmp.eq.s32.totalorder %s15, 1
    %p59 = por %p57, %p58
    %p61 = scmp.ne.s32.totalorder %s46, %s60
    %p62 = scmp.eq.s32.totalorder %s15, 0
    %p63 = por %p61, %p62
    %s65 = sadd.s32 %s64, 1
    %p68 = scmp.eq.s32.totalorder %s9, 1
    %p69 = scmp.ne.s32.totalorder %s64, %s66
    %p70 = scmp.eq.s32.totalorder %s9, 0
    %p71 = por %p69, %p70
    %p72 = scmp.ne.s32.totalorder %s64, %s66
    %p73 = scmp.eq.s32.totalorder %s14, 1
    %p74 = por %p72, %p73
    %p75 = scmp.ne.s32.totalorder %s66, %s67
    %p76 = scmp.eq.s32.totalorder %s14, 0
    %p77 = por %p75, %p76
    %p78 = scmp.ne.s32.totalorder %s66, %s67
    %p79 = scmp.eq.s32.totalorder %s15, 1
    %p80 = por %p78, %p79
    %p82 = scmp.ne.s32.totalorder %s67, %s81
    %p83 = scmp.eq.s32.totalorder %s15, 0
    %p84 = por %p82, %p83
    %s85 = ssub.s32 %s9, %s16
    %p86 = scmp.eq.s32.totalorder %s85, 0
    %s88 = sadd.s32 %s87, 1
    %s89 = scalar_select %p86, %s87, %s88
    %p92 = pneg %p86
    %p93 = scmp.eq.s32.totalorder %s9, 1
    %p94 = por %p92, %p93
    %p95 = scmp.ne.s32.totalorder %s87, %s90
    %p96 = scmp.eq.s32.totalorder %s9, 0
    %p97 = por %p95, %p96
    %p98 = scmp.ne.s32.totalorder %s87, %s90
    %p99 = scmp.eq.s32.totalorder %s14, 1
    %p100 = por %p98, %p99
    %p101 = scmp.ne.s32.totalorder %s90, %s91
    %p102 = scmp.eq.s32.totalorder %s14, 0
    %p103 = por %p101, %p102
    %p104 = scmp.ne.s32.totalorder %s90, %s91
    %p105 = scmp.eq.s32.totalorder %s15, 1
    %p106 = por %p104, %p105
    %p108 = scmp.ne.s32.totalorder %s91, %s107
    %p109 = scmp.eq.s32.totalorder %s15, 0
    %p110 = por %p108, %p109
    %p111 = scmp.le.s32.totalorder 1, %s9
    %p112 = scmp.lt.s32.totalorder %s9, 3
    %p113 = pnand %p111, %p112
    %p114 = pneg %p113
    // Predicated region
    $region9: #{vgg16_forward.27} parent=5 // pred_check
      _
    $region10: #{vgg16_forward.27} parent=5 // pred_check_branch
      %116 = sbr.rel (%p113) target = $region12
    $region11: #{vgg16_forward.27} parent=5 // pred_region
      %s117 = ssub.s32 %s9, 1
      // Predicated region
      $region13: #{vgg16_forward.27} parent=11 // pred_check
        %p118 = pneg %p56
      $region14: #{vgg16_forward.27} parent=11 // pred_check_branch
        %120 = sbr.rel (%p118) target = $region16
      $region15: #{vgg16_forward.27} parent=11 // pred_region
        _
      $region16: #{vgg16_forward.27} parent=11 // pred_fallthru
        _
      // Predicated region
      $region17: #{vgg16_forward.27} parent=11 // pred_check
        %p121 = pneg %p77
      $region18: #{vgg16_forward.27} parent=11 // pred_check_branch
        %123 = sbr.rel (%p121) target = $region20
      $region19: #{vgg16_forward.27} parent=11 // pred_region
        _
      $region20: #{vgg16_forward.27} parent=11 // pred_fallthru
        _
    $region12: #{vgg16_forward.27} parent=5 // pred_fallthru
      _
    %p124 = scmp.lt.s32.totalorder %s9, 2
    // Predicated region
    $region21: #{vgg16_forward.27} parent=5 // pred_check
      %p125 = pneg %p124
    $region22: #{vgg16_forward.27} parent=5 // pred_check_branch
      %127 = sbr.rel (%p125) target = $region24
    $region23: #{vgg16_forward.27} parent=5 // pred_region
      // Predicated region
      $region25: #{vgg16_forward.27} parent=23 // pred_check
        %p128 = pneg %p29
      $region26: #{vgg16_forward.27} parent=23 // pred_check_branch
        %130 = sbr.rel (%p128) target = $region28
      $region27: #{vgg16_forward.27} parent=23 // pred_region
        %p131 = scmp.lt.s32.totalorder %s9, 1
        %s132 = scalar_select %p131, %s9, 1
        %s133 = smul.addr %s132, 20
        %s134 = smul.addr %s133, 4
        %s135 = scalar_lea.vmem %s0, %s134
      $region28: #{vgg16_forward.27} parent=23 // pred_fallthru
        _
    $region24: #{vgg16_forward.27} parent=5 // pred_fallthru
      _
    %p136 = scmp.le.s32.totalorder 1, %s9
    %p137 = scmp.lt.s32.totalorder %s9, 3
    %p138 = pnand %p136, %p137
    %p139 = pneg %p138
    // Predicated region
    $region29: #{vgg16_forward.27} parent=5 // pred_check
      _
    $region30: #{vgg16_forward.27} parent=5 // pred_check_branch
      %141 = sbr.rel (%p138) target = $region32
    $region31: #{vgg16_forward.27} parent=5 // pred_region
      %s142 = ssub.s32 %s9, 1
      %p143 = scmp.lt.s32.totalorder %s14, 1
      %s144 = scalar_select %p143, %s14, 1
      %s145 = smul.addr %s144, 20
      %s146 = smul.addr %s145, 4
      %s147 = scalar_lea.vmem %s0, %s146
      %p148 = pneg %p35
      %p149 = pneg %p32
      %p150 = pneg %p56
      %p151 = pneg %p53
      %p152 = pneg %p77
      %p153 = pneg %p74
      %p154 = pneg %p103
      %p155 = pneg %p100
      %p156 = scmp.lt.s32.totalorder %s14, 1
      %s157 = scalar_select %p156, %s14, 1
      %s158 = smul.addr %s157, 8
      %s159 = smul.addr %s158, 4
      %s160 = scalar_lea.vmem %s3, %s159
      %p161 = scmp.lt.s32.totalorder %s14, 1
      %s162 = scalar_select %p161, %s14, 1
      %s163 = smul.addr %s162, 20
      %s164 = smul.addr %s163, 4
      %s165 = scalar_lea.vmem %s0, %s164
      %p166 = scmp.lt.s32.totalorder %s14, 1
      %s167 = scalar_select %p166, %s14, 1
      %s168 = smul.addr %s167, 8
      %s169 = smul.addr %s168, 4
      %s170 = scalar_lea.vmem %s3, %s169
      loop: start=0, step=1, limit=8
      $region33: #{vgg16_forward.27} parent=31 // loop_pre_header
        _
      $region34: #{vgg16_forward.27} parent=31 // loop_header
        %s173 = sphi 0, %s177
        %p174 = scmp.ge.s32.totalorder %s173, 8
      $region35: #{vgg16_forward.27} parent=31 // loop_header_branch
        %176 = sbr.rel (%p174) target = $region39
      $region36: #{vgg16_forward.27} parent=31 // loop_body
        %s178 = smul.u32 %s173, 2
        %s179 = smul.addr %s178, 4
        %s180 = scalar_lea.vmem %s165, %s179
        %v181 = vld [vmem:[%s180] sm:$0xf]
        %v182 = vld [vmem:[%s1] sm:$0xf]
        %v183 = vld [vmem:[%s1 + $0x4] sm:$0xf]
        %v184 = vld [vmem:[%s1 + $0x8] sm:$0xf]
        %v185 = vld [vmem:[%s1 + $0xc] sm:$0xf]
        %v186 = vld [vmem:[%s1 + $0x10] sm:$0xf]
        %v187 = vld [vmem:[%s1 + $0x14] sm:$0xf]
        %v188 = vld [vmem:[%s1 + $0x18] sm:$0xf]
        %v189 = vld [vmem:[%s1 + $0x1c] sm:$0xf]
        %v190 = vld [vmem:[%s1 + $0x20] sm:$0xf]
        %v191 = vld [vmem:[%s1 + $0x24] sm:$0xf]
        %v192 = vld [vmem:[%s1 + $0x28] sm:$0xf]
        %v193 = vld [vmem:[%s1 + $0x2c] sm:$0xf]
        %v194 = vld [vmem:[%s1 + $0x30] sm:$0xf]
        %v195 = vld [vmem:[%s1 + $0x34] sm:$0xf]
        %v196 = vld [vmem:[%s1 + $0x38] sm:$0xf]
        %v197 = vld [vmem:[%s1 + $0x3c] sm:$0xf]
        %v198 = vld [vmem:[%s180 + $0x4] sm:$0x1]
        %s199 = scalar_lea.vmem %s1, 64
        %v200 = vld [vmem:[%s199] sm:$0xf]
        %v201 = vld [vmem:[%s199 + $0x4] sm:$0xf]
        %v202 = vld [vmem:[%s199 + $0x8] sm:$0xf]
        %v203 = vld [vmem:[%s199 + $0xc] sm:$0xf]
        %v204 = vld [vmem:[%s199 + $0x10] sm:$0xf]
        %v205 = vld [vmem:[%s199 + $0x14] sm:$0xf]
        %v206 = vld [vmem:[%s199 + $0x18] sm:$0xf]
        %v207 = vld [vmem:[%s199 + $0x1c] sm:$0xf]
        %v208 = vld [vmem:[%s199 + $0x20] sm:$0xf]
        %v209 = vld [vmem:[%s199 + $0x24] sm:$0xf]
        %v210 = vld [vmem:[%s199 + $0x28] sm:$0xf]
        %v211 = vld [vmem:[%s199 + $0x2c] sm:$0xf]
        %v212 = vld [vmem:[%s199 + $0x30] sm:$0xf]
        %v213 = vld [vmem:[%s199 + $0x34] sm:$0xf]
        %v214 = vld [vmem:[%s199 + $0x38] sm:$0xf]
        %v215 = vld [vmem:[%s199 + $0x3c] sm:$0xf]
        %v218 = vunpack.c.l.b16 %v181
        %v219 = vunpack.c.l.b16 %v198
        %v220 = vpack.c.b16 %v219, %v218
        %v222 = vshrl.u32 %v220, 16
        %v224 = vshll.u32 %v220, 16
        %v226 = vrot.slane %v224, 1
        %v227 = vor.u32 %v222, %v226
        %v245 = vunpack.c.l.b16 %v200
        %v246 = vunpack.c.l.b16 %v201
        %v247 = vunpack.c.l.b16 %v202
        %v248 = vunpack.c.l.b16 %v203
        %v249 = vunpack.c.l.b16 %v204
        %v250 = vunpack.c.l.b16 %v205
        %v251 = vunpack.c.l.b16 %v206
        %v252 = vunpack.c.l.b16 %v207
        %v253 = vunpack.c.l.b16 %v208
        %v254 = vunpack.c.l.b16 %v209
        %v255 = vunpack.c.l.b16 %v210
        %v256 = vunpack.c.l.b16 %v211
        %v257 = vunpack.c.l.b16 %v212
        %v258 = vunpack.c.l.b16 %v213
        %v259 = vunpack.c.l.b16 %v214
        %v260 = vunpack.c.l.b16 %v215
        %v261 = vpack.c.b16 %v246, %v245
        %v262 = vpack.c.b16 %v248, %v247
        %v263 = vpack.c.b16 %v250, %v249
        %v264 = vpack.c.b16 %v252, %v251
        %v265 = vpack.c.b16 %v254, %v253
        %v266 = vpack.c.b16 %v256, %v255
        %v267 = vpack.c.b16 %v258, %v257
        %v268 = vpack.c.b16 %v260, %v259
        %277 = vmatprep.subr.bf16.mxu0 0
        %278 = vmatpush1.bf16.msra.mxu0 %v261
        %279 = vmatprep.subr.bf16.mxu0 0
        %280 = vmatpush1.bf16.msra.mxu0 %v262
        %281 = vmatprep.subr.bf16.mxu0 0
        %282 = vmatpush1.bf16.msra.mxu0 %v263
        %283 = vmatprep.subr.bf16.mxu0 0
        %284 = vmatpush1.bf16.msra.mxu0 %v264
        %285 = vmatprep.subr.bf16.mxu0 0
        %286 = vmatpush1.bf16.msra.mxu0 %v265
        %287 = vmatprep.subr.bf16.mxu0 0
        %288 = vmatpush1.bf16.msra.mxu0 %v266
        %289 = vmatprep.subr.bf16.mxu0 0
        %290 = vmatpush1.bf16.msra.mxu0 %v267
        %291 = vmatprep.subr.bf16.mxu0 0
        %292 = vmatpush1.bf16.msra.mxu0 %v268
        %293 = vmatprep.subr.bf16.mxu0 0
        %294 = vmatpush1.bf16.msra.mxu0 0
        %295 = vmatprep.subr.bf16.mxu0 0
        %296 = vmatpush1.bf16.msra.mxu0 0
        %297 = vmatprep.subr.bf16.mxu0 0
        %298 = vmatpush1.bf16.msra.mxu0 0
        %299 = vmatprep.subr.bf16.mxu0 0
        %300 = vmatpush1.bf16.msra.mxu0 0
        %301 = vmatprep.subr.bf16.mxu0 0
        %302 = vmatpush1.bf16.msra.mxu0 0
        %303 = vmatprep.subr.bf16.mxu0 0
        %304 = vmatpush1.bf16.msra.mxu0 0
        %305 = vmatprep.subr.bf16.mxu0 0
        %306 = vmatpush1.bf16.msra.mxu0 0
        %307 = vmatprep.subr.bf16.mxu0 0
        %308 = vmatpush1.bf16.msra.mxu0 0
        %309 = vmatprep.mubr.bf16.mxu0 0
        %310 = vmatmul.mubr.bf16.gmra.mrb[0].mxu0 %v227
        %v311 = vpop.f32.mrb[0].mxu0
        %v312 = vadd.f32 0.0, %v311
        %v313 = vpop.f32.mrb[0].mxu0
        %v314 = vpop.f32.mrb[0].mxu0
        %v315 = vpop.f32.mrb[0].mxu0
        %316 = vdwg.mxu0
        %v333 = vunpack.c.l.b16 %v182
        %v334 = vunpack.c.l.b16 %v183
        %v335 = vunpack.c.l.b16 %v184
        %v336 = vunpack.c.l.b16 %v185
        %v337 = vunpack.c.l.b16 %v186
        %v338 = vunpack.c.l.b16 %v187
        %v339 = vunpack.c.l.b16 %v188
        %v340 = vunpack.c.l.b16 %v189
        %v341 = vunpack.c.l.b16 %v190
        %v342 = vunpack.c.l.b16 %v191
        %v343 = vunpack.c.l.b16 %v192
        %v344 = vunpack.c.l.b16 %v193
        %v345 = vunpack.c.l.b16 %v194
        %v346 = vunpack.c.l.b16 %v195
        %v347 = vunpack.c.l.b16 %v196
        %v348 = vunpack.c.l.b16 %v197
        %v349 = vpack.c.b16 %v334, %v333
        %v350 = vpack.c.b16 %v336, %v335
        %v351 = vpack.c.b16 %v338, %v337
        %v352 = vpack.c.b16 %v340, %v339
        %v353 = vpack.c.b16 %v342, %v341
        %v354 = vpack.c.b16 %v344, %v343
        %v355 = vpack.c.b16 %v346, %v345
        %v356 = vpack.c.b16 %v348, %v347
        %365 = vmatprep.subr.bf16.mxu0 0
        %366 = vmatpush1.bf16.msra.mxu0 %v349
        %367 = vmatprep.subr.bf16.mxu0 0
        %368 = vmatpush1.bf16.msra.mxu0 %v350
        %369 = vmatprep.subr.bf16.mxu0 0
        %370 = vmatpush1.bf16.msra.mxu0 %v351
        %371 = vmatprep.subr.bf16.mxu0 0
        %372 = vmatpush1.bf16.msra.mxu0 %v352
        %373 = vmatprep.subr.bf16.mxu0 0
        %374 = vmatpush1.bf16.msra.mxu0 %v353
        %375 = vmatprep.subr.bf16.mxu0 0
        %376 = vmatpush1.bf16.msra.mxu0 %v354
        %377 = vmatprep.subr.bf16.mxu0 0
        %378 = vmatpush1.bf16.msra.mxu0 %v355
        %379 = vmatprep.subr.bf16.mxu0 0
        %380 = vmatpush1.bf16.msra.mxu0 %v356
        %381 = vmatprep.subr.bf16.mxu0 0
        %382 = vmatpush1.bf16.msra.mxu0 0
        %383 = vmatprep.subr.bf16.mxu0 0
        %384 = vmatpush1.bf16.msra.mxu0 0
        %385 = vmatprep.subr.bf16.mxu0 0
        %386 = vmatpush1.bf16.msra.mxu0 0
        %387 = vmatprep.subr.bf16.mxu0 0
        %388 = vmatpush1.bf16.msra.mxu0 0
        %389 = vmatprep.subr.bf16.mxu0 0
        %390 = vmatpush1.bf16.msra.mxu0 0
        %391 = vmatprep.subr.bf16.mxu0 0
        %392 = vmatpush1.bf16.msra.mxu0 0
        %393 = vmatprep.subr.bf16.mxu0 0
        %394 = vmatpush1.bf16.msra.mxu0 0
        %395 = vmatprep.subr.bf16.mxu0 0
        %396 = vmatpush1.bf16.msra.mxu0 0
        %397 = vmatprep.mubr.bf16.mxu0 0
        %398 = vmatmul.mubr.bf16.gmra.mrb[0].mxu0 %v181
        %v399 = vpop.f32.mrb[0].mxu0
        %v400 = vadd.f32 %v312, %v399
        %v401 = vpop.f32.mrb[0].mxu0
        %v402 = vpop.f32.mrb[0].mxu0
        %v403 = vpop.f32.mrb[0].mxu0
        %404 = vdwg.mxu0
        %v405 = vld [vmem:[%s180] sm:$0xe]
        %s406 = scalar_lea.vmem %s1, 128
        %v407 = vld [vmem:[%s406] sm:$0xf]
        %v408 = vld [vmem:[%s406 + $0x4] sm:$0xf]
        %v409 = vld [vmem:[%s406 + $0x8] sm:$0xf]
        %v410 = vld [vmem:[%s406 + $0xc] sm:$0xf]
        %v411 = vld [vmem:[%s406 + $0x10] sm:$0xf]
        %v412 = vld [vmem:[%s406 + $0x14] sm:$0xf]
        %v413 = vld [vmem:[%s406 + $0x18] sm:$0xf]
        %v414 = vld [vmem:[%s406 + $0x1c] sm:$0xf]
        %v415 = vld [vmem:[%s406 + $0x20] sm:$0xf]
        %v416 = vld [vmem:[%s406 + $0x24] sm:$0xf]
        %v417 = vld [vmem:[%s406 + $0x28] sm:$0xf]
        %v418 = vld [vmem:[%s406 + $0x2c] sm:$0xf]
        %v419 = vld [vmem:[%s406 + $0x30] sm:$0xf]
        %v420 = vld [vmem:[%s406 + $0x34] sm:$0xf]
        %v421 = vld [vmem:[%s406 + $0x38] sm:$0xf]
        %v422 = vld [vmem:[%s406 + $0x3c] sm:$0xf]
        %v424 = vunpack.c.l.b16 %v405
        %v425 = vpack.c.b16 %v219, %v424
        %v426 = vrot.slane %v425, 1
        %v444 = vunpack.c.l.b16 %v407
        %v445 = vunpack.c.l.b16 %v408
        %v446 = vunpack.c.l.b16 %v409
        %v447 = vunpack.c.l.b16 %v410
        %v448 = vunpack.c.l.b16 %v411
        %v449 = vunpack.c.l.b16 %v412
        %v450 = vunpack.c.l.b16 %v413
        %v451 = vunpack.c.l.b16 %v414
        %v452 = vunpack.c.l.b16 %v415
        %v453 = vunpack.c.l.b16 %v416
        %v454 = vunpack.c.l.b16 %v417
        %v455 = vunpack.c.l.b16 %v418
        %v456 = vunpack.c.l.b16 %v419
        %v457 = vunpack.c.l.b16 %v420
        %v458 = vunpack.c.l.b16 %v421
        %v459 = vunpack.c.l.b16 %v422
        %v460 = vpack.c.b16 %v445, %v444
        %v461 = vpack.c.b16 %v447, %v446
        %v462 = vpack.c.b16 %v449, %v448
        %v463 = vpack.c.b16 %v451, %v450
        %v464 = vpack.c.b16 %v453, %v452
        %v465 = vpack.c.b16 %v455, %v454
        %v466 = vpack.c.b16 %v457, %v456
        %v467 = vpack.c.b16 %v459, %v458
        %476 = vmatprep.subr.bf16.mxu0 0
        %477 = vmatpush1.bf16.msra.mxu0 %v460
        %478 = vmatprep.subr.bf16.mxu0 0
        %479 = vmatpush1.bf16.msra.mxu0 %v461
        %480 = vmatprep.subr.bf16.mxu0 0
        %481 = vmatpush1.bf16.msra.mxu0 %v462
        %482 = vmatprep.subr.bf16.mxu0 0
        %483 = vmatpush1.bf16.msra.mxu0 %v463
        %484 = vmatprep.subr.bf16.mxu0 0
        %485 = vmatpush1.bf16.msra.mxu0 %v464
        %486 = vmatprep.subr.bf16.mxu0 0
        %487 = vmatpush1.bf16.msra.mxu0 %v465
        %488 = vmatprep.subr.bf16.mxu0 0
        %489 = vmatpush1.bf16.msra.mxu0 %v466
        %490 = vmatprep.subr.bf16.mxu0 0
        %491 = vmatpush1.bf16.msra.mxu0 %v467
        %492 = vmatprep.subr.bf16.mxu0 0
        %493 = vmatpush1.bf16.msra.mxu0 0
        %494 = vmatprep.subr.bf16.mxu0 0
        %495 = vmatpush1.bf16.msra.mxu0 0
        %496 = vmatprep.subr.bf16.mxu0 0
        %497 = vmatpush1.bf16.msra.mxu0 0
        %498 = vmatprep.subr.bf16.mxu0 0
        %499 = vmatpush1.bf16.msra.mxu0 0
        %500 = vmatprep.subr.bf16.mxu0 0
        %501 = vmatpush1.bf16.msra.mxu0 0
        %502 = vmatprep.subr.bf16.mxu0 0
        %503 = vmatpush1.bf16.msra.mxu0 0
        %504 = vmatprep.subr.bf16.mxu0 0
        %505 = vmatpush1.bf16.msra.mxu0 0
        %506 = vmatprep.subr.bf16.mxu0 0
        %507 = vmatpush1.bf16.msra.mxu0 0
        %508 = vmatprep.mubr.bf16.mxu0 0
        %509 = vmatmul.mubr.bf16.gmra.mrb[0].mxu0 %v426
        %v510 = vpop.f32.mrb[0].mxu0
        %v511 = vadd.f32 0.0, %v510
        %v512 = vpop.f32.mrb[0].mxu0
        %v513 = vpop.f32.mrb[0].mxu0
        %v514 = vpop.f32.mrb[0].mxu0
        %515 = vdwg.mxu0
        %v516 = vadd.f32 %v400, %v511
        %s517 = sadd.s32 %s173, 1
        %s518 = smul.u32 %s517, 2
        %s519 = smul.addr %s518, 4
        %s520 = scalar_lea.vmem %s165, %s519
        %v521 = vld [vmem:[%s520] sm:$0xf]
        %s522 = scalar_lea.vmem %s1, 192
        %v523 = vld [vmem:[%s522] sm:$0xf]
        %v524 = vld [vmem:[%s522 + $0x4] sm:$0xf]
        %v525 = vld [vmem:[%s522 + $0x8] sm:$0xf]
        %v526 = vld [vmem:[%s522 + $0xc] sm:$0xf]
        %v527 = vld [vmem:[%s522 + $0x10] sm:$0xf]
        %v528 = vld [vmem:[%s522 + $0x14] sm:$0xf]
        %v529 = vld [vmem:[%s522 + $0x18] sm:$0xf]
        %v530 = vld [vmem:[%s522 + $0x1c] sm:$0xf]
        %v531 = vld [vmem:[%s522 + $0x20] sm:$0xf]
        %v532 = vld [vmem:[%s522 + $0x24] sm:$0xf]
        %v533 = vld [vmem:[%s522 + $0x28] sm:$0xf]
        %v534 = vld [vmem:[%s522 + $0x2c] sm:$0xf]
        %v535 = vld [vmem:[%s522 + $0x30] sm:$0xf]
        %v536 = vld [vmem:[%s522 + $0x34] sm:$0xf]
        %v537 = vld [vmem:[%s522 + $0x38] sm:$0xf]
        %v538 = vld [vmem:[%s522 + $0x3c] sm:$0xf]
        %v555 = vunpack.c.l.b16 %v523
        %v556 = vunpack.c.l.b16 %v524
        %v557 = vunpack.c.l.b16 %v525
        %v558 = vunpack.c.l.b16 %v526
        %v559 = vunpack.c.l.b16 %v527
        %v560 = vunpack.c.l.b16 %v528
        %v561 = vunpack.c.l.b16 %v529
        %v562 = vunpack.c.l.b16 %v530
        %v563 = vunpack.c.l.b16 %v531
        %v564 = vunpack.c.l.b16 %v532
        %v565 = vunpack.c.l.b16 %v533
        %v566 = vunpack.c.l.b16 %v534
        %v567 = vunpack.c.l.b16 %v535
        %v568 = vunpack.c.l.b16 %v536
        %v569 = vunpack.c.l.b16 %v537
        %v570 = vunpack.c.l.b16 %v538
        %v571 = vpack.c.b16 %v556, %v555
        %v572 = vpack.c.b16 %v558, %v557
        %v573 = vpack.c.b16 %v560, %v559
        %v574 = vpack.c.b16 %v562, %v561
        %v575 = vpack.c.b16 %v564, %v563
        %v576 = vpack.c.b16 %v566, %v565
        %v577 = vpack.c.b16 %v568, %v567
        %v578 = vpack.c.b16 %v570, %v569
        %587 = vmatprep.subr.bf16.mxu0 0
        %588 = vmatpush1.bf16.msra.mxu0 %v571
        %589 = vmatprep.subr.bf16.mxu0 0
        %590 = vmatpush1.bf16.msra.mxu0 %v572
        %591 = vmatprep.subr.bf16.mxu0 0
        %592 = vmatpush1.bf16.msra.mxu0 %v573
        %593 = vmatprep.subr.bf16.mxu0 0
        %594 = vmatpush1.bf16.msra.mxu0 %v574
        %595 = vmatprep.subr.bf16.mxu0 0
        %596 = vmatpush1.bf16.msra.mxu0 %v575
        %597 = vmatprep.subr.bf16.mxu0 0
        %598 = vmatpush1.bf16.msra.mxu0 %v576
        %599 = vmatprep.subr.bf16.mxu0 0
        %600 = vmatpush1.bf16.msra.mxu0 %v577
        %601 = vmatprep.subr.bf16.mxu0 0
        %602 = vmatpush1.bf16.msra.mxu0 %v578
        %603 = vmatprep.subr.bf16.mxu0 0
        %604 = vmatpush1.bf16.msra.mxu0 0
        %605 = vmatprep.subr.bf16.mxu0 0
        %606 = vmatpush1.bf16.msra.mxu0 0
        %607 = vmatprep.subr.bf16.mxu0 0
        %608 = vmatpush1.bf16.msra.mxu0 0
        %609 = vmatprep.subr.bf16.mxu0 0
        %610 = vmatpush1.bf16.msra.mxu0 0
        %611 = vmatprep.subr.bf16.mxu0 0
        %612 = vmatpush1.bf16.msra.mxu0 0
        %613 = vmatprep.subr.bf16.mxu0 0
        %614 = vmatpush1.bf16.msra.mxu0 0
        %615 = vmatprep.subr.bf16.mxu0 0
        %616 = vmatpush1.bf16.msra.mxu0 0
        %617 = vmatprep.subr.bf16.mxu0 0
        %618 = vmatpush1.bf16.msra.mxu0 0
        %619 = vmatprep.mubr.bf16.mxu0 0
        %620 = vmatmul.mubr.bf16.gmra.mrb[0].mxu0 %v521
        %v621 = vpop.f32.mrb[0].mxu0
        %v622 = vadd.f32 0.0, %v621
        %v623 = vpop.f32.mrb[0].mxu0
        %v624 = vpop.f32.mrb[0].mxu0
        %v625 = vpop.f32.mrb[0].mxu0
        %626 = vdwg.mxu0
        %v627 = vadd.f32 %v516, %v622
        %v628 = vld [vmem:[%s520] sm:$0xf]
        %v629 = vld [vmem:[%s520 + $0x4] sm:$0x1]
        %s630 = scalar_lea.vmem %s1, 256
        %v631 = vld [vmem:[%s630] sm:$0xf]
        %v632 = vld [vmem:[%s630 + $0x4] sm:$0xf]
        %v633 = vld [vmem:[%s630 + $0x8] sm:$0xf]
        %v634 = vld [vmem:[%s630 + $0xc] sm:$0xf]
        %v635 = vld [vmem:[%s630 + $0x10] sm:$0xf]
        %v636 = vld [vmem:[%s630 + $0x14] sm:$0xf]
        %v637 = vld [vmem:[%s630 + $0x18] sm:$0xf]
        %v638 = vld [vmem:[%s630 + $0x1c] sm:$0xf]
        %v639 = vld [vmem:[%s630 + $0x20] sm:$0xf]
        %v640 = vld [vmem:[%s630 + $0x24] sm:$0xf]
        %v641 = vld [vmem:[%s630 + $0x28] sm:$0xf]
        %v642 = vld [vmem:[%s630 + $0x2c] sm:$0xf]
        %v643 = vld [vmem:[%s630 + $0x30] sm:$0xf]
        %v644 = vld [vmem:[%s630 + $0x34] sm:$0xf]
        %v645 = vld [vmem:[%s630 + $0x38] sm:$0xf]
        %v646 = vld [vmem:[%s630 + $0x3c] sm:$0xf]
        %v649 = vunpack.c.l.b16 %v628
        %v650 = vunpack.c.l.b16 %v629
        %v651 = vpack.c.b16 %v650, %v649
        %v653 = vshrl.u32 %v651, 16
        %v655 = vshll.u32 %v651, 16
        %v657 = vrot.slane %v655, 1
        %v658 = vor.u32 %v653, %v657
        %v676 = vunpack.c.l.b16 %v631
        %v677 = vunpack.c.l.b16 %v632
        %v678 = vunpack.c.l.b16 %v633
        %v679 = vunpack.c.l.b16 %v634
        %v680 = vunpack.c.l.b16 %v635
        %v681 = vunpack.c.l.b16 %v636
        %v682 = vunpack.c.l.b16 %v637
        %v683 = vunpack.c.l.b16 %v638
        %v684 = vunpack.c.l.b16 %v639
        %v685 = vunpack.c.l.b16 %v640
        %v686 = vunpack.c.l.b16 %v641
        %v687 = vunpack.c.l.b16 %v642
        %v688 = vunpack.c.l.b16 %v643
        %v689 = vunpack.c.l.b16 %v644
        %v690 = vunpack.c.l.b16 %v645
        %v691 = vunpack.c.l.b16 %v646
        %v692 = vpack.c.b16 %v677, %v676
        %v693 = vpack.c.b16 %v679, %v678
        %v694 = vpack.c.b16 %v681, %v680
        %v695 = vpack.c.b16 %v683, %v682
        %v696 = vpack.c.b16 %v685, %v684
        %v697 = vpack.c.b16 %v687, %v686
        %v698 = vpack.c.b16 %v689, %v688
        %v699 = vpack.c.b16 %v691, %v690
        %708 = vmatprep.subr.bf16.mxu0 0
        %709 = vmatpush1.bf16.msra.mxu0 %v692
        %710 = vmatprep.subr.bf16.mxu0 0
        %711 = vmatpush1.bf16.msra.mxu0 %v693
        %712 = vmatprep.subr.bf16.mxu0 0
        %713 = vmatpush1.bf16.msra.mxu0 %v694
        %714 = vmatprep.subr.bf16.mxu0 0
        %715 = vmatpush1.bf16.msra.mxu0 %v695
        %716 = vmatprep.subr.bf16.mxu0 0
        %717 = vmatpush1.bf16.msra.mxu0 %v696
        %718 = vmatprep.subr.bf16.mxu0 0
        %719 = vmatpush1.bf16.msra.mxu0 %v697
        %720 = vmatprep.subr.bf16.mxu0 0
        %721 = vmatpush1.bf16.msra.mxu0 %v698
        %722 = vmatprep.subr.bf16.mxu0 0
        %723 = vmatpush1.bf16.msra.mxu0 %v699
        %724 = vmatprep.subr.bf16.mxu0 0
        %725 = vmatpush1.bf16.msra.mxu0 0
        %726 = vmatprep.subr.bf16.mxu0 0
        %727 = vmatpush1.bf16.msra.mxu0 0
        %728 = vmatprep.subr.bf16.mxu0 0
        %729 = vmatpush1.bf16.msra.mxu0 0
        %730 = vmatprep.subr.bf16.mxu0 0
        %731 = vmatpush1.bf16.msra.mxu0 0
        %732 = vmatprep.subr.bf16.mxu0 0
        %733 = vmatpush1.bf16.msra.mxu0 0
        %734 = vmatprep.subr.bf16.mxu0 0
        %735 = vmatpush1.bf16.msra.mxu0 0
        %736 = vmatprep.subr.bf16.mxu0 0
        %737 = vmatpush1.bf16.msra.mxu0 0
        %738 = vmatprep.subr.bf16.mxu0 0
        %739 = vmatpush1.bf16.msra.mxu0 0
        %740 = vmatprep.mubr.bf16.mxu0 0
        %741 = vmatmul.mubr.bf16.gmra.mrb[0].mxu0 %v658
        %v742 = vpop.f32.mrb[0].mxu0
        %v743 = vadd.f32 0.0, %v742
        %v744 = vpop.f32.mrb[0].mxu0
        %v745 = vpop.f32.mrb[0].mxu0
        %v746 = vpop.f32.mrb[0].mxu0
        %747 = vdwg.mxu0
        %v748 = vadd.f32 %v627, %v743
        %v749 = vld [vmem:[%s520] sm:$0xe]
        %s750 = scalar_lea.vmem %s1, 320
        %v751 = vld [vmem:[%s750] sm:$0xf]
        %v752 = vld [vmem:[%s750 + $0x4] sm:$0xf]
        %v753 = vld [vmem:[%s750 + $0x8] sm:$0xf]
        %v754 = vld [vmem:[%s750 + $0xc] sm:$0xf]
        %v755 = vld [vmem:[%s750 + $0x10] sm:$0xf]
        %v756 = vld [vmem:[%s750 + $0x14] sm:$0xf]
        %v757 = vld [vmem:[%s750 + $0x18] sm:$0xf]
        %v758 = vld [vmem:[%s750 + $0x1c] sm:$0xf]
        %v759 = vld [vmem:[%s750 + $0x20] sm:$0xf]
        %v760 = vld [vmem:[%s750 + $0x24] sm:$0xf]
        %v761 = vld [vmem:[%s750 + $0x28] sm:$0xf]
        %v762 = vld [vmem:[%s750 + $0x2c] sm:$0xf]
        %v763 = vld [vmem:[%s750 + $0x30] sm:$0xf]
        %v764 = vld [vmem:[%s750 + $0x34] sm:$0xf]
        %v765 = vld [vmem:[%s750 + $0x38] sm:$0xf]
        %v766 = vld [vmem:[%s750 + $0x3c] sm:$0xf]
        %v768 = vunpack.c.l.b16 %v749
        %v769 = vpack.c.b16 %v650, %v768
        %v770 = vrot.slane %v769, 1
        %v788 = vunpack.c.l.b16 %v751
        %v789 = vunpack.c.l.b16 %v752
        %v790 = vunpack.c.l.b16 %v753
        %v791 = vunpack.c.l.b16 %v754
        %v792 = vunpack.c.l.b16 %v755
        %v793 = vunpack.c.l.b16 %v756
        %v794 = vunpack.c.l.b16 %v757
        %v795 = vunpack.c.l.b16 %v758
        %v796 = vunpack.c.l.b16 %v759
        %v797 = vunpack.c.l.b16 %v760
        %v798 = vunpack.c.l.b16 %v761
        %v799 = vunpack.c.l.b16 %v762
        %v800 = vunpack.c.l.b16 %v763
        %v801 = vunpack.c.l.b16 %v764
        %v802 = vunpack.c.l.b16 %v765
        %v803 = vunpack.c.l.b16 %v766
        %v804 = vpack.c.b16 %v789, %v788
        %v805 = vpack.c.b16 %v791, %v790
        %v806 = vpack.c.b16 %v793, %v792
        %v807 = vpack.c.b16 %v795, %v794
        %v808 = vpack.c.b16 %v797, %v796
        %v809 = vpack.c.b16 %v799, %v798
        %v810 = vpack.c.b16 %v801, %v800
        %v811 = vpack.c.b16 %v803, %v802
        %820 = vmatprep.subr.bf16.mxu0 0
        %821 = vmatpush1.bf16.msra.mxu0 %v804
        %822 = vmatprep.subr.bf16.mxu0 0
        %823 = vmatpush1.bf16.msra.mxu0 %v805
        %824 = vmatprep.subr.bf16.mxu0 0
        %825 = vmatpush1.bf16.msra.mxu0 %v806
        %826 = vmatprep.subr.bf16.mxu0 0
        %827 = vmatpush1.bf16.msra.mxu0 %v807
        %828 = vmatprep.subr.bf16.mxu0 0
        %829 = vmatpush1.bf16.msra.mxu0 %v808
        %830 = vmatprep.subr.bf16.mxu0 0
        %831 = vmatpush1.bf16.msra.mxu0 %v809
        %832 = vmatprep.subr.bf16.mxu0 0
        %833 = vmatpush1.bf16.msra.mxu0 %v810
        %834 = vmatprep.subr.bf16.mxu0 0
        %835 = vmatpush1.bf16.msra.mxu0 %v811
        %836 = vmatprep.subr.bf16.mxu0 0
        %837 = vmatpush1.bf16.msra.mxu0 0
        %838 = vmatprep.subr.bf16.mxu0 0
        %839 = vmatpush1.bf16.msra.mxu0 0
        %840 = vmatprep.subr.bf16.mxu0 0
        %841 = vmatpush1.bf16.msra.mxu0 0
        %842 = vmatprep.subr.bf16.mxu0 0
        %843 = vmatpush1.bf16.msra.mxu0 0
        %844 = vmatprep.subr.bf16.mxu0 0
        %845 = vmatpush1.bf16.msra.mxu0 0
        %846 = vmatprep.subr.bf16.mxu0 0
        %847 = vmatpush1.bf16.msra.mxu0 0
        %848 = vmatprep.subr.bf16.mxu0 0
        %849 = vmatpush1.bf16.msra.mxu0 0
        %850 = vmatprep.subr.bf16.mxu0 0
        %851 = vmatpush1.bf16.msra.mxu0 0
        %852 = vmatprep.mubr.bf16.mxu0 0
        %853 = vmatmul.mubr.bf16.gmra.mrb[0].mxu0 %v770
        %v854 = vpop.f32.mrb[0].mxu0
        %v855 = vadd.f32 0.0, %v854
        %v856 = vpop.f32.mrb[0].mxu0
        %v857 = vpop.f32.mrb[0].mxu0
        %v858 = vpop.f32.mrb[0].mxu0
        %859 = vdwg.mxu0
        %v860 = vadd.f32 %v748, %v855
        %s861 = sadd.s32 %s173, 2
        %s862 = smul.u32 %s861, 2
        %s863 = smul.addr %s862, 4
        %s864 = scalar_lea.vmem %s165, %s863
        %v865 = vld [vmem:[%s864] sm:$0xf]
        %s866 = scalar_lea.vmem %s1, 384
        %v867 = vld [vmem:[%s866] sm:$0xf]
        %v868 = vld [vmem:[%s866 + $0x4] sm:$0xf]
        %v869 = vld [vmem:[%s866 + $0x8] sm:$0xf]
        %v870 = vld [vmem:[%s866 + $0xc] sm:$0xf]
        %v871 = vld [vmem:[%s866 + $0x10] sm:$0xf]
        %v872 = vld [vmem:[%s866 + $0x14] sm:$0xf]
        %v873 = vld [vmem:[%s866 + $0x18] sm:$0xf]
        %v874 = vld [vmem:[%s866 + $0x1c] sm:$0xf]
        %v875 = vld [vmem:[%s866 + $0x20] sm:$0xf]
        %v876 = vld [vmem:[%s866 + $0x24] sm:$0xf]
        %v877 = vld [vmem:[%s866 + $0x28] sm:$0xf]
        %v878 = vld [vmem:[%s866 + $0x2c] sm:$0xf]
        %v879 = vld [vmem:[%s866 + $0x30] sm:$0xf]
        %v880 = vld [vmem:[%s866 + $0x34] sm:$0xf]
        %v881 = vld [vmem:[%s866 + $0x38] sm:$0xf]
        %v882 = vld [vmem:[%s866 + $0x3c] sm:$0xf]
        %v899 = vunpack.c.l.b16 %v867
        %v900 = vunpack.c.l.b16 %v868
        %v901 = vunpack.c.l.b16 %v869
        %v902 = vunpack.c.l.b16 %v870
        %v903 = vunpack.c.l.b16 %v871
        %v904 = vunpack.c.l.b16 %v872
        %v905 = vunpack.c.l.b16 %v873
        %v906 = vunpack.c.l.b16 %v874
        %v907 = vunpack.c.l.b16 %v875
        %v908 = vunpack.c.l.b16 %v876
        %v909 = vunpack.c.l.b16 %v877
        %v910 = vunpack.c.l.b16 %v878
        %v911 = vunpack.c.l.b16 %v879
        %v912 = vunpack.c.l.b16 %v880
        %v913 = vunpack.c.l.b16 %v881
        %v914 = vunpack.c.l.b16 %v882
        %v915 = vpack.c.b16 %v900, %v899
        %v916 = vpack.c.b16 %v902, %v901
        %v917 = vpack.c.b16 %v904, %v903
        %v918 = vpack.c.b16 %v906, %v905
        %v919 = vpack.c.b16 %v908, %v907
        %v920 = vpack.c.b16 %v910, %v909
        %v921 = vpack.c.b16 %v912, %v911
        %v922 = vpack.c.b16 %v914, %v913
        %931 = vmatprep.subr.bf16.mxu0 0
        %932 = vmatpush1.bf16.msra.mxu0 %v915
        %933 = vmatprep.subr.bf16.mxu0 0
        %934 = vmatpush1.bf16.msra.mxu0 %v916
        %935 = vmatprep.subr.bf16.mxu0 0
        %936 = vmatpush1.bf16.msra.mxu0 %v917
        %937 = vmatprep.subr.bf16.mxu0 0
        %938 = vmatpush1.bf16.msra.mxu0 %v918
        %939 = vmatprep.subr.bf16.mxu0 0
        %940 = vmatpush1.bf16.msra.mxu0 %v919
        %941 = vmatprep.subr.bf16.mxu0 0
        %942 = vmatpush1.bf16.msra.mxu0 %v920
        %943 = vmatprep.subr.bf16.mxu0 0
        %944 = vmatpush1.bf16.msra.mxu0 %v921
        %945 = vmatprep.subr.bf16.mxu0 0
        %946 = vmatpush1.bf16.msra.mxu0 %v922
        %947 = vmatprep.subr.bf16.mxu0 0
        %948 = vmatpush1.bf16.msra.mxu0 0
        %949 = vmatprep.subr.bf16.mxu0 0
        %950 = vmatpush1.bf16.msra.mxu0 0
        %951 = vmatprep.subr.bf16.mxu0 0
        %952 = vmatpush1.bf16.msra.mxu0 0
        %953 = vmatprep.subr.bf16.mxu0 0
        %954 = vmatpush1.bf16.msra.mxu0 0
        %955 = vmatprep.subr.bf16.mxu0 0
        %956 = vmatpush1.bf16.msra.mxu0 0
        %957 = vmatprep.subr.bf16.mxu0 0
        %958 = vmatpush1.bf16.msra.mxu0 0
        %959 = vmatprep.subr.bf16.mxu0 0
        %960 = vmatpush1.bf16.msra.mxu0 0
        %961 = vmatprep.subr.bf16.mxu0 0
        %962 = vmatpush1.bf16.msra.mxu0 0
        %963 = vmatprep.mubr.bf16.mxu0 0
        %964 = vmatmul.mubr.bf16.gmra.mrb[0].mxu0 %v865
        %v965 = vpop.f32.mrb[0].mxu0
        %v966 = vadd.f32 0.0, %v965
        %v967 = vpop.f32.mrb[0].mxu0
        %v968 = vpop.f32.mrb[0].mxu0
        %v969 = vpop.f32.mrb[0].mxu0
        %970 = vdwg.mxu0
        %v971 = vadd.f32 %v860, %v966
        %v972 = vld [vmem:[%s864] sm:$0xf]
        %v973 = vld [vmem:[%s864 + $0x4] sm:$0x1]
        %s974 = scalar_lea.vmem %s1, 448
        %v975 = vld [vmem:[%s974] sm:$0xf]
        %v976 = vld [vmem:[%s974 + $0x4] sm:$0xf]
        %v977 = vld [vmem:[%s974 + $0x8] sm:$0xf]
        %v978 = vld [vmem:[%s974 + $0xc] sm:$0xf]
        %v979 = vld [vmem:[%s974 + $0x10] sm:$0xf]
        %v980 = vld [vmem:[%s974 + $0x14] sm:$0xf]
        %v981 = vld [vmem:[%s974 + $0x18] sm:$0xf]
        %v982 = vld [vmem:[%s974 + $0x1c] sm:$0xf]
        %v983 = vld [vmem:[%s974 + $0x20] sm:$0xf]
        %v984 = vld [vmem:[%s974 + $0x24] sm:$0xf]
        %v985 = vld [vmem:[%s974 + $0x28] sm:$0xf]
        %v986 = vld [vmem:[%s974 + $0x2c] sm:$0xf]
        %v987 = vld [vmem:[%s974 + $0x30] sm:$0xf]
        %v988 = vld [vmem:[%s974 + $0x34] sm:$0xf]
        %v989 = vld [vmem:[%s974 + $0x38] sm:$0xf]
        %v990 = vld [vmem:[%s974 + $0x3c] sm:$0xf]
        %v993 = vunpack.c.l.b16 %v972
        %v994 = vunpack.c.l.b16 %v973
        %v995 = vpack.c.b16 %v994, %v993
        %v997 = vshrl.u32 %v995, 16
        %v999 = vshll.u32 %v995, 16
        %v1001 = vrot.slane %v999, 1
        %v1002 = vor.u32 %v997, %v1001
        %v1020 = vunpack.c.l.b16 %v975
        %v1021 = vunpack.c.l.b16 %v976
        %v1022 = vunpack.c.l.b16 %v977
        %v1023 = vunpack.c.l.b16 %v978
        %v1024 = vunpack.c.l.b16 %v979
        %v1025 = vunpack.c.l.b16 %v980
        %v1026 = vunpack.c.l.b16 %v981
        %v1027 = vunpack.c.l.b16 %v982
        %v1028 = vunpack.c.l.b16 %v983
        %v1029 = vunpack.c.l.b16 %v984
        %v1030 = vunpack.c.l.b16 %v985
        %v1031 = vunpack.c.l.b16 %v986
        %v1032 = vunpack.c.l.b16 %v987
        %v1033 = vunpack.c.l.b16 %v988
        %v1034 = vunpack.c.l.b16 %v989
        %v1035 = vunpack.c.l.b16 %v990
        %v1036 = vpack.c.b16 %v1021, %v1020
        %v1037 = vpack.c.b16 %v1023, %v1022
        %v1038 = vpack.c.b16 %v1025, %v1024
        %v1039 = vpack.c.b16 %v1027, %v1026
        %v1040 = vpack.c.b16 %v1029, %v1028
        %v1041 = vpack.c.b16 %v1031, %v1030
        %v1042 = vpack.c.b16 %v1033, %v1032
        %v1043 = vpack.c.b16 %v1035, %v1034
        %1052 = vmatprep.subr.bf16.mxu0 0
        %1053 = vmatpush1.bf16.msra.mxu0 %v1036
        %1054 = vmatprep.subr.bf16.mxu0 0
        %1055 = vmatpush1.bf16.msra.mxu0 %v1037
        %1056 = vmatprep.subr.bf16.mxu0 0
        %1057 = vmatpush1.bf16.msra.mxu0 %v1038
        %1058 = vmatprep.subr.bf16.mxu0 0
        %1059 = vmatpush1.bf16.msra.mxu0 %v1039
        %1060 = vmatprep.subr.bf16.mxu0 0
        %1061 = vmatpush1.bf16.msra.mxu0 %v1040
        %1062 = vmatprep.subr.bf16.mxu0 0
        %1063 = vmatpush1.bf16.msra.mxu0 %v1041
        %1064 = vmatprep.subr.bf16.mxu0 0
        %1065 = vmatpush1.bf16.msra.mxu0 %v1042
        %1066 = vmatprep.subr.bf16.mxu0 0
        %1067 = vmatpush1.bf16.msra.mxu0 %v1043
        %1068 = vmatprep.subr.bf16.mxu0 0
        %1069 = vmatpush1.bf16.msra.mxu0 0
        %1070 = vmatprep.subr.bf16.mxu0 0
        %1071 = vmatpush1.bf16.msra.mxu0 0
        %1072 = vmatprep.subr.bf16.mxu0 0
        %1073 = vmatpush1.bf16.msra.mxu0 0
        %1074 = vmatprep.subr.bf16.mxu0 0
        %1075 = vmatpush1.bf16.msra.mxu0 0
        %1076 = vmatprep.subr.bf16.mxu0 0
        %1077 = vmatpush1.bf16.msra.mxu0 0
        %1078 = vmatprep.subr.bf16.mxu0 0
        %1079 = vmatpush1.bf16.msra.mxu0 0
        %1080 = vmatprep.subr.bf16.mxu0 0
        %1081 = vmatpush1.bf16.msra.mxu0 0
        %1082 = vmatprep.subr.bf16.mxu0 0
        %1083 = vmatpush1.bf16.msra.mxu0 0
        %1084 = vmatprep.mubr.bf16.mxu0 0
        %1085 = vmatmul.mubr.bf16.gmra.mrb[0].mxu0 %v1002
        %v1086 = vpop.f32.mrb[0].mxu0
        %v1087 = vadd.f32 0.0, %v1086
        %v1088 = vpop.f32.mrb[0].mxu0
        %v1089 = vpop.f32.mrb[0].mxu0
        %v1090 = vpop.f32.mrb[0].mxu0
        %1091 = vdwg.mxu0
        %v1092 = vadd.f32 %v971, %v1087
        %v1093 = vld [vmem:[%s864] sm:$0xe]
        %s1094 = scalar_lea.vmem %s1, 512
        %v1095 = vld [vmem:[%s1094] sm:$0xf]
        %v1096 = vld [vmem:[%s1094 + $0x4] sm:$0xf]
        %v1097 = vld [vmem:[%s1094 + $0x8] sm:$0xf]
        %v1098 = vld [vmem:[%s1094 + $0xc] sm:$0xf]
        %v1099 = vld [vmem:[%s1094 + $0x10] sm:$0xf]
        %v1100 = vld [vmem:[%s1094 + $0x14] sm:$0xf]
        %v1101 = vld [vmem:[%s1094 + $0x18] sm:$0xf]
        %v1102 = vld [vmem:[%s1094 + $0x1c] sm:$0xf]
        %v1103 = vld [vmem:[%s1094 + $0x20] sm:$0xf]
        %v1104 = vld [vmem:[%s1094 + $0x24] sm:$0xf]
        %v1105 = vld [vmem:[%s1094 + $0x28] sm:$0xf]
        %v1106 = vld [vmem:[%s1094 + $0x2c] sm:$0xf]
        %v1107 = vld [vmem:[%s1094 + $0x30] sm:$0xf]
        %v1108 = vld [vmem:[%s1094 + $0x34] sm:$0xf]
        %v1109 = vld [vmem:[%s1094 + $0x38] sm:$0xf]
        %v1110 = vld [vmem:[%s1094 + $0x3c] sm:$0xf]
        %v1112 = vunpack.c.l.b16 %v1093
        %v1113 = vpack.c.b16 %v994, %v1112
        %v1114 = vrot.slane %v1113, 1
        %v1132 = vunpack.c.l.b16 %v1095
        %v1133 = vunpack.c.l.b16 %v1096
        %v1134 = vunpack.c.l.b16 %v1097
        %v1135 = vunpack.c.l.b16 %v1098
        %v1136 = vunpack.c.l.b16 %v1099
        %v1137 = vunpack.c.l.b16 %v1100
        %v1138 = vunpack.c.l.b16 %v1101
        %v1139 = vunpack.c.l.b16 %v1102
        %v1140 = vunpack.c.l.b16 %v1103
        %v1141 = vunpack.c.l.b16 %v1104
        %v1142 = vunpack.c.l.b16 %v1105
        %v1143 = vunpack.c.l.b16 %v1106
        %v1144 = vunpack.c.l.b16 %v1107
        %v1145 = vunpack.c.l.b16 %v1108
        %v1146 = vunpack.c.l.b16 %v1109
        %v1147 = vunpack.c.l.b16 %v1110
        %v1148 = vpack.c.b16 %v1133, %v1132
        %v1149 = vpack.c.b16 %v1135, %v1134
        %v1150 = vpack.c.b16 %v1137, %v1136
        %v1151 = vpack.c.b16 %v1139, %v1138
        %v1152 = vpack.c.b16 %v1141, %v1140
        %v1153 = vpack.c.b16 %v1143, %v1142
        %v1154 = vpack.c.b16 %v1145, %v1144
        %v1155 = vpack.c.b16 %v1147, %v1146
        %1164 = vmatprep.subr.bf16.mxu0 0
        %1165 = vmatpush1.bf16.msra.mxu0 %v1148
        %1166 = vmatprep.subr.bf16.mxu0 0
        %1167 = vmatpush1.bf16.msra.mxu0 %v1149
        %1168 = vmatprep.subr.bf16.mxu0 0
        %1169 = vmatpush1.bf16.msra.mxu0 %v1150
        %1170 = vmatprep.subr.bf16.mxu0 0
        %1171 = vmatpush1.bf16.msra.mxu0 %v1151
        %1172 = vmatprep.subr.bf16.mxu0 0
        %1173 = vmatpush1.bf16.msra.mxu0 %v1152
        %1174 = vmatprep.subr.bf16.mxu0 0
        %1175 = vmatpush1.bf16.msra.mxu0 %v1153
        %1176 = vmatprep.subr.bf16.mxu0 0
        %1177 = vmatpush1.bf16.msra.mxu0 %v1154
        %1178 = vmatprep.subr.bf16.mxu0 0
        %1179 = vmatpush1.bf16.msra.mxu0 %v1155
        %1180 = vmatprep.subr.bf16.mxu0 0
        %1181 = vmatpush1.bf16.msra.mxu0 0
        %1182 = vmatprep.subr.bf16.mxu0 0
        %1183 = vmatpush1.bf16.msra.mxu0 0
        %1184 = vmatprep.subr.bf16.mxu0 0
        %1185 = vmatpush1.bf16.msra.mxu0 0
        %1186 = vmatprep.subr.bf16.mxu0 0
        %1187 = vmatpush1.bf16.msra.mxu0 0
        %1188 = vmatprep.subr.bf16.mxu0 0
        %1189 = vmatpush1.bf16.msra.mxu0 0
        %1190 = vmatprep.subr.bf16.mxu0 0
        %1191 = vmatpush1.bf16.msra.mxu0 0
        %1192 = vmatprep.subr.bf16.mxu0 0
        %1193 = vmatpush1.bf16.msra.mxu0 0
        %1194 = vmatprep.subr.bf16.mxu0 0
        %1195 = vmatpush1.bf16.msra.mxu0 0
        %1196 = vmatprep.mubr.bf16.mxu0 0
        %1197 = vmatmul.mubr.bf16.gmra.mrb[0].mxu0 %v1114
        %v1198 = vpop.f32.mrb[0].mxu0
        %v1199 = vadd.f32 0.0, %v1198
        %v1200 = vpop.f32.mrb[0].mxu0
        %v1201 = vpop.f32.mrb[0].mxu0
        %v1202 = vpop.f32.mrb[0].mxu0
        %1203 = vdwg.mxu0
        %v1204 = vadd.f32 %v1092, %v1199
        %v1205 = vld [vmem:[%s2] sm:$0x1]
        %v1207 = vlaneseq
        %v1208 = vshrl.u32 %v1207, 7
        %v1209 = vsub.s32 0, %v1208
        %v1210 = vrot.slane %v1205, %v1209
        %v1212 = vadd.f32 %v1204, %v1210
        %v1213 = vmax.f32 %v1212, 0.0
        %v1214 = vpack.c.bf16 %v1213, %v1213
        %s1215 = smul.addr %s173, 4
        %s1216 = scalar_lea.vmem %s170, %s1215
        %1217 = vst [vmem:[%s1216] sm:$0xf] %v1214
      $region37: #{vgg16_forward.27} parent=31 // loop_footer
        %s177 = sadd.s32 1, %s173
      $region38: #{vgg16_forward.27} parent=31 // loop_footer_branch
        %172 = sbr.rel target = $region34
      $region39: #{vgg16_forward.27} parent=31 // loop_exit
        _
      %p1218 = scmp.lt.s32.totalorder %s14, 1
      %s1219 = scalar_select %p1218, %s14, 1
      %s1220 = smul.addr %s1219, 8
      %s1221 = smul.addr %s1220, 4
      %s1222 = scalar_lea.vmem %s3, %s1221
      // Predicated region
      $region40: #{vgg16_forward.27} parent=31 // pred_check
        %p1223 = pneg %p100
      $region41: #{vgg16_forward.27} parent=31 // pred_check_branch
        %1225 = sbr.rel (%p1223) target = $region43
      $region42: #{vgg16_forward.27} parent=31 // pred_region
        _
      $region43: #{vgg16_forward.27} parent=31 // pred_fallthru
        _
    $region32: #{vgg16_forward.27} parent=5 // pred_fallthru
      _
    %p1226 = scmp.le.s32.totalorder 2, %s9
    // Predicated region
    $region44: #{vgg16_forward.27} parent=5 // pred_check
      %p1227 = pneg %p1226
    $region45: #{vgg16_forward.27} parent=5 // pred_check_branch
      %1229 = sbr.rel (%p1227) target = $region47
    $region46: #{vgg16_forward.27} parent=5 // pred_region
      %s1230 = ssub.s32 %s9, 2
      // Predicated region
      $region48: #{vgg16_forward.27} parent=46 // pred_check
        %p1231 = pneg %p106
      $region49: #{vgg16_forward.27} parent=46 // pred_check_branch
        %1233 = sbr.rel (%p1231) target = $region51
      $region50: #{vgg16_forward.27} parent=46 // pred_region
        %p1234 = scmp.lt.s32.totalorder %s15, 1
        %s1235 = scalar_select %p1234, %s15, 1
        %s1236 = smul.addr %s1235, 8
        %s1237 = smul.addr %s1236, 4
        %s1238 = scalar_lea.vmem %s3, %s1237
      $region51: #{vgg16_forward.27} parent=46 // pred_fallthru
        _
    $region47: #{vgg16_forward.27} parent=5 // pred_fallthru
      _
  $region6: #{vgg16_forward.27} parent=0 // loop_footer
    %s13 = sadd.s32 1, %s9
  $region7: #{vgg16_forward.27} parent=0 // loop_footer_branch
    %8 = sbr.rel target = $region3
  $region8: #{vgg16_forward.27} parent=0 // loop_exit
    _

// kernel: vgg16_forward.34
$region0: #{vgg16_forward.34}
  #allocation0 [shape = 'u32[]', space=smem, size = 0x4, offset = 0x4, fixed_abs, tag = 'smem constant byte address 0x4 - core index']
  #allocation1 [shape = 'u32[144,128]{1,0:T(1,128)}', space=vmem, size = 0x12000, scoped, tag = 'internal scratch']
  %s0 = inlined_call_operand.vmem [shape: bf16[2,4,2,256], index: 0, kind: input, shape index: {}]
  %s1 = inlined_call_operand.vmem [shape: bf16[2,2,2,128], index: 1, kind: output, shape index: {}]
  %s2 = sld [smem:[#allocation0]]
  $region37: #{vgg16_forward.34} parent=0
    _
  %s4 = ssub.s32 1, %s2
  %s5 = scalar_select 0, %s4, %s2
  loop: start=0, step=1, limit=4
  $region2: #{vgg16_forward.34} parent=0 // loop_pre_header
    _
  $region3: #{vgg16_forward.34} parent=0 // loop_header
    %s7 = sphi 0, %s11
    %p8 = scmp.ge.s32.totalorder %s7, 4
    %s14 = sphi 0, %s26
    %s15 = sphi 0, %s22
    %s16 = sphi 0, %s14
    %s17 = sphi 0, %s15
    %s18 = sphi 0, %s16
    %s19 = sphi 0, %s17
    %s31 = sphi 0, %s33
    %s34 = sphi 0, %s31
    %s35 = sphi 0, %s34
    %s51 = sphi 0, %s35
    %s59 = sphi 0, %s61
    %s62 = sphi 0, %s59
    %s63 = sphi 0, %s62
    %s79 = sphi 0, %s63
  $region4: #{vgg16_forward.34} parent=0 // loop_header_branch
    %10 = sbr.rel (%p8) target = $region8
  $region5: #{vgg16_forward.34} parent=0 // loop_body
    %s12 = ssub.s32 %s7, 1
    %s13 = ssub.s32 %s7, 2
    %s20 = sadd.s32 1, %s15
    %p21 = scmp.ge.s32.totalorder %s20, 1
    %s22 = scalar_select %p21, 0, %s20
    %s23 = sadd.s32 1, %s14
    %s24 = scalar_select %p21, %s23, %s14
    %p25 = scmp.ge.s32.totalorder %s24, 2
    %s26 = scalar_select %p25, 0, %s24
    %s27 = ssub.s32 %s14, %s26
    %s28 = ssub.s32 %s15, %s22
    %s29 = sor.u32 %s27, %s28
    %p30 = scmp.eq.s32.totalorder %s29, 0
    %s32 = sadd.s32 %s31, 1
    %s33 = scalar_select %p30, %s31, %s32
    %p36 = pneg %p30
    %p37 = scmp.eq.s32.totalorder %s7, 1
    %p38 = por %p36, %p37
    %p39 = scmp.ne.s32.totalorder %s31, %s34
    %p40 = scmp.eq.s32.totalorder %s7, 0
    %p41 = por %p39, %p40
    %p42 = scmp.ne.s32.totalorder %s31, %s34
    %p43 = scmp.eq.s32.totalorder %s12, 1
    %p44 = por %p42, %p43
    %p45 = scmp.ne.s32.totalorder %s34, %s35
    %p46 = scmp.eq.s32.totalorder %s12, 0
    %p47 = por %p45, %p46
    %p48 = scmp.ne.s32.totalorder %s34, %s35
    %p49 = scmp.eq.s32.totalorder %s13, 1
    %p50 = por %p48, %p49
    %p52 = scmp.ne.s32.totalorder %s35, %s51
    %p53 = scmp.eq.s32.totalorder %s13, 0
    %p54 = por %p52, %p53
    %s55 = ssub.s32 %s14, %s26
    %s56 = ssub.s32 %s15, %s22
    %s57 = sor.u32 %s55, %s56
    %p58 = scmp.eq.s32.totalorder %s57, 0
    %s60 = sadd.s32 %s59, 1
    %s61 = scalar_select %p58, %s59, %s60
    %p64 = pneg %p58
    %p65 = scmp.eq.s32.totalorder %s7, 1
    %p66 = por %p64, %p65
    %p67 = scmp.ne.s32.totalorder %s59, %s62
    %p68 = scmp.eq.s32.totalorder %s7, 0
    %p69 = por %p67, %p68
    %p70 = scmp.ne.s32.totalorder %s59, %s62
    %p71 = scmp.eq.s32.totalorder %s12, 1
    %p72 = por %p70, %p71
    %p73 = scmp.ne.s32.totalorder %s62, %s63
    %p74 = scmp.eq.s32.totalorder %s12, 0
    %p75 = por %p73, %p74
    %p76 = scmp.ne.s32.totalorder %s62, %s63
    %p77 = scmp.eq.s32.totalorder %s13, 1
    %p78 = por %p76, %p77
    %p80 = scmp.ne.s32.totalorder %s63, %s79
    %p81 = scmp.eq.s32.totalorder %s13, 0
    %p82 = por %p80, %p81
    %p83 = scmp.le.s32.totalorder 1, %s7
    %p84 = scmp.lt.s32.totalorder %s7, 3
    %p85 = pnand %p83, %p84
    %p86 = pneg %p85
    // Predicated region
    $region9: #{vgg16_forward.34} parent=5 // pred_check
      _
    $region10: #{vgg16_forward.34} parent=5 // pred_check_branch
      %88 = sbr.rel (%p85) target = $region12
    $region11: #{vgg16_forward.34} parent=5 // pred_region
      %s89 = ssub.s32 %s7, 1
    $region12: #{vgg16_forward.34} parent=5 // pred_fallthru
      _
    %p90 = scmp.lt.s32.totalorder %s7, 2
    // Predicated region
    $region13: #{vgg16_forward.34} parent=5 // pred_check
      %p91 = pneg %p90
    $region14: #{vgg16_forward.34} parent=5 // pred_check_branch
      %93 = sbr.rel (%p91) target = $region16
    $region15: #{vgg16_forward.34} parent=5 // pred_region
      // Predicated region
      $region17: #{vgg16_forward.34} parent=15 // pred_check
        %p94 = pneg %p41
      $region18: #{vgg16_forward.34} parent=15 // pred_check_branch
        %96 = sbr.rel (%p94) target = $region20
      $region19: #{vgg16_forward.34} parent=15 // pred_region
        %s97 = smul.u32 4, %s15
        %p98 = scmp.lt.s32.totalorder %s14, 1
        %s99 = scalar_select %p98, %s14, 1
        %p100 = scmp.lt.s32.totalorder %s97, 3
        %s101 = scalar_select %p100, %s97, 3
        %s102 = smul.addr %s101, 2
        %s103 = smul.addr %s99, 8
        %s104 = sadd.s32 %s102, %s103
        %s105 = scalar_lea.vmem %s0, %s104
        %s106 = smul.u32 4, %s15
      $region20: #{vgg16_forward.34} parent=15 // pred_fallthru
        _
    $region16: #{vgg16_forward.34} parent=5 // pred_fallthru
      _
    %p107 = scmp.le.s32.totalorder 1, %s7
    %p108 = scmp.lt.s32.totalorder %s7, 3
    %p109 = pnand %p107, %p108
    %p110 = pneg %p109
    // Predicated region
    $region21: #{vgg16_forward.34} parent=5 // pred_check
      _
    $region22: #{vgg16_forward.34} parent=5 // pred_check_branch
      %112 = sbr.rel (%p109) target = $region24
    $region23: #{vgg16_forward.34} parent=5 // pred_region
      %s113 = ssub.s32 %s7, 1
      %s114 = smul.u32 4, %s17
      %p115 = scmp.lt.s32.totalorder %s16, 1
      %s116 = scalar_select %p115, %s16, 1
      %p117 = scmp.lt.s32.totalorder %s114, 3
      %s118 = scalar_select %p117, %s114, 3
      %s119 = smul.addr %s118, 2
      %s120 = smul.addr %s116, 8
      %s121 = sadd.s32 %s119, %s120
      %s122 = scalar_lea.vmem %s0, %s121
      %p123 = pneg %p47
      %p124 = pneg %p44
      %p125 = pneg %p75
      %p126 = pneg %p72
      %s127 = smul.u32 2, %s17
      %p128 = scmp.lt.s32.totalorder %s16, 1
      %s129 = scalar_select %p128, %s16, 1
      %p130 = scmp.lt.s32.totalorder %s127, 1
      %s131 = scalar_select %p130, %s127, 1
      %s132 = smul.addr %s129, 2
      %s133 = sadd.s32 %s131, %s132
      %s134 = scalar_lea.vmem %s1, %s133
      %s135 = smul.u32 4, %s17
      %p136 = scmp.lt.s32.totalorder %s16, 1
      %s137 = scalar_select %p136, %s16, 1
      %p138 = scmp.lt.s32.totalorder %s135, 3
      %s139 = scalar_select %p138, %s135, 3
      %s140 = smul.addr %s139, 2
      %s141 = smul.addr %s137, 8
      %s142 = sadd.s32 %s140, %s141
      %s143 = scalar_lea.vmem %s0, %s142
      %s144 = smul.u32 4, %s17
      %s145 = smul.u32 2, %s17
      %p146 = scmp.lt.s32.totalorder %s16, 1
      %s147 = scalar_select %p146, %s16, 1
      %p148 = scmp.lt.s32.totalorder %s145, 1
      %s149 = scalar_select %p148, %s145, 1
      %s150 = smul.addr %s147, 2
      %s151 = sadd.s32 %s149, %s150
      %s152 = scalar_lea.vmem %s1, %s151
      %s153 = smul.u32 2, %s17
      %v154 = vld [vmem:[%s143] sm:$0x3]
      %v155 = vld [vmem:[%s143 + $0x2] sm:$0x3]
      %v156 = vld [vmem:[%s143 + $0x4] sm:$0x3]
      %v157 = vld [vmem:[%s143 + $0x6] sm:$0x3]
      %v162 = vrot.slane %v154, 1
      %v163 = vrot.slane %v155, 1
      %v164 = vrot.slane %v156, 1
      %v165 = vrot.slane %v157, 1
      %v170 = vmax.bf16 %v154, %v162
      %v171 = vmax.bf16 %v155, %v163
      %v172 = vmax.bf16 %v156, %v164
      %v173 = vmax.bf16 %v157, %v165
      %v174 = vmax.bf16 %v170, %v171
      %v175 = vmax.bf16 %v172, %v173
      %176 = vst [vmem:[%s152] sm:$0x1] %v174
      %177 = vst [vmem:[%s152 + $0x1] sm:$0x1] %v175
      %s178 = smul.u32 2, %s17
      %p179 = scmp.lt.s32.totalorder %s16, 1
      %s180 = scalar_select %p179, %s16, 1
      %p181 = scmp.lt.s32.totalorder %s178, 1
      %s182 = scalar_select %p181, %s178, 1
      %s183 = smul.addr %s180, 2
      %s184 = sadd.s32 %s182, %s183
      %s185 = scalar_lea.vmem %s1, %s184
      // Predicated region
      $region25: #{vgg16_forward.34} parent=23 // pred_check
        %p186 = pneg %p72
      $region26: #{vgg16_forward.34} parent=23 // pred_check_branch
        %188 = sbr.rel (%p186) target = $region28
      $region27: #{vgg16_forward.34} parent=23 // pred_region
        %s189 = smul.u32 2, %s17
      $region28: #{vgg16_forward.34} parent=23 // pred_fallthru
        _
    $region24: #{vgg16_forward.34} parent=5 // pred_fallthru
      _
    %p190 = scmp.le.s32.totalorder 2, %s7
    // Predicated region
    $region29: #{vgg16_forward.34} parent=5 // pred_check
      %p191 = pneg %p190
    $region30: #{vgg16_forward.34} parent=5 // pred_check_branch
      %193 = sbr.rel (%p191) target = $region32
    $region31: #{vgg16_forward.34} parent=5 // pred_region
      %s194 = ssub.s32 %s7, 2
      // Predicated region
      $region33: #{vgg16_forward.34} parent=31 // pred_check
        %p195 = pneg %p78
      $region34: #{vgg16_forward.34} parent=31 // pred_check_branch
        %197 = sbr.rel (%p195) target = $region36
      $region35: #{vgg16_forward.34} parent=31 // pred_region
        %s198 = smul.u32 2, %s19
        %p199 = scmp.lt.s32.totalorder %s18, 1
        %s200 = scalar_select %p199, %s18, 1
        %p201 = scmp.lt.s32.totalorder %s198, 1
        %s202 = scalar_select %p201, %s198, 1
        %s203 = smul.addr %s200, 2
        %s204 = sadd.s32 %s202, %s203
        %s205 = scalar_lea.vmem %s1, %s204
      $region36: #{vgg16_forward.34} parent=31 // pred_fallthru
        _
    $region32: #{vgg16_forward.34} parent=5 // pred_fallthru
      _
  $region6: #{vgg16_forward.34} parent=0 // loop_footer
    %s11 = sadd.s32 1, %s7
  $region7: #{vgg16_forward.34} parent=0 // loop_footer_branch
    %6 = sbr.rel target = $region3
  $region8: #{vgg16_forward.34} parent=0 // loop_exit
    _

// kernel: vgg16_forward.38
$region0: #{vgg16_forward.38}
  #allocation0 [shape = 'u32[]', space=smem, size = 0x4, offset = 0x4, fixed_abs, tag = 'smem constant byte address 0x4 - core index']
  #allocation1 [shape = 'u32[144,128]{1,0:T(1,128)}', space=vmem, size = 0x12000, scoped, tag = 'internal scratch']
  %s0 = inlined_call_operand.vmem [shape: bf16[2,2,1,256], index: 0, kind: input, shape index: {}]
  %s1 = inlined_call_operand.vmem [shape: bf16[2,1,1,128], index: 1, kind: output, shape index: {}]
  %s2 = sld [smem:[#allocation0]]
  $region37: #{vgg16_forward.38} parent=0
    _
  %s4 = ssub.s32 1, %s2
  %s5 = scalar_select 0, %s4, %s2
  loop: start=0, step=1, limit=4
  $region2: #{vgg16_forward.38} parent=0 // loop_pre_header
    _
  $region3: #{vgg16_forward.38} parent=0 // loop_header
    %s7 = sphi 0, %s11
    %p8 = scmp.ge.s32.totalorder %s7, 4
    %s14 = sphi 0, %s26
    %s15 = sphi 0, %s22
    %s16 = sphi 0, %s14
    %s17 = sphi 0, %s15
    %s18 = sphi 0, %s16
    %s19 = sphi 0, %s17
    %s31 = sphi 0, %s33
    %s34 = sphi 0, %s31
    %s35 = sphi 0, %s34
    %s51 = sphi 0, %s35
    %s59 = sphi 0, %s61
    %s62 = sphi 0, %s59
    %s63 = sphi 0, %s62
    %s79 = sphi 0, %s63
  $region4: #{vgg16_forward.38} parent=0 // loop_header_branch
    %10 = sbr.rel (%p8) target = $region8
  $region5: #{vgg16_forward.38} parent=0 // loop_body
    %s12 = ssub.s32 %s7, 1
    %s13 = ssub.s32 %s7, 2
    %s20 = sadd.s32 1, %s15
    %p21 = scmp.ge.s32.totalorder %s20, 1
    %s22 = scalar_select %p21, 0, %s20
    %s23 = sadd.s32 1, %s14
    %s24 = scalar_select %p21, %s23, %s14
    %p25 = scmp.ge.s32.totalorder %s24, 2
    %s26 = scalar_select %p25, 0, %s24
    %s27 = ssub.s32 %s14, %s26
    %s28 = ssub.s32 %s15, %s22
    %s29 = sor.u32 %s27, %s28
    %p30 = scmp.eq.s32.totalorder %s29, 0
    %s32 = sadd.s32 %s31, 1
    %s33 = scalar_select %p30, %s31, %s32
    %p36 = pneg %p30
    %p37 = scmp.eq.s32.totalorder %s7, 1
    %p38 = por %p36, %p37
    %p39 = scmp.ne.s32.totalorder %s31, %s34
    %p40 = scmp.eq.s32.totalorder %s7, 0
    %p41 = por %p39, %p40
    %p42 = scmp.ne.s32.totalorder %s31, %s34
    %p43 = scmp.eq.s32.totalorder %s12, 1
    %p44 = por %p42, %p43
    %p45 = scmp.ne.s32.totalorder %s34, %s35
    %p46 = scmp.eq.s32.totalorder %s12, 0
    %p47 = por %p45, %p46
    %p48 = scmp.ne.s32.totalorder %s34, %s35
    %p49 = scmp.eq.s32.totalorder %s13, 1
    %p50 = por %p48, %p49
    %p52 = scmp.ne.s32.totalorder %s35, %s51
    %p53 = scmp.eq.s32.totalorder %s13, 0
    %p54 = por %p52, %p53
    %s55 = ssub.s32 %s14, %s26
    %s56 = ssub.s32 %s15, %s22
    %s57 = sor.u32 %s55, %s56
    %p58 = scmp.eq.s32.totalorder %s57, 0
    %s60 = sadd.s32 %s59, 1
    %s61 = scalar_select %p58, %s59, %s60
    %p64 = pneg %p58
    %p65 = scmp.eq.s32.totalorder %s7, 1
    %p66 = por %p64, %p65
    %p67 = scmp.ne.s32.totalorder %s59, %s62
    %p68 = scmp.eq.s32.totalorder %s7, 0
    %p69 = por %p67, %p68
    %p70 = scmp.ne.s32.totalorder %s59, %s62
    %p71 = scmp.eq.s32.totalorder %s12, 1
    %p72 = por %p70, %p71
    %p73 = scmp.ne.s32.totalorder %s62, %s63
    %p74 = scmp.eq.s32.totalorder %s12, 0
    %p75 = por %p73, %p74
    %p76 = scmp.ne.s32.totalorder %s62, %s63
    %p77 = scmp.eq.s32.totalorder %s13, 1
    %p78 = por %p76, %p77
    %p80 = scmp.ne.s32.totalorder %s63, %s79
    %p81 = scmp.eq.s32.totalorder %s13, 0
    %p82 = por %p80, %p81
    %p83 = scmp.le.s32.totalorder 1, %s7
    %p84 = scmp.lt.s32.totalorder %s7, 3
    %p85 = pnand %p83, %p84
    %p86 = pneg %p85
    // Predicated region
    $region9: #{vgg16_forward.38} parent=5 // pred_check
      _
    $region10: #{vgg16_forward.38} parent=5 // pred_check_branch
      %88 = sbr.rel (%p85) target = $region12
    $region11: #{vgg16_forward.38} parent=5 // pred_region
      %s89 = ssub.s32 %s7, 1
    $region12: #{vgg16_forward.38} parent=5 // pred_fallthru
      _
    %p90 = scmp.lt.s32.totalorder %s7, 2
    // Predicated region
    $region13: #{vgg16_forward.38} parent=5 // pred_check
      %p91 = pneg %p90
    $region14: #{vgg16_forward.38} parent=5 // pred_check_branch
      %93 = sbr.rel (%p91) target = $region16
    $region15: #{vgg16_forward.38} parent=5 // pred_region
      // Predicated region
      $region17: #{vgg16_forward.38} parent=15 // pred_check
        %p94 = pneg %p41
      $region18: #{vgg16_forward.38} parent=15 // pred_check_branch
        %96 = sbr.rel (%p94) target = $region20
      $region19: #{vgg16_forward.38} parent=15 // pred_region
        %s97 = smul.u32 2, %s15
        %p98 = scmp.lt.s32.totalorder %s14, 1
        %s99 = scalar_select %p98, %s14, 1
        %p100 = scmp.lt.s32.totalorder %s97, 1
        %s101 = scalar_select %p100, %s97, 1
        %s102 = smul.addr %s101, 2
        %s103 = smul.addr %s99, 4
        %s104 = sadd.s32 %s102, %s103
        %s105 = scalar_lea.vmem %s0, %s104
        %s106 = smul.u32 2, %s15
      $region20: #{vgg16_forward.38} parent=15 // pred_fallthru
        _
    $region16: #{vgg16_forward.38} parent=5 // pred_fallthru
      _
    %p107 = scmp.le.s32.totalorder 1, %s7
    %p108 = scmp.lt.s32.totalorder %s7, 3
    %p109 = pnand %p107, %p108
    %p110 = pneg %p109
    // Predicated region
    $region21: #{vgg16_forward.38} parent=5 // pred_check
      _
    $region22: #{vgg16_forward.38} parent=5 // pred_check_branch
      %112 = sbr.rel (%p109) target = $region24
    $region23: #{vgg16_forward.38} parent=5 // pred_region
      %s113 = ssub.s32 %s7, 1
      %s114 = smul.u32 2, %s17
      %p115 = scmp.lt.s32.totalorder %s16, 1
      %s116 = scalar_select %p115, %s16, 1
      %p117 = scmp.lt.s32.totalorder %s114, 1
      %s118 = scalar_select %p117, %s114, 1
      %s119 = smul.addr %s118, 2
      %s120 = smul.addr %s116, 4
      %s121 = sadd.s32 %s119, %s120
      %s122 = scalar_lea.vmem %s0, %s121
      %p123 = pneg %p47
      %p124 = pneg %p44
      %p125 = pneg %p75
      %p126 = pneg %p72
      %p127 = scmp.lt.s32.totalorder %s16, 1
      %s128 = scalar_select %p127, %s16, 1
      %p129 = scmp.lt.s32.totalorder %s17, 0
      %s130 = scalar_select %p129, %s17, 0
      %s131 = sadd.s32 %s130, %s128
      %s132 = scalar_lea.vmem %s1, %s131
      %s133 = smul.u32 2, %s17
      %p134 = scmp.lt.s32.totalorder %s16, 1
      %s135 = scalar_select %p134, %s16, 1
      %p136 = scmp.lt.s32.totalorder %s133, 1
      %s137 = scalar_select %p136, %s133, 1
      %s138 = smul.addr %s137, 2
      %s139 = smul.addr %s135, 4
      %s140 = sadd.s32 %s138, %s139
      %s141 = scalar_lea.vmem %s0, %s140
      %s142 = smul.u32 2, %s17
      %p143 = scmp.lt.s32.totalorder %s16, 1
      %s144 = scalar_select %p143, %s16, 1
      %p145 = scmp.lt.s32.totalorder %s17, 0
      %s146 = scalar_select %p145, %s17, 0
      %s147 = sadd.s32 %s146, %s144
      %s148 = scalar_lea.vmem %s1, %s147
      %v149 = vld [vmem:[%s141] sm:$0x3]
      %v150 = vld [vmem:[%s141 + $0x2] sm:$0x3]
      %v153 = vrot.slane %v149, 1
      %v154 = vrot.slane %v150, 1
      %v157 = vmax.bf16 %v149, %v153
      %v158 = vmax.bf16 %v150, %v154
      %v159 = vmax.bf16 %v157, %v158
      %vm160 = vcmask 1040384
      %vm161 = vsmask.f32 256
      %vm162 = vmand %vm160, %vm161
      %v163 = vld [vmem:[%s148] sm:$0x1]
      %v164 = vsel %vm162, %v159, %v163
      %165 = vst [vmem:[%s148] sm:$0x1] %v164
      %p166 = scmp.lt.s32.totalorder %s16, 1
      %s167 = scalar_select %p166, %s16, 1
      %p168 = scmp.lt.s32.totalorder %s17, 0
      %s169 = scalar_select %p168, %s17, 0
      %s170 = sadd.s32 %s169, %s167
      %s171 = scalar_lea.vmem %s1, %s170
      // Predicated region
      $region25: #{vgg16_forward.38} parent=23 // pred_check
        %p172 = pneg %p72
      $region26: #{vgg16_forward.38} parent=23 // pred_check_branch
        %174 = sbr.rel (%p172) target = $region28
      $region27: #{vgg16_forward.38} parent=23 // pred_region
        _
      $region28: #{vgg16_forward.38} parent=23 // pred_fallthru
        _
    $region24: #{vgg16_forward.38} parent=5 // pred_fallthru
      _
    %p175 = scmp.le.s32.totalorder 2, %s7
    // Predicated region
    $region29: #{vgg16_forward.38} parent=5 // pred_check
      %p176 = pneg %p175
    $region30: #{vgg16_forward.38} parent=5 // pred_check_branch
      %178 = sbr.rel (%p176) target = $region32
    $region31: #{vgg16_forward.38} parent=5 // pred_region
      %s179 = ssub.s32 %s7, 2
      // Predicated region
      $region33: #{vgg16_forward.38} parent=31 // pred_check
        %p180 = pneg %p78
      $region34: #{vgg16_forward.38} parent=31 // pred_check_branch
        %182 = sbr.rel (%p180) target = $region36
      $region35: #{vgg16_forward.38} parent=31 // pred_region
        %p183 = scmp.lt.s32.totalorder %s18, 1
        %s184 = scalar_select %p183, %s18, 1
        %p185 = scmp.lt.s32.totalorder %s19, 0
        %s186 = scalar_select %p185, %s19, 0
        %s187 = sadd.s32 %s186, %s184
        %s188 = scalar_lea.vmem %s1, %s187
      $region36: #{vgg16_forward.38} parent=31 // pred_fallthru
        _
    $region32: #{vgg16_forward.38} parent=5 // pred_fallthru
      _
  $region6: #{vgg16_forward.38} parent=0 // loop_footer
    %s11 = sadd.s32 1, %s7
  $region7: #{vgg16_forward.38} parent=0 // loop_footer_branch
    %6 = sbr.rel target = $region3
  $region8: #{vgg16_forward.38} parent=0 // loop_exit
    _

// kernel: vgg16_forward.31
$region0: #{vgg16_forward.31}
  #allocation0 [shape = 'u32[]', space=smem, size = 0x4, offset = 0x4, fixed_abs, tag = 'smem constant byte address 0x4 - core index']
  #allocation1 [shape = 'u32[144,128]{1,0:T(1,128)}', space=vmem, size = 0x12000, scoped, tag = 'internal scratch']
  %s0 = inlined_call_operand.vmem [shape: bf16[2,6,6,128], index: 0, kind: input, shape index: {}]
  %s1 = inlined_call_operand.vmem [shape: bf16[3,3,128,128], index: 1, kind: input, shape index: {}]
  %s2 = inlined_call_operand.vmem [shape: f32[1,128], index: 2, kind: input, shape index: {}]
  %s3 = inlined_call_operand.vmem [shape: bf16[2,4,4,128], index: 3, kind: output, shape index: {}]
  %s4 = sld [smem:[#allocation0]]
  $region52: #{vgg16_forward.31} parent=0
    _
  %s6 = ssub.s32 1, %s4
  %s7 = scalar_select 0, %s6, %s4
  loop: start=0, step=1, limit=4
  $region2: #{vgg16_forward.31} parent=0 // loop_pre_header
    _
  $region3: #{vgg16_forward.31} parent=0 // loop_header
    %s9 = sphi 0, %s13
    %p10 = scmp.ge.s32.totalorder %s9, 4
    %s19 = sphi 0, %s21
    %s22 = sphi 0, %s19
    %s23 = sphi 0, %s22
    %s39 = sphi 0, %s23
    %s43 = sphi 0, %s43
    %s45 = sphi 0, %s43
    %s46 = sphi 0, %s45
    %s60 = sphi 0, %s46
    %s64 = sphi 0, %s64
    %s66 = sphi 0, %s64
    %s67 = sphi 0, %s66
    %s81 = sphi 0, %s67
    %s87 = sphi 0, %s89
    %s90 = sphi 0, %s87
    %s91 = sphi 0, %s90
    %s107 = sphi 0, %s91
  $region4: #{vgg16_forward.31} parent=0 // loop_header_branch
    %12 = sbr.rel (%p10) target = $region8
  $region5: #{vgg16_forward.31} parent=0 // loop_body
    %s14 = ssub.s32 %s9, 1
    %s15 = ssub.s32 %s9, 2
    %s16 = sadd.s32 %s9, 1
    %s17 = ssub.s32 %s9, %s16
    %p18 = scmp.eq.s32.totalorder %s17, 0
    %s20 = sadd.s32 %s19, 1
    %s21 = scalar_select %p18, %s19, %s20
    %p24 = pneg %p18
    %p25 = scmp.eq.s32.totalorder %s9, 1
    %p26 = por %p24, %p25
    %p27 = scmp.ne.s32.totalorder %s19, %s22
    %p28 = scmp.eq.s32.totalorder %s9, 0
    %p29 = por %p27, %p28
    %p30 = scmp.ne.s32.totalorder %s19, %s22
    %p31 = scmp.eq.s32.totalorder %s14, 1
    %p32 = por %p30, %p31
    %p33 = scmp.ne.s32.totalorder %s22, %s23
    %p34 = scmp.eq.s32.totalorder %s14, 0
    %p35 = por %p33, %p34
    %p36 = scmp.ne.s32.totalorder %s22, %s23
    %p37 = scmp.eq.s32.totalorder %s15, 1
    %p38 = por %p36, %p37
    %p40 = scmp.ne.s32.totalorder %s23, %s39
    %p41 = scmp.eq.s32.totalorder %s15, 0
    %p42 = por %p40, %p41
    %s44 = sadd.s32 %s43, 1
    %p47 = scmp.eq.s32.totalorder %s9, 1
    %p48 = scmp.ne.s32.totalorder %s43, %s45
    %p49 = scmp.eq.s32.totalorder %s9, 0
    %p50 = por %p48, %p49
    %p51 = scmp.ne.s32.totalorder %s43, %s45
    %p52 = scmp.eq.s32.totalorder %s14, 1
    %p53 = por %p51, %p52
    %p54 = scmp.ne.s32.totalorder %s45, %s46
    %p55 = scmp.eq.s32.totalorder %s14, 0
    %p56 = por %p54, %p55
    %p57 = scmp.ne.s32.totalorder %s45, %s46
    %p58 = scmp.eq.s32.totalorder %s15, 1
    %p59 = por %p57, %p58
    %p61 = scmp.ne.s32.totalorder %s46, %s60
    %p62 = scmp.eq.s32.totalorder %s15, 0
    %p63 = por %p61, %p62
    %s65 = sadd.s32 %s64, 1
    %p68 = scmp.eq.s32.totalorder %s9, 1
    %p69 = scmp.ne.s32.totalorder %s64, %s66
    %p70 = scmp.eq.s32.totalorder %s9, 0
    %p71 = por %p69, %p70
    %p72 = scmp.ne.s32.totalorder %s64, %s66
    %p73 = scmp.eq.s32.totalorder %s14, 1
    %p74 = por %p72, %p73
    %p75 = scmp.ne.s32.totalorder %s66, %s67
    %p76 = scmp.eq.s32.totalorder %s14, 0
    %p77 = por %p75, %p76
    %p78 = scmp.ne.s32.totalorder %s66, %s67
    %p79 = scmp.eq.s32.totalorder %s15, 1
    %p80 = por %p78, %p79
    %p82 = scmp.ne.s32.totalorder %s67, %s81
    %p83 = scmp.eq.s32.totalorder %s15, 0
    %p84 = por %p82, %p83
    %s85 = ssub.s32 %s9, %s16
    %p86 = scmp.eq.s32.totalorder %s85, 0
    %s88 = sadd.s32 %s87, 1
    %s89 = scalar_select %p86, %s87, %s88
    %p92 = pneg %p86
    %p93 = scmp.eq.s32.totalorder %s9, 1
    %p94 = por %p92, %p93
    %p95 = scmp.ne.s32.totalorder %s87, %s90
    %p96 = scmp.eq.s32.totalorder %s9, 0
    %p97 = por %p95, %p96
    %p98 = scmp.ne.s32.totalorder %s87, %s90
    %p99 = scmp.eq.s32.totalorder %s14, 1
    %p100 = por %p98, %p99
    %p101 = scmp.ne.s32.totalorder %s90, %s91
    %p102 = scmp.eq.s32.totalorder %s14, 0
    %p103 = por %p101, %p102
    %p104 = scmp.ne.s32.totalorder %s90, %s91
    %p105 = scmp.eq.s32.totalorder %s15, 1
    %p106 = por %p104, %p105
    %p108 = scmp.ne.s32.totalorder %s91, %s107
    %p109 = scmp.eq.s32.totalorder %s15, 0
    %p110 = por %p108, %p109
    %p111 = scmp.le.s32.totalorder 1, %s9
    %p112 = scmp.lt.s32.totalorder %s9, 3
    %p113 = pnand %p111, %p112
    %p114 = pneg %p113
    // Predicated region
    $region9: #{vgg16_forward.31} parent=5 // pred_check
      _
    $region10: #{vgg16_forward.31} parent=5 // pred_check_branch
      %116 = sbr.rel (%p113) target = $region12
    $region11: #{vgg16_forward.31} parent=5 // pred_region
      %s117 = ssub.s32 %s9, 1
      // Predicated region
      $region13: #{vgg16_forward.31} parent=11 // pred_check
        %p118 = pneg %p56
      $region14: #{vgg16_forward.31} parent=11 // pred_check_branch
        %120 = sbr.rel (%p118) target = $region16
      $region15: #{vgg16_forward.31} parent=11 // pred_region
        _
      $region16: #{vgg16_forward.31} parent=11 // pred_fallthru
        _
      // Predicated region
      $region17: #{vgg16_forward.31} parent=11 // pred_check
        %p121 = pneg %p77
      $region18: #{vgg16_forward.31} parent=11 // pred_check_branch
        %123 = sbr.rel (%p121) target = $region20
      $region19: #{vgg16_forward.31} parent=11 // pred_region
        _
      $region20: #{vgg16_forward.31} parent=11 // pred_fallthru
        _
    $region12: #{vgg16_forward.31} parent=5 // pred_fallthru
      _
    %p124 = scmp.lt.s32.totalorder %s9, 2
    // Predicated region
    $region21: #{vgg16_forward.31} parent=5 // pred_check
      %p125 = pneg %p124
    $region22: #{vgg16_forward.31} parent=5 // pred_check_branch
      %127 = sbr.rel (%p125) target = $region24
    $region23: #{vgg16_forward.31} parent=5 // pred_region
      // Predicated region
      $region25: #{vgg16_forward.31} parent=23 // pred_check
        %p128 = pneg %p29
      $region26: #{vgg16_forward.31} parent=23 // pred_check_branch
        %130 = sbr.rel (%p128) target = $region28
      $region27: #{vgg16_forward.31} parent=23 // pred_region
        %p131 = scmp.lt.s32.totalorder %s9, 1
        %s132 = scalar_select %p131, %s9, 1
        %s133 = smul.addr %s132, 6
        %s134 = smul.addr %s133, 4
        %s135 = scalar_lea.vmem %s0, %s134
      $region28: #{vgg16_forward.31} parent=23 // pred_fallthru
        _
    $region24: #{vgg16_forward.31} parent=5 // pred_fallthru
      _
    %p136 = scmp.le.s32.totalorder 1, %s9
    %p137 = scmp.lt.s32.totalorder %s9, 3
    %p138 = pnand %p136, %p137
    %p139 = pneg %p138
    // Predicated region
    $region29: #{vgg16_forward.31} parent=5 // pred_check
      _
    $region30: #{vgg16_forward.31} parent=5 // pred_check_branch
      %141 = sbr.rel (%p138) target = $region32
    $region31: #{vgg16_forward.31} parent=5 // pred_region
      %s142 = ssub.s32 %s9, 1
      %p143 = scmp.lt.s32.totalorder %s14, 1
      %s144 = scalar_select %p143, %s14, 1
      %s145 = smul.addr %s144, 6
      %s146 = smul.addr %s145, 4
      %s147 = scalar_lea.vmem %s0, %s146
      %p148 = pneg %p35
      %p149 = pneg %p32
      %p150 = pneg %p56
      %p151 = pneg %p53
      %p152 = pneg %p77
      %p153 = pneg %p74
      %p154 = pneg %p103
      %p155 = pneg %p100
      %p156 = scmp.lt.s32.totalorder %s14, 1
      %s157 = scalar_select %p156, %s14, 1
      %s158 = smul.addr %s157, 4
      %s159 = smul.addr %s158, 2
      %s160 = scalar_lea.vmem %s3, %s159
      %p161 = scmp.lt.s32.totalorder %s14, 1
      %s162 = scalar_select %p161, %s14, 1
      %s163 = smul.addr %s162, 6
      %s164 = smul.addr %s163, 4
      %s165 = scalar_lea.vmem %s0, %s164
      %p166 = scmp.lt.s32.totalorder %s14, 1
      %s167 = scalar_select %p166, %s14, 1
      %s168 = smul.addr %s167, 4
      %s169 = smul.addr %s168, 2
      %s170 = scalar_lea.vmem %s3, %s169
      loop: start=0, step=1, limit=4
      $region33: #{vgg16_forward.31} parent=31 // loop_pre_header
        _
      $region34: #{vgg16_forward.31} parent=31 // loop_header
        %s173 = sphi 0, %s177
        %p174 = scmp.ge.s32.totalorder %s173, 4
      $region35: #{vgg16_forward.31} parent=31 // loop_header_branch
        %176 = sbr.rel (%p174) target = $region39
      $region36: #{vgg16_forward.31} parent=31 // loop_body
        %s178 = smul.addr %s173, 4
        %s179 = scalar_lea.vmem %s165, %s178
        %v180 = vld [vmem:[%s179] sm:$0x3]
        %v181 = vld [vmem:[%s1] sm:$0xf]
        %v182 = vld [vmem:[%s1 + $0x4] sm:$0xf]
        %v183 = vld [vmem:[%s1 + $0x8] sm:$0xf]
        %v184 = vld [vmem:[%s1 + $0xc] sm:$0xf]
        %v185 = vld [vmem:[%s1 + $0x10] sm:$0xf]
        %v186 = vld [vmem:[%s1 + $0x14] sm:$0xf]
        %v187 = vld [vmem:[%s1 + $0x18] sm:$0xf]
        %v188 = vld [vmem:[%s1 + $0x1c] sm:$0xf]
        %v189 = vld [vmem:[%s1 + $0x20] sm:$0xf]
        %v190 = vld [vmem:[%s1 + $0x24] sm:$0xf]
        %v191 = vld [vmem:[%s1 + $0x28] sm:$0xf]
        %v192 = vld [vmem:[%s1 + $0x2c] sm:$0xf]
        %v193 = vld [vmem:[%s1 + $0x30] sm:$0xf]
        %v194 = vld [vmem:[%s1 + $0x34] sm:$0xf]
        %v195 = vld [vmem:[%s1 + $0x38] sm:$0xf]
        %v196 = vld [vmem:[%s1 + $0x3c] sm:$0xf]
        %v197 = vld [vmem:[%s179] sm:$0x7]
        %s198 = scalar_lea.vmem %s1, 64
        %v199 = vld [vmem:[%s198] sm:$0xf]
        %v200 = vld [vmem:[%s198 + $0x4] sm:$0xf]
        %v201 = vld [vmem:[%s198 + $0x8] sm:$0xf]
        %v202 = vld [vmem:[%s198 + $0xc] sm:$0xf]
        %v203 = vld [vmem:[%s198 + $0x10] sm:$0xf]
        %v204 = vld [vmem:[%s198 + $0x14] sm:$0xf]
        %v205 = vld [vmem:[%s198 + $0x18] sm:$0xf]
        %v206 = vld [vmem:[%s198 + $0x1c] sm:$0xf]
        %v207 = vld [vmem:[%s198 + $0x20] sm:$0xf]
        %v208 = vld [vmem:[%s198 + $0x24] sm:$0xf]
        %v209 = vld [vmem:[%s198 + $0x28] sm:$0xf]
        %v210 = vld [vmem:[%s198 + $0x2c] sm:$0xf]
        %v211 = vld [vmem:[%s198 + $0x30] sm:$0xf]
        %v212 = vld [vmem:[%s198 + $0x34] sm:$0xf]
        %v213 = vld [vmem:[%s198 + $0x38] sm:$0xf]
        %v214 = vld [vmem:[%s198 + $0x3c] sm:$0xf]
        %v216 = vunpack.c.l.b16 %v197
        %v217 = vpack.c.b16 %v216, %v216
        %v219 = vshrl.u32 %v217, 16
        %v221 = vshll.u32 %v217, 16
        %v223 = vrot.slane %v221, 1
        %v224 = vor.u32 %v219, %v223
        %v242 = vunpack.c.l.b16 %v199
        %v243 = vunpack.c.l.b16 %v200
        %v244 = vunpack.c.l.b16 %v201
        %v245 = vunpack.c.l.b16 %v202
        %v246 = vunpack.c.l.b16 %v203
        %v247 = vunpack.c.l.b16 %v204
        %v248 = vunpack.c.l.b16 %v205
        %v249 = vunpack.c.l.b16 %v206
        %v250 = vunpack.c.l.b16 %v207
        %v251 = vunpack.c.l.b16 %v208
        %v252 = vunpack.c.l.b16 %v209
        %v253 = vunpack.c.l.b16 %v210
        %v254 = vunpack.c.l.b16 %v211
        %v255 = vunpack.c.l.b16 %v212
        %v256 = vunpack.c.l.b16 %v213
        %v257 = vunpack.c.l.b16 %v214
        %v258 = vpack.c.b16 %v243, %v242
        %v259 = vpack.c.b16 %v245, %v244
        %v260 = vpack.c.b16 %v247, %v246
        %v261 = vpack.c.b16 %v249, %v248
        %v262 = vpack.c.b16 %v251, %v250
        %v263 = vpack.c.b16 %v253, %v252
        %v264 = vpack.c.b16 %v255, %v254
        %v265 = vpack.c.b16 %v257, %v256
        %274 = vmatprep.subr.bf16.mxu0 0
        %275 = vmatpush1.bf16.msra.mxu0 %v258
        %276 = vmatprep.subr.bf16.mxu0 0
        %277 = vmatpush1.bf16.msra.mxu0 %v259
        %278 = vmatprep.subr.bf16.mxu0 0
        %279 = vmatpush1.bf16.msra.mxu0 %v260
        %280 = vmatprep.subr.bf16.mxu0 0
        %281 = vmatpush1.bf16.msra.mxu0 %v261
        %282 = vmatprep.subr.bf16.mxu0 0
        %283 = vmatpush1.bf16.msra.mxu0 %v262
        %284 = vmatprep.subr.bf16.mxu0 0
        %285 = vmatpush1.bf16.msra.mxu0 %v263
        %286 = vmatprep.subr.bf16.mxu0 0
        %287 = vmatpush1.bf16.msra.mxu0 %v264
        %288 = vmatprep.subr.bf16.mxu0 0
        %289 = vmatpush1.bf16.msra.mxu0 %v265
        %290 = vmatprep.subr.bf16.mxu0 0
        %291 = vmatpush1.bf16.msra.mxu0 0
        %292 = vmatprep.subr.bf16.mxu0 0
        %293 = vmatpush1.bf16.msra.mxu0 0
        %294 = vmatprep.subr.bf16.mxu0 0
        %295 = vmatpush1.bf16.msra.mxu0 0
        %296 = vmatprep.subr.bf16.mxu0 0
        %297 = vmatpush1.bf16.msra.mxu0 0
        %298 = vmatprep.subr.bf16.mxu0 0
        %299 = vmatpush1.bf16.msra.mxu0 0
        %300 = vmatprep.subr.bf16.mxu0 0
        %301 = vmatpush1.bf16.msra.mxu0 0
        %302 = vmatprep.subr.bf16.mxu0 0
        %303 = vmatpush1.bf16.msra.mxu0 0
        %304 = vmatprep.subr.bf16.mxu0 0
        %305 = vmatpush1.bf16.msra.mxu0 0
        %306 = vmatprep.mubr.bf16.mxu0 0
        %307 = vmatmul.mubr.bf16.gmra.mrb[0].mxu0 %v224
        %v308 = vpop.f32.mrb[0].mxu0
        %v309 = vadd.f32 0.0, %v308
        %v310 = vpop.f32.mrb[0].mxu0
        %v311 = vpop.f32.mrb[0].mxu0
        %v312 = vpop.f32.mrb[0].mxu0
        %313 = vdwg.mxu0
        %v330 = vunpack.c.l.b16 %v181
        %v331 = vunpack.c.l.b16 %v182
        %v332 = vunpack.c.l.b16 %v183
        %v333 = vunpack.c.l.b16 %v184
        %v334 = vunpack.c.l.b16 %v185
        %v335 = vunpack.c.l.b16 %v186
        %v336 = vunpack.c.l.b16 %v187
        %v337 = vunpack.c.l.b16 %v188
        %v338 = vunpack.c.l.b16 %v189
        %v339 = vunpack.c.l.b16 %v190
        %v340 = vunpack.c.l.b16 %v191
        %v341 = vunpack.c.l.b16 %v192
        %v342 = vunpack.c.l.b16 %v193
        %v343 = vunpack.c.l.b16 %v194
        %v344 = vunpack.c.l.b16 %v195
        %v345 = vunpack.c.l.b16 %v196
        %v346 = vpack.c.b16 %v331, %v330
        %v347 = vpack.c.b16 %v333, %v332
        %v348 = vpack.c.b16 %v335, %v334
        %v349 = vpack.c.b16 %v337, %v336
        %v350 = vpack.c.b16 %v339, %v338
        %v351 = vpack.c.b16 %v341, %v340
        %v352 = vpack.c.b16 %v343, %v342
        %v353 = vpack.c.b16 %v345, %v344
        %362 = vmatprep.subr.bf16.mxu0 0
        %363 = vmatpush1.bf16.msra.mxu0 %v346
        %364 = vmatprep.subr.bf16.mxu0 0
        %365 = vmatpush1.bf16.msra.mxu0 %v347
        %366 = vmatprep.subr.bf16.mxu0 0
        %367 = vmatpush1.bf16.msra.mxu0 %v348
        %368 = vmatprep.subr.bf16.mxu0 0
        %369 = vmatpush1.bf16.msra.mxu0 %v349
        %370 = vmatprep.subr.bf16.mxu0 0
        %371 = vmatpush1.bf16.msra.mxu0 %v350
        %372 = vmatprep.subr.bf16.mxu0 0
        %373 = vmatpush1.bf16.msra.mxu0 %v351
        %374 = vmatprep.subr.bf16.mxu0 0
        %375 = vmatpush1.bf16.msra.mxu0 %v352
        %376 = vmatprep.subr.bf16.mxu0 0
        %377 = vmatpush1.bf16.msra.mxu0 %v353
        %378 = vmatprep.subr.bf16.mxu0 0
        %379 = vmatpush1.bf16.msra.mxu0 0
        %380 = vmatprep.subr.bf16.mxu0 0
        %381 = vmatpush1.bf16.msra.mxu0 0
        %382 = vmatprep.subr.bf16.mxu0 0
        %383 = vmatpush1.bf16.msra.mxu0 0
        %384 = vmatprep.subr.bf16.mxu0 0
        %385 = vmatpush1.bf16.msra.mxu0 0
        %386 = vmatprep.subr.bf16.mxu0 0
        %387 = vmatpush1.bf16.msra.mxu0 0
        %388 = vmatprep.subr.bf16.mxu0 0
        %389 = vmatpush1.bf16.msra.mxu0 0
        %390 = vmatprep.subr.bf16.mxu0 0
        %391 = vmatpush1.bf16.msra.mxu0 0
        %392 = vmatprep.subr.bf16.mxu0 0
        %393 = vmatpush1.bf16.msra.mxu0 0
        %394 = vmatprep.mubr.bf16.mxu0 0
        %395 = vmatmul.mubr.bf16.gmra.mrb[0].mxu0 %v180
        %v396 = vpop.f32.mrb[0].mxu0
        %v397 = vadd.f32 %v309, %v396
        %v398 = vpop.f32.mrb[0].mxu0
        %v399 = vpop.f32.mrb[0].mxu0
        %v400 = vpop.f32.mrb[0].mxu0
        %401 = vdwg.mxu0
        %v402 = vld [vmem:[%s179] sm:$0x6]
        %s403 = scalar_lea.vmem %s1, 128
        %v404 = vld [vmem:[%s403] sm:$0xf]
        %v405 = vld [vmem:[%s403 + $0x4] sm:$0xf]
        %v406 = vld [vmem:[%s403 + $0x8] sm:$0xf]
        %v407 = vld [vmem:[%s403 + $0xc] sm:$0xf]
        %v408 = vld [vmem:[%s403 + $0x10] sm:$0xf]
        %v409 = vld [vmem:[%s403 + $0x14] sm:$0xf]
        %v410 = vld [vmem:[%s403 + $0x18] sm:$0xf]
        %v411 = vld [vmem:[%s403 + $0x1c] sm:$0xf]
        %v412 = vld [vmem:[%s403 + $0x20] sm:$0xf]
        %v413 = vld [vmem:[%s403 + $0x24] sm:$0xf]
        %v414 = vld [vmem:[%s403 + $0x28] sm:$0xf]
        %v415 = vld [vmem:[%s403 + $0x2c] sm:$0xf]
        %v416 = vld [vmem:[%s403 + $0x30] sm:$0xf]
        %v417 = vld [vmem:[%s403 + $0x34] sm:$0xf]
        %v418 = vld [vmem:[%s403 + $0x38] sm:$0xf]
        %v419 = vld [vmem:[%s403 + $0x3c] sm:$0xf]
        %v421 = vunpack.c.l.b16 %v402
        %v422 = vpack.c.b16 %v421, %v421
        %v423 = vrot.slane %v422, 1
        %v441 = vunpack.c.l.b16 %v404
        %v442 = vunpack.c.l.b16 %v405
        %v443 = vunpack.c.l.b16 %v406
        %v444 = vunpack.c.l.b16 %v407
        %v445 = vunpack.c.l.b16 %v408
        %v446 = vunpack.c.l.b16 %v409
        %v447 = vunpack.c.l.b16 %v410
        %v448 = vunpack.c.l.b16 %v411
        %v449 = vunpack.c.l.b16 %v412
        %v450 = vunpack.c.l.b16 %v413
        %v451 = vunpack.c.l.b16 %v414
        %v452 = vunpack.c.l.b16 %v415
        %v453 = vunpack.c.l.b16 %v416
        %v454 = vunpack.c.l.b16 %v417
        %v455 = vunpack.c.l.b16 %v418
        %v456 = vunpack.c.l.b16 %v419
        %v457 = vpack.c.b16 %v442, %v441
        %v458 = vpack.c.b16 %v444, %v443
        %v459 = vpack.c.b16 %v446, %v445
        %v460 = vpack.c.b16 %v448, %v447
        %v461 = vpack.c.b16 %v450, %v449
        %v462 = vpack.c.b16 %v452, %v451
        %v463 = vpack.c.b16 %v454, %v453
        %v464 = vpack.c.b16 %v456, %v455
        %473 = vmatprep.subr.bf16.mxu0 0
        %474 = vmatpush1.bf16.msra.mxu0 %v457
        %475 = vmatprep.subr.bf16.mxu0 0
        %476 = vmatpush1.bf16.msra.mxu0 %v458
        %477 = vmatprep.subr.bf16.mxu0 0
        %478 = vmatpush1.bf16.msra.mxu0 %v459
        %479 = vmatprep.subr.bf16.mxu0 0
        %480 = vmatpush1.bf16.msra.mxu0 %v460
        %481 = vmatprep.subr.bf16.mxu0 0
        %482 = vmatpush1.bf16.msra.mxu0 %v461
        %483 = vmatprep.subr.bf16.mxu0 0
        %484 = vmatpush1.bf16.msra.mxu0 %v462
        %485 = vmatprep.subr.bf16.mxu0 0
        %486 = vmatpush1.bf16.msra.mxu0 %v463
        %487 = vmatprep.subr.bf16.mxu0 0
        %488 = vmatpush1.bf16.msra.mxu0 %v464
        %489 = vmatprep.subr.bf16.mxu0 0
        %490 = vmatpush1.bf16.msra.mxu0 0
        %491 = vmatprep.subr.bf16.mxu0 0
        %492 = vmatpush1.bf16.msra.mxu0 0
        %493 = vmatprep.subr.bf16.mxu0 0
        %494 = vmatpush1.bf16.msra.mxu0 0
        %495 = vmatprep.subr.bf16.mxu0 0
        %496 = vmatpush1.bf16.msra.mxu0 0
        %497 = vmatprep.subr.bf16.mxu0 0
        %498 = vmatpush1.bf16.msra.mxu0 0
        %499 = vmatprep.subr.bf16.mxu0 0
        %500 = vmatpush1.bf16.msra.mxu0 0
        %501 = vmatprep.subr.bf16.mxu0 0
        %502 = vmatpush1.bf16.msra.mxu0 0
        %503 = vmatprep.subr.bf16.mxu0 0
        %504 = vmatpush1.bf16.msra.mxu0 0
        %505 = vmatprep.mubr.bf16.mxu0 0
        %506 = vmatmul.mubr.bf16.gmra.mrb[0].mxu0 %v423
        %v507 = vpop.f32.mrb[0].mxu0
        %v508 = vadd.f32 0.0, %v507
        %v509 = vpop.f32.mrb[0].mxu0
        %v510 = vpop.f32.mrb[0].mxu0
        %v511 = vpop.f32.mrb[0].mxu0
        %512 = vdwg.mxu0
        %v513 = vadd.f32 %v397, %v508
        %s514 = sadd.s32 %s173, 1
        %s515 = smul.addr %s514, 4
        %s516 = scalar_lea.vmem %s165, %s515
        %v517 = vld [vmem:[%s516] sm:$0x3]
        %s518 = scalar_lea.vmem %s1, 192
        %v519 = vld [vmem:[%s518] sm:$0xf]
        %v520 = vld [vmem:[%s518 + $0x4] sm:$0xf]
        %v521 = vld [vmem:[%s518 + $0x8] sm:$0xf]
        %v522 = vld [vmem:[%s518 + $0xc] sm:$0xf]
        %v523 = vld [vmem:[%s518 + $0x10] sm:$0xf]
        %v524 = vld [vmem:[%s518 + $0x14] sm:$0xf]
        %v525 = vld [vmem:[%s518 + $0x18] sm:$0xf]
        %v526 = vld [vmem:[%s518 + $0x1c] sm:$0xf]
        %v527 = vld [vmem:[%s518 + $0x20] sm:$0xf]
        %v528 = vld [vmem:[%s518 + $0x24] sm:$0xf]
        %v529 = vld [vmem:[%s518 + $0x28] sm:$0xf]
        %v530 = vld [vmem:[%s518 + $0x2c] sm:$0xf]
        %v531 = vld [vmem:[%s518 + $0x30] sm:$0xf]
        %v532 = vld [vmem:[%s518 + $0x34] sm:$0xf]
        %v533 = vld [vmem:[%s518 + $0x38] sm:$0xf]
        %v534 = vld [vmem:[%s518 + $0x3c] sm:$0xf]
        %v551 = vunpack.c.l.b16 %v519
        %v552 = vunpack.c.l.b16 %v520
        %v553 = vunpack.c.l.b16 %v521
        %v554 = vunpack.c.l.b16 %v522
        %v555 = vunpack.c.l.b16 %v523
        %v556 = vunpack.c.l.b16 %v524
        %v557 = vunpack.c.l.b16 %v525
        %v558 = vunpack.c.l.b16 %v526
        %v559 = vunpack.c.l.b16 %v527
        %v560 = vunpack.c.l.b16 %v528
        %v561 = vunpack.c.l.b16 %v529
        %v562 = vunpack.c.l.b16 %v530
        %v563 = vunpack.c.l.b16 %v531
        %v564 = vunpack.c.l.b16 %v532
        %v565 = vunpack.c.l.b16 %v533
        %v566 = vunpack.c.l.b16 %v534
        %v567 = vpack.c.b16 %v552, %v551
        %v568 = vpack.c.b16 %v554, %v553
        %v569 = vpack.c.b16 %v556, %v555
        %v570 = vpack.c.b16 %v558, %v557
        %v571 = vpack.c.b16 %v560, %v559
        %v572 = vpack.c.b16 %v562, %v561
        %v573 = vpack.c.b16 %v564, %v563
        %v574 = vpack.c.b16 %v566, %v565
        %583 = vmatprep.subr.bf16.mxu0 0
        %584 = vmatpush1.bf16.msra.mxu0 %v567
        %585 = vmatprep.subr.bf16.mxu0 0
        %586 = vmatpush1.bf16.msra.mxu0 %v568
        %587 = vmatprep.subr.bf16.mxu0 0
        %588 = vmatpush1.bf16.msra.mxu0 %v569
        %589 = vmatprep.subr.bf16.mxu0 0
        %590 = vmatpush1.bf16.msra.mxu0 %v570
        %591 = vmatprep.subr.bf16.mxu0 0
        %592 = vmatpush1.bf16.msra.mxu0 %v571
        %593 = vmatprep.subr.bf16.mxu0 0
        %594 = vmatpush1.bf16.msra.mxu0 %v572
        %595 = vmatprep.subr.bf16.mxu0 0
        %596 = vmatpush1.bf16.msra.mxu0 %v573
        %597 = vmatprep.subr.bf16.mxu0 0
        %598 = vmatpush1.bf16.msra.mxu0 %v574
        %599 = vmatprep.subr.bf16.mxu0 0
        %600 = vmatpush1.bf16.msra.mxu0 0
        %601 = vmatprep.subr.bf16.mxu0 0
        %602 = vmatpush1.bf16.msra.mxu0 0
        %603 = vmatprep.subr.bf16.mxu0 0
        %604 = vmatpush1.bf16.msra.mxu0 0
        %605 = vmatprep.subr.bf16.mxu0 0
        %606 = vmatpush1.bf16.msra.mxu0 0
        %607 = vmatprep.subr.bf16.mxu0 0
        %608 = vmatpush1.bf16.msra.mxu0 0
        %609 = vmatprep.subr.bf16.mxu0 0
        %610 = vmatpush1.bf16.msra.mxu0 0
        %611 = vmatprep.subr.bf16.mxu0 0
        %612 = vmatpush1.bf16.msra.mxu0 0
        %613 = vmatprep.subr.bf16.mxu0 0
        %614 = vmatpush1.bf16.msra.mxu0 0
        %615 = vmatprep.mubr.bf16.mxu0 0
        %616 = vmatmul.mubr.bf16.gmra.mrb[0].mxu0 %v517
        %v617 = vpop.f32.mrb[0].mxu0
        %v618 = vadd.f32 0.0, %v617
        %v619 = vpop.f32.mrb[0].mxu0
        %v620 = vpop.f32.mrb[0].mxu0
        %v621 = vpop.f32.mrb[0].mxu0
        %622 = vdwg.mxu0
        %v623 = vadd.f32 %v513, %v618
        %v624 = vld [vmem:[%s516] sm:$0x7]
        %s625 = scalar_lea.vmem %s1, 256
        %v626 = vld [vmem:[%s625] sm:$0xf]
        %v627 = vld [vmem:[%s625 + $0x4] sm:$0xf]
        %v628 = vld [vmem:[%s625 + $0x8] sm:$0xf]
        %v629 = vld [vmem:[%s625 + $0xc] sm:$0xf]
        %v630 = vld [vmem:[%s625 + $0x10] sm:$0xf]
        %v631 = vld [vmem:[%s625 + $0x14] sm:$0xf]
        %v632 = vld [vmem:[%s625 + $0x18] sm:$0xf]
        %v633 = vld [vmem:[%s625 + $0x1c] sm:$0xf]
        %v634 = vld [vmem:[%s625 + $0x20] sm:$0xf]
        %v635 = vld [vmem:[%s625 + $0x24] sm:$0xf]
        %v636 = vld [vmem:[%s625 + $0x28] sm:$0xf]
        %v637 = vld [vmem:[%s625 + $0x2c] sm:$0xf]
        %v638 = vld [vmem:[%s625 + $0x30] sm:$0xf]
        %v639 = vld [vmem:[%s625 + $0x34] sm:$0xf]
        %v640 = vld [vmem:[%s625 + $0x38] sm:$0xf]
        %v641 = vld [vmem:[%s625 + $0x3c] sm:$0xf]
        %v643 = vunpack.c.l.b16 %v624
        %v644 = vpack.c.b16 %v643, %v643
        %v646 = vshrl.u32 %v644, 16
        %v648 = vshll.u32 %v644, 16
        %v650 = vrot.slane %v648, 1
        %v651 = vor.u32 %v646, %v650
        %v669 = vunpack.c.l.b16 %v626
        %v670 = vunpack.c.l.b16 %v627
        %v671 = vunpack.c.l.b16 %v628
        %v672 = vunpack.c.l.b16 %v629
        %v673 = vunpack.c.l.b16 %v630
        %v674 = vunpack.c.l.b16 %v631
        %v675 = vunpack.c.l.b16 %v632
        %v676 = vunpack.c.l.b16 %v633
        %v677 = vunpack.c.l.b16 %v634
        %v678 = vunpack.c.l.b16 %v635
        %v679 = vunpack.c.l.b16 %v636
        %v680 = vunpack.c.l.b16 %v637
        %v681 = vunpack.c.l.b16 %v638
        %v682 = vunpack.c.l.b16 %v639
        %v683 = vunpack.c.l.b16 %v640
        %v684 = vunpack.c.l.b16 %v641
        %v685 = vpack.c.b16 %v670, %v669
        %v686 = vpack.c.b16 %v672, %v671
        %v687 = vpack.c.b16 %v674, %v673
        %v688 = vpack.c.b16 %v676, %v675
        %v689 = vpack.c.b16 %v678, %v677
        %v690 = vpack.c.b16 %v680, %v679
        %v691 = vpack.c.b16 %v682, %v681
        %v692 = vpack.c.b16 %v684, %v683
        %701 = vmatprep.subr.bf16.mxu0 0
        %702 = vmatpush1.bf16.msra.mxu0 %v685
        %703 = vmatprep.subr.bf16.mxu0 0
        %704 = vmatpush1.bf16.msra.mxu0 %v686
        %705 = vmatprep.subr.bf16.mxu0 0
        %706 = vmatpush1.bf16.msra.mxu0 %v687
        %707 = vmatprep.subr.bf16.mxu0 0
        %708 = vmatpush1.bf16.msra.mxu0 %v688
        %709 = vmatprep.subr.bf16.mxu0 0
        %710 = vmatpush1.bf16.msra.mxu0 %v689
        %711 = vmatprep.subr.bf16.mxu0 0
        %712 = vmatpush1.bf16.msra.mxu0 %v690
        %713 = vmatprep.subr.bf16.mxu0 0
        %714 = vmatpush1.bf16.msra.mxu0 %v691
        %715 = vmatprep.subr.bf16.mxu0 0
        %716 = vmatpush1.bf16.msra.mxu0 %v692
        %717 = vmatprep.subr.bf16.mxu0 0
        %718 = vmatpush1.bf16.msra.mxu0 0
        %719 = vmatprep.subr.bf16.mxu0 0
        %720 = vmatpush1.bf16.msra.mxu0 0
        %721 = vmatprep.subr.bf16.mxu0 0
        %722 = vmatpush1.bf16.msra.mxu0 0
        %723 = vmatprep.subr.bf16.mxu0 0
        %724 = vmatpush1.bf16.msra.mxu0 0
        %725 = vmatprep.subr.bf16.mxu0 0
        %726 = vmatpush1.bf16.msra.mxu0 0
        %727 = vmatprep.subr.bf16.mxu0 0
        %728 = vmatpush1.bf16.msra.mxu0 0
        %729 = vmatprep.subr.bf16.mxu0 0
        %730 = vmatpush1.bf16.msra.mxu0 0
        %731 = vmatprep.subr.bf16.mxu0 0
        %732 = vmatpush1.bf16.msra.mxu0 0
        %733 = vmatprep.mubr.bf16.mxu0 0
        %734 = vmatmul.mubr.bf16.gmra.mrb[0].mxu0 %v651
        %v735 = vpop.f32.mrb[0].mxu0
        %v736 = vadd.f32 0.0, %v735
        %v737 = vpop.f32.mrb[0].mxu0
        %v738 = vpop.f32.mrb[0].mxu0
        %v739 = vpop.f32.mrb[0].mxu0
        %740 = vdwg.mxu0
        %v741 = vadd.f32 %v623, %v736
        %v742 = vld [vmem:[%s516] sm:$0x6]
        %s743 = scalar_lea.vmem %s1, 320
        %v744 = vld [vmem:[%s743] sm:$0xf]
        %v745 = vld [vmem:[%s743 + $0x4] sm:$0xf]
        %v746 = vld [vmem:[%s743 + $0x8] sm:$0xf]
        %v747 = vld [vmem:[%s743 + $0xc] sm:$0xf]
        %v748 = vld [vmem:[%s743 + $0x10] sm:$0xf]
        %v749 = vld [vmem:[%s743 + $0x14] sm:$0xf]
        %v750 = vld [vmem:[%s743 + $0x18] sm:$0xf]
        %v751 = vld [vmem:[%s743 + $0x1c] sm:$0xf]
        %v752 = vld [vmem:[%s743 + $0x20] sm:$0xf]
        %v753 = vld [vmem:[%s743 + $0x24] sm:$0xf]
        %v754 = vld [vmem:[%s743 + $0x28] sm:$0xf]
        %v755 = vld [vmem:[%s743 + $0x2c] sm:$0xf]
        %v756 = vld [vmem:[%s743 + $0x30] sm:$0xf]
        %v757 = vld [vmem:[%s743 + $0x34] sm:$0xf]
        %v758 = vld [vmem:[%s743 + $0x38] sm:$0xf]
        %v759 = vld [vmem:[%s743 + $0x3c] sm:$0xf]
        %v761 = vunpack.c.l.b16 %v742
        %v762 = vpack.c.b16 %v761, %v761
        %v763 = vrot.slane %v762, 1
        %v781 = vunpack.c.l.b16 %v744
        %v782 = vunpack.c.l.b16 %v745
        %v783 = vunpack.c.l.b16 %v746
        %v784 = vunpack.c.l.b16 %v747
        %v785 = vunpack.c.l.b16 %v748
        %v786 = vunpack.c.l.b16 %v749
        %v787 = vunpack.c.l.b16 %v750
        %v788 = vunpack.c.l.b16 %v751
        %v789 = vunpack.c.l.b16 %v752
        %v790 = vunpack.c.l.b16 %v753
        %v791 = vunpack.c.l.b16 %v754
        %v792 = vunpack.c.l.b16 %v755
        %v793 = vunpack.c.l.b16 %v756
        %v794 = vunpack.c.l.b16 %v757
        %v795 = vunpack.c.l.b16 %v758
        %v796 = vunpack.c.l.b16 %v759
        %v797 = vpack.c.b16 %v782, %v781
        %v798 = vpack.c.b16 %v784, %v783
        %v799 = vpack.c.b16 %v786, %v785
        %v800 = vpack.c.b16 %v788, %v787
        %v801 = vpack.c.b16 %v790, %v789
        %v802 = vpack.c.b16 %v792, %v791
        %v803 = vpack.c.b16 %v794, %v793
        %v804 = vpack.c.b16 %v796, %v795
        %813 = vmatprep.subr.bf16.mxu0 0
        %814 = vmatpush1.bf16.msra.mxu0 %v797
        %815 = vmatprep.subr.bf16.mxu0 0
        %816 = vmatpush1.bf16.msra.mxu0 %v798
        %817 = vmatprep.subr.bf16.mxu0 0
        %818 = vmatpush1.bf16.msra.mxu0 %v799
        %819 = vmatprep.subr.bf16.mxu0 0
        %820 = vmatpush1.bf16.msra.mxu0 %v800
        %821 = vmatprep.subr.bf16.mxu0 0
        %822 = vmatpush1.bf16.msra.mxu0 %v801
        %823 = vmatprep.subr.bf16.mxu0 0
        %824 = vmatpush1.bf16.msra.mxu0 %v802
        %825 = vmatprep.subr.bf16.mxu0 0
        %826 = vmatpush1.bf16.msra.mxu0 %v803
        %827 = vmatprep.subr.bf16.mxu0 0
        %828 = vmatpush1.bf16.msra.mxu0 %v804
        %829 = vmatprep.subr.bf16.mxu0 0
        %830 = vmatpush1.bf16.msra.mxu0 0
        %831 = vmatprep.subr.bf16.mxu0 0
        %832 = vmatpush1.bf16.msra.mxu0 0
        %833 = vmatprep.subr.bf16.mxu0 0
        %834 = vmatpush1.bf16.msra.mxu0 0
        %835 = vmatprep.subr.bf16.mxu0 0
        %836 = vmatpush1.bf16.msra.mxu0 0
        %837 = vmatprep.subr.bf16.mxu0 0
        %838 = vmatpush1.bf16.msra.mxu0 0
        %839 = vmatprep.subr.bf16.mxu0 0
        %840 = vmatpush1.bf16.msra.mxu0 0
        %841 = vmatprep.subr.bf16.mxu0 0
        %842 = vmatpush1.bf16.msra.mxu0 0
        %843 = vmatprep.subr.bf16.mxu0 0
        %844 = vmatpush1.bf16.msra.mxu0 0
        %845 = vmatprep.mubr.bf16.mxu0 0
        %846 = vmatmul.mubr.bf16.gmra.mrb[0].mxu0 %v763
        %v847 = vpop.f32.mrb[0].mxu0
        %v848 = vadd.f32 0.0, %v847
        %v849 = vpop.f32.mrb[0].mxu0
        %v850 = vpop.f32.mrb[0].mxu0
        %v851 = vpop.f32.mrb[0].mxu0
        %852 = vdwg.mxu0
        %v853 = vadd.f32 %v741, %v848
        %s854 = sadd.s32 %s173, 2
        %s855 = smul.addr %s854, 4
        %s856 = scalar_lea.vmem %s165, %s855
        %v857 = vld [vmem:[%s856] sm:$0x3]
        %s858 = scalar_lea.vmem %s1, 384
        %v859 = vld [vmem:[%s858] sm:$0xf]
        %v860 = vld [vmem:[%s858 + $0x4] sm:$0xf]
        %v861 = vld [vmem:[%s858 + $0x8] sm:$0xf]
        %v862 = vld [vmem:[%s858 + $0xc] sm:$0xf]
        %v863 = vld [vmem:[%s858 + $0x10] sm:$0xf]
        %v864 = vld [vmem:[%s858 + $0x14] sm:$0xf]
        %v865 = vld [vmem:[%s858 + $0x18] sm:$0xf]
        %v866 = vld [vmem:[%s858 + $0x1c] sm:$0xf]
        %v867 = vld [vmem:[%s858 + $0x20] sm:$0xf]
        %v868 = vld [vmem:[%s858 + $0x24] sm:$0xf]
        %v869 = vld [vmem:[%s858 + $0x28] sm:$0xf]
        %v870 = vld [vmem:[%s858 + $0x2c] sm:$0xf]
        %v871 = vld [vmem:[%s858 + $0x30] sm:$0xf]
        %v872 = vld [vmem:[%s858 + $0x34] sm:$0xf]
        %v873 = vld [vmem:[%s858 + $0x38] sm:$0xf]
        %v874 = vld [vmem:[%s858 + $0x3c] sm:$0xf]
        %v891 = vunpack.c.l.b16 %v859
        %v892 = vunpack.c.l.b16 %v860
        %v893 = vunpack.c.l.b16 %v861
        %v894 = vunpack.c.l.b16 %v862
        %v895 = vunpack.c.l.b16 %v863
        %v896 = vunpack.c.l.b16 %v864
        %v897 = vunpack.c.l.b16 %v865
        %v898 = vunpack.c.l.b16 %v866
        %v899 = vunpack.c.l.b16 %v867
        %v900 = vunpack.c.l.b16 %v868
        %v901 = vunpack.c.l.b16 %v869
        %v902 = vunpack.c.l.b16 %v870
        %v903 = vunpack.c.l.b16 %v871
        %v904 = vunpack.c.l.b16 %v872
        %v905 = vunpack.c.l.b16 %v873
        %v906 = vunpack.c.l.b16 %v874
        %v907 = vpack.c.b16 %v892, %v891
        %v908 = vpack.c.b16 %v894, %v893
        %v909 = vpack.c.b16 %v896, %v895
        %v910 = vpack.c.b16 %v898, %v897
        %v911 = vpack.c.b16 %v900, %v899
        %v912 = vpack.c.b16 %v902, %v901
        %v913 = vpack.c.b16 %v904, %v903
        %v914 = vpack.c.b16 %v906, %v905
        %923 = vmatprep.subr.bf16.mxu0 0
        %924 = vmatpush1.bf16.msra.mxu0 %v907
        %925 = vmatprep.subr.bf16.mxu0 0
        %926 = vmatpush1.bf16.msra.mxu0 %v908
        %927 = vmatprep.subr.bf16.mxu0 0
        %928 = vmatpush1.bf16.msra.mxu0 %v909
        %929 = vmatprep.subr.bf16.mxu0 0
        %930 = vmatpush1.bf16.msra.mxu0 %v910
        %931 = vmatprep.subr.bf16.mxu0 0
        %932 = vmatpush1.bf16.msra.mxu0 %v911
        %933 = vmatprep.subr.bf16.mxu0 0
        %934 = vmatpush1.bf16.msra.mxu0 %v912
        %935 = vmatprep.subr.bf16.mxu0 0
        %936 = vmatpush1.bf16.msra.mxu0 %v913
        %937 = vmatprep.subr.bf16.mxu0 0
        %938 = vmatpush1.bf16.msra.mxu0 %v914
        %939 = vmatprep.subr.bf16.mxu0 0
        %940 = vmatpush1.bf16.msra.mxu0 0
        %941 = vmatprep.subr.bf16.mxu0 0
        %942 = vmatpush1.bf16.msra.mxu0 0
        %943 = vmatprep.subr.bf16.mxu0 0
        %944 = vmatpush1.bf16.msra.mxu0 0
        %945 = vmatprep.subr.bf16.mxu0 0
        %946 = vmatpush1.bf16.msra.mxu0 0
        %947 = vmatprep.subr.bf16.mxu0 0
        %948 = vmatpush1.bf16.msra.mxu0 0
        %949 = vmatprep.subr.bf16.mxu0 0
        %950 = vmatpush1.bf16.msra.mxu0 0
        %951 = vmatprep.subr.bf16.mxu0 0
        %952 = vmatpush1.bf16.msra.mxu0 0
        %953 = vmatprep.subr.bf16.mxu0 0
        %954 = vmatpush1.bf16.msra.mxu0 0
        %955 = vmatprep.mubr.bf16.mxu0 0
        %956 = vmatmul.mubr.bf16.gmra.mrb[0].mxu0 %v857
        %v957 = vpop.f32.mrb[0].mxu0
        %v958 = vadd.f32 0.0, %v957
        %v959 = vpop.f32.mrb[0].mxu0
        %v960 = vpop.f32.mrb[0].mxu0
        %v961 = vpop.f32.mrb[0].mxu0
        %962 = vdwg.mxu0
        %v963 = vadd.f32 %v853, %v958
        %v964 = vld [vmem:[%s856] sm:$0x7]
        %s965 = scalar_lea.vmem %s1, 448
        %v966 = vld [vmem:[%s965] sm:$0xf]
        %v967 = vld [vmem:[%s965 + $0x4] sm:$0xf]
        %v968 = vld [vmem:[%s965 + $0x8] sm:$0xf]
        %v969 = vld [vmem:[%s965 + $0xc] sm:$0xf]
        %v970 = vld [vmem:[%s965 + $0x10] sm:$0xf]
        %v971 = vld [vmem:[%s965 + $0x14] sm:$0xf]
        %v972 = vld [vmem:[%s965 + $0x18] sm:$0xf]
        %v973 = vld [vmem:[%s965 + $0x1c] sm:$0xf]
        %v974 = vld [vmem:[%s965 + $0x20] sm:$0xf]
        %v975 = vld [vmem:[%s965 + $0x24] sm:$0xf]
        %v976 = vld [vmem:[%s965 + $0x28] sm:$0xf]
        %v977 = vld [vmem:[%s965 + $0x2c] sm:$0xf]
        %v978 = vld [vmem:[%s965 + $0x30] sm:$0xf]
        %v979 = vld [vmem:[%s965 + $0x34] sm:$0xf]
        %v980 = vld [vmem:[%s965 + $0x38] sm:$0xf]
        %v981 = vld [vmem:[%s965 + $0x3c] sm:$0xf]
        %v983 = vunpack.c.l.b16 %v964
        %v984 = vpack.c.b16 %v983, %v983
        %v986 = vshrl.u32 %v984, 16
        %v988 = vshll.u32 %v984, 16
        %v990 = vrot.slane %v988, 1
        %v991 = vor.u32 %v986, %v990
        %v1009 = vunpack.c.l.b16 %v966
        %v1010 = vunpack.c.l.b16 %v967
        %v1011 = vunpack.c.l.b16 %v968
        %v1012 = vunpack.c.l.b16 %v969
        %v1013 = vunpack.c.l.b16 %v970
        %v1014 = vunpack.c.l.b16 %v971
        %v1015 = vunpack.c.l.b16 %v972
        %v1016 = vunpack.c.l.b16 %v973
        %v1017 = vunpack.c.l.b16 %v974
        %v1018 = vunpack.c.l.b16 %v975
        %v1019 = vunpack.c.l.b16 %v976
        %v1020 = vunpack.c.l.b16 %v977
        %v1021 = vunpack.c.l.b16 %v978
        %v1022 = vunpack.c.l.b16 %v979
        %v1023 = vunpack.c.l.b16 %v980
        %v1024 = vunpack.c.l.b16 %v981
        %v1025 = vpack.c.b16 %v1010, %v1009
        %v1026 = vpack.c.b16 %v1012, %v1011
        %v1027 = vpack.c.b16 %v1014, %v1013
        %v1028 = vpack.c.b16 %v1016, %v1015
        %v1029 = vpack.c.b16 %v1018, %v1017
        %v1030 = vpack.c.b16 %v1020, %v1019
        %v1031 = vpack.c.b16 %v1022, %v1021
        %v1032 = vpack.c.b16 %v1024, %v1023
        %1041 = vmatprep.subr.bf16.mxu0 0
        %1042 = vmatpush1.bf16.msra.mxu0 %v1025
        %1043 = vmatprep.subr.bf16.mxu0 0
        %1044 = vmatpush1.bf16.msra.mxu0 %v1026
        %1045 = vmatprep.subr.bf16.mxu0 0
        %1046 = vmatpush1.bf16.msra.mxu0 %v1027
        %1047 = vmatprep.subr.bf16.mxu0 0
        %1048 = vmatpush1.bf16.msra.mxu0 %v1028
        %1049 = vmatprep.subr.bf16.mxu0 0
        %1050 = vmatpush1.bf16.msra.mxu0 %v1029
        %1051 = vmatprep.subr.bf16.mxu0 0
        %1052 = vmatpush1.bf16.msra.mxu0 %v1030
        %1053 = vmatprep.subr.bf16.mxu0 0
        %1054 = vmatpush1.bf16.msra.mxu0 %v1031
        %1055 = vmatprep.subr.bf16.mxu0 0
        %1056 = vmatpush1.bf16.msra.mxu0 %v1032
        %1057 = vmatprep.subr.bf16.mxu0 0
        %1058 = vmatpush1.bf16.msra.mxu0 0
        %1059 = vmatprep.subr.bf16.mxu0 0
        %1060 = vmatpush1.bf16.msra.mxu0 0
        %1061 = vmatprep.subr.bf16.mxu0 0
        %1062 = vmatpush1.bf16.msra.mxu0 0
        %1063 = vmatprep.subr.bf16.mxu0 0
        %1064 = vmatpush1.bf16.msra.mxu0 0
        %1065 = vmatprep.subr.bf16.mxu0 0
        %1066 = vmatpush1.bf16.msra.mxu0 0
        %1067 = vmatprep.subr.bf16.mxu0 0
        %1068 = vmatpush1.bf16.msra.mxu0 0
        %1069 = vmatprep.subr.bf16.mxu0 0
        %1070 = vmatpush1.bf16.msra.mxu0 0
        %1071 = vmatprep.subr.bf16.mxu0 0
        %1072 = vmatpush1.bf16.msra.mxu0 0
        %1073 = vmatprep.mubr.bf16.mxu0 0
        %1074 = vmatmul.mubr.bf16.gmra.mrb[0].mxu0 %v991
        %v1075 = vpop.f32.mrb[0].mxu0
        %v1076 = vadd.f32 0.0, %v1075
        %v1077 = vpop.f32.mrb[0].mxu0
        %v1078 = vpop.f32.mrb[0].mxu0
        %v1079 = vpop.f32.mrb[0].mxu0
        %1080 = vdwg.mxu0
        %v1081 = vadd.f32 %v963, %v1076
        %v1082 = vld [vmem:[%s856] sm:$0x6]
        %s1083 = scalar_lea.vmem %s1, 512
        %v1084 = vld [vmem:[%s1083] sm:$0xf]
        %v1085 = vld [vmem:[%s1083 + $0x4] sm:$0xf]
        %v1086 = vld [vmem:[%s1083 + $0x8] sm:$0xf]
        %v1087 = vld [vmem:[%s1083 + $0xc] sm:$0xf]
        %v1088 = vld [vmem:[%s1083 + $0x10] sm:$0xf]
        %v1089 = vld [vmem:[%s1083 + $0x14] sm:$0xf]
        %v1090 = vld [vmem:[%s1083 + $0x18] sm:$0xf]
        %v1091 = vld [vmem:[%s1083 + $0x1c] sm:$0xf]
        %v1092 = vld [vmem:[%s1083 + $0x20] sm:$0xf]
        %v1093 = vld [vmem:[%s1083 + $0x24] sm:$0xf]
        %v1094 = vld [vmem:[%s1083 + $0x28] sm:$0xf]
        %v1095 = vld [vmem:[%s1083 + $0x2c] sm:$0xf]
        %v1096 = vld [vmem:[%s1083 + $0x30] sm:$0xf]
        %v1097 = vld [vmem:[%s1083 + $0x34] sm:$0xf]
        %v1098 = vld [vmem:[%s1083 + $0x38] sm:$0xf]
        %v1099 = vld [vmem:[%s1083 + $0x3c] sm:$0xf]
        %v1101 = vunpack.c.l.b16 %v1082
        %v1102 = vpack.c.b16 %v1101, %v1101
        %v1103 = vrot.slane %v1102, 1
        %v1121 = vunpack.c.l.b16 %v1084
        %v1122 = vunpack.c.l.b16 %v1085
        %v1123 = vunpack.c.l.b16 %v1086
        %v1124 = vunpack.c.l.b16 %v1087
        %v1125 = vunpack.c.l.b16 %v1088
        %v1126 = vunpack.c.l.b16 %v1089
        %v1127 = vunpack.c.l.b16 %v1090
        %v1128 = vunpack.c.l.b16 %v1091
        %v1129 = vunpack.c.l.b16 %v1092
        %v1130 = vunpack.c.l.b16 %v1093
        %v1131 = vunpack.c.l.b16 %v1094
        %v1132 = vunpack.c.l.b16 %v1095
        %v1133 = vunpack.c.l.b16 %v1096
        %v1134 = vunpack.c.l.b16 %v1097
        %v1135 = vunpack.c.l.b16 %v1098
        %v1136 = vunpack.c.l.b16 %v1099
        %v1137 = vpack.c.b16 %v1122, %v1121
        %v1138 = vpack.c.b16 %v1124, %v1123
        %v1139 = vpack.c.b16 %v1126, %v1125
        %v1140 = vpack.c.b16 %v1128, %v1127
        %v1141 = vpack.c.b16 %v1130, %v1129
        %v1142 = vpack.c.b16 %v1132, %v1131
        %v1143 = vpack.c.b16 %v1134, %v1133
        %v1144 = vpack.c.b16 %v1136, %v1135
        %1153 = vmatprep.subr.bf16.mxu0 0
        %1154 = vmatpush1.bf16.msra.mxu0 %v1137
        %1155 = vmatprep.subr.bf16.mxu0 0
        %1156 = vmatpush1.bf16.msra.mxu0 %v1138
        %1157 = vmatprep.subr.bf16.mxu0 0
        %1158 = vmatpush1.bf16.msra.mxu0 %v1139
        %1159 = vmatprep.subr.bf16.mxu0 0
        %1160 = vmatpush1.bf16.msra.mxu0 %v1140
        %1161 = vmatprep.subr.bf16.mxu0 0
        %1162 = vmatpush1.bf16.msra.mxu0 %v1141
        %1163 = vmatprep.subr.bf16.mxu0 0
        %1164 = vmatpush1.bf16.msra.mxu0 %v1142
        %1165 = vmatprep.subr.bf16.mxu0 0
        %1166 = vmatpush1.bf16.msra.mxu0 %v1143
        %1167 = vmatprep.subr.bf16.mxu0 0
        %1168 = vmatpush1.bf16.msra.mxu0 %v1144
        %1169 = vmatprep.subr.bf16.mxu0 0
        %1170 = vmatpush1.bf16.msra.mxu0 0
        %1171 = vmatprep.subr.bf16.mxu0 0
        %1172 = vmatpush1.bf16.msra.mxu0 0
        %1173 = vmatprep.subr.bf16.mxu0 0
        %1174 = vmatpush1.bf16.msra.mxu0 0
        %1175 = vmatprep.subr.bf16.mxu0 0
        %1176 = vmatpush1.bf16.msra.mxu0 0
        %1177 = vmatprep.subr.bf16.mxu0 0
        %1178 = vmatpush1.bf16.msra.mxu0 0
        %1179 = vmatprep.subr.bf16.mxu0 0
        %1180 = vmatpush1.bf16.msra.mxu0 0
        %1181 = vmatprep.subr.bf16.mxu0 0
        %1182 = vmatpush1.bf16.msra.mxu0 0
        %1183 = vmatprep.subr.bf16.mxu0 0
        %1184 = vmatpush1.bf16.msra.mxu0 0
        %1185 = vmatprep.mubr.bf16.mxu0 0
        %1186 = vmatmul.mubr.bf16.gmra.mrb[0].mxu0 %v1103
        %v1187 = vpop.f32.mrb[0].mxu0
        %v1188 = vadd.f32 0.0, %v1187
        %v1189 = vpop.f32.mrb[0].mxu0
        %v1190 = vpop.f32.mrb[0].mxu0
        %v1191 = vpop.f32.mrb[0].mxu0
        %1192 = vdwg.mxu0
        %v1193 = vadd.f32 %v1081, %v1188
        %v1194 = vld [vmem:[%s2] sm:$0x1]
        %v1196 = vlaneseq
        %v1197 = vshrl.u32 %v1196, 7
        %v1198 = vsub.s32 0, %v1197
        %v1199 = vrot.slane %v1194, %v1198
        %v1201 = vadd.f32 %v1193, %v1199
        %v1202 = vmax.f32 %v1201, 0.0
        %v1203 = vpack.c.bf16 %v1202, %v1202
        %s1204 = smul.addr %s173, 2
        %s1205 = scalar_lea.vmem %s170, %s1204
        %1206 = vst [vmem:[%s1205] sm:$0x3] %v1203
      $region37: #{vgg16_forward.31} parent=31 // loop_footer
        %s177 = sadd.s32 1, %s173
      $region38: #{vgg16_forward.31} parent=31 // loop_footer_branch
        %172 = sbr.rel target = $region34
      $region39: #{vgg16_forward.31} parent=31 // loop_exit
        _
      %p1207 = scmp.lt.s32.totalorder %s14, 1
      %s1208 = scalar_select %p1207, %s14, 1
      %s1209 = smul.addr %s1208, 4
      %s1210 = smul.addr %s1209, 2
      %s1211 = scalar_lea.vmem %s3, %s1210
      // Predicated region
      $region40: #{vgg16_forward.31} parent=31 // pred_check
        %p1212 = pneg %p100
      $region41: #{vgg16_forward.31} parent=31 // pred_check_branch
        %1214 = sbr.rel (%p1212) target = $region43
      $region42: #{vgg16_forward.31} parent=31 // pred_region
        _
      $region43: #{vgg16_forward.31} parent=31 // pred_fallthru
        _
    $region32: #{vgg16_forward.31} parent=5 // pred_fallthru
      _
    %p1215 = scmp.le.s32.totalorder 2, %s9
    // Predicated region
    $region44: #{vgg16_forward.31} parent=5 // pred_check
      %p1216 = pneg %p1215
    $region45: #{vgg16_forward.31} parent=5 // pred_check_branch
      %1218 = sbr.rel (%p1216) target = $region47
    $region46: #{vgg16_forward.31} parent=5 // pred_region
      %s1219 = ssub.s32 %s9, 2
      // Predicated region
      $region48: #{vgg16_forward.31} parent=46 // pred_check
        %p1220 = pneg %p106
      $region49: #{vgg16_forward.31} parent=46 // pred_check_branch
        %1222 = sbr.rel (%p1220) target = $region51
      $region50: #{vgg16_forward.31} parent=46 // pred_region
        %p1223 = scmp.lt.s32.totalorder %s15, 1
        %s1224 = scalar_select %p1223, %s15, 1
        %s1225 = smul.addr %s1224, 4
        %s1226 = smul.addr %s1225, 2
        %s1227 = scalar_lea.vmem %s3, %s1226
      $region51: #{vgg16_forward.31} parent=46 // pred_fallthru
        _
    $region47: #{vgg16_forward.31} parent=5 // pred_fallthru
      _
  $region6: #{vgg16_forward.31} parent=0 // loop_footer
    %s13 = sadd.s32 1, %s9
  $region7: #{vgg16_forward.31} parent=0 // loop_footer_branch
    %8 = sbr.rel target = $region3
  $region8: #{vgg16_forward.31} parent=0 // loop_exit
    _

// kernel: vgg16_forward.35
$region0: #{vgg16_forward.35}
  #allocation0 [shape = 'u32[]', space=smem, size = 0x4, offset = 0x4, fixed_abs, tag = 'smem constant byte address 0x4 - core index']
  #allocation1 [shape = 'u32[144,128]{1,0:T(1,128)}', space=vmem, size = 0x12000, scoped, tag = 'internal scratch']
  %s0 = inlined_call_operand.vmem [shape: bf16[2,4,4,128], index: 0, kind: input, shape index: {}]
  %s1 = inlined_call_operand.vmem [shape: bf16[3,3,128,128], index: 1, kind: input, shape index: {}]
  %s2 = inlined_call_operand.vmem [shape: f32[1,128], index: 2, kind: input, shape index: {}]
  %s3 = inlined_call_operand.vmem [shape: bf16[2,2,2,128], index: 3, kind: output, shape index: {}]
  %s4 = sld [smem:[#allocation0]]
  $region52: #{vgg16_forward.35} parent=0
    _
  %s6 = ssub.s32 1, %s4
  %s7 = scalar_select 0, %s6, %s4
  loop: start=0, step=1, limit=4
  $region2: #{vgg16_forward.35} parent=0 // loop_pre_header
    _
  $region3: #{vgg16_forward.35} parent=0 // loop_header
    %s9 = sphi 0, %s13
    %p10 = scmp.ge.s32.totalorder %s9, 4
    %s19 = sphi 0, %s21
    %s22 = sphi 0, %s19
    %s23 = sphi 0, %s22
    %s39 = sphi 0, %s23
    %s43 = sphi 0, %s43
    %s45 = sphi 0, %s43
    %s46 = sphi 0, %s45
    %s60 = sphi 0, %s46
    %s64 = sphi 0, %s64
    %s66 = sphi 0, %s64
    %s67 = sphi 0, %s66
    %s81 = sphi 0, %s67
    %s87 = sphi 0, %s89
    %s90 = sphi 0, %s87
    %s91 = sphi 0, %s90
    %s107 = sphi 0, %s91
  $region4: #{vgg16_forward.35} parent=0 // loop_header_branch
    %12 = sbr.rel (%p10) target = $region8
  $region5: #{vgg16_forward.35} parent=0 // loop_body
    %s14 = ssub.s32 %s9, 1
    %s15 = ssub.s32 %s9, 2
    %s16 = sadd.s32 %s9, 1
    %s17 = ssub.s32 %s9, %s16
    %p18 = scmp.eq.s32.totalorder %s17, 0
    %s20 = sadd.s32 %s19, 1
    %s21 = scalar_select %p18, %s19, %s20
    %p24 = pneg %p18
    %p25 = scmp.eq.s32.totalorder %s9, 1
    %p26 = por %p24, %p25
    %p27 = scmp.ne.s32.totalorder %s19, %s22
    %p28 = scmp.eq.s32.totalorder %s9, 0
    %p29 = por %p27, %p28
    %p30 = scmp.ne.s32.totalorder %s19, %s22
    %p31 = scmp.eq.s32.totalorder %s14, 1
    %p32 = por %p30, %p31
    %p33 = scmp.ne.s32.totalorder %s22, %s23
    %p34 = scmp.eq.s32.totalorder %s14, 0
    %p35 = por %p33, %p34
    %p36 = scmp.ne.s32.totalorder %s22, %s23
    %p37 = scmp.eq.s32.totalorder %s15, 1
    %p38 = por %p36, %p37
    %p40 = scmp.ne.s32.totalorder %s23, %s39
    %p41 = scmp.eq.s32.totalorder %s15, 0
    %p42 = por %p40, %p41
    %s44 = sadd.s32 %s43, 1
    %p47 = scmp.eq.s32.totalorder %s9, 1
    %p48 = scmp.ne.s32.totalorder %s43, %s45
    %p49 = scmp.eq.s32.totalorder %s9, 0
    %p50 = por %p48, %p49
    %p51 = scmp.ne.s32.totalorder %s43, %s45
    %p52 = scmp.eq.s32.totalorder %s14, 1
    %p53 = por %p51, %p52
    %p54 = scmp.ne.s32.totalorder %s45, %s46
    %p55 = scmp.eq.s32.totalorder %s14, 0
    %p56 = por %p54, %p55
    %p57 = scmp.ne.s32.totalorder %s45, %s46
    %p58 = scmp.eq.s32.totalorder %s15, 1
    %p59 = por %p57, %p58
    %p61 = scmp.ne.s32.totalorder %s46, %s60
    %p62 = scmp.eq.s32.totalorder %s15, 0
    %p63 = por %p61, %p62
    %s65 = sadd.s32 %s64, 1
    %p68 = scmp.eq.s32.totalorder %s9, 1
    %p69 = scmp.ne.s32.totalorder %s64, %s66
    %p70 = scmp.eq.s32.totalorder %s9, 0
    %p71 = por %p69, %p70
    %p72 = scmp.ne.s32.totalorder %s64, %s66
    %p73 = scmp.eq.s32.totalorder %s14, 1
    %p74 = por %p72, %p73
    %p75 = scmp.ne.s32.totalorder %s66, %s67
    %p76 = scmp.eq.s32.totalorder %s14, 0
    %p77 = por %p75, %p76
    %p78 = scmp.ne.s32.totalorder %s66, %s67
    %p79 = scmp.eq.s32.totalorder %s15, 1
    %p80 = por %p78, %p79
    %p82 = scmp.ne.s32.totalorder %s67, %s81
    %p83 = scmp.eq.s32.totalorder %s15, 0
    %p84 = por %p82, %p83
    %s85 = ssub.s32 %s9, %s16
    %p86 = scmp.eq.s32.totalorder %s85, 0
    %s88 = sadd.s32 %s87, 1
    %s89 = scalar_select %p86, %s87, %s88
    %p92 = pneg %p86
    %p93 = scmp.eq.s32.totalorder %s9, 1
    %p94 = por %p92, %p93
    %p95 = scmp.ne.s32.totalorder %s87, %s90
    %p96 = scmp.eq.s32.totalorder %s9, 0
    %p97 = por %p95, %p96
    %p98 = scmp.ne.s32.totalorder %s87, %s90
    %p99 = scmp.eq.s32.totalorder %s14, 1
    %p100 = por %p98, %p99
    %p101 = scmp.ne.s32.totalorder %s90, %s91
    %p102 = scmp.eq.s32.totalorder %s14, 0
    %p103 = por %p101, %p102
    %p104 = scmp.ne.s32.totalorder %s90, %s91
    %p105 = scmp.eq.s32.totalorder %s15, 1
    %p106 = por %p104, %p105
    %p108 = scmp.ne.s32.totalorder %s91, %s107
    %p109 = scmp.eq.s32.totalorder %s15, 0
    %p110 = por %p108, %p109
    %p111 = scmp.le.s32.totalorder 1, %s9
    %p112 = scmp.lt.s32.totalorder %s9, 3
    %p113 = pnand %p111, %p112
    %p114 = pneg %p113
    // Predicated region
    $region9: #{vgg16_forward.35} parent=5 // pred_check
      _
    $region10: #{vgg16_forward.35} parent=5 // pred_check_branch
      %116 = sbr.rel (%p113) target = $region12
    $region11: #{vgg16_forward.35} parent=5 // pred_region
      %s117 = ssub.s32 %s9, 1
      // Predicated region
      $region13: #{vgg16_forward.35} parent=11 // pred_check
        %p118 = pneg %p56
      $region14: #{vgg16_forward.35} parent=11 // pred_check_branch
        %120 = sbr.rel (%p118) target = $region16
      $region15: #{vgg16_forward.35} parent=11 // pred_region
        _
      $region16: #{vgg16_forward.35} parent=11 // pred_fallthru
        _
      // Predicated region
      $region17: #{vgg16_forward.35} parent=11 // pred_check
        %p121 = pneg %p77
      $region18: #{vgg16_forward.35} parent=11 // pred_check_branch
        %123 = sbr.rel (%p121) target = $region20
      $region19: #{vgg16_forward.35} parent=11 // pred_region
        _
      $region20: #{vgg16_forward.35} parent=11 // pred_fallthru
        _
    $region12: #{vgg16_forward.35} parent=5 // pred_fallthru
      _
    %p124 = scmp.lt.s32.totalorder %s9, 2
    // Predicated region
    $region21: #{vgg16_forward.35} parent=5 // pred_check
      %p125 = pneg %p124
    $region22: #{vgg16_forward.35} parent=5 // pred_check_branch
      %127 = sbr.rel (%p125) target = $region24
    $region23: #{vgg16_forward.35} parent=5 // pred_region
      // Predicated region
      $region25: #{vgg16_forward.35} parent=23 // pred_check
        %p128 = pneg %p29
      $region26: #{vgg16_forward.35} parent=23 // pred_check_branch
        %130 = sbr.rel (%p128) target = $region28
      $region27: #{vgg16_forward.35} parent=23 // pred_region
        %p131 = scmp.lt.s32.totalorder %s9, 1
        %s132 = scalar_select %p131, %s9, 1
        %s133 = smul.addr %s132, 4
        %s134 = smul.addr %s133, 2
        %s135 = scalar_lea.vmem %s0, %s134
      $region28: #{vgg16_forward.35} parent=23 // pred_fallthru
        _
    $region24: #{vgg16_forward.35} parent=5 // pred_fallthru
      _
    %p136 = scmp.le.s32.totalorder 1, %s9
    %p137 = scmp.lt.s32.totalorder %s9, 3
    %p138 = pnand %p136, %p137
    %p139 = pneg %p138
    // Predicated region
    $region29: #{vgg16_forward.35} parent=5 // pred_check
      _
    $region30: #{vgg16_forward.35} parent=5 // pred_check_branch
      %141 = sbr.rel (%p138) target = $region32
    $region31: #{vgg16_forward.35} parent=5 // pred_region
      %s142 = ssub.s32 %s9, 1
      %p143 = scmp.lt.s32.totalorder %s14, 1
      %s144 = scalar_select %p143, %s14, 1
      %s145 = smul.addr %s144, 4
      %s146 = smul.addr %s145, 2
      %s147 = scalar_lea.vmem %s0, %s146
      %p148 = pneg %p35
      %p149 = pneg %p32
      %p150 = pneg %p56
      %p151 = pneg %p53
      %p152 = pneg %p77
      %p153 = pneg %p74
      %p154 = pneg %p103
      %p155 = pneg %p100
      %p156 = scmp.lt.s32.totalorder %s14, 1
      %s157 = scalar_select %p156, %s14, 1
      %s158 = smul.addr %s157, 2
      %s159 = scalar_lea.vmem %s3, %s158
      %p160 = scmp.lt.s32.totalorder %s14, 1
      %s161 = scalar_select %p160, %s14, 1
      %s162 = smul.addr %s161, 4
      %s163 = smul.addr %s162, 2
      %s164 = scalar_lea.vmem %s0, %s163
      %p165 = scmp.lt.s32.totalorder %s14, 1
      %s166 = scalar_select %p165, %s14, 1
      %s167 = smul.addr %s166, 2
      %s168 = scalar_lea.vmem %s3, %s167
      loop: start=0, step=1, limit=2
      $region33: #{vgg16_forward.35} parent=31 // loop_pre_header
        _
      $region34: #{vgg16_forward.35} parent=31 // loop_header
        %s171 = sphi 0, %s175
        %p172 = scmp.ge.s32.totalorder %s171, 2
      $region35: #{vgg16_forward.35} parent=31 // loop_header_branch
        %174 = sbr.rel (%p172) target = $region39
      $region36: #{vgg16_forward.35} parent=31 // loop_body
        %s176 = smul.addr %s171, 2
        %s177 = scalar_lea.vmem %s164, %s176
        %v178 = vld [vmem:[%s177] sm:$0x1]
        %v179 = vld [vmem:[%s1] sm:$0xf]
        %v180 = vld [vmem:[%s1 + $0x4] sm:$0xf]
        %v181 = vld [vmem:[%s1 + $0x8] sm:$0xf]
        %v182 = vld [vmem:[%s1 + $0xc] sm:$0xf]
        %v183 = vld [vmem:[%s1 + $0x10] sm:$0xf]
        %v184 = vld [vmem:[%s1 + $0x14] sm:$0xf]
        %v185 = vld [vmem:[%s1 + $0x18] sm:$0xf]
        %v186 = vld [vmem:[%s1 + $0x1c] sm:$0xf]
        %v187 = vld [vmem:[%s1 + $0x20] sm:$0xf]
        %v188 = vld [vmem:[%s1 + $0x24] sm:$0xf]
        %v189 = vld [vmem:[%s1 + $0x28] sm:$0xf]
        %v190 = vld [vmem:[%s1 + $0x2c] sm:$0xf]
        %v191 = vld [vmem:[%s1 + $0x30] sm:$0xf]
        %v192 = vld [vmem:[%s1 + $0x34] sm:$0xf]
        %v193 = vld [vmem:[%s1 + $0x38] sm:$0xf]
        %v194 = vld [vmem:[%s1 + $0x3c] sm:$0xf]
        %v195 = vld [vmem:[%s177] sm:$0x3]
        %s196 = scalar_lea.vmem %s1, 64
        %v197 = vld [vmem:[%s196] sm:$0xf]
        %v198 = vld [vmem:[%s196 + $0x4] sm:$0xf]
        %v199 = vld [vmem:[%s196 + $0x8] sm:$0xf]
        %v200 = vld [vmem:[%s196 + $0xc] sm:$0xf]
        %v201 = vld [vmem:[%s196 + $0x10] sm:$0xf]
        %v202 = vld [vmem:[%s196 + $0x14] sm:$0xf]
        %v203 = vld [vmem:[%s196 + $0x18] sm:$0xf]
        %v204 = vld [vmem:[%s196 + $0x1c] sm:$0xf]
        %v205 = vld [vmem:[%s196 + $0x20] sm:$0xf]
        %v206 = vld [vmem:[%s196 + $0x24] sm:$0xf]
        %v207 = vld [vmem:[%s196 + $0x28] sm:$0xf]
        %v208 = vld [vmem:[%s196 + $0x2c] sm:$0xf]
        %v209 = vld [vmem:[%s196 + $0x30] sm:$0xf]
        %v210 = vld [vmem:[%s196 + $0x34] sm:$0xf]
        %v211 = vld [vmem:[%s196 + $0x38] sm:$0xf]
        %v212 = vld [vmem:[%s196 + $0x3c] sm:$0xf]
        %v215 = vunpack.c.l.s4 1983009808
        %v216 = vunpack.c.0.s8 %v215
        %v217 = vlaneseq
        %v218 = vshrl.u32 %v217, 7
        %v219 = vsub.s32 %v216, %v218
        %v220 = vrot.slane %v195, %v219
        %v222 = vshrl.u32 %v220, 16
        %v224 = vshll.u32 %v220, 16
        %v226 = vrot.slane %v224, 1
        %v227 = vor.u32 %v222, %v226
        %v245 = vunpack.c.l.b16 %v197
        %v246 = vunpack.c.l.b16 %v198
        %v247 = vunpack.c.l.b16 %v199
        %v248 = vunpack.c.l.b16 %v200
        %v249 = vunpack.c.l.b16 %v201
        %v250 = vunpack.c.l.b16 %v202
        %v251 = vunpack.c.l.b16 %v203
        %v252 = vunpack.c.l.b16 %v204
        %v253 = vunpack.c.l.b16 %v205
        %v254 = vunpack.c.l.b16 %v206
        %v255 = vunpack.c.l.b16 %v207
        %v256 = vunpack.c.l.b16 %v208
        %v257 = vunpack.c.l.b16 %v209
        %v258 = vunpack.c.l.b16 %v210
        %v259 = vunpack.c.l.b16 %v211
        %v260 = vunpack.c.l.b16 %v212
        %v261 = vpack.c.b16 %v246, %v245
        %v262 = vpack.c.b16 %v248, %v247
        %v263 = vpack.c.b16 %v250, %v249
        %v264 = vpack.c.b16 %v252, %v251
        %v265 = vpack.c.b16 %v254, %v253
        %v266 = vpack.c.b16 %v256, %v255
        %v267 = vpack.c.b16 %v258, %v257
        %v268 = vpack.c.b16 %v260, %v259
        %277 = vmatprep.subr.bf16.mxu0 0
        %278 = vmatpush1.bf16.msra.mxu0 %v261
        %279 = vmatprep.subr.bf16.mxu0 0
        %280 = vmatpush1.bf16.msra.mxu0 %v262
        %281 = vmatprep.subr.bf16.mxu0 0
        %282 = vmatpush1.bf16.msra.mxu0 %v263
        %283 = vmatprep.subr.bf16.mxu0 0
        %284 = vmatpush1.bf16.msra.mxu0 %v264
        %285 = vmatprep.subr.bf16.mxu0 0
        %286 = vmatpush1.bf16.msra.mxu0 %v265
        %287 = vmatprep.subr.bf16.mxu0 0
        %288 = vmatpush1.bf16.msra.mxu0 %v266
        %289 = vmatprep.subr.bf16.mxu0 0
        %290 = vmatpush1.bf16.msra.mxu0 %v267
        %291 = vmatprep.subr.bf16.mxu0 0
        %292 = vmatpush1.bf16.msra.mxu0 %v268
        %293 = vmatprep.subr.bf16.mxu0 0
        %294 = vmatpush1.bf16.msra.mxu0 0
        %295 = vmatprep.subr.bf16.mxu0 0
        %296 = vmatpush1.bf16.msra.mxu0 0
        %297 = vmatprep.subr.bf16.mxu0 0
        %298 = vmatpush1.bf16.msra.mxu0 0
        %299 = vmatprep.subr.bf16.mxu0 0
        %300 = vmatpush1.bf16.msra.mxu0 0
        %301 = vmatprep.subr.bf16.mxu0 0
        %302 = vmatpush1.bf16.msra.mxu0 0
        %303 = vmatprep.subr.bf16.mxu0 0
        %304 = vmatpush1.bf16.msra.mxu0 0
        %305 = vmatprep.subr.bf16.mxu0 0
        %306 = vmatpush1.bf16.msra.mxu0 0
        %307 = vmatprep.subr.bf16.mxu0 0
        %308 = vmatpush1.bf16.msra.mxu0 0
        %309 = vmatprep.mubr.bf16.mxu0 0
        %310 = vmatmul.mubr.bf16.gmra.mrb[0].mxu0 %v227
        %v311 = vpop.f32.mrb[0].mxu0
        %v312 = vadd.f32 0.0, %v311
        %v313 = vpop.f32.mrb[0].mxu0
        %v314 = vpop.f32.mrb[0].mxu0
        %v315 = vpop.f32.mrb[0].mxu0
        %316 = vdwg.mxu0
        %v333 = vunpack.c.l.b16 %v179
        %v334 = vunpack.c.l.b16 %v180
        %v335 = vunpack.c.l.b16 %v181
        %v336 = vunpack.c.l.b16 %v182
        %v337 = vunpack.c.l.b16 %v183
        %v338 = vunpack.c.l.b16 %v184
        %v339 = vunpack.c.l.b16 %v185
        %v340 = vunpack.c.l.b16 %v186
        %v341 = vunpack.c.l.b16 %v187
        %v342 = vunpack.c.l.b16 %v188
        %v343 = vunpack.c.l.b16 %v189
        %v344 = vunpack.c.l.b16 %v190
        %v345 = vunpack.c.l.b16 %v191
        %v346 = vunpack.c.l.b16 %v192
        %v347 = vunpack.c.l.b16 %v193
        %v348 = vunpack.c.l.b16 %v194
        %v349 = vpack.c.b16 %v334, %v333
        %v350 = vpack.c.b16 %v336, %v335
        %v351 = vpack.c.b16 %v338, %v337
        %v352 = vpack.c.b16 %v340, %v339
        %v353 = vpack.c.b16 %v342, %v341
        %v354 = vpack.c.b16 %v344, %v343
        %v355 = vpack.c.b16 %v346, %v345
        %v356 = vpack.c.b16 %v348, %v347
        %365 = vmatprep.subr.bf16.mxu0 0
        %366 = vmatpush1.bf16.msra.mxu0 %v349
        %367 = vmatprep.subr.bf16.mxu0 0
        %368 = vmatpush1.bf16.msra.mxu0 %v350
        %369 = vmatprep.subr.bf16.mxu0 0
        %370 = vmatpush1.bf16.msra.mxu0 %v351
        %371 = vmatprep.subr.bf16.mxu0 0
        %372 = vmatpush1.bf16.msra.mxu0 %v352
        %373 = vmatprep.subr.bf16.mxu0 0
        %374 = vmatpush1.bf16.msra.mxu0 %v353
        %375 = vmatprep.subr.bf16.mxu0 0
        %376 = vmatpush1.bf16.msra.mxu0 %v354
        %377 = vmatprep.subr.bf16.mxu0 0
        %378 = vmatpush1.bf16.msra.mxu0 %v355
        %379 = vmatprep.subr.bf16.mxu0 0
        %380 = vmatpush1.bf16.msra.mxu0 %v356
        %381 = vmatprep.subr.bf16.mxu0 0
        %382 = vmatpush1.bf16.msra.mxu0 0
        %383 = vmatprep.subr.bf16.mxu0 0
        %384 = vmatpush1.bf16.msra.mxu0 0
        %385 = vmatprep.subr.bf16.mxu0 0
        %386 = vmatpush1.bf16.msra.mxu0 0
        %387 = vmatprep.subr.bf16.mxu0 0
        %388 = vmatpush1.bf16.msra.mxu0 0
        %389 = vmatprep.subr.bf16.mxu0 0
        %390 = vmatpush1.bf16.msra.mxu0 0
        %391 = vmatprep.subr.bf16.mxu0 0
        %392 = vmatpush1.bf16.msra.mxu0 0
        %393 = vmatprep.subr.bf16.mxu0 0
        %394 = vmatpush1.bf16.msra.mxu0 0
        %395 = vmatprep.subr.bf16.mxu0 0
        %396 = vmatpush1.bf16.msra.mxu0 0
        %397 = vmatprep.mubr.bf16.mxu0 0
        %398 = vmatmul.mubr.bf16.gmra.mrb[0].mxu0 %v178
        %v399 = vpop.f32.mrb[0].mxu0
        %v400 = vadd.f32 %v312, %v399
        %v401 = vpop.f32.mrb[0].mxu0
        %v402 = vpop.f32.mrb[0].mxu0
        %v403 = vpop.f32.mrb[0].mxu0
        %404 = vdwg.mxu0
        %v405 = vld [vmem:[%s177] sm:$0x2]
        %s406 = scalar_lea.vmem %s1, 128
        %v407 = vld [vmem:[%s406] sm:$0xf]
        %v408 = vld [vmem:[%s406 + $0x4] sm:$0xf]
        %v409 = vld [vmem:[%s406 + $0x8] sm:$0xf]
        %v410 = vld [vmem:[%s406 + $0xc] sm:$0xf]
        %v411 = vld [vmem:[%s406 + $0x10] sm:$0xf]
        %v412 = vld [vmem:[%s406 + $0x14] sm:$0xf]
        %v413 = vld [vmem:[%s406 + $0x18] sm:$0xf]
        %v414 = vld [vmem:[%s406 + $0x1c] sm:$0xf]
        %v415 = vld [vmem:[%s406 + $0x20] sm:$0xf]
        %v416 = vld [vmem:[%s406 + $0x24] sm:$0xf]
        %v417 = vld [vmem:[%s406 + $0x28] sm:$0xf]
        %v418 = vld [vmem:[%s406 + $0x2c] sm:$0xf]
        %v419 = vld [vmem:[%s406 + $0x30] sm:$0xf]
        %v420 = vld [vmem:[%s406 + $0x34] sm:$0xf]
        %v421 = vld [vmem:[%s406 + $0x38] sm:$0xf]
        %v422 = vld [vmem:[%s406 + $0x3c] sm:$0xf]
        %v425 = vunpack.c.l.s4 1983009808
        %v426 = vunpack.c.0.s8 %v425
        %v427 = vlaneseq
        %v428 = vshrl.u32 %v427, 7
        %v429 = vsub.s32 %v426, %v428
        %v430 = vrot.slane %v405, %v429
        %v431 = vrot.slane %v430, 1
        %v449 = vunpack.c.l.b16 %v407
        %v450 = vunpack.c.l.b16 %v408
        %v451 = vunpack.c.l.b16 %v409
        %v452 = vunpack.c.l.b16 %v410
        %v453 = vunpack.c.l.b16 %v411
        %v454 = vunpack.c.l.b16 %v412
        %v455 = vunpack.c.l.b16 %v413
        %v456 = vunpack.c.l.b16 %v414
        %v457 = vunpack.c.l.b16 %v415
        %v458 = vunpack.c.l.b16 %v416
        %v459 = vunpack.c.l.b16 %v417
        %v460 = vunpack.c.l.b16 %v418
        %v461 = vunpack.c.l.b16 %v419
        %v462 = vunpack.c.l.b16 %v420
        %v463 = vunpack.c.l.b16 %v421
        %v464 = vunpack.c.l.b16 %v422
        %v465 = vpack.c.b16 %v450, %v449
        %v466 = vpack.c.b16 %v452, %v451
        %v467 = vpack.c.b16 %v454, %v453
        %v468 = vpack.c.b16 %v456, %v455
        %v469 = vpack.c.b16 %v458, %v457
        %v470 = vpack.c.b16 %v460, %v459
        %v471 = vpack.c.b16 %v462, %v461
        %v472 = vpack.c.b16 %v464, %v463
        %481 = vmatprep.subr.bf16.mxu0 0
        %482 = vmatpush1.bf16.msra.mxu0 %v465
        %483 = vmatprep.subr.bf16.mxu0 0
        %484 = vmatpush1.bf16.msra.mxu0 %v466
        %485 = vmatprep.subr.bf16.mxu0 0
        %486 = vmatpush1.bf16.msra.mxu0 %v467
        %487 = vmatprep.subr.bf16.mxu0 0
        %488 = vmatpush1.bf16.msra.mxu0 %v468
        %489 = vmatprep.subr.bf16.mxu0 0
        %490 = vmatpush1.bf16.msra.mxu0 %v469
        %491 = vmatprep.subr.bf16.mxu0 0
        %492 = vmatpush1.bf16.msra.mxu0 %v470
        %493 = vmatprep.subr.bf16.mxu0 0
        %494 = vmatpush1.bf16.msra.mxu0 %v471
        %495 = vmatprep.subr.bf16.mxu0 0
        %496 = vmatpush1.bf16.msra.mxu0 %v472
        %497 = vmatprep.subr.bf16.mxu0 0
        %498 = vmatpush1.bf16.msra.mxu0 0
        %499 = vmatprep.subr.bf16.mxu0 0
        %500 = vmatpush1.bf16.msra.mxu0 0
        %501 = vmatprep.subr.bf16.mxu0 0
        %502 = vmatpush1.bf16.msra.mxu0 0
        %503 = vmatprep.subr.bf16.mxu0 0
        %504 = vmatpush1.bf16.msra.mxu0 0
        %505 = vmatprep.subr.bf16.mxu0 0
        %506 = vmatpush1.bf16.msra.mxu0 0
        %507 = vmatprep.subr.bf16.mxu0 0
        %508 = vmatpush1.bf16.msra.mxu0 0
        %509 = vmatprep.subr.bf16.mxu0 0
        %510 = vmatpush1.bf16.msra.mxu0 0
        %511 = vmatprep.subr.bf16.mxu0 0
        %512 = vmatpush1.bf16.msra.mxu0 0
        %513 = vmatprep.mubr.bf16.mxu0 0
        %514 = vmatmul.mubr.bf16.gmra.mrb[0].mxu0 %v431
        %v515 = vpop.f32.mrb[0].mxu0
        %v516 = vadd.f32 0.0, %v515
        %v517 = vpop.f32.mrb[0].mxu0
        %v518 = vpop.f32.mrb[0].mxu0
        %v519 = vpop.f32.mrb[0].mxu0
        %520 = vdwg.mxu0
        %v521 = vadd.f32 %v400, %v516
        %s522 = sadd.s32 %s171, 1
        %s523 = smul.addr %s522, 2
        %s524 = scalar_lea.vmem %s164, %s523
        %v525 = vld [vmem:[%s524] sm:$0x1]
        %s526 = scalar_lea.vmem %s1, 192
        %v527 = vld [vmem:[%s526] sm:$0xf]
        %v528 = vld [vmem:[%s526 + $0x4] sm:$0xf]
        %v529 = vld [vmem:[%s526 + $0x8] sm:$0xf]
        %v530 = vld [vmem:[%s526 + $0xc] sm:$0xf]
        %v531 = vld [vmem:[%s526 + $0x10] sm:$0xf]
        %v532 = vld [vmem:[%s526 + $0x14] sm:$0xf]
        %v533 = vld [vmem:[%s526 + $0x18] sm:$0xf]
        %v534 = vld [vmem:[%s526 + $0x1c] sm:$0xf]
        %v535 = vld [vmem:[%s526 + $0x20] sm:$0xf]
        %v536 = vld [vmem:[%s526 + $0x24] sm:$0xf]
        %v537 = vld [vmem:[%s526 + $0x28] sm:$0xf]
        %v538 = vld [vmem:[%s526 + $0x2c] sm:$0xf]
        %v539 = vld [vmem:[%s526 + $0x30] sm:$0xf]
        %v540 = vld [vmem:[%s526 + $0x34] sm:$0xf]
        %v541 = vld [vmem:[%s526 + $0x38] sm:$0xf]
        %v542 = vld [vmem:[%s526 + $0x3c] sm:$0xf]
        %v559 = vunpack.c.l.b16 %v527
        %v560 = vunpack.c.l.b16 %v528
        %v561 = vunpack.c.l.b16 %v529
        %v562 = vunpack.c.l.b16 %v530
        %v563 = vunpack.c.l.b16 %v531
        %v564 = vunpack.c.l.b16 %v532
        %v565 = vunpack.c.l.b16 %v533
        %v566 = vunpack.c.l.b16 %v534
        %v567 = vunpack.c.l.b16 %v535
        %v568 = vunpack.c.l.b16 %v536
        %v569 = vunpack.c.l.b16 %v537
        %v570 = vunpack.c.l.b16 %v538
        %v571 = vunpack.c.l.b16 %v539
        %v572 = vunpack.c.l.b16 %v540
        %v573 = vunpack.c.l.b16 %v541
        %v574 = vunpack.c.l.b16 %v542
        %v575 = vpack.c.b16 %v560, %v559
        %v576 = vpack.c.b16 %v562, %v561
        %v577 = vpack.c.b16 %v564, %v563
        %v578 = vpack.c.b16 %v566, %v565
        %v579 = vpack.c.b16 %v568, %v567
        %v580 = vpack.c.b16 %v570, %v569
        %v581 = vpack.c.b16 %v572, %v571
        %v582 = vpack.c.b16 %v574, %v573
        %591 = vmatprep.subr.bf16.mxu0 0
        %592 = vmatpush1.bf16.msra.mxu0 %v575
        %593 = vmatprep.subr.bf16.mxu0 0
        %594 = vmatpush1.bf16.msra.mxu0 %v576
        %595 = vmatprep.subr.bf16.mxu0 0
        %596 = vmatpush1.bf16.msra.mxu0 %v577
        %597 = vmatprep.subr.bf16.mxu0 0
        %598 = vmatpush1.bf16.msra.mxu0 %v578
        %599 = vmatprep.subr.bf16.mxu0 0
        %600 = vmatpush1.bf16.msra.mxu0 %v579
        %601 = vmatprep.subr.bf16.mxu0 0
        %602 = vmatpush1.bf16.msra.mxu0 %v580
        %603 = vmatprep.subr.bf16.mxu0 0
        %604 = vmatpush1.bf16.msra.mxu0 %v581
        %605 = vmatprep.subr.bf16.mxu0 0
        %606 = vmatpush1.bf16.msra.mxu0 %v582
        %607 = vmatprep.subr.bf16.mxu0 0
        %608 = vmatpush1.bf16.msra.mxu0 0
        %609 = vmatprep.subr.bf16.mxu0 0
        %610 = vmatpush1.bf16.msra.mxu0 0
        %611 = vmatprep.subr.bf16.mxu0 0
        %612 = vmatpush1.bf16.msra.mxu0 0
        %613 = vmatprep.subr.bf16.mxu0 0
        %614 = vmatpush1.bf16.msra.mxu0 0
        %615 = vmatprep.subr.bf16.mxu0 0
        %616 = vmatpush1.bf16.msra.mxu0 0
        %617 = vmatprep.subr.bf16.mxu0 0
        %618 = vmatpush1.bf16.msra.mxu0 0
        %619 = vmatprep.subr.bf16.mxu0 0
        %620 = vmatpush1.bf16.msra.mxu0 0
        %621 = vmatprep.subr.bf16.mxu0 0
        %622 = vmatpush1.bf16.msra.mxu0 0
        %623 = vmatprep.mubr.bf16.mxu0 0
        %624 = vmatmul.mubr.bf16.gmra.mrb[0].mxu0 %v525
        %v625 = vpop.f32.mrb[0].mxu0
        %v626 = vadd.f32 0.0, %v625
        %v627 = vpop.f32.mrb[0].mxu0
        %v628 = vpop.f32.mrb[0].mxu0
        %v629 = vpop.f32.mrb[0].mxu0
        %630 = vdwg.mxu0
        %v631 = vadd.f32 %v521, %v626
        %v632 = vld [vmem:[%s524] sm:$0x3]
        %s633 = scalar_lea.vmem %s1, 256
        %v634 = vld [vmem:[%s633] sm:$0xf]
        %v635 = vld [vmem:[%s633 + $0x4] sm:$0xf]
        %v636 = vld [vmem:[%s633 + $0x8] sm:$0xf]
        %v637 = vld [vmem:[%s633 + $0xc] sm:$0xf]
        %v638 = vld [vmem:[%s633 + $0x10] sm:$0xf]
        %v639 = vld [vmem:[%s633 + $0x14] sm:$0xf]
        %v640 = vld [vmem:[%s633 + $0x18] sm:$0xf]
        %v641 = vld [vmem:[%s633 + $0x1c] sm:$0xf]
        %v642 = vld [vmem:[%s633 + $0x20] sm:$0xf]
        %v643 = vld [vmem:[%s633 + $0x24] sm:$0xf]
        %v644 = vld [vmem:[%s633 + $0x28] sm:$0xf]
        %v645 = vld [vmem:[%s633 + $0x2c] sm:$0xf]
        %v646 = vld [vmem:[%s633 + $0x30] sm:$0xf]
        %v647 = vld [vmem:[%s633 + $0x34] sm:$0xf]
        %v648 = vld [vmem:[%s633 + $0x38] sm:$0xf]
        %v649 = vld [vmem:[%s633 + $0x3c] sm:$0xf]
        %v652 = vunpack.c.l.s4 1983009808
        %v653 = vunpack.c.0.s8 %v652
        %v654 = vlaneseq
        %v655 = vshrl.u32 %v654, 7
        %v656 = vsub.s32 %v653, %v655
        %v657 = vrot.slane %v632, %v656
        %v659 = vshrl.u32 %v657, 16
        %v661 = vshll.u32 %v657, 16
        %v663 = vrot.slane %v661, 1
        %v664 = vor.u32 %v659, %v663
        %v682 = vunpack.c.l.b16 %v634
        %v683 = vunpack.c.l.b16 %v635
        %v684 = vunpack.c.l.b16 %v636
        %v685 = vunpack.c.l.b16 %v637
        %v686 = vunpack.c.l.b16 %v638
        %v687 = vunpack.c.l.b16 %v639
        %v688 = vunpack.c.l.b16 %v640
        %v689 = vunpack.c.l.b16 %v641
        %v690 = vunpack.c.l.b16 %v642
        %v691 = vunpack.c.l.b16 %v643
        %v692 = vunpack.c.l.b16 %v644
        %v693 = vunpack.c.l.b16 %v645
        %v694 = vunpack.c.l.b16 %v646
        %v695 = vunpack.c.l.b16 %v647
        %v696 = vunpack.c.l.b16 %v648
        %v697 = vunpack.c.l.b16 %v649
        %v698 = vpack.c.b16 %v683, %v682
        %v699 = vpack.c.b16 %v685, %v684
        %v700 = vpack.c.b16 %v687, %v686
        %v701 = vpack.c.b16 %v689, %v688
        %v702 = vpack.c.b16 %v691, %v690
        %v703 = vpack.c.b16 %v693, %v692
        %v704 = vpack.c.b16 %v695, %v694
        %v705 = vpack.c.b16 %v697, %v696
        %714 = vmatprep.subr.bf16.mxu0 0
        %715 = vmatpush1.bf16.msra.mxu0 %v698
        %716 = vmatprep.subr.bf16.mxu0 0
        %717 = vmatpush1.bf16.msra.mxu0 %v699
        %718 = vmatprep.subr.bf16.mxu0 0
        %719 = vmatpush1.bf16.msra.mxu0 %v700
        %720 = vmatprep.subr.bf16.mxu0 0
        %721 = vmatpush1.bf16.msra.mxu0 %v701
        %722 = vmatprep.subr.bf16.mxu0 0
        %723 = vmatpush1.bf16.msra.mxu0 %v702
        %724 = vmatprep.subr.bf16.mxu0 0
        %725 = vmatpush1.bf16.msra.mxu0 %v703
        %726 = vmatprep.subr.bf16.mxu0 0
        %727 = vmatpush1.bf16.msra.mxu0 %v704
        %728 = vmatprep.subr.bf16.mxu0 0
        %729 = vmatpush1.bf16.msra.mxu0 %v705
        %730 = vmatprep.subr.bf16.mxu0 0
        %731 = vmatpush1.bf16.msra.mxu0 0
        %732 = vmatprep.subr.bf16.mxu0 0
        %733 = vmatpush1.bf16.msra.mxu0 0
        %734 = vmatprep.subr.bf16.mxu0 0
        %735 = vmatpush1.bf16.msra.mxu0 0
        %736 = vmatprep.subr.bf16.mxu0 0
        %737 = vmatpush1.bf16.msra.mxu0 0
        %738 = vmatprep.subr.bf16.mxu0 0
        %739 = vmatpush1.bf16.msra.mxu0 0
        %740 = vmatprep.subr.bf16.mxu0 0
        %741 = vmatpush1.bf16.msra.mxu0 0
        %742 = vmatprep.subr.bf16.mxu0 0
        %743 = vmatpush1.bf16.msra.mxu0 0
        %744 = vmatprep.subr.bf16.mxu0 0
        %745 = vmatpush1.bf16.msra.mxu0 0
        %746 = vmatprep.mubr.bf16.mxu0 0
        %747 = vmatmul.mubr.bf16.gmra.mrb[0].mxu0 %v664
        %v748 = vpop.f32.mrb[0].mxu0
        %v749 = vadd.f32 0.0, %v748
        %v750 = vpop.f32.mrb[0].mxu0
        %v751 = vpop.f32.mrb[0].mxu0
        %v752 = vpop.f32.mrb[0].mxu0
        %753 = vdwg.mxu0
        %v754 = vadd.f32 %v631, %v749
        %v755 = vld [vmem:[%s524] sm:$0x2]
        %s756 = scalar_lea.vmem %s1, 320
        %v757 = vld [vmem:[%s756] sm:$0xf]
        %v758 = vld [vmem:[%s756 + $0x4] sm:$0xf]
        %v759 = vld [vmem:[%s756 + $0x8] sm:$0xf]
        %v760 = vld [vmem:[%s756 + $0xc] sm:$0xf]
        %v761 = vld [vmem:[%s756 + $0x10] sm:$0xf]
        %v762 = vld [vmem:[%s756 + $0x14] sm:$0xf]
        %v763 = vld [vmem:[%s756 + $0x18] sm:$0xf]
        %v764 = vld [vmem:[%s756 + $0x1c] sm:$0xf]
        %v765 = vld [vmem:[%s756 + $0x20] sm:$0xf]
        %v766 = vld [vmem:[%s756 + $0x24] sm:$0xf]
        %v767 = vld [vmem:[%s756 + $0x28] sm:$0xf]
        %v768 = vld [vmem:[%s756 + $0x2c] sm:$0xf]
        %v769 = vld [vmem:[%s756 + $0x30] sm:$0xf]
        %v770 = vld [vmem:[%s756 + $0x34] sm:$0xf]
        %v771 = vld [vmem:[%s756 + $0x38] sm:$0xf]
        %v772 = vld [vmem:[%s756 + $0x3c] sm:$0xf]
        %v775 = vunpack.c.l.s4 1983009808
        %v776 = vunpack.c.0.s8 %v775
        %v777 = vlaneseq
        %v778 = vshrl.u32 %v777, 7
        %v779 = vsub.s32 %v776, %v778
        %v780 = vrot.slane %v755, %v779
        %v781 = vrot.slane %v780, 1
        %v799 = vunpack.c.l.b16 %v757
        %v800 = vunpack.c.l.b16 %v758
        %v801 = vunpack.c.l.b16 %v759
        %v802 = vunpack.c.l.b16 %v760
        %v803 = vunpack.c.l.b16 %v761
        %v804 = vunpack.c.l.b16 %v762
        %v805 = vunpack.c.l.b16 %v763
        %v806 = vunpack.c.l.b16 %v764
        %v807 = vunpack.c.l.b16 %v765
        %v808 = vunpack.c.l.b16 %v766
        %v809 = vunpack.c.l.b16 %v767
        %v810 = vunpack.c.l.b16 %v768
        %v811 = vunpack.c.l.b16 %v769
        %v812 = vunpack.c.l.b16 %v770
        %v813 = vunpack.c.l.b16 %v771
        %v814 = vunpack.c.l.b16 %v772
        %v815 = vpack.c.b16 %v800, %v799
        %v816 = vpack.c.b16 %v802, %v801
        %v817 = vpack.c.b16 %v804, %v803
        %v818 = vpack.c.b16 %v806, %v805
        %v819 = vpack.c.b16 %v808, %v807
        %v820 = vpack.c.b16 %v810, %v809
        %v821 = vpack.c.b16 %v812, %v811
        %v822 = vpack.c.b16 %v814, %v813
        %831 = vmatprep.subr.bf16.mxu0 0
        %832 = vmatpush1.bf16.msra.mxu0 %v815
        %833 = vmatprep.subr.bf16.mxu0 0
        %834 = vmatpush1.bf16.msra.mxu0 %v816
        %835 = vmatprep.subr.bf16.mxu0 0
        %836 = vmatpush1.bf16.msra.mxu0 %v817
        %837 = vmatprep.subr.bf16.mxu0 0
        %838 = vmatpush1.bf16.msra.mxu0 %v818
        %839 = vmatprep.subr.bf16.mxu0 0
        %840 = vmatpush1.bf16.msra.mxu0 %v819
        %841 = vmatprep.subr.bf16.mxu0 0
        %842 = vmatpush1.bf16.msra.mxu0 %v820
        %843 = vmatprep.subr.bf16.mxu0 0
        %844 = vmatpush1.bf16.msra.mxu0 %v821
        %845 = vmatprep.subr.bf16.mxu0 0
        %846 = vmatpush1.bf16.msra.mxu0 %v822
        %847 = vmatprep.subr.bf16.mxu0 0
        %848 = vmatpush1.bf16.msra.mxu0 0
        %849 = vmatprep.subr.bf16.mxu0 0
        %850 = vmatpush1.bf16.msra.mxu0 0
        %851 = vmatprep.subr.bf16.mxu0 0
        %852 = vmatpush1.bf16.msra.mxu0 0
        %853 = vmatprep.subr.bf16.mxu0 0
        %854 = vmatpush1.bf16.msra.mxu0 0
        %855 = vmatprep.subr.bf16.mxu0 0
        %856 = vmatpush1.bf16.msra.mxu0 0
        %857 = vmatprep.subr.bf16.mxu0 0
        %858 = vmatpush1.bf16.msra.mxu0 0
        %859 = vmatprep.subr.bf16.mxu0 0
        %860 = vmatpush1.bf16.msra.mxu0 0
        %861 = vmatprep.subr.bf16.mxu0 0
        %862 = vmatpush1.bf16.msra.mxu0 0
        %863 = vmatprep.mubr.bf16.mxu0 0
        %864 = vmatmul.mubr.bf16.gmra.mrb[0].mxu0 %v781
        %v865 = vpop.f32.mrb[0].mxu0
        %v866 = vadd.f32 0.0, %v865
        %v867 = vpop.f32.mrb[0].mxu0
        %v868 = vpop.f32.mrb[0].mxu0
        %v869 = vpop.f32.mrb[0].mxu0
        %870 = vdwg.mxu0
        %v871 = vadd.f32 %v754, %v866
        %s872 = sadd.s32 %s171, 2
        %s873 = smul.addr %s872, 2
        %s874 = scalar_lea.vmem %s164, %s873
        %v875 = vld [vmem:[%s874] sm:$0x1]
        %s876 = scalar_lea.vmem %s1, 384
        %v877 = vld [vmem:[%s876] sm:$0xf]
        %v878 = vld [vmem:[%s876 + $0x4] sm:$0xf]
        %v879 = vld [vmem:[%s876 + $0x8] sm:$0xf]
        %v880 = vld [vmem:[%s876 + $0xc] sm:$0xf]
        %v881 = vld [vmem:[%s876 + $0x10] sm:$0xf]
        %v882 = vld [vmem:[%s876 + $0x14] sm:$0xf]
        %v883 = vld [vmem:[%s876 + $0x18] sm:$0xf]
        %v884 = vld [vmem:[%s876 + $0x1c] sm:$0xf]
        %v885 = vld [vmem:[%s876 + $0x20] sm:$0xf]
        %v886 = vld [vmem:[%s876 + $0x24] sm:$0xf]
        %v887 = vld [vmem:[%s876 + $0x28] sm:$0xf]
        %v888 = vld [vmem:[%s876 + $0x2c] sm:$0xf]
        %v889 = vld [vmem:[%s876 + $0x30] sm:$0xf]
        %v890 = vld [vmem:[%s876 + $0x34] sm:$0xf]
        %v891 = vld [vmem:[%s876 + $0x38] sm:$0xf]
        %v892 = vld [vmem:[%s876 + $0x3c] sm:$0xf]
        %v909 = vunpack.c.l.b16 %v877
        %v910 = vunpack.c.l.b16 %v878
        %v911 = vunpack.c.l.b16 %v879
        %v912 = vunpack.c.l.b16 %v880
        %v913 = vunpack.c.l.b16 %v881
        %v914 = vunpack.c.l.b16 %v882
        %v915 = vunpack.c.l.b16 %v883
        %v916 = vunpack.c.l.b16 %v884
        %v917 = vunpack.c.l.b16 %v885
        %v918 = vunpack.c.l.b16 %v886
        %v919 = vunpack.c.l.b16 %v887
        %v920 = vunpack.c.l.b16 %v888
        %v921 = vunpack.c.l.b16 %v889
        %v922 = vunpack.c.l.b16 %v890
        %v923 = vunpack.c.l.b16 %v891
        %v924 = vunpack.c.l.b16 %v892
        %v925 = vpack.c.b16 %v910, %v909
        %v926 = vpack.c.b16 %v912, %v911
        %v927 = vpack.c.b16 %v914, %v913
        %v928 = vpack.c.b16 %v916, %v915
        %v929 = vpack.c.b16 %v918, %v917
        %v930 = vpack.c.b16 %v920, %v919
        %v931 = vpack.c.b16 %v922, %v921
        %v932 = vpack.c.b16 %v924, %v923
        %941 = vmatprep.subr.bf16.mxu0 0
        %942 = vmatpush1.bf16.msra.mxu0 %v925
        %943 = vmatprep.subr.bf16.mxu0 0
        %944 = vmatpush1.bf16.msra.mxu0 %v926
        %945 = vmatprep.subr.bf16.mxu0 0
        %946 = vmatpush1.bf16.msra.mxu0 %v927
        %947 = vmatprep.subr.bf16.mxu0 0
        %948 = vmatpush1.bf16.msra.mxu0 %v928
        %949 = vmatprep.subr.bf16.mxu0 0
        %950 = vmatpush1.bf16.msra.mxu0 %v929
        %951 = vmatprep.subr.bf16.mxu0 0
        %952 = vmatpush1.bf16.msra.mxu0 %v930
        %953 = vmatprep.subr.bf16.mxu0 0
        %954 = vmatpush1.bf16.msra.mxu0 %v931
        %955 = vmatprep.subr.bf16.mxu0 0
        %956 = vmatpush1.bf16.msra.mxu0 %v932
        %957 = vmatprep.subr.bf16.mxu0 0
        %958 = vmatpush1.bf16.msra.mxu0 0
        %959 = vmatprep.subr.bf16.mxu0 0
        %960 = vmatpush1.bf16.msra.mxu0 0
        %961 = vmatprep.subr.bf16.mxu0 0
        %962 = vmatpush1.bf16.msra.mxu0 0
        %963 = vmatprep.subr.bf16.mxu0 0
        %964 = vmatpush1.bf16.msra.mxu0 0
        %965 = vmatprep.subr.bf16.mxu0 0
        %966 = vmatpush1.bf16.msra.mxu0 0
        %967 = vmatprep.subr.bf16.mxu0 0
        %968 = vmatpush1.bf16.msra.mxu0 0
        %969 = vmatprep.subr.bf16.mxu0 0
        %970 = vmatpush1.bf16.msra.mxu0 0
        %971 = vmatprep.subr.bf16.mxu0 0
        %972 = vmatpush1.bf16.msra.mxu0 0
        %973 = vmatprep.mubr.bf16.mxu0 0
        %974 = vmatmul.mubr.bf16.gmra.mrb[0].mxu0 %v875
        %v975 = vpop.f32.mrb[0].mxu0
        %v976 = vadd.f32 0.0, %v975
        %v977 = vpop.f32.mrb[0].mxu0
        %v978 = vpop.f32.mrb[0].mxu0
        %v979 = vpop.f32.mrb[0].mxu0
        %980 = vdwg.mxu0
        %v981 = vadd.f32 %v871, %v976
        %v982 = vld [vmem:[%s874] sm:$0x3]
        %s983 = scalar_lea.vmem %s1, 448
        %v984 = vld [vmem:[%s983] sm:$0xf]
        %v985 = vld [vmem:[%s983 + $0x4] sm:$0xf]
        %v986 = vld [vmem:[%s983 + $0x8] sm:$0xf]
        %v987 = vld [vmem:[%s983 + $0xc] sm:$0xf]
        %v988 = vld [vmem:[%s983 + $0x10] sm:$0xf]
        %v989 = vld [vmem:[%s983 + $0x14] sm:$0xf]
        %v990 = vld [vmem:[%s983 + $0x18] sm:$0xf]
        %v991 = vld [vmem:[%s983 + $0x1c] sm:$0xf]
        %v992 = vld [vmem:[%s983 + $0x20] sm:$0xf]
        %v993 = vld [vmem:[%s983 + $0x24] sm:$0xf]
        %v994 = vld [vmem:[%s983 + $0x28] sm:$0xf]
        %v995 = vld [vmem:[%s983 + $0x2c] sm:$0xf]
        %v996 = vld [vmem:[%s983 + $0x30] sm:$0xf]
        %v997 = vld [vmem:[%s983 + $0x34] sm:$0xf]
        %v998 = vld [vmem:[%s983 + $0x38] sm:$0xf]
        %v999 = vld [vmem:[%s983 + $0x3c] sm:$0xf]
        %v1002 = vunpack.c.l.s4 1983009808
        %v1003 = vunpack.c.0.s8 %v1002
        %v1004 = vlaneseq
        %v1005 = vshrl.u32 %v1004, 7
        %v1006 = vsub.s32 %v1003, %v1005
        %v1007 = vrot.slane %v982, %v1006
        %v1009 = vshrl.u32 %v1007, 16
        %v1011 = vshll.u32 %v1007, 16
        %v1013 = vrot.slane %v1011, 1
        %v1014 = vor.u32 %v1009, %v1013
        %v1032 = vunpack.c.l.b16 %v984
        %v1033 = vunpack.c.l.b16 %v985
        %v1034 = vunpack.c.l.b16 %v986
        %v1035 = vunpack.c.l.b16 %v987
        %v1036 = vunpack.c.l.b16 %v988
        %v1037 = vunpack.c.l.b16 %v989
        %v1038 = vunpack.c.l.b16 %v990
        %v1039 = vunpack.c.l.b16 %v991
        %v1040 = vunpack.c.l.b16 %v992
        %v1041 = vunpack.c.l.b16 %v993
        %v1042 = vunpack.c.l.b16 %v994
        %v1043 = vunpack.c.l.b16 %v995
        %v1044 = vunpack.c.l.b16 %v996
        %v1045 = vunpack.c.l.b16 %v997
        %v1046 = vunpack.c.l.b16 %v998
        %v1047 = vunpack.c.l.b16 %v999
        %v1048 = vpack.c.b16 %v1033, %v1032
        %v1049 = vpack.c.b16 %v1035, %v1034
        %v1050 = vpack.c.b16 %v1037, %v1036
        %v1051 = vpack.c.b16 %v1039, %v1038
        %v1052 = vpack.c.b16 %v1041, %v1040
        %v1053 = vpack.c.b16 %v1043, %v1042
        %v1054 = vpack.c.b16 %v1045, %v1044
        %v1055 = vpack.c.b16 %v1047, %v1046
        %1064 = vmatprep.subr.bf16.mxu0 0
        %1065 = vmatpush1.bf16.msra.mxu0 %v1048
        %1066 = vmatprep.subr.bf16.mxu0 0
        %1067 = vmatpush1.bf16.msra.mxu0 %v1049
        %1068 = vmatprep.subr.bf16.mxu0 0
        %1069 = vmatpush1.bf16.msra.mxu0 %v1050
        %1070 = vmatprep.subr.bf16.mxu0 0
        %1071 = vmatpush1.bf16.msra.mxu0 %v1051
        %1072 = vmatprep.subr.bf16.mxu0 0
        %1073 = vmatpush1.bf16.msra.mxu0 %v1052
        %1074 = vmatprep.subr.bf16.mxu0 0
        %1075 = vmatpush1.bf16.msra.mxu0 %v1053
        %1076 = vmatprep.subr.bf16.mxu0 0
        %1077 = vmatpush1.bf16.msra.mxu0 %v1054
        %1078 = vmatprep.subr.bf16.mxu0 0
        %1079 = vmatpush1.bf16.msra.mxu0 %v1055
        %1080 = vmatprep.subr.bf16.mxu0 0
        %1081 = vmatpush1.bf16.msra.mxu0 0
        %1082 = vmatprep.subr.bf16.mxu0 0
        %1083 = vmatpush1.bf16.msra.mxu0 0
        %1084 = vmatprep.subr.bf16.mxu0 0
        %1085 = vmatpush1.bf16.msra.mxu0 0
        %1086 = vmatprep.subr.bf16.mxu0 0
        %1087 = vmatpush1.bf16.msra.mxu0 0
        %1088 = vmatprep.subr.bf16.mxu0 0
        %1089 = vmatpush1.bf16.msra.mxu0 0
        %1090 = vmatprep.subr.bf16.mxu0 0
        %1091 = vmatpush1.bf16.msra.mxu0 0
        %1092 = vmatprep.subr.bf16.mxu0 0
        %1093 = vmatpush1.bf16.msra.mxu0 0
        %1094 = vmatprep.subr.bf16.mxu0 0
        %1095 = vmatpush1.bf16.msra.mxu0 0
        %1096 = vmatprep.mubr.bf16.mxu0 0
        %1097 = vmatmul.mubr.bf16.gmra.mrb[0].mxu0 %v1014
        %v1098 = vpop.f32.mrb[0].mxu0
        %v1099 = vadd.f32 0.0, %v1098
        %v1100 = vpop.f32.mrb[0].mxu0
        %v1101 = vpop.f32.mrb[0].mxu0
        %v1102 = vpop.f32.mrb[0].mxu0
        %1103 = vdwg.mxu0
        %v1104 = vadd.f32 %v981, %v1099
        %v1105 = vld [vmem:[%s874] sm:$0x2]
        %s1106 = scalar_lea.vmem %s1, 512
        %v1107 = vld [vmem:[%s1106] sm:$0xf]
        %v1108 = vld [vmem:[%s1106 + $0x4] sm:$0xf]
        %v1109 = vld [vmem:[%s1106 + $0x8] sm:$0xf]
        %v1110 = vld [vmem:[%s1106 + $0xc] sm:$0xf]
        %v1111 = vld [vmem:[%s1106 + $0x10] sm:$0xf]
        %v1112 = vld [vmem:[%s1106 + $0x14] sm:$0xf]
        %v1113 = vld [vmem:[%s1106 + $0x18] sm:$0xf]
        %v1114 = vld [vmem:[%s1106 + $0x1c] sm:$0xf]
        %v1115 = vld [vmem:[%s1106 + $0x20] sm:$0xf]
        %v1116 = vld [vmem:[%s1106 + $0x24] sm:$0xf]
        %v1117 = vld [vmem:[%s1106 + $0x28] sm:$0xf]
        %v1118 = vld [vmem:[%s1106 + $0x2c] sm:$0xf]
        %v1119 = vld [vmem:[%s1106 + $0x30] sm:$0xf]
        %v1120 = vld [vmem:[%s1106 + $0x34] sm:$0xf]
        %v1121 = vld [vmem:[%s1106 + $0x38] sm:$0xf]
        %v1122 = vld [vmem:[%s1106 + $0x3c] sm:$0xf]
        %v1125 = vunpack.c.l.s4 1983009808
        %v1126 = vunpack.c.0.s8 %v1125
        %v1127 = vlaneseq
        %v1128 = vshrl.u32 %v1127, 7
        %v1129 = vsub.s32 %v1126, %v1128
        %v1130 = vrot.slane %v1105, %v1129
        %v1131 = vrot.slane %v1130, 1
        %v1149 = vunpack.c.l.b16 %v1107
        %v1150 = vunpack.c.l.b16 %v1108
        %v1151 = vunpack.c.l.b16 %v1109
        %v1152 = vunpack.c.l.b16 %v1110
        %v1153 = vunpack.c.l.b16 %v1111
        %v1154 = vunpack.c.l.b16 %v1112
        %v1155 = vunpack.c.l.b16 %v1113
        %v1156 = vunpack.c.l.b16 %v1114
        %v1157 = vunpack.c.l.b16 %v1115
        %v1158 = vunpack.c.l.b16 %v1116
        %v1159 = vunpack.c.l.b16 %v1117
        %v1160 = vunpack.c.l.b16 %v1118
        %v1161 = vunpack.c.l.b16 %v1119
        %v1162 = vunpack.c.l.b16 %v1120
        %v1163 = vunpack.c.l.b16 %v1121
        %v1164 = vunpack.c.l.b16 %v1122
        %v1165 = vpack.c.b16 %v1150, %v1149
        %v1166 = vpack.c.b16 %v1152, %v1151
        %v1167 = vpack.c.b16 %v1154, %v1153
        %v1168 = vpack.c.b16 %v1156, %v1155
        %v1169 = vpack.c.b16 %v1158, %v1157
        %v1170 = vpack.c.b16 %v1160, %v1159
        %v1171 = vpack.c.b16 %v1162, %v1161
        %v1172 = vpack.c.b16 %v1164, %v1163
        %1181 = vmatprep.subr.bf16.mxu0 0
        %1182 = vmatpush1.bf16.msra.mxu0 %v1165
        %1183 = vmatprep.subr.bf16.mxu0 0
        %1184 = vmatpush1.bf16.msra.mxu0 %v1166
        %1185 = vmatprep.subr.bf16.mxu0 0
        %1186 = vmatpush1.bf16.msra.mxu0 %v1167
        %1187 = vmatprep.subr.bf16.mxu0 0
        %1188 = vmatpush1.bf16.msra.mxu0 %v1168
        %1189 = vmatprep.subr.bf16.mxu0 0
        %1190 = vmatpush1.bf16.msra.mxu0 %v1169
        %1191 = vmatprep.subr.bf16.mxu0 0
        %1192 = vmatpush1.bf16.msra.mxu0 %v1170
        %1193 = vmatprep.subr.bf16.mxu0 0
        %1194 = vmatpush1.bf16.msra.mxu0 %v1171
        %1195 = vmatprep.subr.bf16.mxu0 0
        %1196 = vmatpush1.bf16.msra.mxu0 %v1172
        %1197 = vmatprep.subr.bf16.mxu0 0
        %1198 = vmatpush1.bf16.msra.mxu0 0
        %1199 = vmatprep.subr.bf16.mxu0 0
        %1200 = vmatpush1.bf16.msra.mxu0 0
        %1201 = vmatprep.subr.bf16.mxu0 0
        %1202 = vmatpush1.bf16.msra.mxu0 0
        %1203 = vmatprep.subr.bf16.mxu0 0
        %1204 = vmatpush1.bf16.msra.mxu0 0
        %1205 = vmatprep.subr.bf16.mxu0 0
        %1206 = vmatpush1.bf16.msra.mxu0 0
        %1207 = vmatprep.subr.bf16.mxu0 0
        %1208 = vmatpush1.bf16.msra.mxu0 0
        %1209 = vmatprep.subr.bf16.mxu0 0
        %1210 = vmatpush1.bf16.msra.mxu0 0
        %1211 = vmatprep.subr.bf16.mxu0 0
        %1212 = vmatpush1.bf16.msra.mxu0 0
        %1213 = vmatprep.mubr.bf16.mxu0 0
        %1214 = vmatmul.mubr.bf16.gmra.mrb[0].mxu0 %v1131
        %v1215 = vpop.f32.mrb[0].mxu0
        %v1216 = vadd.f32 0.0, %v1215
        %v1217 = vpop.f32.mrb[0].mxu0
        %v1218 = vpop.f32.mrb[0].mxu0
        %v1219 = vpop.f32.mrb[0].mxu0
        %1220 = vdwg.mxu0
        %v1221 = vadd.f32 %v1104, %v1216
        %v1222 = vld [vmem:[%s2] sm:$0x1]
        %v1224 = vlaneseq
        %v1225 = vshrl.u32 %v1224, 7
        %v1226 = vsub.s32 0, %v1225
        %v1227 = vrot.slane %v1222, %v1226
        %v1229 = vadd.f32 %v1221, %v1227
        %v1230 = vmax.f32 %v1229, 0.0
        %v1231 = vpack.c.bf16 %v1230, %v1230
        %s1232 = scalar_lea.vmem %s168, %s171
        %1233 = vst [vmem:[%s1232] sm:$0x1] %v1231
      $region37: #{vgg16_forward.35} parent=31 // loop_footer
        %s175 = sadd.s32 1, %s171
      $region38: #{vgg16_forward.35} parent=31 // loop_footer_branch
        %170 = sbr.rel target = $region34
      $region39: #{vgg16_forward.35} parent=31 // loop_exit
        _
      %p1234 = scmp.lt.s32.totalorder %s14, 1
      %s1235 = scalar_select %p1234, %s14, 1
      %s1236 = smul.addr %s1235, 2
      %s1237 = scalar_lea.vmem %s3, %s1236
      // Predicated region
      $region40: #{vgg16_forward.35} parent=31 // pred_check
        %p1238 = pneg %p100
      $region41: #{vgg16_forward.35} parent=31 // pred_check_branch
        %1240 = sbr.rel (%p1238) target = $region43
      $region42: #{vgg16_forward.35} parent=31 // pred_region
        _
      $region43: #{vgg16_forward.35} parent=31 // pred_fallthru
        _
    $region32: #{vgg16_forward.35} parent=5 // pred_fallthru
      _
    %p1241 = scmp.le.s32.totalorder 2, %s9
    // Predicated region
    $region44: #{vgg16_forward.35} parent=5 // pred_check
      %p1242 = pneg %p1241
    $region45: #{vgg16_forward.35} parent=5 // pred_check_branch
      %1244 = sbr.rel (%p1242) target = $region47
    $region46: #{vgg16_forward.35} parent=5 // pred_region
      %s1245 = ssub.s32 %s9, 2
      // Predicated region
      $region48: #{vgg16_forward.35} parent=46 // pred_check
        %p1246 = pneg %p106
      $region49: #{vgg16_forward.35} parent=46 // pred_check_branch
        %1248 = sbr.rel (%p1246) target = $region51
      $region50: #{vgg16_forward.35} parent=46 // pred_region
        %p1249 = scmp.lt.s32.totalorder %s15, 1
        %s1250 = scalar_select %p1249, %s15, 1
        %s1251 = smul.addr %s1250, 2
        %s1252 = scalar_lea.vmem %s3, %s1251
      $region51: #{vgg16_forward.35} parent=46 // pred_fallthru
        _
    $region47: #{vgg16_forward.35} parent=5 // pred_fallthru
      _
  $region6: #{vgg16_forward.35} parent=0 // loop_footer
    %s13 = sadd.s32 1, %s9
  $region7: #{vgg16_forward.35} parent=0 // loop_footer_branch
    %8 = sbr.rel target = $region3
  $region8: #{vgg16_forward.35} parent=0 // loop_exit
    _

// kernel: vgg16_forward.39
$region0: #{vgg16_forward.39}
  #allocation0 [shape = 'u32[]', space=smem, size = 0x4, offset = 0x4, fixed_abs, tag = 'smem constant byte address 0x4 - core index']
  #allocation1 [shape = 'u32[144,128]{1,0:T(1,128)}', space=vmem, size = 0x12000, scoped, tag = 'internal scratch']
  #allocation2 [shape = 'f32[16,128]{1,0:T(8,128)}', space=vmem, size = 0x2000, scoped, tag = 'scratch operand']
  %s0 = inlined_call_operand.vmem [shape: bf16[16,128], index: 0, kind: input, shape index: {}]
  %s1 = inlined_call_operand.vmem [shape: bf16[128,128], index: 1, kind: input, shape index: {}]
  %s2 = inlined_call_operand.vmem [shape: f32[1,128], index: 2, kind: input, shape index: {}]
  %s3 = inlined_call_operand.vmem [shape: bf16[16,128], index: 3, kind: output, shape index: {}]
  %s4 = sld [smem:[#allocation0]]
  $region30: #{vgg16_forward.39} parent=0
    _
  %s6 = ssub.s32 1, %s4
  %s7 = scalar_select 0, %s6, %s4
  // Predicated region
  $region2: #{vgg16_forward.39} parent=0 // pred_check
    _
  $region3: #{vgg16_forward.39} parent=0 // pred_check_branch
    %9 = sbr.rel (0) target = $region5
  $region4: #{vgg16_forward.39} parent=0 // pred_region
    _
  $region5: #{vgg16_forward.39} parent=0 // pred_fallthru
    _
  // Predicated region
  $region6: #{vgg16_forward.39} parent=0 // pred_check
    _
  $region7: #{vgg16_forward.39} parent=0 // pred_check_branch
    %11 = sbr.rel (0) target = $region9
  $region8: #{vgg16_forward.39} parent=0 // pred_region
    _
  $region9: #{vgg16_forward.39} parent=0 // pred_fallthru
    _
  // Predicated region
  $region10: #{vgg16_forward.39} parent=0 // pred_check
    _
  $region11: #{vgg16_forward.39} parent=0 // pred_check_branch
    %13 = sbr.rel (0) target = $region13
  $region12: #{vgg16_forward.39} parent=0 // pred_region
    _
  $region13: #{vgg16_forward.39} parent=0 // pred_fallthru
    _
  %p15 = scmp.eq.s32.totalorder 0, 0
  // Predicated region
  $region14: #{vgg16_forward.39} parent=0 // pred_check
    %p16 = pneg %p15
  $region15: #{vgg16_forward.39} parent=0 // pred_check_branch
    %18 = sbr.rel (%p16) target = $region17
  $region16: #{vgg16_forward.39} parent=0 // pred_region
    %19 = vst [vmem:[#allocation2] sm:$0xff] 0.0
    %20 = vst [vmem:[#allocation2 + $0x8] sm:$0xff] 0.0
  $region17: #{vgg16_forward.39} parent=0 // pred_fallthru
    _
  %v21 = vld [vmem:[#allocation2] sm:$0xff]
  %v22 = vld [vmem:[#allocation2 + $0x8] sm:$0xff]
  %v23 = vld [vmem:[%s0] sm:$0xf]
  %v24 = vld [vmem:[%s0 + $0x4] sm:$0xf]
  %v25 = vld [vmem:[%s1] sm:$0xf]
  %v26 = vld [vmem:[%s1 + $0x4] sm:$0xf]
  %v27 = vld [vmem:[%s1 + $0x8] sm:$0xf]
  %v28 = vld [vmem:[%s1 + $0xc] sm:$0xf]
  %v29 = vld [vmem:[%s1 + $0x10] sm:$0xf]
  %v30 = vld [vmem:[%s1 + $0x14] sm:$0xf]
  %v31 = vld [vmem:[%s1 + $0x18] sm:$0xf]
  %v32 = vld [vmem:[%s1 + $0x1c] sm:$0xf]
  %v33 = vld [vmem:[%s1 + $0x20] sm:$0xf]
  %v34 = vld [vmem:[%s1 + $0x24] sm:$0xf]
  %v35 = vld [vmem:[%s1 + $0x28] sm:$0xf]
  %v36 = vld [vmem:[%s1 + $0x2c] sm:$0xf]
  %v37 = vld [vmem:[%s1 + $0x30] sm:$0xf]
  %v38 = vld [vmem:[%s1 + $0x34] sm:$0xf]
  %v39 = vld [vmem:[%s1 + $0x38] sm:$0xf]
  %v40 = vld [vmem:[%s1 + $0x3c] sm:$0xf]
  %v43 = vunpack.c.l.b16 %v23
  %v44 = vunpack.c.l.b16 %v24
  %v45 = vpack.c.b16 %v44, %v43
  %v63 = vunpack.c.l.b16 %v25
  %v64 = vunpack.c.l.b16 %v26
  %v65 = vunpack.c.l.b16 %v27
  %v66 = vunpack.c.l.b16 %v28
  %v67 = vunpack.c.l.b16 %v29
  %v68 = vunpack.c.l.b16 %v30
  %v69 = vunpack.c.l.b16 %v31
  %v70 = vunpack.c.l.b16 %v32
  %v71 = vunpack.c.l.b16 %v33
  %v72 = vunpack.c.l.b16 %v34
  %v73 = vunpack.c.l.b16 %v35
  %v74 = vunpack.c.l.b16 %v36
  %v75 = vunpack.c.l.b16 %v37
  %v76 = vunpack.c.l.b16 %v38
  %v77 = vunpack.c.l.b16 %v39
  %v78 = vunpack.c.l.b16 %v40
  %v79 = vpack.c.b16 %v64, %v63
  %v80 = vpack.c.b16 %v66, %v65
  %v81 = vpack.c.b16 %v68, %v67
  %v82 = vpack.c.b16 %v70, %v69
  %v83 = vpack.c.b16 %v72, %v71
  %v84 = vpack.c.b16 %v74, %v73
  %v85 = vpack.c.b16 %v76, %v75
  %v86 = vpack.c.b16 %v78, %v77
  %95 = vmatprep.subr.bf16.mxu0 0
  %96 = vmatpush1.bf16.msra.mxu0 %v79
  %97 = vmatprep.subr.bf16.mxu0 0
  %98 = vmatpush1.bf16.msra.mxu0 %v80
  %99 = vmatprep.subr.bf16.mxu0 0
  %100 = vmatpush1.bf16.msra.mxu0 %v81
  %101 = vmatprep.subr.bf16.mxu0 0
  %102 = vmatpush1.bf16.msra.mxu0 %v82
  %103 = vmatprep.subr.bf16.mxu0 0
  %104 = vmatpush1.bf16.msra.mxu0 %v83
  %105 = vmatprep.subr.bf16.mxu0 0
  %106 = vmatpush1.bf16.msra.mxu0 %v84
  %107 = vmatprep.subr.bf16.mxu0 0
  %108 = vmatpush1.bf16.msra.mxu0 %v85
  %109 = vmatprep.subr.bf16.mxu0 0
  %110 = vmatpush1.bf16.msra.mxu0 %v86
  %111 = vmatprep.subr.bf16.mxu0 0
  %112 = vmatpush1.bf16.msra.mxu0 0
  %113 = vmatprep.subr.bf16.mxu0 0
  %114 = vmatpush1.bf16.msra.mxu0 0
  %115 = vmatprep.subr.bf16.mxu0 0
  %116 = vmatpush1.bf16.msra.mxu0 0
  %117 = vmatprep.subr.bf16.mxu0 0
  %118 = vmatpush1.bf16.msra.mxu0 0
  %119 = vmatprep.subr.bf16.mxu0 0
  %120 = vmatpush1.bf16.msra.mxu0 0
  %121 = vmatprep.subr.bf16.mxu0 0
  %122 = vmatpush1.bf16.msra.mxu0 0
  %123 = vmatprep.subr.bf16.mxu0 0
  %124 = vmatpush1.bf16.msra.mxu0 0
  %125 = vmatprep.subr.bf16.mxu0 0
  %126 = vmatpush1.bf16.msra.mxu0 0
  %127 = vmatprep.mubr.bf16.mxu0 0
  %128 = vmatmul.mubr.bf16.gmra.mrb[0].mxu0 %v45
  %v129 = vpop.f32.mrb[0].mxu0
  %v130 = vadd.f32 0.0, %v129
  %v131 = vpop.f32.mrb[0].mxu0
  %v132 = vpop.f32.mrb[0].mxu0
  %v133 = vadd.f32 0.0, %v132
  %v134 = vpop.f32.mrb[0].mxu0
  %135 = vdwg.mxu0
  %v136 = vadd.f32 %v21, %v130
  %v137 = vadd.f32 %v22, %v133
  %138 = vst [vmem:[#allocation2] sm:$0xff] %v136
  %139 = vst [vmem:[#allocation2 + $0x8] sm:$0xff] %v137
  // Predicated region
  $region18: #{vgg16_forward.39} parent=0 // pred_check
    %p140 = pneg %p15
  $region19: #{vgg16_forward.39} parent=0 // pred_check_branch
    %142 = sbr.rel (%p140) target = $region21
  $region20: #{vgg16_forward.39} parent=0 // pred_region
    %v143 = vld [vmem:[#allocation2] sm:$0xff]
    %v144 = vld [vmem:[#allocation2 + $0x8] sm:$0xff]
    %v145 = vld [vmem:[%s2] sm:$0x1]
    %v147 = vlaneseq
    %v148 = vshrl.u32 %v147, 7
    %v149 = vsub.s32 0, %v148
    %v150 = vrot.slane %v145, %v149
    %v152 = vadd.f32 %v143, %v150
    %v153 = vadd.f32 %v144, %v150
    %v154 = vmax.f32 %v152, 0.0
    %v155 = vmax.f32 %v153, 0.0
    %v156 = vpack.c.bf16 %v155, %v154
    %v158 = vunpack.c.l.b16 %v156
    %v159 = vunpack.c.h.b16 %v156
    %v160 = vpack.c.b16 %v158, %v158
    %v161 = vpack.c.b16 %v159, %v159
    %164 = vst [vmem:[%s3] sm:$0xf] %v160
    %165 = vst [vmem:[%s3 + $0x4] sm:$0xf] %v161
  $region21: #{vgg16_forward.39} parent=0 // pred_fallthru
    _
  // Predicated region
  $region22: #{vgg16_forward.39} parent=0 // pred_check
    _
  $region23: #{vgg16_forward.39} parent=0 // pred_check_branch
    %167 = sbr.rel (0) target = $region25
  $region24: #{vgg16_forward.39} parent=0 // pred_region
    _
  $region25: #{vgg16_forward.39} parent=0 // pred_fallthru
    _
  // Predicated region
  $region26: #{vgg16_forward.39} parent=0 // pred_check
    _
  $region27: #{vgg16_forward.39} parent=0 // pred_check_branch
    %169 = sbr.rel (0) target = $region29
  $region28: #{vgg16_forward.39} parent=0 // pred_region
    _
  $region29: #{vgg16_forward.39} parent=0 // pred_fallthru
    _

// kernel: vgg16_forward.41
$region0: #{vgg16_forward.41}
  #allocation0 [shape = 'u32[]', space=smem, size = 0x4, offset = 0x4, fixed_abs, tag = 'smem constant byte address 0x4 - core index']
  #allocation1 [shape = 'u32[144,128]{1,0:T(1,128)}', space=vmem, size = 0x12000, scoped, tag = 'internal scratch']
  #allocation2 [shape = 'f32[16,128]{1,0:T(8,128)}', space=vmem, size = 0x2000, scoped, tag = 'scratch operand']
  %s0 = inlined_call_operand.vmem [shape: bf16[16,128], index: 0, kind: input, shape index: {}]
  %s1 = inlined_call_operand.vmem [shape: bf16[128,128], index: 1, kind: input, shape index: {}]
  %s2 = inlined_call_operand.vmem [shape: f32[1,128], index: 2, kind: input, shape index: {}]
  %s3 = inlined_call_operand.vmem [shape: f32[16,128], index: 3, kind: output, shape index: {}]
  %s4 = sld [smem:[#allocation0]]
  $region30: #{vgg16_forward.41} parent=0
    _
  %s6 = ssub.s32 1, %s4
  %s7 = scalar_select 0, %s6, %s4
  // Predicated region
  $region2: #{vgg16_forward.41} parent=0 // pred_check
    _
  $region3: #{vgg16_forward.41} parent=0 // pred_check_branch
    %9 = sbr.rel (0) target = $region5
  $region4: #{vgg16_forward.41} parent=0 // pred_region
    _
  $region5: #{vgg16_forward.41} parent=0 // pred_fallthru
    _
  // Predicated region
  $region6: #{vgg16_forward.41} parent=0 // pred_check
    _
  $region7: #{vgg16_forward.41} parent=0 // pred_check_branch
    %11 = sbr.rel (0) target = $region9
  $region8: #{vgg16_forward.41} parent=0 // pred_region
    _
  $region9: #{vgg16_forward.41} parent=0 // pred_fallthru
    _
  // Predicated region
  $region10: #{vgg16_forward.41} parent=0 // pred_check
    _
  $region11: #{vgg16_forward.41} parent=0 // pred_check_branch
    %13 = sbr.rel (0) target = $region13
  $region12: #{vgg16_forward.41} parent=0 // pred_region
    _
  $region13: #{vgg16_forward.41} parent=0 // pred_fallthru
    _
  %p15 = scmp.eq.s32.totalorder 0, 0
  // Predicated region
  $region14: #{vgg16_forward.41} parent=0 // pred_check
    %p16 = pneg %p15
  $region15: #{vgg16_forward.41} parent=0 // pred_check_branch
    %18 = sbr.rel (%p16) target = $region17
  $region16: #{vgg16_forward.41} parent=0 // pred_region
    %19 = vst [vmem:[#allocation2] sm:$0xff] 0.0
    %20 = vst [vmem:[#allocation2 + $0x8] sm:$0xff] 0.0
  $region17: #{vgg16_forward.41} parent=0 // pred_fallthru
    _
  %v21 = vld [vmem:[#allocation2] sm:$0xff]
  %v22 = vld [vmem:[#allocation2 + $0x8] sm:$0xff]
  %v23 = vld [vmem:[%s0] sm:$0xf]
  %v24 = vld [vmem:[%s0 + $0x4] sm:$0xf]
  %v25 = vld [vmem:[%s1] sm:$0xf]
  %v26 = vld [vmem:[%s1 + $0x4] sm:$0xf]
  %v27 = vld [vmem:[%s1 + $0x8] sm:$0xf]
  %v28 = vld [vmem:[%s1 + $0xc] sm:$0xf]
  %v29 = vld [vmem:[%s1 + $0x10] sm:$0xf]
  %v30 = vld [vmem:[%s1 + $0x14] sm:$0xf]
  %v31 = vld [vmem:[%s1 + $0x18] sm:$0xf]
  %v32 = vld [vmem:[%s1 + $0x1c] sm:$0xf]
  %v33 = vld [vmem:[%s1 + $0x20] sm:$0xf]
  %v34 = vld [vmem:[%s1 + $0x24] sm:$0xf]
  %v35 = vld [vmem:[%s1 + $0x28] sm:$0xf]
  %v36 = vld [vmem:[%s1 + $0x2c] sm:$0xf]
  %v37 = vld [vmem:[%s1 + $0x30] sm:$0xf]
  %v38 = vld [vmem:[%s1 + $0x34] sm:$0xf]
  %v39 = vld [vmem:[%s1 + $0x38] sm:$0xf]
  %v40 = vld [vmem:[%s1 + $0x3c] sm:$0xf]
  %v43 = vunpack.c.l.b16 %v23
  %v44 = vunpack.c.l.b16 %v24
  %v45 = vpack.c.b16 %v44, %v43
  %v63 = vunpack.c.l.b16 %v25
  %v64 = vunpack.c.l.b16 %v26
  %v65 = vunpack.c.l.b16 %v27
  %v66 = vunpack.c.l.b16 %v28
  %v67 = vunpack.c.l.b16 %v29
  %v68 = vunpack.c.l.b16 %v30
  %v69 = vunpack.c.l.b16 %v31
  %v70 = vunpack.c.l.b16 %v32
  %v71 = vunpack.c.l.b16 %v33
  %v72 = vunpack.c.l.b16 %v34
  %v73 = vunpack.c.l.b16 %v35
  %v74 = vunpack.c.l.b16 %v36
  %v75 = vunpack.c.l.b16 %v37
  %v76 = vunpack.c.l.b16 %v38
  %v77 = vunpack.c.l.b16 %v39
  %v78 = vunpack.c.l.b16 %v40
  %v79 = vpack.c.b16 %v64, %v63
  %v80 = vpack.c.b16 %v66, %v65
  %v81 = vpack.c.b16 %v68, %v67
  %v82 = vpack.c.b16 %v70, %v69
  %v83 = vpack.c.b16 %v72, %v71
  %v84 = vpack.c.b16 %v74, %v73
  %v85 = vpack.c.b16 %v76, %v75
  %v86 = vpack.c.b16 %v78, %v77
  %95 = vmatprep.subr.bf16.mxu0 0
  %96 = vmatpush1.bf16.msra.mxu0 %v79
  %97 = vmatprep.subr.bf16.mxu0 0
  %98 = vmatpush1.bf16.msra.mxu0 %v80
  %99 = vmatprep.subr.bf16.mxu0 0
  %100 = vmatpush1.bf16.msra.mxu0 %v81
  %101 = vmatprep.subr.bf16.mxu0 0
  %102 = vmatpush1.bf16.msra.mxu0 %v82
  %103 = vmatprep.subr.bf16.mxu0 0
  %104 = vmatpush1.bf16.msra.mxu0 %v83
  %105 = vmatprep.subr.bf16.mxu0 0
  %106 = vmatpush1.bf16.msra.mxu0 %v84
  %107 = vmatprep.subr.bf16.mxu0 0
  %108 = vmatpush1.bf16.msra.mxu0 %v85
  %109 = vmatprep.subr.bf16.mxu0 0
  %110 = vmatpush1.bf16.msra.mxu0 %v86
  %111 = vmatprep.subr.bf16.mxu0 0
  %112 = vmatpush1.bf16.msra.mxu0 0
  %113 = vmatprep.subr.bf16.mxu0 0
  %114 = vmatpush1.bf16.msra.mxu0 0
  %115 = vmatprep.subr.bf16.mxu0 0
  %116 = vmatpush1.bf16.msra.mxu0 0
  %117 = vmatprep.subr.bf16.mxu0 0
  %118 = vmatpush1.bf16.msra.mxu0 0
  %119 = vmatprep.subr.bf16.mxu0 0
  %120 = vmatpush1.bf16.msra.mxu0 0
  %121 = vmatprep.subr.bf16.mxu0 0
  %122 = vmatpush1.bf16.msra.mxu0 0
  %123 = vmatprep.subr.bf16.mxu0 0
  %124 = vmatpush1.bf16.msra.mxu0 0
  %125 = vmatprep.subr.bf16.mxu0 0
  %126 = vmatpush1.bf16.msra.mxu0 0
  %127 = vmatprep.mubr.bf16.mxu0 0
  %128 = vmatmul.mubr.bf16.gmra.mrb[0].mxu0 %v45
  %v129 = vpop.f32.mrb[0].mxu0
  %v130 = vadd.f32 0.0, %v129
  %v131 = vpop.f32.mrb[0].mxu0
  %v132 = vpop.f32.mrb[0].mxu0
  %v133 = vadd.f32 0.0, %v132
  %v134 = vpop.f32.mrb[0].mxu0
  %135 = vdwg.mxu0
  %v136 = vadd.f32 %v21, %v130
  %v137 = vadd.f32 %v22, %v133
  %138 = vst [vmem:[#allocation2] sm:$0xff] %v136
  %139 = vst [vmem:[#allocation2 + $0x8] sm:$0xff] %v137
  // Predicated region
  $region18: #{vgg16_forward.41} parent=0 // pred_check
    %p140 = pneg %p15
  $region19: #{vgg16_forward.41} parent=0 // pred_check_branch
    %142 = sbr.rel (%p140) target = $region21
  $region20: #{vgg16_forward.41} parent=0 // pred_region
    %v143 = vld [vmem:[#allocation2] sm:$0xff]
    %v144 = vld [vmem:[#allocation2 + $0x8] sm:$0xff]
    %v145 = vld [vmem:[%s2] sm:$0x1]
    %v147 = vlaneseq
    %v148 = vshrl.u32 %v147, 7
    %v149 = vsub.s32 0, %v148
    %v150 = vrot.slane %v145, %v149
    %v152 = vadd.f32 %v143, %v150
    %v153 = vadd.f32 %v144, %v150
    %154 = vst [vmem:[%s3] sm:$0xff] %v152
    %155 = vst [vmem:[%s3 + $0x8] sm:$0xff] %v153
  $region21: #{vgg16_forward.41} parent=0 // pred_fallthru
    _
  // Predicated region
  $region22: #{vgg16_forward.41} parent=0 // pred_check
    _
  $region23: #{vgg16_forward.41} parent=0 // pred_check_branch
    %157 = sbr.rel (0) target = $region25
  $region24: #{vgg16_forward.41} parent=0 // pred_region
    _
  $region25: #{vgg16_forward.41} parent=0 // pred_fallthru
    _
  // Predicated region
  $region26: #{vgg16_forward.41} parent=0 // pred_check
    _
  $region27: #{vgg16_forward.41} parent=0 // pred_check_branch
    %159 = sbr.rel (0) target = $region29
  $region28: #{vgg16_forward.41} parent=0 // pred_region
    _
  $region29: #{vgg16_forward.41} parent=0 // pred_fallthru
    _

</llo_original>
